<compile_context>
chip_gen: v5e
topology: v5e:2x2
jax: 0.10.0
libtpu: 0.0.40
codegen_flags: <defaults>
</compile_context>

<pallas_src>
import functools

import jax
import jax.numpy as jnp
from jax.experimental import pallas as pl
from jax.experimental.pallas import tpu as pltpu

MAX_LOG_STD = 2.0
MIN_LOG_STD = -20.0

_VMEM_LIMIT = 32 * 1024 * 1024  # explicit budget, safe under v7x's 64 MiB VMEM


# ----------------------------------------------------------------------------
# Pallas kernel 1: tiled matmul + bias + optional ReLU (conv layers via im2col)
# ----------------------------------------------------------------------------
def _matmul_bias_act_kernel(x_ref, w_ref, b_ref, o_ref, *, relu):
    acc = jnp.dot(x_ref[...], w_ref[...], preferred_element_type=jnp.float32)
    acc = acc + b_ref[...]                      # f32 epilogue (v5e has no bf16 VPU)
    if relu:
        acc = jnp.maximum(acc, 0.0)
    o_ref[...] = acc.astype(o_ref.dtype)


def matmul_bias_act(x, w, b, *, relu, out_dtype, bm_max=2048):
    """y = act(x @ w + b); x:(M,K) bf16, w:(K,N) bf16, b:(N,) f32. Tiled over M."""
    M, K = x.shape
    _, N = w.shape
    bm = bm_max if (M % bm_max == 0) else M     # large M tiles; whole M if small
    kern = functools.partial(_matmul_bias_act_kernel, relu=relu)
    # TODO(synk): with conv_ch=16 the output is lane-sparse (N=16 < 128); a
    # transposed/packed store layout would make stores lane-dense but needs an
    # extra relayout that is not worth it at these tiny sizes.
    return pl.pallas_call(
        kern,
        out_shape=jax.ShapeDtypeStruct((M, N), out_dtype),
        grid_spec=pltpu.PrefetchScalarGridSpec(
            num_scalar_prefetch=0,
            grid=(M // bm,),
            in_specs=[
                pl.BlockSpec((bm, K), lambda i: (i, 0)),
                pl.BlockSpec((K, N), lambda i: (0, 0)),
                pl.BlockSpec((1, N), lambda i: (0, 0)),
            ],
            out_specs=pl.BlockSpec((bm, N), lambda i: (i, 0)),
        ),
        compiler_params=pltpu.CompilerParams(
            dimension_semantics=("parallel",),
            vmem_limit_bytes=_VMEM_LIMIT,
        ),
    )(x, w, b.reshape(1, N))


# ----------------------------------------------------------------------------
# Pallas kernel 2: the entire MLP tail fused into one kernel
#   perc_fc1/2 -> split(obs, goal) -> encoder fc1..3 -> proposal fc1..3 -> head
# ----------------------------------------------------------------------------
def _fused_tail_kernel(
    feats_ref,
    pw1_ref, pb1_ref, pw2_ref, pb2_ref,
    ew1_ref, eb1_ref, ew2_ref, eb2_ref, ew3_ref, eb3_ref,
    qw1s_ref, qw1g_ref, qb1_ref, qw2_ref, qb2_ref, qw3_ref, qb3_ref,
    hwm_ref, hbm_ref, hws_ref, hbs_ref,
    mean_ref, std_ref,
    *, n_img):
    def mm(x, w_ref, b_ref, relu):
        y = jnp.dot(x, w_ref[...], preferred_element_type=jnp.float32) + b_ref[...]
        return jnp.maximum(y, 0.0) if relu else y

    # Perception MLP on the batched (obs ++ goal) conv features.
    emb = mm(feats_ref[...], pw1_ref, pb1_ref, True)
    emb = mm(emb, pw2_ref, pb2_ref, False)              # (2B, state_dim)
    emb_state = emb[:n_img]                             # obs embeddings
    emb_goal = emb[n_img:]                              # goal embeddings

    # Goal encoder.
    g = mm(emb_goal, ew1_ref, eb1_ref, True)
    g = mm(g, ew2_ref, eb2_ref, True)
    g = mm(g, ew3_ref, eb3_ref, False)                  # (B, goal_dim)

    # Proposal MLP: concat([emb_state, g], -1) @ W1 realized as two matmuls.
    x = (jnp.dot(emb_state, qw1s_ref[...], preferred_element_type=jnp.float32)
         + jnp.dot(g, qw1g_ref[...], preferred_element_type=jnp.float32)
         + qb1_ref[...])
    x = jnp.maximum(x, 0.0)
    x = mm(x, qw2_ref, qb2_ref, True)
    x = mm(x, qw3_ref, qb3_ref, True)

    # Head: torch.split realized as pre-split weights; clamp + exp for std.
    mean = mm(x, hwm_ref, hbm_ref, False)
    logstd = mm(x, hws_ref, hbs_ref, False)
    logstd = jnp.clip(logstd, MIN_LOG_STD, MAX_LOG_STD)
    mean_ref[...] = mean.astype(mean_ref.dtype)
    std_ref[...] = jnp.exp(logstd).astype(std_ref.dtype)


def fused_mlp_tail(p, feats, n_img, skill_dim):
    inputs = [
        feats,
        p["perc_fc1"][0], p["perc_fc1"][1].reshape(1, -1),
        p["perc_fc2"][0], p["perc_fc2"][1].reshape(1, -1),
        p["enc_fc1"][0], p["enc_fc1"][1].reshape(1, -1),
        p["enc_fc2"][0], p["enc_fc2"][1].reshape(1, -1),
        p["enc_fc3"][0], p["enc_fc3"][1].reshape(1, -1),
        p["prop_fc1_s"], p["prop_fc1_g"], p["prop_b1"].reshape(1, -1),
        p["prop_fc2"][0], p["prop_fc2"][1].reshape(1, -1),
        p["prop_fc3"][0], p["prop_fc3"][1].reshape(1, -1),
        p["head_w_mean"], p["head_b_mean"].reshape(1, -1),
        p["head_w_std"], p["head_b_std"].reshape(1, -1),
    ]
    in_specs = [pl.BlockSpec(a.shape, lambda i: (0, 0)) for a in inputs]
    kern = functools.partial(_fused_tail_kernel, n_img=n_img)
    return pl.pallas_call(
        kern,
        out_shape=(
            jax.ShapeDtypeStruct((n_img, skill_dim), jnp.float32),
            jax.ShapeDtypeStruct((n_img, skill_dim), jnp.float32),
        ),
        grid_spec=pltpu.PrefetchScalarGridSpec(
            num_scalar_prefetch=0,
            grid=(1,),
            in_specs=in_specs,
            out_specs=[
                pl.BlockSpec((n_img, skill_dim), lambda i: (0, 0)),
                pl.BlockSpec((n_img, skill_dim), lambda i: (0, 0)),
            ],
        ),
        compiler_params=pltpu.CompilerParams(vmem_limit_bytes=_VMEM_LIMIT),
    )(*inputs)


# ----------------------------------------------------------------------------
# Plain-JAX glue: im2col (pad + static strided slices) feeding the Pallas matmul
# ----------------------------------------------------------------------------
def im2col_nhwc(x, kh, kw, stride, pad):
    """x: (B,H,W,C) -> (B*Ho*Wo, kh*kw*C), patch feature order = (i, j, c)."""
    B, H, W, C = x.shape
    xp = jnp.pad(x, ((0, 0), (pad, pad), (pad, pad), (0, 0)))
    Ho = (H + 2 * pad - kh) // stride + 1
    Wo = (W + 2 * pad - kw) // stride + 1
    cols = []
    for i in range(kh):
        for j in range(kw):
            cols.append(xp[:, i:i + Ho * stride:stride, j:j + Wo * stride:stride, :])
    patches = jnp.concatenate(cols, axis=-1)  # (B, Ho, Wo, kh*kw*C)
    return patches.reshape(B * Ho * Wo, kh * kw * C), Ho, Wo


def conv2d_pallas(x_nhwc, w_mat, b, *, stride, pad, kh=3, kw=3):
    """Conv via im2col + Pallas matmul; w_mat is (K_padded, O) bf16, b is (O,) f32."""
    B = x_nhwc.shape[0]
    cols, Ho, Wo = im2col_nhwc(x_nhwc, kh, kw, stride, pad)
    K = cols.shape[1]
    Kp, O = w_mat.shape
    if Kp != K:  # zero-pad patch features to sublane-aligned K (e.g. 27 -> 32)
        cols = jnp.pad(cols, ((0, 0), (0, Kp - K)))
    y = matmul_bias_act(cols.astype(jnp.bfloat16), w_mat, b,
                        relu=True, out_dtype=jnp.bfloat16)
    return y.reshape(B, Ho, Wo, O)


# ----------------------------------------------------------------------------
# Parameter construction (deterministic, synthetic, PyTorch-equivalent layout)
# ----------------------------------------------------------------------------
def _init_linear(key, fan_in, fan_out):
    k1, k2 = jax.random.split(key)
    bound = 1.0 / jnp.sqrt(fan_in)
    w = jax.random.uniform(k1, (fan_in, fan_out), jnp.float32, -bound, bound)
    b = jax.random.uniform(k2, (fan_out,), jnp.float32, -bound, bound)
    return w, b


def _init_conv(key, out_ch, in_ch, k):
    k1, k2 = jax.random.split(key)
    fan_in = in_ch * k * k
    bound = 1.0 / jnp.sqrt(fan_in)
    w = jax.random.uniform(k1, (out_ch, in_ch, k, k), jnp.float32, -bound, bound)
    b = jax.random.uniform(k2, (out_ch,), jnp.float32, -bound, bound)
    return w, b


def make_params(key, state_dim, goal_dim, skill_dim, hidden_size, conv_ch=16):
    keys = jax.random.split(key, 16)
    p = {}
    # Perception: 4 convs (3 -> conv_ch -> ... -> conv_ch), 128 -> 8 spatial
    p["conv1"] = _init_conv(keys[0], conv_ch, 3, 3)
    p["conv2"] = _init_conv(keys[1], conv_ch, conv_ch, 3)
    p["conv3"] = _init_conv(keys[2], conv_ch, conv_ch, 3)
    p["conv4"] = _init_conv(keys[3], conv_ch, conv_ch, 3)
    flat = conv_ch * 8 * 8
    p["perc_fc1"] = _init_linear(keys[4], flat, hidden_size)
    p["perc_fc2"] = _init_linear(keys[5], hidden_size, state_dim)
    # Encoder(state_dim, goal_dim, hidden_size)
    p["enc_fc1"] = _init_linear(keys[6], state_dim, hidden_size)
    p["enc_fc2"] = _init_linear(keys[7], hidden_size, hidden_size)
    p["enc_fc3"] = _init_linear(keys[8], hidden_size, goal_dim)
    # SkillProposal.layers
    p["prop_fc1"] = _init_linear(keys[9], state_dim + goal_dim, hidden_size)
    p["prop_fc2"] = _init_linear(keys[10], hidden_size, hidden_size)
    p["prop_fc3"] = _init_linear(keys[11], hidden_size, hidden_size)
    p["prop_head"] = _init_linear(keys[12], hidden_size, 2 * skill_dim)
    return p


def _round_up(x, m):
    return ((x + m - 1) // m) * m


def prepare_params(raw, state_dim, goal_dim, skill_dim, hidden_size, conv_ch=16):
    """One-time re-layout of PyTorch-layout params into kernel-ready form."""
    p = {}
    # Conv weights -> im2col matmul layout (kh*kw*C, O), K padded, bf16.
    for name in ("conv1", "conv2", "conv3", "conv4"):
        w, b = raw[name]                      # (O, C, kh, kw), (O,)
        O, C, kh, kw = w.shape
        K = kh * kw * C
        w_mat = jnp.transpose(w, (2, 3, 1, 0)).reshape(K, O)  # (i, j, c) order
        Kp = _round_up(K, 8)
        if Kp != K:
            w_mat = jnp.pad(w_mat, ((0, Kp - K), (0, 0)))
        p[name] = (w_mat.astype(jnp.bfloat16), b)
    # perc_fc1: permute rows from PyTorch CHW flatten order to NHWC flatten
    # order so the runtime feature-map transpose is not needed.
    w, b = raw["perc_fc1"]                    # (conv_ch*8*8, hidden)
    w = (w.reshape(conv_ch, 8, 8, hidden_size)
          .transpose(1, 2, 0, 3)
          .reshape(conv_ch * 8 * 8, hidden_size))
    p["perc_fc1"] = (w, b)
    p["perc_fc2"] = raw["perc_fc2"]
    p["enc_fc1"] = raw["enc_fc1"]
    p["enc_fc2"] = raw["enc_fc2"]
    p["enc_fc3"] = raw["enc_fc3"]
    # prop_fc1 split so the in-kernel concat becomes two matmuls.
    w, b = raw["prop_fc1"]                    # (state_dim + goal_dim, hidden)
    p["prop_fc1_s"] = w[:state_dim]
    p["prop_fc1_g"] = w[state_dim:]
    p["prop_b1"] = b
    p["prop_fc2"] = raw["prop_fc2"]
    p["prop_fc3"] = raw["prop_fc3"]
    # head split into mean / logstd halves (== torch.split on the output).
    w, b = raw["prop_head"]                   # (hidden, 2*skill_dim)
    p["head_w_mean"], p["head_w_std"] = w[:, :skill_dim], w[:, skill_dim:]
    p["head_b_mean"], p["head_b_std"] = b[:skill_dim], b[skill_dim:]
    return p


# ----------------------------------------------------------------------------
# Forward pass (mirrors SkillProposal.forward)
# ----------------------------------------------------------------------------
def skill_proposal_forward(params, obs, goal, skill_dim):
    n_img = obs.shape[0]
    # Batch obs and goal through a single perception pass (B -> 2B).
    imgs = jnp.concatenate([obs, goal], axis=0)                  # (2B, C, H, W)
    x = jnp.transpose(imgs, (0, 2, 3, 1)).astype(jnp.bfloat16)   # NCHW -> NHWC
    x = conv2d_pallas(x, *params["conv1"], stride=2, pad=1)
    x = conv2d_pallas(x, *params["conv2"], stride=2, pad=1)
    x = conv2d_pallas(x, *params["conv3"], stride=2, pad=1)
    x = conv2d_pallas(x, *params["conv4"], stride=2, pad=1)
    # NHWC flatten (perc_fc1 rows were permuted at prep time to match).
    feats = x.reshape(x.shape[0], -1).astype(jnp.float32)        # (2B, 1024)
    # Single fused kernel for the whole MLP tail + distribution head.
    mean, std = fused_mlp_tail(params, feats, n_img=n_img, skill_dim=skill_dim)
    # TODO(synk): SquashedNormal is a tanh-transformed Normal distribution
    # object; a kernel cannot return a distribution, so we return (mean, std).
    return mean, std


# ----------------------------------------------------------------------------
if __name__ == "__main__":
    STATE_DIM, GOAL_DIM, SKILL_DIM, HIDDEN = 32, 16, 8, 64
    B, C, H, W = 2, 3, 128, 128  # Perception(128, 128, ...) -> 128x128 RGB images

    key = jax.random.PRNGKey(0)
    k_obs, k_goal, k_param = jax.random.split(key, 3)
    obs = jax.random.normal(k_obs, (B, C, H, W), jnp.float32)
    goal = jax.random.normal(k_goal, (B, C, H, W), jnp.float32)
    raw_params = make_params(k_param, STATE_DIM, GOAL_DIM, SKILL_DIM, HIDDEN)
    params = prepare_params(raw_params, STATE_DIM, GOAL_DIM, SKILL_DIM, HIDDEN)

    forward = jax.jit(functools.partial(skill_proposal_forward, skill_dim=SKILL_DIM))
    mean, std = forward(params, obs, goal)
    jax.block_until_ready((mean, std))

    assert mean.shape == (B, SKILL_DIM) and std.shape == (B, SKILL_DIM)
    assert bool(jnp.all(jnp.isfinite(mean))) and bool(jnp.all(std > 0.0))
    print("KERNEL_OK")
</pallas_src>

<mosaic_0001>
module attributes {stable_mosaic.version = 11 : i64} {
  func.func @_matmul_bias_act_kernel(%arg0: i32, %arg1: memref<2048x32xbf16, #tpu.memory_space<vmem>>, %arg2: memref<32x16xbf16, #tpu.memory_space<vmem>>, %arg3: memref<1x16xf32, #tpu.memory_space<vmem>>, %arg4: memref<2048x16xbf16, #tpu.memory_space<vmem>>) attributes {dimension_semantics = [#tpu.dimension_semantics<parallel>], iteration_bounds = array<i64: 8>, scalar_prefetch = 0 : i64, scratch_operands = 0 : i64, tpu.core_type = #tpu.core_type<tc>, window_params = [{transform_indices = @transform_0, window_bounds = array<i64: 2048, 32>}, {pipeline_mode = #tpu.pipeline_mode<synchronous>, transform_indices = @transform_1, window_bounds = array<i64: 32, 16>}, {pipeline_mode = #tpu.pipeline_mode<synchronous>, transform_indices = @transform_2, window_bounds = array<i64: 1, 16>}, {transform_indices = @transform_3, window_bounds = array<i64: 2048, 16>}]} {
    %c0 = arith.constant 0 : index
    %c0_0 = arith.constant 0 : index
    %0 = vector.load %arg1[%c0, %c0_0] : memref<2048x32xbf16, #tpu.memory_space<vmem>>, vector<2048x32xbf16>
    %c0_1 = arith.constant 0 : index
    %c0_2 = arith.constant 0 : index
    %1 = vector.load %arg2[%c0_1, %c0_2] : memref<32x16xbf16, #tpu.memory_space<vmem>>, vector<32x16xbf16>
    %cst = arith.constant dense<0.000000e+00> : vector<2048x16xf32>
    %2 = tpu.matmul %0, %1, %cst {dimension_numbers = #tpu.dot_dimension_numbers<[1], [0], [0], [1], [0, 0, 1, 1], [], []>} : vector<2048x32xbf16>, vector<32x16xbf16>, vector<2048x16xf32> -> vector<2048x16xf32>
    %c0_3 = arith.constant 0 : index
    %c0_4 = arith.constant 0 : index
    %3 = vector.load %arg3[%c0_3, %c0_4] : memref<1x16xf32, #tpu.memory_space<vmem>>, vector<1x16xf32>
    %4 = vector.broadcast %3 : vector<1x16xf32> to vector<2048x16xf32>
    %5 = arith.addf %2, %4 : vector<2048x16xf32>
    %cst_5 = arith.constant 0.000000e+00 : f32
    %6 = vector.broadcast %cst_5 : f32 to vector<2048x16xf32>
    %7 = arith.maximumf %5, %6 : vector<2048x16xf32>
    %8 = arith.truncf %7 : vector<2048x16xf32> to vector<2048x16xbf16>
    %c0_6 = arith.constant 0 : index
    %c0_7 = arith.constant 0 : index
    %9 = vector.load %arg4[%c0_6, %c0_7] : memref<2048x16xbf16, #tpu.memory_space<vmem>>, vector<2048x16xbf16>
    tpu.vector_store %arg4[%c0_6, %c0_7], %8 {strides = array<i32>} : memref<2048x16xbf16, #tpu.memory_space<vmem>>, vector<2048x16xbf16>,
    return
  }
  func.func @transform_0(%arg0: i32) -> (i32, i32) {
    %c0_i32 = arith.constant 0 : i32
    %c0_i32_0 = arith.constant 0 : i32
    return %arg0, %c0_i32 : i32, i32
  }
  func.func @transform_1(%arg0: i32) -> (i32, i32) {
    %c0_i32 = arith.constant 0 : i32
    %c0_i32_0 = arith.constant 0 : i32
    %c0_i32_1 = arith.constant 0 : i32
    return %c0_i32, %c0_i32_0 : i32, i32
  }
  func.func @transform_2(%arg0: i32) -> (i32, i32) {
    %c0_i32 = arith.constant 0 : i32
    %c0_i32_0 = arith.constant 0 : i32
    %c0_i32_1 = arith.constant 0 : i32
    return %c0_i32, %c0_i32_0 : i32, i32
  }
  func.func @transform_3(%arg0: i32) -> (i32, i32) {
    %c0_i32 = arith.constant 0 : i32
    %c0_i32_0 = arith.constant 0 : i32
    return %arg0, %c0_i32 : i32, i32
  }
}

module attributes {stable_mosaic.version = 11 : i64} {
  func.func @_matmul_bias_act_kernel(%arg0: i32, %arg1: memref<2048x144xbf16, #tpu.memory_space<vmem>>, %arg2: memref<144x16xbf16, #tpu.memory_space<vmem>>, %arg3: memref<1x16xf32, #tpu.memory_space<vmem>>, %arg4: memref<2048x16xbf16, #tpu.memory_space<vmem>>) attributes {dimension_semantics = [#tpu.dimension_semantics<parallel>], iteration_bounds = array<i64: 2>, scalar_prefetch = 0 : i64, scratch_operands = 0 : i64, tpu.core_type = #tpu.core_type<tc>, window_params = [{transform_indices = @transform_0, window_bounds = array<i64: 2048, 144>}, {pipeline_mode = #tpu.pipeline_mode<synchronous>, transform_indices = @transform_1, window_bounds = array<i64: 144, 16>}, {pipeline_mode = #tpu.pipeline_mode<synchronous>, transform_indices = @transform_2, window_bounds = array<i64: 1, 16>}, {transform_indices = @transform_3, window_bounds = array<i64: 2048, 16>}]} {
    %c0 = arith.constant 0 : index
    %c0_0 = arith.constant 0 : index
    %0 = vector.load %arg1[%c0, %c0_0] : memref<2048x144xbf16, #tpu.memory_space<vmem>>, vector<2048x144xbf16>
    %c0_1 = arith.constant 0 : index
    %c0_2 = arith.constant 0 : index
    %1 = vector.load %arg2[%c0_1, %c0_2] : memref<144x16xbf16, #tpu.memory_space<vmem>>, vector<144x16xbf16>
    %cst = arith.constant dense<0.000000e+00> : vector<2048x16xf32>
    %2 = tpu.matmul %0, %1, %cst {dimension_numbers = #tpu.dot_dimension_numbers<[1], [0], [0], [1], [0, 0, 1, 1], [], []>} : vector<2048x144xbf16>, vector<144x16xbf16>, vector<2048x16xf32> -> vector<2048x16xf32>
    %c0_3 = arith.constant 0 : index
    %c0_4 = arith.constant 0 : index
    %3 = vector.load %arg3[%c0_3, %c0_4] : memref<1x16xf32, #tpu.memory_space<vmem>>, vector<1x16xf32>
    %4 = vector.broadcast %3 : vector<1x16xf32> to vector<2048x16xf32>
    %5 = arith.addf %2, %4 : vector<2048x16xf32>
    %cst_5 = arith.constant 0.000000e+00 : f32
    %6 = vector.broadcast %cst_5 : f32 to vector<2048x16xf32>
    %7 = arith.maximumf %5, %6 : vector<2048x16xf32>
    %8 = arith.truncf %7 : vector<2048x16xf32> to vector<2048x16xbf16>
    %c0_6 = arith.constant 0 : index
    %c0_7 = arith.constant 0 : index
    %9 = vector.load %arg4[%c0_6, %c0_7] : memref<2048x16xbf16, #tpu.memory_space<vmem>>, vector<2048x16xbf16>
    tpu.vector_store %arg4[%c0_6, %c0_7], %8 {strides = array<i32>} : memref<2048x16xbf16, #tpu.memory_space<vmem>>, vector<2048x16xbf16>,
    return
  }
  func.func @transform_0(%arg0: i32) -> (i32, i32) {
    %c0_i32 = arith.constant 0 : i32
    %c0_i32_0 = arith.constant 0 : i32
    return %arg0, %c0_i32 : i32, i32
  }
  func.func @transform_1(%arg0: i32) -> (i32, i32) {
    %c0_i32 = arith.constant 0 : i32
    %c0_i32_0 = arith.constant 0 : i32
    %c0_i32_1 = arith.constant 0 : i32
    return %c0_i32, %c0_i32_0 : i32, i32
  }
  func.func @transform_2(%arg0: i32) -> (i32, i32) {
    %c0_i32 = arith.constant 0 : i32
    %c0_i32_0 = arith.constant 0 : i32
    %c0_i32_1 = arith.constant 0 : i32
    return %c0_i32, %c0_i32_0 : i32, i32
  }
  func.func @transform_3(%arg0: i32) -> (i32, i32) {
    %c0_i32 = arith.constant 0 : i32
    %c0_i32_0 = arith.constant 0 : i32
    return %arg0, %c0_i32 : i32, i32
  }
}

module attributes {stable_mosaic.version = 11 : i64} {
  func.func @_matmul_bias_act_kernel(%arg0: i32, %arg1: memref<1024x144xbf16, #tpu.memory_space<vmem>>, %arg2: memref<144x16xbf16, #tpu.memory_space<vmem>>, %arg3: memref<1x16xf32, #tpu.memory_space<vmem>>, %arg4: memref<1024x16xbf16, #tpu.memory_space<vmem>>) attributes {dimension_semantics = [#tpu.dimension_semantics<parallel>], iteration_bounds = array<i64: 1>, scalar_prefetch = 0 : i64, scratch_operands = 0 : i64, tpu.core_type = #tpu.core_type<tc>, window_params = [{transform_indices = @transform_0, window_bounds = array<i64: 1024, 144>}, {pipeline_mode = #tpu.pipeline_mode<synchronous>, transform_indices = @transform_1, window_bounds = array<i64: 144, 16>}, {pipeline_mode = #tpu.pipeline_mode<synchronous>, transform_indices = @transform_2, window_bounds = array<i64: 1, 16>}, {transform_indices = @transform_3, window_bounds = array<i64: 1024, 16>}]} {
    %c0 = arith.constant 0 : index
    %c0_0 = arith.constant 0 : index
    %0 = vector.load %arg1[%c0, %c0_0] : memref<1024x144xbf16, #tpu.memory_space<vmem>>, vector<1024x144xbf16>
    %c0_1 = arith.constant 0 : index
    %c0_2 = arith.constant 0 : index
    %1 = vector.load %arg2[%c0_1, %c0_2] : memref<144x16xbf16, #tpu.memory_space<vmem>>, vector<144x16xbf16>
    %cst = arith.constant dense<0.000000e+00> : vector<1024x16xf32>
    %2 = tpu.matmul %0, %1, %cst {dimension_numbers = #tpu.dot_dimension_numbers<[1], [0], [0], [1], [0, 0, 1, 1], [], []>} : vector<1024x144xbf16>, vector<144x16xbf16>, vector<1024x16xf32> -> vector<1024x16xf32>
    %c0_3 = arith.constant 0 : index
    %c0_4 = arith.constant 0 : index
    %3 = vector.load %arg3[%c0_3, %c0_4] : memref<1x16xf32, #tpu.memory_space<vmem>>, vector<1x16xf32>
    %4 = vector.broadcast %3 : vector<1x16xf32> to vector<1024x16xf32>
    %5 = arith.addf %2, %4 : vector<1024x16xf32>
    %cst_5 = arith.constant 0.000000e+00 : f32
    %6 = vector.broadcast %cst_5 : f32 to vector<1024x16xf32>
    %7 = arith.maximumf %5, %6 : vector<1024x16xf32>
    %8 = arith.truncf %7 : vector<1024x16xf32> to vector<1024x16xbf16>
    %c0_6 = arith.constant 0 : index
    %c0_7 = arith.constant 0 : index
    %9 = vector.load %arg4[%c0_6, %c0_7] : memref<1024x16xbf16, #tpu.memory_space<vmem>>, vector<1024x16xbf16>
    tpu.vector_store %arg4[%c0_6, %c0_7], %8 {strides = array<i32>} : memref<1024x16xbf16, #tpu.memory_space<vmem>>, vector<1024x16xbf16>,
    return
  }
  func.func @transform_0(%arg0: i32) -> (i32, i32) {
    %c0_i32 = arith.constant 0 : i32
    %c0_i32_0 = arith.constant 0 : i32
    return %arg0, %c0_i32 : i32, i32
  }
  func.func @transform_1(%arg0: i32) -> (i32, i32) {
    %c0_i32 = arith.constant 0 : i32
    %c0_i32_0 = arith.constant 0 : i32
    %c0_i32_1 = arith.constant 0 : i32
    return %c0_i32, %c0_i32_0 : i32, i32
  }
  func.func @transform_2(%arg0: i32) -> (i32, i32) {
    %c0_i32 = arith.constant 0 : i32
    %c0_i32_0 = arith.constant 0 : i32
    %c0_i32_1 = arith.constant 0 : i32
    return %c0_i32, %c0_i32_0 : i32, i32
  }
  func.func @transform_3(%arg0: i32) -> (i32, i32) {
    %c0_i32 = arith.constant 0 : i32
    %c0_i32_0 = arith.constant 0 : i32
    return %arg0, %c0_i32 : i32, i32
  }
}

module attributes {stable_mosaic.version = 11 : i64} {
  func.func @_matmul_bias_act_kernel(%arg0: i32, %arg1: memref<256x144xbf16, #tpu.memory_space<vmem>>, %arg2: memref<144x16xbf16, #tpu.memory_space<vmem>>, %arg3: memref<1x16xf32, #tpu.memory_space<vmem>>, %arg4: memref<256x16xbf16, #tpu.memory_space<vmem>>) attributes {dimension_semantics = [#tpu.dimension_semantics<parallel>], iteration_bounds = array<i64: 1>, scalar_prefetch = 0 : i64, scratch_operands = 0 : i64, tpu.core_type = #tpu.core_type<tc>, window_params = [{transform_indices = @transform_0, window_bounds = array<i64: 256, 144>}, {pipeline_mode = #tpu.pipeline_mode<synchronous>, transform_indices = @transform_1, window_bounds = array<i64: 144, 16>}, {pipeline_mode = #tpu.pipeline_mode<synchronous>, transform_indices = @transform_2, window_bounds = array<i64: 1, 16>}, {transform_indices = @transform_3, window_bounds = array<i64: 256, 16>}]} {
    %c0 = arith.constant 0 : index
    %c0_0 = arith.constant 0 : index
    %0 = vector.load %arg1[%c0, %c0_0] : memref<256x144xbf16, #tpu.memory_space<vmem>>, vector<256x144xbf16>
    %c0_1 = arith.constant 0 : index
    %c0_2 = arith.constant 0 : index
    %1 = vector.load %arg2[%c0_1, %c0_2] : memref<144x16xbf16, #tpu.memory_space<vmem>>, vector<144x16xbf16>
    %cst = arith.constant dense<0.000000e+00> : vector<256x16xf32>
    %2 = tpu.matmul %0, %1, %cst {dimension_numbers = #tpu.dot_dimension_numbers<[1], [0], [0], [1], [0, 0, 1, 1], [], []>} : vector<256x144xbf16>, vector<144x16xbf16>, vector<256x16xf32> -> vector<256x16xf32>
    %c0_3 = arith.constant 0 : index
    %c0_4 = arith.constant 0 : index
    %3 = vector.load %arg3[%c0_3, %c0_4] : memref<1x16xf32, #tpu.memory_space<vmem>>, vector<1x16xf32>
    %4 = vector.broadcast %3 : vector<1x16xf32> to vector<256x16xf32>
    %5 = arith.addf %2, %4 : vector<256x16xf32>
    %cst_5 = arith.constant 0.000000e+00 : f32
    %6 = vector.broadcast %cst_5 : f32 to vector<256x16xf32>
    %7 = arith.maximumf %5, %6 : vector<256x16xf32>
    %8 = arith.truncf %7 : vector<256x16xf32> to vector<256x16xbf16>
    %c0_6 = arith.constant 0 : index
    %c0_7 = arith.constant 0 : index
    %9 = vector.load %arg4[%c0_6, %c0_7] : memref<256x16xbf16, #tpu.memory_space<vmem>>, vector<256x16xbf16>
    tpu.vector_store %arg4[%c0_6, %c0_7], %8 {strides = array<i32>} : memref<256x16xbf16, #tpu.memory_space<vmem>>, vector<256x16xbf16>,
    return
  }
  func.func @transform_0(%arg0: i32) -> (i32, i32) {
    %c0_i32 = arith.constant 0 : i32
    %c0_i32_0 = arith.constant 0 : i32
    return %arg0, %c0_i32 : i32, i32
  }
  func.func @transform_1(%arg0: i32) -> (i32, i32) {
    %c0_i32 = arith.constant 0 : i32
    %c0_i32_0 = arith.constant 0 : i32
    %c0_i32_1 = arith.constant 0 : i32
    return %c0_i32, %c0_i32_0 : i32, i32
  }
  func.func @transform_2(%arg0: i32) -> (i32, i32) {
    %c0_i32 = arith.constant 0 : i32
    %c0_i32_0 = arith.constant 0 : i32
    %c0_i32_1 = arith.constant 0 : i32
    return %c0_i32, %c0_i32_0 : i32, i32
  }
  func.func @transform_3(%arg0: i32) -> (i32, i32) {
    %c0_i32 = arith.constant 0 : i32
    %c0_i32_0 = arith.constant 0 : i32
    return %arg0, %c0_i32 : i32, i32
  }
}

module attributes {stable_mosaic.version = 11 : i64} {
  func.func @_fused_tail_kernel(%arg0: i32, %arg1: memref<4x1024xf32, #tpu.memory_space<vmem>>, %arg2: memref<1024x64xf32, #tpu.memory_space<vmem>>, %arg3: memref<1x64xf32, #tpu.memory_space<vmem>>, %arg4: memref<64x32xf32, #tpu.memory_space<vmem>>, %arg5: memref<1x32xf32, #tpu.memory_space<vmem>>, %arg6: memref<32x64xf32, #tpu.memory_space<vmem>>, %arg7: memref<1x64xf32, #tpu.memory_space<vmem>>, %arg8: memref<64x64xf32, #tpu.memory_space<vmem>>, %arg9: memref<1x64xf32, #tpu.memory_space<vmem>>, %arg10: memref<64x16xf32, #tpu.memory_space<vmem>>, %arg11: memref<1x16xf32, #tpu.memory_space<vmem>>, %arg12: memref<32x64xf32, #tpu.memory_space<vmem>>, %arg13: memref<16x64xf32, #tpu.memory_space<vmem>>, %arg14: memref<1x64xf32, #tpu.memory_space<vmem>>, %arg15: memref<64x64xf32, #tpu.memory_space<vmem>>, %arg16: memref<1x64xf32, #tpu.memory_space<vmem>>, %arg17: memref<64x64xf32, #tpu.memory_space<vmem>>, %arg18: memref<1x64xf32, #tpu.memory_space<vmem>>, %arg19: memref<64x8xf32, #tpu.memory_space<vmem>>, %arg20: memref<1x8xf32, #tpu.memory_space<vmem>>, %arg21: memref<64x8xf32, #tpu.memory_space<vmem>>, %arg22: memref<1x8xf32, #tpu.memory_space<vmem>>, %arg23: memref<2x8xf32, #tpu.memory_space<vmem>>, %arg24: memref<2x8xf32, #tpu.memory_space<vmem>>) attributes {dimension_semantics = [#tpu.dimension_semantics<arbitrary>], iteration_bounds = array<i64: 1>, scalar_prefetch = 0 : i64, scratch_operands = 0 : i64, tpu.core_type = #tpu.core_type<tc>, window_params = [{pipeline_mode = #tpu.pipeline_mode<synchronous>, transform_indices = @transform_0, window_bounds = array<i64: 4, 1024>}, {pipeline_mode = #tpu.pipeline_mode<synchronous>, transform_indices = @transform_1, window_bounds = array<i64: 1024, 64>}, {pipeline_mode = #tpu.pipeline_mode<synchronous>, transform_indices = @transform_2, window_bounds = array<i64: 1, 64>}, {pipeline_mode = #tpu.pipeline_mode<synchronous>, transform_indices = @transform_3, window_bounds = array<i64: 64, 32>}, {pipeline_mode = #tpu.pipeline_mode<synchronous>, transform_indices = @transform_4, window_bounds = array<i64: 1, 32>}, {pipeline_mode = #tpu.pipeline_mode<synchronous>, transform_indices = @transform_5, window_bounds = array<i64: 32, 64>}, {pipeline_mode = #tpu.pipeline_mode<synchronous>, transform_indices = @transform_6, window_bounds = array<i64: 1, 64>}, {pipeline_mode = #tpu.pipeline_mode<synchronous>, transform_indices = @transform_7, window_bounds = array<i64: 64, 64>}, {pipeline_mode = #tpu.pipeline_mode<synchronous>, transform_indices = @transform_8, window_bounds = array<i64: 1, 64>}, {pipeline_mode = #tpu.pipeline_mode<synchronous>, transform_indices = @transform_9, window_bounds = array<i64: 64, 16>}, {pipeline_mode = #tpu.pipeline_mode<synchronous>, transform_indices = @transform_10, window_bounds = array<i64: 1, 16>}, {pipeline_mode = #tpu.pipeline_mode<synchronous>, transform_indices = @transform_11, window_bounds = array<i64: 32, 64>}, {pipeline_mode = #tpu.pipeline_mode<synchronous>, transform_indices = @transform_12, window_bounds = array<i64: 16, 64>}, {pipeline_mode = #tpu.pipeline_mode<synchronous>, transform_indices = @transform_13, window_bounds = array<i64: 1, 64>}, {pipeline_mode = #tpu.pipeline_mode<synchronous>, transform_indices = @transform_14, window_bounds = array<i64: 64, 64>}, {pipeline_mode = #tpu.pipeline_mode<synchronous>, transform_indices = @transform_15, window_bounds = array<i64: 1, 64>}, {pipeline_mode = #tpu.pipeline_mode<synchronous>, transform_indices = @transform_16, window_bounds = array<i64: 64, 64>}, {pipeline_mode = #tpu.pipeline_mode<synchronous>, transform_indices = @transform_17, window_bounds = array<i64: 1, 64>}, {pipeline_mode = #tpu.pipeline_mode<synchronous>, transform_indices = @transform_18, window_bounds = array<i64: 64, 8>}, {pipeline_mode = #tpu.pipeline_mode<synchronous>, transform_indices = @transform_19, window_bounds = array<i64: 1, 8>}, {pipeline_mode = #tpu.pipeline_mode<synchronous>, transform_indices = @transform_20, window_bounds = array<i64: 64, 8>}, {pipeline_mode = #tpu.pipeline_mode<synchronous>, transform_indices = @transform_21, window_bounds = array<i64: 1, 8>}, {pipeline_mode = #tpu.pipeline_mode<synchronous>, transform_indices = @transform_22, window_bounds = array<i64: 2, 8>}, {pipeline_mode = #tpu.pipeline_mode<synchronous>, transform_indices = @transform_23, window_bounds = array<i64: 2, 8>}]} {
    %c0 = arith.constant 0 : index
    %c0_0 = arith.constant 0 : index
    %0 = vector.load %arg1[%c0, %c0_0] : memref<4x1024xf32, #tpu.memory_space<vmem>>, vector<4x1024xf32>
    %c0_1 = arith.constant 0 : index
    %c0_2 = arith.constant 0 : index
    %1 = vector.load %arg2[%c0_1, %c0_2] : memref<1024x64xf32, #tpu.memory_space<vmem>>, vector<1024x64xf32>
    %cst = arith.constant dense<0.000000e+00> : vector<4x64xf32>
    %2 = tpu.matmul %0, %1, %cst {dimension_numbers = #tpu.dot_dimension_numbers<[1], [0], [0], [1], [0, 0, 1, 1], [], []>} : vector<4x1024xf32>, vector<1024x64xf32>, vector<4x64xf32> -> vector<4x64xf32>
    %c0_3 = arith.constant 0 : index
    %c0_4 = arith.constant 0 : index
    %3 = vector.load %arg3[%c0_3, %c0_4] : memref<1x64xf32, #tpu.memory_space<vmem>>, vector<1x64xf32>
    %4 = vector.broadcast %3 : vector<1x64xf32> to vector<4x64xf32>
    %5 = arith.addf %2, %4 : vector<4x64xf32>
    %cst_5 = arith.constant 0.000000e+00 : f32
    %6 = vector.broadcast %cst_5 : f32 to vector<4x64xf32>
    %7 = arith.maximumf %5, %6 : vector<4x64xf32>
    %c0_6 = arith.constant 0 : index
    %c0_7 = arith.constant 0 : index
    %8 = vector.load %arg4[%c0_6, %c0_7] : memref<64x32xf32, #tpu.memory_space<vmem>>, vector<64x32xf32>
    %cst_8 = arith.constant dense<0.000000e+00> : vector<4x32xf32>
    %9 = tpu.matmul %7, %8, %cst_8 {dimension_numbers = #tpu.dot_dimension_numbers<[1], [0], [0], [1], [0, 0, 1, 1], [], []>} : vector<4x64xf32>, vector<64x32xf32>, vector<4x32xf32> -> vector<4x32xf32>
    %c0_9 = arith.constant 0 : index
    %c0_10 = arith.constant 0 : index
    %10 = vector.load %arg5[%c0_9, %c0_10] : memref<1x32xf32, #tpu.memory_space<vmem>>, vector<1x32xf32>
    %11 = vector.broadcast %10 : vector<1x32xf32> to vector<4x32xf32>
    %12 = arith.addf %9, %11 : vector<4x32xf32>
    %13 = vector.extract_strided_slice %12 {offsets = [0, 0], sizes = [2, 32], strides = [1, 1]} : vector<4x32xf32> to vector<2x32xf32>
    %14 = vector.extract_strided_slice %12 {offsets = [2, 0], sizes = [2, 32], strides = [1, 1]} : vector<4x32xf32> to vector<2x32xf32>
    %c0_11 = arith.constant 0 : index
    %c0_12 = arith.constant 0 : index
    %15 = vector.load %arg6[%c0_11, %c0_12] : memref<32x64xf32, #tpu.memory_space<vmem>>, vector<32x64xf32>
    %cst_13 = arith.constant dense<0.000000e+00> : vector<2x64xf32>
    %16 = tpu.matmul %14, %15, %cst_13 {dimension_numbers = #tpu.dot_dimension_numbers<[1], [0], [0], [1], [0, 0, 1, 1], [], []>} : vector<2x32xf32>, vector<32x64xf32>, vector<2x64xf32> -> vector<2x64xf32>
    %c0_14 = arith.constant 0 : index
    %c0_15 = arith.constant 0 : index
    %17 = vector.load %arg7[%c0_14, %c0_15] : memref<1x64xf32, #tpu.memory_space<vmem>>, vector<1x64xf32>
    %18 = vector.broadcast %17 : vector<1x64xf32> to vector<2x64xf32>
    %19 = arith.addf %16, %18 : vector<2x64xf32>
    %cst_16 = arith.constant 0.000000e+00 : f32
    %20 = vector.broadcast %cst_16 : f32 to vector<2x64xf32>
    %21 = arith.maximumf %19, %20 : vector<2x64xf32>
    %c0_17 = arith.constant 0 : index
    %c0_18 = arith.constant 0 : index
    %22 = vector.load %arg8[%c0_17, %c0_18] : memref<64x64xf32, #tpu.memory_space<vmem>>, vector<64x64xf32>
    %cst_19 = arith.constant dense<0.000000e+00> : vector<2x64xf32>
    %23 = tpu.matmul %21, %22, %cst_19 {dimension_numbers = #tpu.dot_dimension_numbers<[1], [0], [0], [1], [0, 0, 1, 1], [], []>} : vector<2x64xf32>, vector<64x64xf32>, vector<2x64xf32> -> vector<2x64xf32>
    %c0_20 = arith.constant 0 : index
    %c0_21 = arith.constant 0 : index
    %24 = vector.load %arg9[%c0_20, %c0_21] : memref<1x64xf32, #tpu.memory_space<vmem>>, vector<1x64xf32>
    %25 = vector.broadcast %24 : vector<1x64xf32> to vector<2x64xf32>
    %26 = arith.addf %23, %25 : vector<2x64xf32>
    %cst_22 = arith.constant 0.000000e+00 : f32
    %27 = vector.broadcast %cst_22 : f32 to vector<2x64xf32>
    %28 = arith.maximumf %26, %27 : vector<2x64xf32>
    %c0_23 = arith.constant 0 : index
    %c0_24 = arith.constant 0 : index
    %29 = vector.load %arg10[%c0_23, %c0_24] : memref<64x16xf32, #tpu.memory_space<vmem>>, vector<64x16xf32>
    %cst_25 = arith.constant dense<0.000000e+00> : vector<2x16xf32>
    %30 = tpu.matmul %28, %29, %cst_25 {dimension_numbers = #tpu.dot_dimension_numbers<[1], [0], [0], [1], [0, 0, 1, 1], [], []>} : vector<2x64xf32>, vector<64x16xf32>, vector<2x16xf32> -> vector<2x16xf32>
    %c0_26 = arith.constant 0 : index
    %c0_27 = arith.constant 0 : index
    %31 = vector.load %arg11[%c0_26, %c0_27] : memref<1x16xf32, #tpu.memory_space<vmem>>, vector<1x16xf32>
    %32 = vector.broadcast %31 : vector<1x16xf32> to vector<2x16xf32>
    %33 = arith.addf %30, %32 : vector<2x16xf32>
    %c0_28 = arith.constant 0 : index
    %c0_29 = arith.constant 0 : index
    %34 = vector.load %arg12[%c0_28, %c0_29] : memref<32x64xf32, #tpu.memory_space<vmem>>, vector<32x64xf32>
    %cst_30 = arith.constant dense<0.000000e+00> : vector<2x64xf32>
    %35 = tpu.matmul %13, %34, %cst_30 {dimension_numbers = #tpu.dot_dimension_numbers<[1], [0], [0], [1], [0, 0, 1, 1], [], []>} : vector<2x32xf32>, vector<32x64xf32>, vector<2x64xf32> -> vector<2x64xf32>
    %c0_31 = arith.constant 0 : index
    %c0_32 = arith.constant 0 : index
    %36 = vector.load %arg13[%c0_31, %c0_32] : memref<16x64xf32, #tpu.memory_space<vmem>>, vector<16x64xf32>
    %cst_33 = arith.constant dense<0.000000e+00> : vector<2x64xf32>
    %37 = tpu.matmul %33, %36, %cst_33 {dimension_numbers = #tpu.dot_dimension_numbers<[1], [0], [0], [1], [0, 0, 1, 1], [], []>} : vector<2x16xf32>, vector<16x64xf32>, vector<2x64xf32> -> vector<2x64xf32>
    %38 = arith.addf %35, %37 : vector<2x64xf32>
    %c0_34 = arith.constant 0 : index
    %c0_35 = arith.constant 0 : index
    %39 = vector.load %arg14[%c0_34, %c0_35] : memref<1x64xf32, #tpu.memory_space<vmem>>, vector<1x64xf32>
    %40 = vector.broadcast %39 : vector<1x64xf32> to vector<2x64xf32>
    %41 = arith.addf %38, %40 : vector<2x64xf32>
    %cst_36 = arith.constant 0.000000e+00 : f32
    %42 = vector.broadcast %cst_36 : f32 to vector<2x64xf32>
    %43 = arith.maximumf %41, %42 : vector<2x64xf32>
    %c0_37 = arith.constant 0 : index
    %c0_38 = arith.constant 0 : index
    %44 = vector.load %arg15[%c0_37, %c0_38] : memref<64x64xf32, #tpu.memory_space<vmem>>, vector<64x64xf32>
    %cst_39 = arith.constant dense<0.000000e+00> : vector<2x64xf32>
    %45 = tpu.matmul %43, %44, %cst_39 {dimension_numbers = #tpu.dot_dimension_numbers<[1], [0], [0], [1], [0, 0, 1, 1], [], []>} : vector<2x64xf32>, vector<64x64xf32>, vector<2x64xf32> -> vector<2x64xf32>
    %c0_40 = arith.constant 0 : index
    %c0_41 = arith.constant 0 : index
    %46 = vector.load %arg16[%c0_40, %c0_41] : memref<1x64xf32, #tpu.memory_space<vmem>>, vector<1x64xf32>
    %47 = vector.broadcast %46 : vector<1x64xf32> to vector<2x64xf32>
    %48 = arith.addf %45, %47 : vector<2x64xf32>
    %cst_42 = arith.constant 0.000000e+00 : f32
    %49 = vector.broadcast %cst_42 : f32 to vector<2x64xf32>
    %50 = arith.maximumf %48, %49 : vector<2x64xf32>
    %c0_43 = arith.constant 0 : index
    %c0_44 = arith.constant 0 : index
    %51 = vector.load %arg17[%c0_43, %c0_44] : memref<64x64xf32, #tpu.memory_space<vmem>>, vector<64x64xf32>
    %cst_45 = arith.constant dense<0.000000e+00> : vector<2x64xf32>
    %52 = tpu.matmul %50, %51, %cst_45 {dimension_numbers = #tpu.dot_dimension_numbers<[1], [0], [0], [1], [0, 0, 1, 1], [], []>} : vector<2x64xf32>, vector<64x64xf32>, vector<2x64xf32> -> vector<2x64xf32>
    %c0_46 = arith.constant 0 : index
    %c0_47 = arith.constant 0 : index
    %53 = vector.load %arg18[%c0_46, %c0_47] : memref<1x64xf32, #tpu.memory_space<vmem>>, vector<1x64xf32>
    %54 = vector.broadcast %53 : vector<1x64xf32> to vector<2x64xf32>
    %55 = arith.addf %52, %54 : vector<2x64xf32>
    %cst_48 = arith.constant 0.000000e+00 : f32
    %56 = vector.broadcast %cst_48 : f32 to vector<2x64xf32>
    %57 = arith.maximumf %55, %56 : vector<2x64xf32>
    %c0_49 = arith.constant 0 : index
    %c0_50 = arith.constant 0 : index
    %58 = vector.load %arg19[%c0_49, %c0_50] : memref<64x8xf32, #tpu.memory_space<vmem>>, vector<64x8xf32>
    %cst_51 = arith.constant dense<0.000000e+00> : vector<2x8xf32>
    %59 = tpu.matmul %57, %58, %cst_51 {dimension_numbers = #tpu.dot_dimension_numbers<[1], [0], [0], [1], [0, 0, 1, 1], [], []>} : vector<2x64xf32>, vector<64x8xf32>, vector<2x8xf32> -> vector<2x8xf32>
    %c0_52 = arith.constant 0 : index
    %c0_53 = arith.constant 0 : index
    %60 = vector.load %arg20[%c0_52, %c0_53] : memref<1x8xf32, #tpu.memory_space<vmem>>, vector<1x8xf32>
    %61 = vector.broadcast %60 : vector<1x8xf32> to vector<2x8xf32>
    %62 = arith.addf %59, %61 : vector<2x8xf32>
    %c0_54 = arith.constant 0 : index
    %c0_55 = arith.constant 0 : index
    %63 = vector.load %arg21[%c0_54, %c0_55] : memref<64x8xf32, #tpu.memory_space<vmem>>, vector<64x8xf32>
    %cst_56 = arith.constant dense<0.000000e+00> : vector<2x8xf32>
    %64 = tpu.matmul %57, %63, %cst_56 {dimension_numbers = #tpu.dot_dimension_numbers<[1], [0], [0], [1], [0, 0, 1, 1], [], []>} : vector<2x64xf32>, vector<64x8xf32>, vector<2x8xf32> -> vector<2x8xf32>
    %c0_57 = arith.constant 0 : index
    %c0_58 = arith.constant 0 : index
    %65 = vector.load %arg22[%c0_57, %c0_58] : memref<1x8xf32, #tpu.memory_space<vmem>>, vector<1x8xf32>
    %66 = vector.broadcast %65 : vector<1x8xf32> to vector<2x8xf32>
    %67 = arith.addf %64, %66 : vector<2x8xf32>
    %cst_59 = arith.constant -2.000000e+01 : f32
    %cst_60 = arith.constant 2.000000e+00 : f32
    %68 = vector.broadcast %cst_59 : f32 to vector<2x8xf32>
    %69 = arith.maximumf %68, %67 : vector<2x8xf32>
    %70 = vector.broadcast %cst_60 : f32 to vector<2x8xf32>
    %71 = arith.minimumf %70, %69 : vector<2x8xf32>
    %c0_61 = arith.constant 0 : index
    %c0_62 = arith.constant 0 : index
    %72 = vector.load %arg23[%c0_61, %c0_62] : memref<2x8xf32, #tpu.memory_space<vmem>>, vector<2x8xf32>
    tpu.vector_store %arg23[%c0_61, %c0_62], %62 {strides = array<i32>} : memref<2x8xf32, #tpu.memory_space<vmem>>, vector<2x8xf32>,
    %73 = math.exp %71 : vector<2x8xf32>
    %c0_63 = arith.constant 0 : index
    %c0_64 = arith.constant 0 : index
    %74 = vector.load %arg24[%c0_63, %c0_64] : memref<2x8xf32, #tpu.memory_space<vmem>>, vector<2x8xf32>
    tpu.vector_store %arg24[%c0_63, %c0_64], %73 {strides = array<i32>} : memref<2x8xf32, #tpu.memory_space<vmem>>, vector<2x8xf32>,
    return
  }
  func.func @transform_0(%arg0: i32) -> (i32, i32) {
    %c0_i32 = arith.constant 0 : i32
    %c0_i32_0 = arith.constant 0 : i32
    %c0_i32_1 = arith.constant 0 : i32
    return %c0_i32, %c0_i32_0 : i32, i32
  }
  func.func @transform_1(%arg0: i32) -> (i32, i32) {
    %c0_i32 = arith.constant 0 : i32
    %c0_i32_0 = arith.constant 0 : i32
    %c0_i32_1 = arith.constant 0 : i32
    return %c0_i32, %c0_i32_0 : i32, i32
  }
  func.func @transform_2(%arg0: i32) -> (i32, i32) {
    %c0_i32 = arith.constant 0 : i32
    %c0_i32_0 = arith.constant 0 : i32
    %c0_i32_1 = arith.constant 0 : i32
    return %c0_i32, %c0_i32_0 : i32, i32
  }
  func.func @transform_3(%arg0: i32) -> (i32, i32) {
    %c0_i32 = arith.constant 0 : i32
    %c0_i32_0 = arith.constant 0 : i32
    %c0_i32_1 = arith.constant 0 : i32
    return %c0_i32, %c0_i32_0 : i32, i32
  }
  func.func @transform_4(%arg0: i32) -> (i32, i32) {
    %c0_i32 = arith.constant 0 : i32
    %c0_i32_0 = arith.constant 0 : i32
    %c0_i32_1 = arith.constant 0 : i32
    return %c0_i32, %c0_i32_0 : i32, i32
  }
  func.func @transform_5(%arg0: i32) -> (i32, i32) {
    %c0_i32 = arith.constant 0 : i32
    %c0_i32_0 = arith.constant 0 : i32
    %c0_i32_1 = arith.constant 0 : i32
    return %c0_i32, %c0_i32_0 : i32, i32
  }
  func.func @transform_6(%arg0: i32) -> (i32, i32) {
    %c0_i32 = arith.constant 0 : i32
    %c0_i32_0 = arith.constant 0 : i32
    %c0_i32_1 = arith.constant 0 : i32
    return %c0_i32, %c0_i32_0 : i32, i32
  }
  func.func @transform_7(%arg0: i32) -> (i32, i32) {
    %c0_i32 = arith.constant 0 : i32
    %c0_i32_0 = arith.constant 0 : i32
    %c0_i32_1 = arith.constant 0 : i32
    return %c0_i32, %c0_i32_0 : i32, i32
  }
  func.func @transform_8(%arg0: i32) -> (i32, i32) {
    %c0_i32 = arith.constant 0 : i32
    %c0_i32_0 = arith.constant 0 : i32
    %c0_i32_1 = arith.constant 0 : i32
    return %c0_i32, %c0_i32_0 : i32, i32
  }
  func.func @transform_9(%arg0: i32) -> (i32, i32) {
    %c0_i32 = arith.constant 0 : i32
    %c0_i32_0 = arith.constant 0 : i32
    %c0_i32_1 = arith.constant 0 : i32
    return %c0_i32, %c0_i32_0 : i32, i32
  }
  func.func @transform_10(%arg0: i32) -> (i32, i32) {
    %c0_i32 = arith.constant 0 : i32
    %c0_i32_0 = arith.constant 0 : i32
    %c0_i32_1 = arith.constant 0 : i32
    return %c0_i32, %c0_i32_0 : i32, i32
  }
  func.func @transform_11(%arg0: i32) -> (i32, i32) {
    %c0_i32 = arith.constant 0 : i32
    %c0_i32_0 = arith.constant 0 : i32
    %c0_i32_1 = arith.constant 0 : i32
    return %c0_i32, %c0_i32_0 : i32, i32
  }
  func.func @transform_12(%arg0: i32) -> (i32, i32) {
    %c0_i32 = arith.constant 0 : i32
    %c0_i32_0 = arith.constant 0 : i32
    %c0_i32_1 = arith.constant 0 : i32
    return %c0_i32, %c0_i32_0 : i32, i32
  }
  func.func @transform_13(%arg0: i32) -> (i32, i32) {
    %c0_i32 = arith.constant 0 : i32
    %c0_i32_0 = arith.constant 0 : i32
    %c0_i32_1 = arith.constant 0 : i32
    return %c0_i32, %c0_i32_0 : i32, i32
  }
  func.func @transform_14(%arg0: i32) -> (i32, i32) {
    %c0_i32 = arith.constant 0 : i32
    %c0_i32_0 = arith.constant 0 : i32
    %c0_i32_1 = arith.constant 0 : i32
    return %c0_i32, %c0_i32_0 : i32, i32
  }
  func.func @transform_15(%arg0: i32) -> (i32, i32) {
    %c0_i32 = arith.constant 0 : i32
    %c0_i32_0 = arith.constant 0 : i32
    %c0_i32_1 = arith.constant 0 : i32
    return %c0_i32, %c0_i32_0 : i32, i32
  }
  func.func @transform_16(%arg0: i32) -> (i32, i32) {
    %c0_i32 = arith.constant 0 : i32
    %c0_i32_0 = arith.constant 0 : i32
    %c0_i32_1 = arith.constant 0 : i32
    return %c0_i32, %c0_i32_0 : i32, i32
  }
  func.func @transform_17(%arg0: i32) -> (i32, i32) {
    %c0_i32 = arith.constant 0 : i32
    %c0_i32_0 = arith.constant 0 : i32
    %c0_i32_1 = arith.constant 0 : i32
    return %c0_i32, %c0_i32_0 : i32, i32
  }
  func.func @transform_18(%arg0: i32) -> (i32, i32) {
    %c0_i32 = arith.constant 0 : i32
    %c0_i32_0 = arith.constant 0 : i32
    %c0_i32_1 = arith.constant 0 : i32
    return %c0_i32, %c0_i32_0 : i32, i32
  }
  func.func @transform_19(%arg0: i32) -> (i32, i32) {
    %c0_i32 = arith.constant 0 : i32
    %c0_i32_0 = arith.constant 0 : i32
    %c0_i32_1 = arith.constant 0 : i32
    return %c0_i32, %c0_i32_0 : i32, i32
  }
  func.func @transform_20(%arg0: i32) -> (i32, i32) {
    %c0_i32 = arith.constant 0 : i32
    %c0_i32_0 = arith.constant 0 : i32
    %c0_i32_1 = arith.constant 0 : i32
    return %c0_i32, %c0_i32_0 : i32, i32
  }
  func.func @transform_21(%arg0: i32) -> (i32, i32) {
    %c0_i32 = arith.constant 0 : i32
    %c0_i32_0 = arith.constant 0 : i32
    %c0_i32_1 = arith.constant 0 : i32
    return %c0_i32, %c0_i32_0 : i32, i32
  }
  func.func @transform_22(%arg0: i32) -> (i32, i32) {
    %c0_i32 = arith.constant 0 : i32
    %c0_i32_0 = arith.constant 0 : i32
    %c0_i32_1 = arith.constant 0 : i32
    return %c0_i32, %c0_i32_0 : i32, i32
  }
  func.func @transform_23(%arg0: i32) -> (i32, i32) {
    %c0_i32 = arith.constant 0 : i32
    %c0_i32_0 = arith.constant 0 : i32
    %c0_i32_1 = arith.constant 0 : i32
    return %c0_i32, %c0_i32_0 : i32, i32
  }
}

</mosaic_0001>

<llo_original>
// kernel: skill_proposal_forward.5
$region0: #{skill_proposal_forward.5}
  #allocation0 [shape = 'u32[]', space=smem, size = 0x4, offset = 0x4, fixed_abs, tag = 'smem constant byte address 0x4 - core index']
  #allocation1 [shape = 'u32[72,128]{1,0:T(1,128)}', space=vmem, size = 0x9000, scoped, tag = 'internal scratch']
  %s0 = inlined_call_operand.vmem [shape: bf16[16384,32], index: 0, kind: input, shape index: {}]
  %s1 = inlined_call_operand.vmem [shape: bf16[32,16], index: 1, kind: input, shape index: {}]
  %s2 = inlined_call_operand.vmem [shape: f32[1,16], index: 2, kind: input, shape index: {}]
  %s3 = inlined_call_operand.vmem [shape: bf16[16384,16], index: 3, kind: output, shape index: {}]
  %s4 = sld [smem:[#allocation0]]
  $region45: #{skill_proposal_forward.5} parent=0
    _
  %s6 = ssub.s32 1, %s4
  %s7 = scalar_select 0, %s6, %s4
  loop: start=0, step=1, limit=10
  $region2: #{skill_proposal_forward.5} parent=0 // loop_pre_header
    _
  $region3: #{skill_proposal_forward.5} parent=0 // loop_header
    %s9 = sphi 0, %s13
    %p10 = scmp.ge.s32.totalorder %s9, 10
    %s19 = sphi 0, %s21
    %s22 = sphi 0, %s19
    %s23 = sphi 0, %s22
    %s39 = sphi 0, %s23
    %s43 = sphi 0, %s43
    %s45 = sphi 0, %s43
    %s46 = sphi 0, %s45
    %s60 = sphi 0, %s46
    %s64 = sphi 0, %s64
    %s66 = sphi 0, %s64
    %s67 = sphi 0, %s66
    %s81 = sphi 0, %s67
    %s87 = sphi 0, %s89
    %s90 = sphi 0, %s87
    %s91 = sphi 0, %s90
    %s107 = sphi 0, %s91
  $region4: #{skill_proposal_forward.5} parent=0 // loop_header_branch
    %12 = sbr.rel (%p10) target = $region8
  $region5: #{skill_proposal_forward.5} parent=0 // loop_body
    %s14 = ssub.s32 %s9, 1
    %s15 = ssub.s32 %s9, 2
    %s16 = sadd.s32 %s9, 1
    %s17 = ssub.s32 %s9, %s16
    %p18 = scmp.eq.s32.totalorder %s17, 0
    %s20 = sadd.s32 %s19, 1
    %s21 = scalar_select %p18, %s19, %s20
    %p24 = pneg %p18
    %p25 = scmp.eq.s32.totalorder %s9, 7
    %p26 = por %p24, %p25
    %p27 = scmp.ne.s32.totalorder %s19, %s22
    %p28 = scmp.eq.s32.totalorder %s9, 0
    %p29 = por %p27, %p28
    %p30 = scmp.ne.s32.totalorder %s19, %s22
    %p31 = scmp.eq.s32.totalorder %s14, 7
    %p32 = por %p30, %p31
    %p33 = scmp.ne.s32.totalorder %s22, %s23
    %p34 = scmp.eq.s32.totalorder %s14, 0
    %p35 = por %p33, %p34
    %p36 = scmp.ne.s32.totalorder %s22, %s23
    %p37 = scmp.eq.s32.totalorder %s15, 7
    %p38 = por %p36, %p37
    %p40 = scmp.ne.s32.totalorder %s23, %s39
    %p41 = scmp.eq.s32.totalorder %s15, 0
    %p42 = por %p40, %p41
    %s44 = sadd.s32 %s43, 1
    %p47 = scmp.eq.s32.totalorder %s9, 7
    %p48 = scmp.ne.s32.totalorder %s43, %s45
    %p49 = scmp.eq.s32.totalorder %s9, 0
    %p50 = por %p48, %p49
    %p51 = scmp.ne.s32.totalorder %s43, %s45
    %p52 = scmp.eq.s32.totalorder %s14, 7
    %p53 = por %p51, %p52
    %p54 = scmp.ne.s32.totalorder %s45, %s46
    %p55 = scmp.eq.s32.totalorder %s14, 0
    %p56 = por %p54, %p55
    %p57 = scmp.ne.s32.totalorder %s45, %s46
    %p58 = scmp.eq.s32.totalorder %s15, 7
    %p59 = por %p57, %p58
    %p61 = scmp.ne.s32.totalorder %s46, %s60
    %p62 = scmp.eq.s32.totalorder %s15, 0
    %p63 = por %p61, %p62
    %s65 = sadd.s32 %s64, 1
    %p68 = scmp.eq.s32.totalorder %s9, 7
    %p69 = scmp.ne.s32.totalorder %s64, %s66
    %p70 = scmp.eq.s32.totalorder %s9, 0
    %p71 = por %p69, %p70
    %p72 = scmp.ne.s32.totalorder %s64, %s66
    %p73 = scmp.eq.s32.totalorder %s14, 7
    %p74 = por %p72, %p73
    %p75 = scmp.ne.s32.totalorder %s66, %s67
    %p76 = scmp.eq.s32.totalorder %s14, 0
    %p77 = por %p75, %p76
    %p78 = scmp.ne.s32.totalorder %s66, %s67
    %p79 = scmp.eq.s32.totalorder %s15, 7
    %p80 = por %p78, %p79
    %p82 = scmp.ne.s32.totalorder %s67, %s81
    %p83 = scmp.eq.s32.totalorder %s15, 0
    %p84 = por %p82, %p83
    %s85 = ssub.s32 %s9, %s16
    %p86 = scmp.eq.s32.totalorder %s85, 0
    %s88 = sadd.s32 %s87, 1
    %s89 = scalar_select %p86, %s87, %s88
    %p92 = pneg %p86
    %p93 = scmp.eq.s32.totalorder %s9, 7
    %p94 = por %p92, %p93
    %p95 = scmp.ne.s32.totalorder %s87, %s90
    %p96 = scmp.eq.s32.totalorder %s9, 0
    %p97 = por %p95, %p96
    %p98 = scmp.ne.s32.totalorder %s87, %s90
    %p99 = scmp.eq.s32.totalorder %s14, 7
    %p100 = por %p98, %p99
    %p101 = scmp.ne.s32.totalorder %s90, %s91
    %p102 = scmp.eq.s32.totalorder %s14, 0
    %p103 = por %p101, %p102
    %p104 = scmp.ne.s32.totalorder %s90, %s91
    %p105 = scmp.eq.s32.totalorder %s15, 7
    %p106 = por %p104, %p105
    %p108 = scmp.ne.s32.totalorder %s91, %s107
    %p109 = scmp.eq.s32.totalorder %s15, 0
    %p110 = por %p108, %p109
    %p111 = scmp.le.s32.totalorder 1, %s9
    %p112 = scmp.lt.s32.totalorder %s9, 9
    %p113 = pnand %p111, %p112
    %p114 = pneg %p113
    // Predicated region
    $region9: #{skill_proposal_forward.5} parent=5 // pred_check
      _
    $region10: #{skill_proposal_forward.5} parent=5 // pred_check_branch
      %116 = sbr.rel (%p113) target = $region12
    $region11: #{skill_proposal_forward.5} parent=5 // pred_region
      %s117 = ssub.s32 %s9, 1
      // Predicated region
      $region13: #{skill_proposal_forward.5} parent=11 // pred_check
        %p118 = pneg %p56
      $region14: #{skill_proposal_forward.5} parent=11 // pred_check_branch
        %120 = sbr.rel (%p118) target = $region16
      $region15: #{skill_proposal_forward.5} parent=11 // pred_region
        _
      $region16: #{skill_proposal_forward.5} parent=11 // pred_fallthru
        _
      // Predicated region
      $region17: #{skill_proposal_forward.5} parent=11 // pred_check
        %p121 = pneg %p77
      $region18: #{skill_proposal_forward.5} parent=11 // pred_check_branch
        %123 = sbr.rel (%p121) target = $region20
      $region19: #{skill_proposal_forward.5} parent=11 // pred_region
        _
      $region20: #{skill_proposal_forward.5} parent=11 // pred_fallthru
        _
    $region12: #{skill_proposal_forward.5} parent=5 // pred_fallthru
      _
    %p124 = scmp.lt.s32.totalorder %s9, 8
    // Predicated region
    $region21: #{skill_proposal_forward.5} parent=5 // pred_check
      %p125 = pneg %p124
    $region22: #{skill_proposal_forward.5} parent=5 // pred_check_branch
      %127 = sbr.rel (%p125) target = $region24
    $region23: #{skill_proposal_forward.5} parent=5 // pred_region
      // Predicated region
      $region25: #{skill_proposal_forward.5} parent=23 // pred_check
        %p128 = pneg %p29
      $region26: #{skill_proposal_forward.5} parent=23 // pred_check_branch
        %130 = sbr.rel (%p128) target = $region28
      $region27: #{skill_proposal_forward.5} parent=23 // pred_region
        %s131 = smul.u32 256, %s9
        %p132 = scmp.lt.s32.totalorder %s131, 2047
        %s133 = scalar_select %p132, %s131, 2047
        %s134 = smul.addr %s133, 4
        %s135 = scalar_lea.vmem %s0, %s134
        %s136 = smul.u32 256, %s9
      $region28: #{skill_proposal_forward.5} parent=23 // pred_fallthru
        _
    $region24: #{skill_proposal_forward.5} parent=5 // pred_fallthru
      _
    %p137 = scmp.le.s32.totalorder 1, %s9
    %p138 = scmp.lt.s32.totalorder %s9, 9
    %p139 = pnand %p137, %p138
    %p140 = pneg %p139
    // Predicated region
    $region29: #{skill_proposal_forward.5} parent=5 // pred_check
      _
    $region30: #{skill_proposal_forward.5} parent=5 // pred_check_branch
      %142 = sbr.rel (%p139) target = $region32
    $region31: #{skill_proposal_forward.5} parent=5 // pred_region
      %s143 = ssub.s32 %s9, 1
      %s144 = smul.u32 256, %s14
      %p145 = scmp.lt.s32.totalorder %s144, 2047
      %s146 = scalar_select %p145, %s144, 2047
      %s147 = smul.addr %s146, 4
      %s148 = scalar_lea.vmem %s0, %s147
      %p149 = pneg %p35
      %p150 = pneg %p32
      %p151 = pneg %p56
      %p152 = pneg %p53
      %p153 = pneg %p77
      %p154 = pneg %p74
      %p155 = pneg %p103
      %p156 = pneg %p100
      %s157 = smul.u32 256, %s14
      %p158 = scmp.lt.s32.totalorder %s157, 2047
      %s159 = scalar_select %p158, %s157, 2047
      %s160 = smul.addr %s159, 4
      %s161 = scalar_lea.vmem %s3, %s160
      %s162 = smul.u32 256, %s14
      %p163 = scmp.lt.s32.totalorder %s162, 2047
      %s164 = scalar_select %p163, %s162, 2047
      %s165 = smul.addr %s164, 4
      %s166 = scalar_lea.vmem %s0, %s165
      %s167 = smul.u32 256, %s14
      %s168 = smul.u32 256, %s14
      %p169 = scmp.lt.s32.totalorder %s168, 2047
      %s170 = scalar_select %p169, %s168, 2047
      %s171 = smul.addr %s170, 4
      %s172 = scalar_lea.vmem %s3, %s171
      %s173 = smul.u32 256, %s14
      %v175 = vld [vmem:[%s166] sm:$0xf]
      %v176 = vld [vmem:[%s166 + $0x4] sm:$0xf]
      %v177 = vld [vmem:[%s166 + $0x8] sm:$0xf]
      %v178 = vld [vmem:[%s166 + $0xc] sm:$0xf]
      %v179 = vld [vmem:[%s166 + $0x10] sm:$0xf]
      %v180 = vld [vmem:[%s166 + $0x14] sm:$0xf]
      %v181 = vld [vmem:[%s166 + $0x18] sm:$0xf]
      %v182 = vld [vmem:[%s166 + $0x1c] sm:$0xf]
      %v183 = vld [vmem:[%s166 + $0x20] sm:$0xf]
      %v184 = vld [vmem:[%s166 + $0x24] sm:$0xf]
      %v185 = vld [vmem:[%s166 + $0x28] sm:$0xf]
      %v186 = vld [vmem:[%s166 + $0x2c] sm:$0xf]
      %v187 = vld [vmem:[%s166 + $0x30] sm:$0xf]
      %v188 = vld [vmem:[%s166 + $0x34] sm:$0xf]
      %v189 = vld [vmem:[%s166 + $0x38] sm:$0xf]
      %v190 = vld [vmem:[%s166 + $0x3c] sm:$0xf]
      %v191 = vld [vmem:[%s166 + $0x40] sm:$0xf]
      %v192 = vld [vmem:[%s166 + $0x44] sm:$0xf]
      %v193 = vld [vmem:[%s166 + $0x48] sm:$0xf]
      %v194 = vld [vmem:[%s166 + $0x4c] sm:$0xf]
      %v195 = vld [vmem:[%s166 + $0x50] sm:$0xf]
      %v196 = vld [vmem:[%s166 + $0x54] sm:$0xf]
      %v197 = vld [vmem:[%s166 + $0x58] sm:$0xf]
      %v198 = vld [vmem:[%s166 + $0x5c] sm:$0xf]
      %v199 = vld [vmem:[%s166 + $0x60] sm:$0xf]
      %v200 = vld [vmem:[%s166 + $0x64] sm:$0xf]
      %v201 = vld [vmem:[%s166 + $0x68] sm:$0xf]
      %v202 = vld [vmem:[%s166 + $0x6c] sm:$0xf]
      %v203 = vld [vmem:[%s166 + $0x70] sm:$0xf]
      %v204 = vld [vmem:[%s166 + $0x74] sm:$0xf]
      %v205 = vld [vmem:[%s166 + $0x78] sm:$0xf]
      %v206 = vld [vmem:[%s166 + $0x7c] sm:$0xf]
      %v207 = vld [vmem:[%s166 + $0x80] sm:$0xf]
      %v208 = vld [vmem:[%s166 + $0x84] sm:$0xf]
      %v209 = vld [vmem:[%s166 + $0x88] sm:$0xf]
      %v210 = vld [vmem:[%s166 + $0x8c] sm:$0xf]
      %v211 = vld [vmem:[%s166 + $0x90] sm:$0xf]
      %v212 = vld [vmem:[%s166 + $0x94] sm:$0xf]
      %v213 = vld [vmem:[%s166 + $0x98] sm:$0xf]
      %v214 = vld [vmem:[%s166 + $0x9c] sm:$0xf]
      %v215 = vld [vmem:[%s166 + $0xa0] sm:$0xf]
      %v216 = vld [vmem:[%s166 + $0xa4] sm:$0xf]
      %v217 = vld [vmem:[%s166 + $0xa8] sm:$0xf]
      %v218 = vld [vmem:[%s166 + $0xac] sm:$0xf]
      %v219 = vld [vmem:[%s166 + $0xb0] sm:$0xf]
      %v220 = vld [vmem:[%s166 + $0xb4] sm:$0xf]
      %v221 = vld [vmem:[%s166 + $0xb8] sm:$0xf]
      %v222 = vld [vmem:[%s166 + $0xbc] sm:$0xf]
      %v223 = vld [vmem:[%s166 + $0xc0] sm:$0xf]
      %v224 = vld [vmem:[%s166 + $0xc4] sm:$0xf]
      %v225 = vld [vmem:[%s166 + $0xc8] sm:$0xf]
      %v226 = vld [vmem:[%s166 + $0xcc] sm:$0xf]
      %v227 = vld [vmem:[%s166 + $0xd0] sm:$0xf]
      %v228 = vld [vmem:[%s166 + $0xd4] sm:$0xf]
      %v229 = vld [vmem:[%s166 + $0xd8] sm:$0xf]
      %v230 = vld [vmem:[%s166 + $0xdc] sm:$0xf]
      %v231 = vld [vmem:[%s166 + $0xe0] sm:$0xf]
      %v232 = vld [vmem:[%s166 + $0xe4] sm:$0xf]
      %v233 = vld [vmem:[%s166 + $0xe8] sm:$0xf]
      %v234 = vld [vmem:[%s166 + $0xec] sm:$0xf]
      %v235 = vld [vmem:[%s166 + $0xf0] sm:$0xf]
      %v236 = vld [vmem:[%s166 + $0xf4] sm:$0xf]
      %v237 = vld [vmem:[%s166 + $0xf8] sm:$0xf]
      %v238 = vld [vmem:[%s166 + $0xfc] sm:$0xf]
      %v239 = vld [vmem:[%s166 + $0x100] sm:$0xf]
      %v240 = vld [vmem:[%s166 + $0x104] sm:$0xf]
      %v241 = vld [vmem:[%s166 + $0x108] sm:$0xf]
      %v242 = vld [vmem:[%s166 + $0x10c] sm:$0xf]
      %v243 = vld [vmem:[%s166 + $0x110] sm:$0xf]
      %v244 = vld [vmem:[%s166 + $0x114] sm:$0xf]
      %v245 = vld [vmem:[%s166 + $0x118] sm:$0xf]
      %v246 = vld [vmem:[%s166 + $0x11c] sm:$0xf]
      %v247 = vld [vmem:[%s166 + $0x120] sm:$0xf]
      %v248 = vld [vmem:[%s166 + $0x124] sm:$0xf]
      %v249 = vld [vmem:[%s166 + $0x128] sm:$0xf]
      %v250 = vld [vmem:[%s166 + $0x12c] sm:$0xf]
      %v251 = vld [vmem:[%s166 + $0x130] sm:$0xf]
      %v252 = vld [vmem:[%s166 + $0x134] sm:$0xf]
      %v253 = vld [vmem:[%s166 + $0x138] sm:$0xf]
      %v254 = vld [vmem:[%s166 + $0x13c] sm:$0xf]
      %v255 = vld [vmem:[%s166 + $0x140] sm:$0xf]
      %v256 = vld [vmem:[%s166 + $0x144] sm:$0xf]
      %v257 = vld [vmem:[%s166 + $0x148] sm:$0xf]
      %v258 = vld [vmem:[%s166 + $0x14c] sm:$0xf]
      %v259 = vld [vmem:[%s166 + $0x150] sm:$0xf]
      %v260 = vld [vmem:[%s166 + $0x154] sm:$0xf]
      %v261 = vld [vmem:[%s166 + $0x158] sm:$0xf]
      %v262 = vld [vmem:[%s166 + $0x15c] sm:$0xf]
      %v263 = vld [vmem:[%s166 + $0x160] sm:$0xf]
      %v264 = vld [vmem:[%s166 + $0x164] sm:$0xf]
      %v265 = vld [vmem:[%s166 + $0x168] sm:$0xf]
      %v266 = vld [vmem:[%s166 + $0x16c] sm:$0xf]
      %v267 = vld [vmem:[%s166 + $0x170] sm:$0xf]
      %v268 = vld [vmem:[%s166 + $0x174] sm:$0xf]
      %v269 = vld [vmem:[%s166 + $0x178] sm:$0xf]
      %v270 = vld [vmem:[%s166 + $0x17c] sm:$0xf]
      %v271 = vld [vmem:[%s166 + $0x180] sm:$0xf]
      %v272 = vld [vmem:[%s166 + $0x184] sm:$0xf]
      %v273 = vld [vmem:[%s166 + $0x188] sm:$0xf]
      %v274 = vld [vmem:[%s166 + $0x18c] sm:$0xf]
      %v275 = vld [vmem:[%s166 + $0x190] sm:$0xf]
      %v276 = vld [vmem:[%s166 + $0x194] sm:$0xf]
      %v277 = vld [vmem:[%s166 + $0x198] sm:$0xf]
      %v278 = vld [vmem:[%s166 + $0x19c] sm:$0xf]
      %v279 = vld [vmem:[%s166 + $0x1a0] sm:$0xf]
      %v280 = vld [vmem:[%s166 + $0x1a4] sm:$0xf]
      %v281 = vld [vmem:[%s166 + $0x1a8] sm:$0xf]
      %v282 = vld [vmem:[%s166 + $0x1ac] sm:$0xf]
      %v283 = vld [vmem:[%s166 + $0x1b0] sm:$0xf]
      %v284 = vld [vmem:[%s166 + $0x1b4] sm:$0xf]
      %v285 = vld [vmem:[%s166 + $0x1b8] sm:$0xf]
      %v286 = vld [vmem:[%s166 + $0x1bc] sm:$0xf]
      %v287 = vld [vmem:[%s166 + $0x1c0] sm:$0xf]
      %v288 = vld [vmem:[%s166 + $0x1c4] sm:$0xf]
      %v289 = vld [vmem:[%s166 + $0x1c8] sm:$0xf]
      %v290 = vld [vmem:[%s166 + $0x1cc] sm:$0xf]
      %v291 = vld [vmem:[%s166 + $0x1d0] sm:$0xf]
      %v292 = vld [vmem:[%s166 + $0x1d4] sm:$0xf]
      %v293 = vld [vmem:[%s166 + $0x1d8] sm:$0xf]
      %v294 = vld [vmem:[%s166 + $0x1dc] sm:$0xf]
      %v295 = vld [vmem:[%s166 + $0x1e0] sm:$0xf]
      %v296 = vld [vmem:[%s166 + $0x1e4] sm:$0xf]
      %v297 = vld [vmem:[%s166 + $0x1e8] sm:$0xf]
      %v298 = vld [vmem:[%s166 + $0x1ec] sm:$0xf]
      %v299 = vld [vmem:[%s166 + $0x1f0] sm:$0xf]
      %v300 = vld [vmem:[%s166 + $0x1f4] sm:$0xf]
      %v301 = vld [vmem:[%s166 + $0x1f8] sm:$0xf]
      %v302 = vld [vmem:[%s166 + $0x1fc] sm:$0xf]
      %v303 = vld [vmem:[%s166 + $0x200] sm:$0xf]
      %v304 = vld [vmem:[%s166 + $0x204] sm:$0xf]
      %v305 = vld [vmem:[%s166 + $0x208] sm:$0xf]
      %v306 = vld [vmem:[%s166 + $0x20c] sm:$0xf]
      %v307 = vld [vmem:[%s166 + $0x210] sm:$0xf]
      %v308 = vld [vmem:[%s166 + $0x214] sm:$0xf]
      %v309 = vld [vmem:[%s166 + $0x218] sm:$0xf]
      %v310 = vld [vmem:[%s166 + $0x21c] sm:$0xf]
      %v311 = vld [vmem:[%s166 + $0x220] sm:$0xf]
      %v312 = vld [vmem:[%s166 + $0x224] sm:$0xf]
      %v313 = vld [vmem:[%s166 + $0x228] sm:$0xf]
      %v314 = vld [vmem:[%s166 + $0x22c] sm:$0xf]
      %v315 = vld [vmem:[%s166 + $0x230] sm:$0xf]
      %v316 = vld [vmem:[%s166 + $0x234] sm:$0xf]
      %v317 = vld [vmem:[%s166 + $0x238] sm:$0xf]
      %v318 = vld [vmem:[%s166 + $0x23c] sm:$0xf]
      %v319 = vld [vmem:[%s166 + $0x240] sm:$0xf]
      %v320 = vld [vmem:[%s166 + $0x244] sm:$0xf]
      %v321 = vld [vmem:[%s166 + $0x248] sm:$0xf]
      %v322 = vld [vmem:[%s166 + $0x24c] sm:$0xf]
      %v323 = vld [vmem:[%s166 + $0x250] sm:$0xf]
      %v324 = vld [vmem:[%s166 + $0x254] sm:$0xf]
      %v325 = vld [vmem:[%s166 + $0x258] sm:$0xf]
      %v326 = vld [vmem:[%s166 + $0x25c] sm:$0xf]
      %v327 = vld [vmem:[%s166 + $0x260] sm:$0xf]
      %v328 = vld [vmem:[%s166 + $0x264] sm:$0xf]
      %v329 = vld [vmem:[%s166 + $0x268] sm:$0xf]
      %v330 = vld [vmem:[%s166 + $0x26c] sm:$0xf]
      %v331 = vld [vmem:[%s166 + $0x270] sm:$0xf]
      %v332 = vld [vmem:[%s166 + $0x274] sm:$0xf]
      %v333 = vld [vmem:[%s166 + $0x278] sm:$0xf]
      %v334 = vld [vmem:[%s166 + $0x27c] sm:$0xf]
      %v335 = vld [vmem:[%s166 + $0x280] sm:$0xf]
      %v336 = vld [vmem:[%s166 + $0x284] sm:$0xf]
      %v337 = vld [vmem:[%s166 + $0x288] sm:$0xf]
      %v338 = vld [vmem:[%s166 + $0x28c] sm:$0xf]
      %v339 = vld [vmem:[%s166 + $0x290] sm:$0xf]
      %v340 = vld [vmem:[%s166 + $0x294] sm:$0xf]
      %v341 = vld [vmem:[%s166 + $0x298] sm:$0xf]
      %v342 = vld [vmem:[%s166 + $0x29c] sm:$0xf]
      %v343 = vld [vmem:[%s166 + $0x2a0] sm:$0xf]
      %v344 = vld [vmem:[%s166 + $0x2a4] sm:$0xf]
      %v345 = vld [vmem:[%s166 + $0x2a8] sm:$0xf]
      %v346 = vld [vmem:[%s166 + $0x2ac] sm:$0xf]
      %v347 = vld [vmem:[%s166 + $0x2b0] sm:$0xf]
      %v348 = vld [vmem:[%s166 + $0x2b4] sm:$0xf]
      %v349 = vld [vmem:[%s166 + $0x2b8] sm:$0xf]
      %v350 = vld [vmem:[%s166 + $0x2bc] sm:$0xf]
      %v351 = vld [vmem:[%s166 + $0x2c0] sm:$0xf]
      %v352 = vld [vmem:[%s166 + $0x2c4] sm:$0xf]
      %v353 = vld [vmem:[%s166 + $0x2c8] sm:$0xf]
      %v354 = vld [vmem:[%s166 + $0x2cc] sm:$0xf]
      %v355 = vld [vmem:[%s166 + $0x2d0] sm:$0xf]
      %v356 = vld [vmem:[%s166 + $0x2d4] sm:$0xf]
      %v357 = vld [vmem:[%s166 + $0x2d8] sm:$0xf]
      %v358 = vld [vmem:[%s166 + $0x2dc] sm:$0xf]
      %v359 = vld [vmem:[%s166 + $0x2e0] sm:$0xf]
      %v360 = vld [vmem:[%s166 + $0x2e4] sm:$0xf]
      %v361 = vld [vmem:[%s166 + $0x2e8] sm:$0xf]
      %v362 = vld [vmem:[%s166 + $0x2ec] sm:$0xf]
      %v363 = vld [vmem:[%s166 + $0x2f0] sm:$0xf]
      %v364 = vld [vmem:[%s166 + $0x2f4] sm:$0xf]
      %v365 = vld [vmem:[%s166 + $0x2f8] sm:$0xf]
      %v366 = vld [vmem:[%s166 + $0x2fc] sm:$0xf]
      %v367 = vld [vmem:[%s166 + $0x300] sm:$0xf]
      %v368 = vld [vmem:[%s166 + $0x304] sm:$0xf]
      %v369 = vld [vmem:[%s166 + $0x308] sm:$0xf]
      %v370 = vld [vmem:[%s166 + $0x30c] sm:$0xf]
      %v371 = vld [vmem:[%s166 + $0x310] sm:$0xf]
      %v372 = vld [vmem:[%s166 + $0x314] sm:$0xf]
      %v373 = vld [vmem:[%s166 + $0x318] sm:$0xf]
      %v374 = vld [vmem:[%s166 + $0x31c] sm:$0xf]
      %v375 = vld [vmem:[%s166 + $0x320] sm:$0xf]
      %v376 = vld [vmem:[%s166 + $0x324] sm:$0xf]
      %v377 = vld [vmem:[%s166 + $0x328] sm:$0xf]
      %v378 = vld [vmem:[%s166 + $0x32c] sm:$0xf]
      %v379 = vld [vmem:[%s166 + $0x330] sm:$0xf]
      %v380 = vld [vmem:[%s166 + $0x334] sm:$0xf]
      %v381 = vld [vmem:[%s166 + $0x338] sm:$0xf]
      %v382 = vld [vmem:[%s166 + $0x33c] sm:$0xf]
      %v383 = vld [vmem:[%s166 + $0x340] sm:$0xf]
      %v384 = vld [vmem:[%s166 + $0x344] sm:$0xf]
      %v385 = vld [vmem:[%s166 + $0x348] sm:$0xf]
      %v386 = vld [vmem:[%s166 + $0x34c] sm:$0xf]
      %v387 = vld [vmem:[%s166 + $0x350] sm:$0xf]
      %v388 = vld [vmem:[%s166 + $0x354] sm:$0xf]
      %v389 = vld [vmem:[%s166 + $0x358] sm:$0xf]
      %v390 = vld [vmem:[%s166 + $0x35c] sm:$0xf]
      %v391 = vld [vmem:[%s166 + $0x360] sm:$0xf]
      %v392 = vld [vmem:[%s166 + $0x364] sm:$0xf]
      %v393 = vld [vmem:[%s166 + $0x368] sm:$0xf]
      %v394 = vld [vmem:[%s166 + $0x36c] sm:$0xf]
      %v395 = vld [vmem:[%s166 + $0x370] sm:$0xf]
      %v396 = vld [vmem:[%s166 + $0x374] sm:$0xf]
      %v397 = vld [vmem:[%s166 + $0x378] sm:$0xf]
      %v398 = vld [vmem:[%s166 + $0x37c] sm:$0xf]
      %v399 = vld [vmem:[%s166 + $0x380] sm:$0xf]
      %v400 = vld [vmem:[%s166 + $0x384] sm:$0xf]
      %v401 = vld [vmem:[%s166 + $0x388] sm:$0xf]
      %v402 = vld [vmem:[%s166 + $0x38c] sm:$0xf]
      %v403 = vld [vmem:[%s166 + $0x390] sm:$0xf]
      %v404 = vld [vmem:[%s166 + $0x394] sm:$0xf]
      %v405 = vld [vmem:[%s166 + $0x398] sm:$0xf]
      %v406 = vld [vmem:[%s166 + $0x39c] sm:$0xf]
      %v407 = vld [vmem:[%s166 + $0x3a0] sm:$0xf]
      %v408 = vld [vmem:[%s166 + $0x3a4] sm:$0xf]
      %v409 = vld [vmem:[%s166 + $0x3a8] sm:$0xf]
      %v410 = vld [vmem:[%s166 + $0x3ac] sm:$0xf]
      %v411 = vld [vmem:[%s166 + $0x3b0] sm:$0xf]
      %v412 = vld [vmem:[%s166 + $0x3b4] sm:$0xf]
      %v413 = vld [vmem:[%s166 + $0x3b8] sm:$0xf]
      %v414 = vld [vmem:[%s166 + $0x3bc] sm:$0xf]
      %v415 = vld [vmem:[%s166 + $0x3c0] sm:$0xf]
      %v416 = vld [vmem:[%s166 + $0x3c4] sm:$0xf]
      %v417 = vld [vmem:[%s166 + $0x3c8] sm:$0xf]
      %v418 = vld [vmem:[%s166 + $0x3cc] sm:$0xf]
      %v419 = vld [vmem:[%s166 + $0x3d0] sm:$0xf]
      %v420 = vld [vmem:[%s166 + $0x3d4] sm:$0xf]
      %v421 = vld [vmem:[%s166 + $0x3d8] sm:$0xf]
      %v422 = vld [vmem:[%s166 + $0x3dc] sm:$0xf]
      %v423 = vld [vmem:[%s166 + $0x3e0] sm:$0xf]
      %v424 = vld [vmem:[%s166 + $0x3e4] sm:$0xf]
      %v425 = vld [vmem:[%s166 + $0x3e8] sm:$0xf]
      %v426 = vld [vmem:[%s166 + $0x3ec] sm:$0xf]
      %v427 = vld [vmem:[%s166 + $0x3f0] sm:$0xf]
      %v428 = vld [vmem:[%s166 + $0x3f4] sm:$0xf]
      %v429 = vld [vmem:[%s166 + $0x3f8] sm:$0xf]
      %v430 = vld [vmem:[%s166 + $0x3fc] sm:$0xf]
      %v431 = vld [vmem:[%s1] sm:$0xf]
      %v432 = vld [vmem:[%s1 + $0x4] sm:$0xf]
      %v433 = vld [vmem:[%s1 + $0x8] sm:$0xf]
      %v434 = vld [vmem:[%s1 + $0xc] sm:$0xf]
      %v435 = vld [vmem:[%s2] sm:$0x1]
      %v437 = vperm.slane %v435, 0
      %v695 = vunpack.c.l.b16 %v175
      %v696 = vunpack.c.l.b16 %v176
      %v697 = vunpack.c.l.b16 %v177
      %v698 = vunpack.c.l.b16 %v178
      %v699 = vunpack.c.l.b16 %v179
      %v700 = vunpack.c.l.b16 %v180
      %v701 = vunpack.c.l.b16 %v181
      %v702 = vunpack.c.l.b16 %v182
      %v703 = vunpack.c.l.b16 %v183
      %v704 = vunpack.c.l.b16 %v184
      %v705 = vunpack.c.l.b16 %v185
      %v706 = vunpack.c.l.b16 %v186
      %v707 = vunpack.c.l.b16 %v187
      %v708 = vunpack.c.l.b16 %v188
      %v709 = vunpack.c.l.b16 %v189
      %v710 = vunpack.c.l.b16 %v190
      %v711 = vunpack.c.l.b16 %v191
      %v712 = vunpack.c.l.b16 %v192
      %v713 = vunpack.c.l.b16 %v193
      %v714 = vunpack.c.l.b16 %v194
      %v715 = vunpack.c.l.b16 %v195
      %v716 = vunpack.c.l.b16 %v196
      %v717 = vunpack.c.l.b16 %v197
      %v718 = vunpack.c.l.b16 %v198
      %v719 = vunpack.c.l.b16 %v199
      %v720 = vunpack.c.l.b16 %v200
      %v721 = vunpack.c.l.b16 %v201
      %v722 = vunpack.c.l.b16 %v202
      %v723 = vunpack.c.l.b16 %v203
      %v724 = vunpack.c.l.b16 %v204
      %v725 = vunpack.c.l.b16 %v205
      %v726 = vunpack.c.l.b16 %v206
      %v727 = vunpack.c.l.b16 %v207
      %v728 = vunpack.c.l.b16 %v208
      %v729 = vunpack.c.l.b16 %v209
      %v730 = vunpack.c.l.b16 %v210
      %v731 = vunpack.c.l.b16 %v211
      %v732 = vunpack.c.l.b16 %v212
      %v733 = vunpack.c.l.b16 %v213
      %v734 = vunpack.c.l.b16 %v214
      %v735 = vunpack.c.l.b16 %v215
      %v736 = vunpack.c.l.b16 %v216
      %v737 = vunpack.c.l.b16 %v217
      %v738 = vunpack.c.l.b16 %v218
      %v739 = vunpack.c.l.b16 %v219
      %v740 = vunpack.c.l.b16 %v220
      %v741 = vunpack.c.l.b16 %v221
      %v742 = vunpack.c.l.b16 %v222
      %v743 = vunpack.c.l.b16 %v223
      %v744 = vunpack.c.l.b16 %v224
      %v745 = vunpack.c.l.b16 %v225
      %v746 = vunpack.c.l.b16 %v226
      %v747 = vunpack.c.l.b16 %v227
      %v748 = vunpack.c.l.b16 %v228
      %v749 = vunpack.c.l.b16 %v229
      %v750 = vunpack.c.l.b16 %v230
      %v751 = vunpack.c.l.b16 %v231
      %v752 = vunpack.c.l.b16 %v232
      %v753 = vunpack.c.l.b16 %v233
      %v754 = vunpack.c.l.b16 %v234
      %v755 = vunpack.c.l.b16 %v235
      %v756 = vunpack.c.l.b16 %v236
      %v757 = vunpack.c.l.b16 %v237
      %v758 = vunpack.c.l.b16 %v238
      %v759 = vunpack.c.l.b16 %v239
      %v760 = vunpack.c.l.b16 %v240
      %v761 = vunpack.c.l.b16 %v241
      %v762 = vunpack.c.l.b16 %v242
      %v763 = vunpack.c.l.b16 %v243
      %v764 = vunpack.c.l.b16 %v244
      %v765 = vunpack.c.l.b16 %v245
      %v766 = vunpack.c.l.b16 %v246
      %v767 = vunpack.c.l.b16 %v247
      %v768 = vunpack.c.l.b16 %v248
      %v769 = vunpack.c.l.b16 %v249
      %v770 = vunpack.c.l.b16 %v250
      %v771 = vunpack.c.l.b16 %v251
      %v772 = vunpack.c.l.b16 %v252
      %v773 = vunpack.c.l.b16 %v253
      %v774 = vunpack.c.l.b16 %v254
      %v775 = vunpack.c.l.b16 %v255
      %v776 = vunpack.c.l.b16 %v256
      %v777 = vunpack.c.l.b16 %v257
      %v778 = vunpack.c.l.b16 %v258
      %v779 = vunpack.c.l.b16 %v259
      %v780 = vunpack.c.l.b16 %v260
      %v781 = vunpack.c.l.b16 %v261
      %v782 = vunpack.c.l.b16 %v262
      %v783 = vunpack.c.l.b16 %v263
      %v784 = vunpack.c.l.b16 %v264
      %v785 = vunpack.c.l.b16 %v265
      %v786 = vunpack.c.l.b16 %v266
      %v787 = vunpack.c.l.b16 %v267
      %v788 = vunpack.c.l.b16 %v268
      %v789 = vunpack.c.l.b16 %v269
      %v790 = vunpack.c.l.b16 %v270
      %v791 = vunpack.c.l.b16 %v271
      %v792 = vunpack.c.l.b16 %v272
      %v793 = vunpack.c.l.b16 %v273
      %v794 = vunpack.c.l.b16 %v274
      %v795 = vunpack.c.l.b16 %v275
      %v796 = vunpack.c.l.b16 %v276
      %v797 = vunpack.c.l.b16 %v277
      %v798 = vunpack.c.l.b16 %v278
      %v799 = vunpack.c.l.b16 %v279
      %v800 = vunpack.c.l.b16 %v280
      %v801 = vunpack.c.l.b16 %v281
      %v802 = vunpack.c.l.b16 %v282
      %v803 = vunpack.c.l.b16 %v283
      %v804 = vunpack.c.l.b16 %v284
      %v805 = vunpack.c.l.b16 %v285
      %v806 = vunpack.c.l.b16 %v286
      %v807 = vunpack.c.l.b16 %v287
      %v808 = vunpack.c.l.b16 %v288
      %v809 = vunpack.c.l.b16 %v289
      %v810 = vunpack.c.l.b16 %v290
      %v811 = vunpack.c.l.b16 %v291
      %v812 = vunpack.c.l.b16 %v292
      %v813 = vunpack.c.l.b16 %v293
      %v814 = vunpack.c.l.b16 %v294
      %v815 = vunpack.c.l.b16 %v295
      %v816 = vunpack.c.l.b16 %v296
      %v817 = vunpack.c.l.b16 %v297
      %v818 = vunpack.c.l.b16 %v298
      %v819 = vunpack.c.l.b16 %v299
      %v820 = vunpack.c.l.b16 %v300
      %v821 = vunpack.c.l.b16 %v301
      %v822 = vunpack.c.l.b16 %v302
      %v823 = vunpack.c.l.b16 %v303
      %v824 = vunpack.c.l.b16 %v304
      %v825 = vunpack.c.l.b16 %v305
      %v826 = vunpack.c.l.b16 %v306
      %v827 = vunpack.c.l.b16 %v307
      %v828 = vunpack.c.l.b16 %v308
      %v829 = vunpack.c.l.b16 %v309
      %v830 = vunpack.c.l.b16 %v310
      %v831 = vunpack.c.l.b16 %v311
      %v832 = vunpack.c.l.b16 %v312
      %v833 = vunpack.c.l.b16 %v313
      %v834 = vunpack.c.l.b16 %v314
      %v835 = vunpack.c.l.b16 %v315
      %v836 = vunpack.c.l.b16 %v316
      %v837 = vunpack.c.l.b16 %v317
      %v838 = vunpack.c.l.b16 %v318
      %v839 = vunpack.c.l.b16 %v319
      %v840 = vunpack.c.l.b16 %v320
      %v841 = vunpack.c.l.b16 %v321
      %v842 = vunpack.c.l.b16 %v322
      %v843 = vunpack.c.l.b16 %v323
      %v844 = vunpack.c.l.b16 %v324
      %v845 = vunpack.c.l.b16 %v325
      %v846 = vunpack.c.l.b16 %v326
      %v847 = vunpack.c.l.b16 %v327
      %v848 = vunpack.c.l.b16 %v328
      %v849 = vunpack.c.l.b16 %v329
      %v850 = vunpack.c.l.b16 %v330
      %v851 = vunpack.c.l.b16 %v331
      %v852 = vunpack.c.l.b16 %v332
      %v853 = vunpack.c.l.b16 %v333
      %v854 = vunpack.c.l.b16 %v334
      %v855 = vunpack.c.l.b16 %v335
      %v856 = vunpack.c.l.b16 %v336
      %v857 = vunpack.c.l.b16 %v337
      %v858 = vunpack.c.l.b16 %v338
      %v859 = vunpack.c.l.b16 %v339
      %v860 = vunpack.c.l.b16 %v340
      %v861 = vunpack.c.l.b16 %v341
      %v862 = vunpack.c.l.b16 %v342
      %v863 = vunpack.c.l.b16 %v343
      %v864 = vunpack.c.l.b16 %v344
      %v865 = vunpack.c.l.b16 %v345
      %v866 = vunpack.c.l.b16 %v346
      %v867 = vunpack.c.l.b16 %v347
      %v868 = vunpack.c.l.b16 %v348
      %v869 = vunpack.c.l.b16 %v349
      %v870 = vunpack.c.l.b16 %v350
      %v871 = vunpack.c.l.b16 %v351
      %v872 = vunpack.c.l.b16 %v352
      %v873 = vunpack.c.l.b16 %v353
      %v874 = vunpack.c.l.b16 %v354
      %v875 = vunpack.c.l.b16 %v355
      %v876 = vunpack.c.l.b16 %v356
      %v877 = vunpack.c.l.b16 %v357
      %v878 = vunpack.c.l.b16 %v358
      %v879 = vunpack.c.l.b16 %v359
      %v880 = vunpack.c.l.b16 %v360
      %v881 = vunpack.c.l.b16 %v361
      %v882 = vunpack.c.l.b16 %v362
      %v883 = vunpack.c.l.b16 %v363
      %v884 = vunpack.c.l.b16 %v364
      %v885 = vunpack.c.l.b16 %v365
      %v886 = vunpack.c.l.b16 %v366
      %v887 = vunpack.c.l.b16 %v367
      %v888 = vunpack.c.l.b16 %v368
      %v889 = vunpack.c.l.b16 %v369
      %v890 = vunpack.c.l.b16 %v370
      %v891 = vunpack.c.l.b16 %v371
      %v892 = vunpack.c.l.b16 %v372
      %v893 = vunpack.c.l.b16 %v373
      %v894 = vunpack.c.l.b16 %v374
      %v895 = vunpack.c.l.b16 %v375
      %v896 = vunpack.c.l.b16 %v376
      %v897 = vunpack.c.l.b16 %v377
      %v898 = vunpack.c.l.b16 %v378
      %v899 = vunpack.c.l.b16 %v379
      %v900 = vunpack.c.l.b16 %v380
      %v901 = vunpack.c.l.b16 %v381
      %v902 = vunpack.c.l.b16 %v382
      %v903 = vunpack.c.l.b16 %v383
      %v904 = vunpack.c.l.b16 %v384
      %v905 = vunpack.c.l.b16 %v385
      %v906 = vunpack.c.l.b16 %v386
      %v907 = vunpack.c.l.b16 %v387
      %v908 = vunpack.c.l.b16 %v388
      %v909 = vunpack.c.l.b16 %v389
      %v910 = vunpack.c.l.b16 %v390
      %v911 = vunpack.c.l.b16 %v391
      %v912 = vunpack.c.l.b16 %v392
      %v913 = vunpack.c.l.b16 %v393
      %v914 = vunpack.c.l.b16 %v394
      %v915 = vunpack.c.l.b16 %v395
      %v916 = vunpack.c.l.b16 %v396
      %v917 = vunpack.c.l.b16 %v397
      %v918 = vunpack.c.l.b16 %v398
      %v919 = vunpack.c.l.b16 %v399
      %v920 = vunpack.c.l.b16 %v400
      %v921 = vunpack.c.l.b16 %v401
      %v922 = vunpack.c.l.b16 %v402
      %v923 = vunpack.c.l.b16 %v403
      %v924 = vunpack.c.l.b16 %v404
      %v925 = vunpack.c.l.b16 %v405
      %v926 = vunpack.c.l.b16 %v406
      %v927 = vunpack.c.l.b16 %v407
      %v928 = vunpack.c.l.b16 %v408
      %v929 = vunpack.c.l.b16 %v409
      %v930 = vunpack.c.l.b16 %v410
      %v931 = vunpack.c.l.b16 %v411
      %v932 = vunpack.c.l.b16 %v412
      %v933 = vunpack.c.l.b16 %v413
      %v934 = vunpack.c.l.b16 %v414
      %v935 = vunpack.c.l.b16 %v415
      %v936 = vunpack.c.l.b16 %v416
      %v937 = vunpack.c.l.b16 %v417
      %v938 = vunpack.c.l.b16 %v418
      %v939 = vunpack.c.l.b16 %v419
      %v940 = vunpack.c.l.b16 %v420
      %v941 = vunpack.c.l.b16 %v421
      %v942 = vunpack.c.l.b16 %v422
      %v943 = vunpack.c.l.b16 %v423
      %v944 = vunpack.c.l.b16 %v424
      %v945 = vunpack.c.l.b16 %v425
      %v946 = vunpack.c.l.b16 %v426
      %v947 = vunpack.c.l.b16 %v427
      %v948 = vunpack.c.l.b16 %v428
      %v949 = vunpack.c.l.b16 %v429
      %v950 = vunpack.c.l.b16 %v430
      %v951 = vpack.c.b16 %v696, %v695
      %v952 = vpack.c.b16 %v698, %v697
      %v953 = vpack.c.b16 %v700, %v699
      %v954 = vpack.c.b16 %v702, %v701
      %v955 = vpack.c.b16 %v704, %v703
      %v956 = vpack.c.b16 %v706, %v705
      %v957 = vpack.c.b16 %v708, %v707
      %v958 = vpack.c.b16 %v710, %v709
      %v959 = vpack.c.b16 %v712, %v711
      %v960 = vpack.c.b16 %v714, %v713
      %v961 = vpack.c.b16 %v716, %v715
      %v962 = vpack.c.b16 %v718, %v717
      %v963 = vpack.c.b16 %v720, %v719
      %v964 = vpack.c.b16 %v722, %v721
      %v965 = vpack.c.b16 %v724, %v723
      %v966 = vpack.c.b16 %v726, %v725
      %v967 = vpack.c.b16 %v728, %v727
      %v968 = vpack.c.b16 %v730, %v729
      %v969 = vpack.c.b16 %v732, %v731
      %v970 = vpack.c.b16 %v734, %v733
      %v971 = vpack.c.b16 %v736, %v735
      %v972 = vpack.c.b16 %v738, %v737
      %v973 = vpack.c.b16 %v740, %v739
      %v974 = vpack.c.b16 %v742, %v741
      %v975 = vpack.c.b16 %v744, %v743
      %v976 = vpack.c.b16 %v746, %v745
      %v977 = vpack.c.b16 %v748, %v747
      %v978 = vpack.c.b16 %v750, %v749
      %v979 = vpack.c.b16 %v752, %v751
      %v980 = vpack.c.b16 %v754, %v753
      %v981 = vpack.c.b16 %v756, %v755
      %v982 = vpack.c.b16 %v758, %v757
      %v983 = vpack.c.b16 %v760, %v759
      %v984 = vpack.c.b16 %v762, %v761
      %v985 = vpack.c.b16 %v764, %v763
      %v986 = vpack.c.b16 %v766, %v765
      %v987 = vpack.c.b16 %v768, %v767
      %v988 = vpack.c.b16 %v770, %v769
      %v989 = vpack.c.b16 %v772, %v771
      %v990 = vpack.c.b16 %v774, %v773
      %v991 = vpack.c.b16 %v776, %v775
      %v992 = vpack.c.b16 %v778, %v777
      %v993 = vpack.c.b16 %v780, %v779
      %v994 = vpack.c.b16 %v782, %v781
      %v995 = vpack.c.b16 %v784, %v783
      %v996 = vpack.c.b16 %v786, %v785
      %v997 = vpack.c.b16 %v788, %v787
      %v998 = vpack.c.b16 %v790, %v789
      %v999 = vpack.c.b16 %v792, %v791
      %v1000 = vpack.c.b16 %v794, %v793
      %v1001 = vpack.c.b16 %v796, %v795
      %v1002 = vpack.c.b16 %v798, %v797
      %v1003 = vpack.c.b16 %v800, %v799
      %v1004 = vpack.c.b16 %v802, %v801
      %v1005 = vpack.c.b16 %v804, %v803
      %v1006 = vpack.c.b16 %v806, %v805
      %v1007 = vpack.c.b16 %v808, %v807
      %v1008 = vpack.c.b16 %v810, %v809
      %v1009 = vpack.c.b16 %v812, %v811
      %v1010 = vpack.c.b16 %v814, %v813
      %v1011 = vpack.c.b16 %v816, %v815
      %v1012 = vpack.c.b16 %v818, %v817
      %v1013 = vpack.c.b16 %v820, %v819
      %v1014 = vpack.c.b16 %v822, %v821
      %v1015 = vpack.c.b16 %v824, %v823
      %v1016 = vpack.c.b16 %v826, %v825
      %v1017 = vpack.c.b16 %v828, %v827
      %v1018 = vpack.c.b16 %v830, %v829
      %v1019 = vpack.c.b16 %v832, %v831
      %v1020 = vpack.c.b16 %v834, %v833
      %v1021 = vpack.c.b16 %v836, %v835
      %v1022 = vpack.c.b16 %v838, %v837
      %v1023 = vpack.c.b16 %v840, %v839
      %v1024 = vpack.c.b16 %v842, %v841
      %v1025 = vpack.c.b16 %v844, %v843
      %v1026 = vpack.c.b16 %v846, %v845
      %v1027 = vpack.c.b16 %v848, %v847
      %v1028 = vpack.c.b16 %v850, %v849
      %v1029 = vpack.c.b16 %v852, %v851
      %v1030 = vpack.c.b16 %v854, %v853
      %v1031 = vpack.c.b16 %v856, %v855
      %v1032 = vpack.c.b16 %v858, %v857
      %v1033 = vpack.c.b16 %v860, %v859
      %v1034 = vpack.c.b16 %v862, %v861
      %v1035 = vpack.c.b16 %v864, %v863
      %v1036 = vpack.c.b16 %v866, %v865
      %v1037 = vpack.c.b16 %v868, %v867
      %v1038 = vpack.c.b16 %v870, %v869
      %v1039 = vpack.c.b16 %v872, %v871
      %v1040 = vpack.c.b16 %v874, %v873
      %v1041 = vpack.c.b16 %v876, %v875
      %v1042 = vpack.c.b16 %v878, %v877
      %v1043 = vpack.c.b16 %v880, %v879
      %v1044 = vpack.c.b16 %v882, %v881
      %v1045 = vpack.c.b16 %v884, %v883
      %v1046 = vpack.c.b16 %v886, %v885
      %v1047 = vpack.c.b16 %v888, %v887
      %v1048 = vpack.c.b16 %v890, %v889
      %v1049 = vpack.c.b16 %v892, %v891
      %v1050 = vpack.c.b16 %v894, %v893
      %v1051 = vpack.c.b16 %v896, %v895
      %v1052 = vpack.c.b16 %v898, %v897
      %v1053 = vpack.c.b16 %v900, %v899
      %v1054 = vpack.c.b16 %v902, %v901
      %v1055 = vpack.c.b16 %v904, %v903
      %v1056 = vpack.c.b16 %v906, %v905
      %v1057 = vpack.c.b16 %v908, %v907
      %v1058 = vpack.c.b16 %v910, %v909
      %v1059 = vpack.c.b16 %v912, %v911
      %v1060 = vpack.c.b16 %v914, %v913
      %v1061 = vpack.c.b16 %v916, %v915
      %v1062 = vpack.c.b16 %v918, %v917
      %v1063 = vpack.c.b16 %v920, %v919
      %v1064 = vpack.c.b16 %v922, %v921
      %v1065 = vpack.c.b16 %v924, %v923
      %v1066 = vpack.c.b16 %v926, %v925
      %v1067 = vpack.c.b16 %v928, %v927
      %v1068 = vpack.c.b16 %v930, %v929
      %v1069 = vpack.c.b16 %v932, %v931
      %v1070 = vpack.c.b16 %v934, %v933
      %v1071 = vpack.c.b16 %v936, %v935
      %v1072 = vpack.c.b16 %v938, %v937
      %v1073 = vpack.c.b16 %v940, %v939
      %v1074 = vpack.c.b16 %v942, %v941
      %v1075 = vpack.c.b16 %v944, %v943
      %v1076 = vpack.c.b16 %v946, %v945
      %v1077 = vpack.c.b16 %v948, %v947
      %v1078 = vpack.c.b16 %v950, %v949
      %v1083 = vunpack.c.l.b16 %v431
      %v1084 = vunpack.c.l.b16 %v432
      %v1085 = vunpack.c.l.b16 %v433
      %v1086 = vunpack.c.l.b16 %v434
      %v1087 = vpack.c.b16 %v1084, %v1083
      %v1088 = vpack.c.b16 %v1086, %v1085
      %vm1091 = vcmask 261120
      %v1093 = vsel %vm1091, %v951, 0
      %v1096 = vsel %vm1091, %v952, 0
      %v1099 = vsel %vm1091, %v953, 0
      %v1102 = vsel %vm1091, %v954, 0
      %v1105 = vsel %vm1091, %v955, 0
      %v1108 = vsel %vm1091, %v956, 0
      %v1111 = vsel %vm1091, %v957, 0
      %v1114 = vsel %vm1091, %v958, 0
      %v1117 = vsel %vm1091, %v959, 0
      %v1120 = vsel %vm1091, %v960, 0
      %v1123 = vsel %vm1091, %v961, 0
      %v1126 = vsel %vm1091, %v962, 0
      %v1129 = vsel %vm1091, %v963, 0
      %v1132 = vsel %vm1091, %v964, 0
      %v1135 = vsel %vm1091, %v965, 0
      %v1138 = vsel %vm1091, %v966, 0
      %v1141 = vsel %vm1091, %v967, 0
      %v1144 = vsel %vm1091, %v968, 0
      %v1147 = vsel %vm1091, %v969, 0
      %v1150 = vsel %vm1091, %v970, 0
      %v1153 = vsel %vm1091, %v971, 0
      %v1156 = vsel %vm1091, %v972, 0
      %v1159 = vsel %vm1091, %v973, 0
      %v1162 = vsel %vm1091, %v974, 0
      %v1165 = vsel %vm1091, %v975, 0
      %v1168 = vsel %vm1091, %v976, 0
      %v1171 = vsel %vm1091, %v977, 0
      %v1174 = vsel %vm1091, %v978, 0
      %v1177 = vsel %vm1091, %v979, 0
      %v1180 = vsel %vm1091, %v980, 0
      %v1183 = vsel %vm1091, %v981, 0
      %v1186 = vsel %vm1091, %v982, 0
      %v1189 = vsel %vm1091, %v983, 0
      %v1192 = vsel %vm1091, %v984, 0
      %v1195 = vsel %vm1091, %v985, 0
      %v1198 = vsel %vm1091, %v986, 0
      %v1201 = vsel %vm1091, %v987, 0
      %v1204 = vsel %vm1091, %v988, 0
      %v1207 = vsel %vm1091, %v989, 0
      %v1210 = vsel %vm1091, %v990, 0
      %v1213 = vsel %vm1091, %v991, 0
      %v1216 = vsel %vm1091, %v992, 0
      %v1219 = vsel %vm1091, %v993, 0
      %v1222 = vsel %vm1091, %v994, 0
      %v1225 = vsel %vm1091, %v995, 0
      %v1228 = vsel %vm1091, %v996, 0
      %v1231 = vsel %vm1091, %v997, 0
      %v1234 = vsel %vm1091, %v998, 0
      %v1237 = vsel %vm1091, %v999, 0
      %v1240 = vsel %vm1091, %v1000, 0
      %v1243 = vsel %vm1091, %v1001, 0
      %v1246 = vsel %vm1091, %v1002, 0
      %v1249 = vsel %vm1091, %v1003, 0
      %v1252 = vsel %vm1091, %v1004, 0
      %v1255 = vsel %vm1091, %v1005, 0
      %v1258 = vsel %vm1091, %v1006, 0
      %v1261 = vsel %vm1091, %v1007, 0
      %v1264 = vsel %vm1091, %v1008, 0
      %v1267 = vsel %vm1091, %v1009, 0
      %v1270 = vsel %vm1091, %v1010, 0
      %v1273 = vsel %vm1091, %v1011, 0
      %v1276 = vsel %vm1091, %v1012, 0
      %v1279 = vsel %vm1091, %v1013, 0
      %v1282 = vsel %vm1091, %v1014, 0
      %v1285 = vsel %vm1091, %v1015, 0
      %v1288 = vsel %vm1091, %v1016, 0
      %v1291 = vsel %vm1091, %v1017, 0
      %v1294 = vsel %vm1091, %v1018, 0
      %v1297 = vsel %vm1091, %v1019, 0
      %v1300 = vsel %vm1091, %v1020, 0
      %v1303 = vsel %vm1091, %v1021, 0
      %v1306 = vsel %vm1091, %v1022, 0
      %v1309 = vsel %vm1091, %v1023, 0
      %v1312 = vsel %vm1091, %v1024, 0
      %v1315 = vsel %vm1091, %v1025, 0
      %v1318 = vsel %vm1091, %v1026, 0
      %v1321 = vsel %vm1091, %v1027, 0
      %v1324 = vsel %vm1091, %v1028, 0
      %v1327 = vsel %vm1091, %v1029, 0
      %v1330 = vsel %vm1091, %v1030, 0
      %v1333 = vsel %vm1091, %v1031, 0
      %v1336 = vsel %vm1091, %v1032, 0
      %v1339 = vsel %vm1091, %v1033, 0
      %v1342 = vsel %vm1091, %v1034, 0
      %v1345 = vsel %vm1091, %v1035, 0
      %v1348 = vsel %vm1091, %v1036, 0
      %v1351 = vsel %vm1091, %v1037, 0
      %v1354 = vsel %vm1091, %v1038, 0
      %v1357 = vsel %vm1091, %v1039, 0
      %v1360 = vsel %vm1091, %v1040, 0
      %v1363 = vsel %vm1091, %v1041, 0
      %v1366 = vsel %vm1091, %v1042, 0
      %v1369 = vsel %vm1091, %v1043, 0
      %v1372 = vsel %vm1091, %v1044, 0
      %v1375 = vsel %vm1091, %v1045, 0
      %v1378 = vsel %vm1091, %v1046, 0
      %v1381 = vsel %vm1091, %v1047, 0
      %v1384 = vsel %vm1091, %v1048, 0
      %v1387 = vsel %vm1091, %v1049, 0
      %v1390 = vsel %vm1091, %v1050, 0
      %v1393 = vsel %vm1091, %v1051, 0
      %v1396 = vsel %vm1091, %v1052, 0
      %v1399 = vsel %vm1091, %v1053, 0
      %v1402 = vsel %vm1091, %v1054, 0
      %v1405 = vsel %vm1091, %v1055, 0
      %v1408 = vsel %vm1091, %v1056, 0
      %v1411 = vsel %vm1091, %v1057, 0
      %v1414 = vsel %vm1091, %v1058, 0
      %v1417 = vsel %vm1091, %v1059, 0
      %v1420 = vsel %vm1091, %v1060, 0
      %v1423 = vsel %vm1091, %v1061, 0
      %v1426 = vsel %vm1091, %v1062, 0
      %v1429 = vsel %vm1091, %v1063, 0
      %v1432 = vsel %vm1091, %v1064, 0
      %v1435 = vsel %vm1091, %v1065, 0
      %v1438 = vsel %vm1091, %v1066, 0
      %v1441 = vsel %vm1091, %v1067, 0
      %v1444 = vsel %vm1091, %v1068, 0
      %v1447 = vsel %vm1091, %v1069, 0
      %v1450 = vsel %vm1091, %v1070, 0
      %v1453 = vsel %vm1091, %v1071, 0
      %v1456 = vsel %vm1091, %v1072, 0
      %v1459 = vsel %vm1091, %v1073, 0
      %v1462 = vsel %vm1091, %v1074, 0
      %v1465 = vsel %vm1091, %v1075, 0
      %v1468 = vsel %vm1091, %v1076, 0
      %v1471 = vsel %vm1091, %v1077, 0
      %v1474 = vsel %vm1091, %v1078, 0
      %1476 = vmatpush.bf16.msra.mxu0 0
      %1477 = vmatpush.bf16.msra.mxu0 0
      %1478 = vmatpush.bf16.msra.mxu0 0
      %1479 = vmatpush.bf16.msra.mxu0 0
      %1480 = vmatpush.bf16.msra.mxu0 0
      %1481 = vmatpush.bf16.msra.mxu0 0
      %1482 = vmatpush.bf16.msra.mxu0 %v1088
      %1483 = vmatpush.bf16.msra.mxu0 %v1087
      %1484 = vmatmul.bf16.gmra.mxu0 %v1093
      %v1485 = vpop.f32.mrf.mxu0
      %v1486 = vadd.f32 %v437, %v1485
      %v1487 = vpop.f32.mrf.mxu0
      %v1488 = vadd.f32 %v437, %v1487
      %1489 = vmatmul.bf16.gmra.mxu0 %v1096
      %v1490 = vpop.f32.mrf.mxu0
      %v1491 = vadd.f32 %v437, %v1490
      %v1492 = vpop.f32.mrf.mxu0
      %v1493 = vadd.f32 %v437, %v1492
      %1494 = vmatmul.bf16.gmra.mxu0 %v1099
      %v1495 = vpop.f32.mrf.mxu0
      %v1496 = vadd.f32 %v437, %v1495
      %v1497 = vpop.f32.mrf.mxu0
      %v1498 = vadd.f32 %v437, %v1497
      %1499 = vmatmul.bf16.gmra.mxu0 %v1102
      %v1500 = vpop.f32.mrf.mxu0
      %v1501 = vadd.f32 %v437, %v1500
      %v1502 = vpop.f32.mrf.mxu0
      %v1503 = vadd.f32 %v437, %v1502
      %1504 = vmatmul.bf16.gmra.mxu0 %v1105
      %v1505 = vpop.f32.mrf.mxu0
      %v1506 = vadd.f32 %v437, %v1505
      %v1507 = vpop.f32.mrf.mxu0
      %v1508 = vadd.f32 %v437, %v1507
      %1509 = vmatmul.bf16.gmra.mxu0 %v1108
      %v1510 = vpop.f32.mrf.mxu0
      %v1511 = vadd.f32 %v437, %v1510
      %v1512 = vpop.f32.mrf.mxu0
      %v1513 = vadd.f32 %v437, %v1512
      %1514 = vmatmul.bf16.gmra.mxu0 %v1111
      %v1515 = vpop.f32.mrf.mxu0
      %v1516 = vadd.f32 %v437, %v1515
      %v1517 = vpop.f32.mrf.mxu0
      %v1518 = vadd.f32 %v437, %v1517
      %1519 = vmatmul.bf16.gmra.mxu0 %v1114
      %v1520 = vpop.f32.mrf.mxu0
      %v1521 = vadd.f32 %v437, %v1520
      %v1522 = vpop.f32.mrf.mxu0
      %v1523 = vadd.f32 %v437, %v1522
      %1524 = vmatmul.bf16.gmra.mxu0 %v1117
      %v1525 = vpop.f32.mrf.mxu0
      %v1526 = vadd.f32 %v437, %v1525
      %v1527 = vpop.f32.mrf.mxu0
      %v1528 = vadd.f32 %v437, %v1527
      %1529 = vmatmul.bf16.gmra.mxu0 %v1120
      %v1530 = vpop.f32.mrf.mxu0
      %v1531 = vadd.f32 %v437, %v1530
      %v1532 = vpop.f32.mrf.mxu0
      %v1533 = vadd.f32 %v437, %v1532
      %1534 = vmatmul.bf16.gmra.mxu0 %v1123
      %v1535 = vpop.f32.mrf.mxu0
      %v1536 = vadd.f32 %v437, %v1535
      %v1537 = vpop.f32.mrf.mxu0
      %v1538 = vadd.f32 %v437, %v1537
      %1539 = vmatmul.bf16.gmra.mxu0 %v1126
      %v1540 = vpop.f32.mrf.mxu0
      %v1541 = vadd.f32 %v437, %v1540
      %v1542 = vpop.f32.mrf.mxu0
      %v1543 = vadd.f32 %v437, %v1542
      %1544 = vmatmul.bf16.gmra.mxu0 %v1129
      %v1545 = vpop.f32.mrf.mxu0
      %v1546 = vadd.f32 %v437, %v1545
      %v1547 = vpop.f32.mrf.mxu0
      %v1548 = vadd.f32 %v437, %v1547
      %1549 = vmatmul.bf16.gmra.mxu0 %v1132
      %v1550 = vpop.f32.mrf.mxu0
      %v1551 = vadd.f32 %v437, %v1550
      %v1552 = vpop.f32.mrf.mxu0
      %v1553 = vadd.f32 %v437, %v1552
      %1554 = vmatmul.bf16.gmra.mxu0 %v1135
      %v1555 = vpop.f32.mrf.mxu0
      %v1556 = vadd.f32 %v437, %v1555
      %v1557 = vpop.f32.mrf.mxu0
      %v1558 = vadd.f32 %v437, %v1557
      %1559 = vmatmul.bf16.gmra.mxu0 %v1138
      %v1560 = vpop.f32.mrf.mxu0
      %v1561 = vadd.f32 %v437, %v1560
      %v1562 = vpop.f32.mrf.mxu0
      %v1563 = vadd.f32 %v437, %v1562
      %1564 = vmatmul.bf16.gmra.mxu0 %v1141
      %v1565 = vpop.f32.mrf.mxu0
      %v1566 = vadd.f32 %v437, %v1565
      %v1567 = vpop.f32.mrf.mxu0
      %v1568 = vadd.f32 %v437, %v1567
      %1569 = vmatmul.bf16.gmra.mxu0 %v1144
      %v1570 = vpop.f32.mrf.mxu0
      %v1571 = vadd.f32 %v437, %v1570
      %v1572 = vpop.f32.mrf.mxu0
      %v1573 = vadd.f32 %v437, %v1572
      %1574 = vmatmul.bf16.gmra.mxu0 %v1147
      %v1575 = vpop.f32.mrf.mxu0
      %v1576 = vadd.f32 %v437, %v1575
      %v1577 = vpop.f32.mrf.mxu0
      %v1578 = vadd.f32 %v437, %v1577
      %1579 = vmatmul.bf16.gmra.mxu0 %v1150
      %v1580 = vpop.f32.mrf.mxu0
      %v1581 = vadd.f32 %v437, %v1580
      %v1582 = vpop.f32.mrf.mxu0
      %v1583 = vadd.f32 %v437, %v1582
      %1584 = vmatmul.bf16.gmra.mxu0 %v1153
      %v1585 = vpop.f32.mrf.mxu0
      %v1586 = vadd.f32 %v437, %v1585
      %v1587 = vpop.f32.mrf.mxu0
      %v1588 = vadd.f32 %v437, %v1587
      %1589 = vmatmul.bf16.gmra.mxu0 %v1156
      %v1590 = vpop.f32.mrf.mxu0
      %v1591 = vadd.f32 %v437, %v1590
      %v1592 = vpop.f32.mrf.mxu0
      %v1593 = vadd.f32 %v437, %v1592
      %1594 = vmatmul.bf16.gmra.mxu0 %v1159
      %v1595 = vpop.f32.mrf.mxu0
      %v1596 = vadd.f32 %v437, %v1595
      %v1597 = vpop.f32.mrf.mxu0
      %v1598 = vadd.f32 %v437, %v1597
      %1599 = vmatmul.bf16.gmra.mxu0 %v1162
      %v1600 = vpop.f32.mrf.mxu0
      %v1601 = vadd.f32 %v437, %v1600
      %v1602 = vpop.f32.mrf.mxu0
      %v1603 = vadd.f32 %v437, %v1602
      %1604 = vmatmul.bf16.gmra.mxu0 %v1165
      %v1605 = vpop.f32.mrf.mxu0
      %v1606 = vadd.f32 %v437, %v1605
      %v1607 = vpop.f32.mrf.mxu0
      %v1608 = vadd.f32 %v437, %v1607
      %1609 = vmatmul.bf16.gmra.mxu0 %v1168
      %v1610 = vpop.f32.mrf.mxu0
      %v1611 = vadd.f32 %v437, %v1610
      %v1612 = vpop.f32.mrf.mxu0
      %v1613 = vadd.f32 %v437, %v1612
      %1614 = vmatmul.bf16.gmra.mxu0 %v1171
      %v1615 = vpop.f32.mrf.mxu0
      %v1616 = vadd.f32 %v437, %v1615
      %v1617 = vpop.f32.mrf.mxu0
      %v1618 = vadd.f32 %v437, %v1617
      %1619 = vmatmul.bf16.gmra.mxu0 %v1174
      %v1620 = vpop.f32.mrf.mxu0
      %v1621 = vadd.f32 %v437, %v1620
      %v1622 = vpop.f32.mrf.mxu0
      %v1623 = vadd.f32 %v437, %v1622
      %1624 = vmatmul.bf16.gmra.mxu0 %v1177
      %v1625 = vpop.f32.mrf.mxu0
      %v1626 = vadd.f32 %v437, %v1625
      %v1627 = vpop.f32.mrf.mxu0
      %v1628 = vadd.f32 %v437, %v1627
      %1629 = vmatmul.bf16.gmra.mxu0 %v1180
      %v1630 = vpop.f32.mrf.mxu0
      %v1631 = vadd.f32 %v437, %v1630
      %v1632 = vpop.f32.mrf.mxu0
      %v1633 = vadd.f32 %v437, %v1632
      %1634 = vmatmul.bf16.gmra.mxu0 %v1183
      %v1635 = vpop.f32.mrf.mxu0
      %v1636 = vadd.f32 %v437, %v1635
      %v1637 = vpop.f32.mrf.mxu0
      %v1638 = vadd.f32 %v437, %v1637
      %1639 = vmatmul.bf16.gmra.mxu0 %v1186
      %v1640 = vpop.f32.mrf.mxu0
      %v1641 = vadd.f32 %v437, %v1640
      %v1642 = vpop.f32.mrf.mxu0
      %v1643 = vadd.f32 %v437, %v1642
      %1644 = vmatmul.bf16.gmra.mxu0 %v1189
      %v1645 = vpop.f32.mrf.mxu0
      %v1646 = vadd.f32 %v437, %v1645
      %v1647 = vpop.f32.mrf.mxu0
      %v1648 = vadd.f32 %v437, %v1647
      %1649 = vmatmul.bf16.gmra.mxu0 %v1192
      %v1650 = vpop.f32.mrf.mxu0
      %v1651 = vadd.f32 %v437, %v1650
      %v1652 = vpop.f32.mrf.mxu0
      %v1653 = vadd.f32 %v437, %v1652
      %1654 = vmatmul.bf16.gmra.mxu0 %v1195
      %v1655 = vpop.f32.mrf.mxu0
      %v1656 = vadd.f32 %v437, %v1655
      %v1657 = vpop.f32.mrf.mxu0
      %v1658 = vadd.f32 %v437, %v1657
      %1659 = vmatmul.bf16.gmra.mxu0 %v1198
      %v1660 = vpop.f32.mrf.mxu0
      %v1661 = vadd.f32 %v437, %v1660
      %v1662 = vpop.f32.mrf.mxu0
      %v1663 = vadd.f32 %v437, %v1662
      %1664 = vmatmul.bf16.gmra.mxu0 %v1201
      %v1665 = vpop.f32.mrf.mxu0
      %v1666 = vadd.f32 %v437, %v1665
      %v1667 = vpop.f32.mrf.mxu0
      %v1668 = vadd.f32 %v437, %v1667
      %1669 = vmatmul.bf16.gmra.mxu0 %v1204
      %v1670 = vpop.f32.mrf.mxu0
      %v1671 = vadd.f32 %v437, %v1670
      %v1672 = vpop.f32.mrf.mxu0
      %v1673 = vadd.f32 %v437, %v1672
      %1674 = vmatmul.bf16.gmra.mxu0 %v1207
      %v1675 = vpop.f32.mrf.mxu0
      %v1676 = vadd.f32 %v437, %v1675
      %v1677 = vpop.f32.mrf.mxu0
      %v1678 = vadd.f32 %v437, %v1677
      %1679 = vmatmul.bf16.gmra.mxu0 %v1210
      %v1680 = vpop.f32.mrf.mxu0
      %v1681 = vadd.f32 %v437, %v1680
      %v1682 = vpop.f32.mrf.mxu0
      %v1683 = vadd.f32 %v437, %v1682
      %1684 = vmatmul.bf16.gmra.mxu0 %v1213
      %v1685 = vpop.f32.mrf.mxu0
      %v1686 = vadd.f32 %v437, %v1685
      %v1687 = vpop.f32.mrf.mxu0
      %v1688 = vadd.f32 %v437, %v1687
      %1689 = vmatmul.bf16.gmra.mxu0 %v1216
      %v1690 = vpop.f32.mrf.mxu0
      %v1691 = vadd.f32 %v437, %v1690
      %v1692 = vpop.f32.mrf.mxu0
      %v1693 = vadd.f32 %v437, %v1692
      %1694 = vmatmul.bf16.gmra.mxu0 %v1219
      %v1695 = vpop.f32.mrf.mxu0
      %v1696 = vadd.f32 %v437, %v1695
      %v1697 = vpop.f32.mrf.mxu0
      %v1698 = vadd.f32 %v437, %v1697
      %1699 = vmatmul.bf16.gmra.mxu0 %v1222
      %v1700 = vpop.f32.mrf.mxu0
      %v1701 = vadd.f32 %v437, %v1700
      %v1702 = vpop.f32.mrf.mxu0
      %v1703 = vadd.f32 %v437, %v1702
      %1704 = vmatmul.bf16.gmra.mxu0 %v1225
      %v1705 = vpop.f32.mrf.mxu0
      %v1706 = vadd.f32 %v437, %v1705
      %v1707 = vpop.f32.mrf.mxu0
      %v1708 = vadd.f32 %v437, %v1707
      %1709 = vmatmul.bf16.gmra.mxu0 %v1228
      %v1710 = vpop.f32.mrf.mxu0
      %v1711 = vadd.f32 %v437, %v1710
      %v1712 = vpop.f32.mrf.mxu0
      %v1713 = vadd.f32 %v437, %v1712
      %1714 = vmatmul.bf16.gmra.mxu0 %v1231
      %v1715 = vpop.f32.mrf.mxu0
      %v1716 = vadd.f32 %v437, %v1715
      %v1717 = vpop.f32.mrf.mxu0
      %v1718 = vadd.f32 %v437, %v1717
      %1719 = vmatmul.bf16.gmra.mxu0 %v1234
      %v1720 = vpop.f32.mrf.mxu0
      %v1721 = vadd.f32 %v437, %v1720
      %v1722 = vpop.f32.mrf.mxu0
      %v1723 = vadd.f32 %v437, %v1722
      %1724 = vmatmul.bf16.gmra.mxu0 %v1237
      %v1725 = vpop.f32.mrf.mxu0
      %v1726 = vadd.f32 %v437, %v1725
      %v1727 = vpop.f32.mrf.mxu0
      %v1728 = vadd.f32 %v437, %v1727
      %1729 = vmatmul.bf16.gmra.mxu0 %v1240
      %v1730 = vpop.f32.mrf.mxu0
      %v1731 = vadd.f32 %v437, %v1730
      %v1732 = vpop.f32.mrf.mxu0
      %v1733 = vadd.f32 %v437, %v1732
      %1734 = vmatmul.bf16.gmra.mxu0 %v1243
      %v1735 = vpop.f32.mrf.mxu0
      %v1736 = vadd.f32 %v437, %v1735
      %v1737 = vpop.f32.mrf.mxu0
      %v1738 = vadd.f32 %v437, %v1737
      %1739 = vmatmul.bf16.gmra.mxu0 %v1246
      %v1740 = vpop.f32.mrf.mxu0
      %v1741 = vadd.f32 %v437, %v1740
      %v1742 = vpop.f32.mrf.mxu0
      %v1743 = vadd.f32 %v437, %v1742
      %1744 = vmatmul.bf16.gmra.mxu0 %v1249
      %v1745 = vpop.f32.mrf.mxu0
      %v1746 = vadd.f32 %v437, %v1745
      %v1747 = vpop.f32.mrf.mxu0
      %v1748 = vadd.f32 %v437, %v1747
      %1749 = vmatmul.bf16.gmra.mxu0 %v1252
      %v1750 = vpop.f32.mrf.mxu0
      %v1751 = vadd.f32 %v437, %v1750
      %v1752 = vpop.f32.mrf.mxu0
      %v1753 = vadd.f32 %v437, %v1752
      %1754 = vmatmul.bf16.gmra.mxu0 %v1255
      %v1755 = vpop.f32.mrf.mxu0
      %v1756 = vadd.f32 %v437, %v1755
      %v1757 = vpop.f32.mrf.mxu0
      %v1758 = vadd.f32 %v437, %v1757
      %1759 = vmatmul.bf16.gmra.mxu0 %v1258
      %v1760 = vpop.f32.mrf.mxu0
      %v1761 = vadd.f32 %v437, %v1760
      %v1762 = vpop.f32.mrf.mxu0
      %v1763 = vadd.f32 %v437, %v1762
      %1764 = vmatmul.bf16.gmra.mxu0 %v1261
      %v1765 = vpop.f32.mrf.mxu0
      %v1766 = vadd.f32 %v437, %v1765
      %v1767 = vpop.f32.mrf.mxu0
      %v1768 = vadd.f32 %v437, %v1767
      %1769 = vmatmul.bf16.gmra.mxu0 %v1264
      %v1770 = vpop.f32.mrf.mxu0
      %v1771 = vadd.f32 %v437, %v1770
      %v1772 = vpop.f32.mrf.mxu0
      %v1773 = vadd.f32 %v437, %v1772
      %1774 = vmatmul.bf16.gmra.mxu0 %v1267
      %v1775 = vpop.f32.mrf.mxu0
      %v1776 = vadd.f32 %v437, %v1775
      %v1777 = vpop.f32.mrf.mxu0
      %v1778 = vadd.f32 %v437, %v1777
      %1779 = vmatmul.bf16.gmra.mxu0 %v1270
      %v1780 = vpop.f32.mrf.mxu0
      %v1781 = vadd.f32 %v437, %v1780
      %v1782 = vpop.f32.mrf.mxu0
      %v1783 = vadd.f32 %v437, %v1782
      %1784 = vmatmul.bf16.gmra.mxu0 %v1273
      %v1785 = vpop.f32.mrf.mxu0
      %v1786 = vadd.f32 %v437, %v1785
      %v1787 = vpop.f32.mrf.mxu0
      %v1788 = vadd.f32 %v437, %v1787
      %1789 = vmatmul.bf16.gmra.mxu0 %v1276
      %v1790 = vpop.f32.mrf.mxu0
      %v1791 = vadd.f32 %v437, %v1790
      %v1792 = vpop.f32.mrf.mxu0
      %v1793 = vadd.f32 %v437, %v1792
      %1794 = vmatmul.bf16.gmra.mxu0 %v1279
      %v1795 = vpop.f32.mrf.mxu0
      %v1796 = vadd.f32 %v437, %v1795
      %v1797 = vpop.f32.mrf.mxu0
      %v1798 = vadd.f32 %v437, %v1797
      %1799 = vmatmul.bf16.gmra.mxu0 %v1282
      %v1800 = vpop.f32.mrf.mxu0
      %v1801 = vadd.f32 %v437, %v1800
      %v1802 = vpop.f32.mrf.mxu0
      %v1803 = vadd.f32 %v437, %v1802
      %1804 = vmatmul.bf16.gmra.mxu0 %v1285
      %v1805 = vpop.f32.mrf.mxu0
      %v1806 = vadd.f32 %v437, %v1805
      %v1807 = vpop.f32.mrf.mxu0
      %v1808 = vadd.f32 %v437, %v1807
      %1809 = vmatmul.bf16.gmra.mxu0 %v1288
      %v1810 = vpop.f32.mrf.mxu0
      %v1811 = vadd.f32 %v437, %v1810
      %v1812 = vpop.f32.mrf.mxu0
      %v1813 = vadd.f32 %v437, %v1812
      %1814 = vmatmul.bf16.gmra.mxu0 %v1291
      %v1815 = vpop.f32.mrf.mxu0
      %v1816 = vadd.f32 %v437, %v1815
      %v1817 = vpop.f32.mrf.mxu0
      %v1818 = vadd.f32 %v437, %v1817
      %1819 = vmatmul.bf16.gmra.mxu0 %v1294
      %v1820 = vpop.f32.mrf.mxu0
      %v1821 = vadd.f32 %v437, %v1820
      %v1822 = vpop.f32.mrf.mxu0
      %v1823 = vadd.f32 %v437, %v1822
      %1824 = vmatmul.bf16.gmra.mxu0 %v1297
      %v1825 = vpop.f32.mrf.mxu0
      %v1826 = vadd.f32 %v437, %v1825
      %v1827 = vpop.f32.mrf.mxu0
      %v1828 = vadd.f32 %v437, %v1827
      %1829 = vmatmul.bf16.gmra.mxu0 %v1300
      %v1830 = vpop.f32.mrf.mxu0
      %v1831 = vadd.f32 %v437, %v1830
      %v1832 = vpop.f32.mrf.mxu0
      %v1833 = vadd.f32 %v437, %v1832
      %1834 = vmatmul.bf16.gmra.mxu0 %v1303
      %v1835 = vpop.f32.mrf.mxu0
      %v1836 = vadd.f32 %v437, %v1835
      %v1837 = vpop.f32.mrf.mxu0
      %v1838 = vadd.f32 %v437, %v1837
      %1839 = vmatmul.bf16.gmra.mxu0 %v1306
      %v1840 = vpop.f32.mrf.mxu0
      %v1841 = vadd.f32 %v437, %v1840
      %v1842 = vpop.f32.mrf.mxu0
      %v1843 = vadd.f32 %v437, %v1842
      %1844 = vmatmul.bf16.gmra.mxu0 %v1309
      %v1845 = vpop.f32.mrf.mxu0
      %v1846 = vadd.f32 %v437, %v1845
      %v1847 = vpop.f32.mrf.mxu0
      %v1848 = vadd.f32 %v437, %v1847
      %1849 = vmatmul.bf16.gmra.mxu0 %v1312
      %v1850 = vpop.f32.mrf.mxu0
      %v1851 = vadd.f32 %v437, %v1850
      %v1852 = vpop.f32.mrf.mxu0
      %v1853 = vadd.f32 %v437, %v1852
      %1854 = vmatmul.bf16.gmra.mxu0 %v1315
      %v1855 = vpop.f32.mrf.mxu0
      %v1856 = vadd.f32 %v437, %v1855
      %v1857 = vpop.f32.mrf.mxu0
      %v1858 = vadd.f32 %v437, %v1857
      %1859 = vmatmul.bf16.gmra.mxu0 %v1318
      %v1860 = vpop.f32.mrf.mxu0
      %v1861 = vadd.f32 %v437, %v1860
      %v1862 = vpop.f32.mrf.mxu0
      %v1863 = vadd.f32 %v437, %v1862
      %1864 = vmatmul.bf16.gmra.mxu0 %v1321
      %v1865 = vpop.f32.mrf.mxu0
      %v1866 = vadd.f32 %v437, %v1865
      %v1867 = vpop.f32.mrf.mxu0
      %v1868 = vadd.f32 %v437, %v1867
      %1869 = vmatmul.bf16.gmra.mxu0 %v1324
      %v1870 = vpop.f32.mrf.mxu0
      %v1871 = vadd.f32 %v437, %v1870
      %v1872 = vpop.f32.mrf.mxu0
      %v1873 = vadd.f32 %v437, %v1872
      %1874 = vmatmul.bf16.gmra.mxu0 %v1327
      %v1875 = vpop.f32.mrf.mxu0
      %v1876 = vadd.f32 %v437, %v1875
      %v1877 = vpop.f32.mrf.mxu0
      %v1878 = vadd.f32 %v437, %v1877
      %1879 = vmatmul.bf16.gmra.mxu0 %v1330
      %v1880 = vpop.f32.mrf.mxu0
      %v1881 = vadd.f32 %v437, %v1880
      %v1882 = vpop.f32.mrf.mxu0
      %v1883 = vadd.f32 %v437, %v1882
      %1884 = vmatmul.bf16.gmra.mxu0 %v1333
      %v1885 = vpop.f32.mrf.mxu0
      %v1886 = vadd.f32 %v437, %v1885
      %v1887 = vpop.f32.mrf.mxu0
      %v1888 = vadd.f32 %v437, %v1887
      %1889 = vmatmul.bf16.gmra.mxu0 %v1336
      %v1890 = vpop.f32.mrf.mxu0
      %v1891 = vadd.f32 %v437, %v1890
      %v1892 = vpop.f32.mrf.mxu0
      %v1893 = vadd.f32 %v437, %v1892
      %1894 = vmatmul.bf16.gmra.mxu0 %v1339
      %v1895 = vpop.f32.mrf.mxu0
      %v1896 = vadd.f32 %v437, %v1895
      %v1897 = vpop.f32.mrf.mxu0
      %v1898 = vadd.f32 %v437, %v1897
      %1899 = vmatmul.bf16.gmra.mxu0 %v1342
      %v1900 = vpop.f32.mrf.mxu0
      %v1901 = vadd.f32 %v437, %v1900
      %v1902 = vpop.f32.mrf.mxu0
      %v1903 = vadd.f32 %v437, %v1902
      %1904 = vmatmul.bf16.gmra.mxu0 %v1345
      %v1905 = vpop.f32.mrf.mxu0
      %v1906 = vadd.f32 %v437, %v1905
      %v1907 = vpop.f32.mrf.mxu0
      %v1908 = vadd.f32 %v437, %v1907
      %1909 = vmatmul.bf16.gmra.mxu0 %v1348
      %v1910 = vpop.f32.mrf.mxu0
      %v1911 = vadd.f32 %v437, %v1910
      %v1912 = vpop.f32.mrf.mxu0
      %v1913 = vadd.f32 %v437, %v1912
      %1914 = vmatmul.bf16.gmra.mxu0 %v1351
      %v1915 = vpop.f32.mrf.mxu0
      %v1916 = vadd.f32 %v437, %v1915
      %v1917 = vpop.f32.mrf.mxu0
      %v1918 = vadd.f32 %v437, %v1917
      %1919 = vmatmul.bf16.gmra.mxu0 %v1354
      %v1920 = vpop.f32.mrf.mxu0
      %v1921 = vadd.f32 %v437, %v1920
      %v1922 = vpop.f32.mrf.mxu0
      %v1923 = vadd.f32 %v437, %v1922
      %1924 = vmatmul.bf16.gmra.mxu0 %v1357
      %v1925 = vpop.f32.mrf.mxu0
      %v1926 = vadd.f32 %v437, %v1925
      %v1927 = vpop.f32.mrf.mxu0
      %v1928 = vadd.f32 %v437, %v1927
      %1929 = vmatmul.bf16.gmra.mxu0 %v1360
      %v1930 = vpop.f32.mrf.mxu0
      %v1931 = vadd.f32 %v437, %v1930
      %v1932 = vpop.f32.mrf.mxu0
      %v1933 = vadd.f32 %v437, %v1932
      %1934 = vmatmul.bf16.gmra.mxu0 %v1363
      %v1935 = vpop.f32.mrf.mxu0
      %v1936 = vadd.f32 %v437, %v1935
      %v1937 = vpop.f32.mrf.mxu0
      %v1938 = vadd.f32 %v437, %v1937
      %1939 = vmatmul.bf16.gmra.mxu0 %v1366
      %v1940 = vpop.f32.mrf.mxu0
      %v1941 = vadd.f32 %v437, %v1940
      %v1942 = vpop.f32.mrf.mxu0
      %v1943 = vadd.f32 %v437, %v1942
      %1944 = vmatmul.bf16.gmra.mxu0 %v1369
      %v1945 = vpop.f32.mrf.mxu0
      %v1946 = vadd.f32 %v437, %v1945
      %v1947 = vpop.f32.mrf.mxu0
      %v1948 = vadd.f32 %v437, %v1947
      %1949 = vmatmul.bf16.gmra.mxu0 %v1372
      %v1950 = vpop.f32.mrf.mxu0
      %v1951 = vadd.f32 %v437, %v1950
      %v1952 = vpop.f32.mrf.mxu0
      %v1953 = vadd.f32 %v437, %v1952
      %1954 = vmatmul.bf16.gmra.mxu0 %v1375
      %v1955 = vpop.f32.mrf.mxu0
      %v1956 = vadd.f32 %v437, %v1955
      %v1957 = vpop.f32.mrf.mxu0
      %v1958 = vadd.f32 %v437, %v1957
      %1959 = vmatmul.bf16.gmra.mxu0 %v1378
      %v1960 = vpop.f32.mrf.mxu0
      %v1961 = vadd.f32 %v437, %v1960
      %v1962 = vpop.f32.mrf.mxu0
      %v1963 = vadd.f32 %v437, %v1962
      %1964 = vmatmul.bf16.gmra.mxu0 %v1381
      %v1965 = vpop.f32.mrf.mxu0
      %v1966 = vadd.f32 %v437, %v1965
      %v1967 = vpop.f32.mrf.mxu0
      %v1968 = vadd.f32 %v437, %v1967
      %1969 = vmatmul.bf16.gmra.mxu0 %v1384
      %v1970 = vpop.f32.mrf.mxu0
      %v1971 = vadd.f32 %v437, %v1970
      %v1972 = vpop.f32.mrf.mxu0
      %v1973 = vadd.f32 %v437, %v1972
      %1974 = vmatmul.bf16.gmra.mxu0 %v1387
      %v1975 = vpop.f32.mrf.mxu0
      %v1976 = vadd.f32 %v437, %v1975
      %v1977 = vpop.f32.mrf.mxu0
      %v1978 = vadd.f32 %v437, %v1977
      %1979 = vmatmul.bf16.gmra.mxu0 %v1390
      %v1980 = vpop.f32.mrf.mxu0
      %v1981 = vadd.f32 %v437, %v1980
      %v1982 = vpop.f32.mrf.mxu0
      %v1983 = vadd.f32 %v437, %v1982
      %1984 = vmatmul.bf16.gmra.mxu0 %v1393
      %v1985 = vpop.f32.mrf.mxu0
      %v1986 = vadd.f32 %v437, %v1985
      %v1987 = vpop.f32.mrf.mxu0
      %v1988 = vadd.f32 %v437, %v1987
      %1989 = vmatmul.bf16.gmra.mxu0 %v1396
      %v1990 = vpop.f32.mrf.mxu0
      %v1991 = vadd.f32 %v437, %v1990
      %v1992 = vpop.f32.mrf.mxu0
      %v1993 = vadd.f32 %v437, %v1992
      %1994 = vmatmul.bf16.gmra.mxu0 %v1399
      %v1995 = vpop.f32.mrf.mxu0
      %v1996 = vadd.f32 %v437, %v1995
      %v1997 = vpop.f32.mrf.mxu0
      %v1998 = vadd.f32 %v437, %v1997
      %1999 = vmatmul.bf16.gmra.mxu0 %v1402
      %v2000 = vpop.f32.mrf.mxu0
      %v2001 = vadd.f32 %v437, %v2000
      %v2002 = vpop.f32.mrf.mxu0
      %v2003 = vadd.f32 %v437, %v2002
      %2004 = vmatmul.bf16.gmra.mxu0 %v1405
      %v2005 = vpop.f32.mrf.mxu0
      %v2006 = vadd.f32 %v437, %v2005
      %v2007 = vpop.f32.mrf.mxu0
      %v2008 = vadd.f32 %v437, %v2007
      %2009 = vmatmul.bf16.gmra.mxu0 %v1408
      %v2010 = vpop.f32.mrf.mxu0
      %v2011 = vadd.f32 %v437, %v2010
      %v2012 = vpop.f32.mrf.mxu0
      %v2013 = vadd.f32 %v437, %v2012
      %2014 = vmatmul.bf16.gmra.mxu0 %v1411
      %v2015 = vpop.f32.mrf.mxu0
      %v2016 = vadd.f32 %v437, %v2015
      %v2017 = vpop.f32.mrf.mxu0
      %v2018 = vadd.f32 %v437, %v2017
      %2019 = vmatmul.bf16.gmra.mxu0 %v1414
      %v2020 = vpop.f32.mrf.mxu0
      %v2021 = vadd.f32 %v437, %v2020
      %v2022 = vpop.f32.mrf.mxu0
      %v2023 = vadd.f32 %v437, %v2022
      %2024 = vmatmul.bf16.gmra.mxu0 %v1417
      %v2025 = vpop.f32.mrf.mxu0
      %v2026 = vadd.f32 %v437, %v2025
      %v2027 = vpop.f32.mrf.mxu0
      %v2028 = vadd.f32 %v437, %v2027
      %2029 = vmatmul.bf16.gmra.mxu0 %v1420
      %v2030 = vpop.f32.mrf.mxu0
      %v2031 = vadd.f32 %v437, %v2030
      %v2032 = vpop.f32.mrf.mxu0
      %v2033 = vadd.f32 %v437, %v2032
      %2034 = vmatmul.bf16.gmra.mxu0 %v1423
      %v2035 = vpop.f32.mrf.mxu0
      %v2036 = vadd.f32 %v437, %v2035
      %v2037 = vpop.f32.mrf.mxu0
      %v2038 = vadd.f32 %v437, %v2037
      %2039 = vmatmul.bf16.gmra.mxu0 %v1426
      %v2040 = vpop.f32.mrf.mxu0
      %v2041 = vadd.f32 %v437, %v2040
      %v2042 = vpop.f32.mrf.mxu0
      %v2043 = vadd.f32 %v437, %v2042
      %2044 = vmatmul.bf16.gmra.mxu0 %v1429
      %v2045 = vpop.f32.mrf.mxu0
      %v2046 = vadd.f32 %v437, %v2045
      %v2047 = vpop.f32.mrf.mxu0
      %v2048 = vadd.f32 %v437, %v2047
      %2049 = vmatmul.bf16.gmra.mxu0 %v1432
      %v2050 = vpop.f32.mrf.mxu0
      %v2051 = vadd.f32 %v437, %v2050
      %v2052 = vpop.f32.mrf.mxu0
      %v2053 = vadd.f32 %v437, %v2052
      %2054 = vmatmul.bf16.gmra.mxu0 %v1435
      %v2055 = vpop.f32.mrf.mxu0
      %v2056 = vadd.f32 %v437, %v2055
      %v2057 = vpop.f32.mrf.mxu0
      %v2058 = vadd.f32 %v437, %v2057
      %2059 = vmatmul.bf16.gmra.mxu0 %v1438
      %v2060 = vpop.f32.mrf.mxu0
      %v2061 = vadd.f32 %v437, %v2060
      %v2062 = vpop.f32.mrf.mxu0
      %v2063 = vadd.f32 %v437, %v2062
      %2064 = vmatmul.bf16.gmra.mxu0 %v1441
      %v2065 = vpop.f32.mrf.mxu0
      %v2066 = vadd.f32 %v437, %v2065
      %v2067 = vpop.f32.mrf.mxu0
      %v2068 = vadd.f32 %v437, %v2067
      %2069 = vmatmul.bf16.gmra.mxu0 %v1444
      %v2070 = vpop.f32.mrf.mxu0
      %v2071 = vadd.f32 %v437, %v2070
      %v2072 = vpop.f32.mrf.mxu0
      %v2073 = vadd.f32 %v437, %v2072
      %2074 = vmatmul.bf16.gmra.mxu0 %v1447
      %v2075 = vpop.f32.mrf.mxu0
      %v2076 = vadd.f32 %v437, %v2075
      %v2077 = vpop.f32.mrf.mxu0
      %v2078 = vadd.f32 %v437, %v2077
      %2079 = vmatmul.bf16.gmra.mxu0 %v1450
      %v2080 = vpop.f32.mrf.mxu0
      %v2081 = vadd.f32 %v437, %v2080
      %v2082 = vpop.f32.mrf.mxu0
      %v2083 = vadd.f32 %v437, %v2082
      %2084 = vmatmul.bf16.gmra.mxu0 %v1453
      %v2085 = vpop.f32.mrf.mxu0
      %v2086 = vadd.f32 %v437, %v2085
      %v2087 = vpop.f32.mrf.mxu0
      %v2088 = vadd.f32 %v437, %v2087
      %2089 = vmatmul.bf16.gmra.mxu0 %v1456
      %v2090 = vpop.f32.mrf.mxu0
      %v2091 = vadd.f32 %v437, %v2090
      %v2092 = vpop.f32.mrf.mxu0
      %v2093 = vadd.f32 %v437, %v2092
      %2094 = vmatmul.bf16.gmra.mxu0 %v1459
      %v2095 = vpop.f32.mrf.mxu0
      %v2096 = vadd.f32 %v437, %v2095
      %v2097 = vpop.f32.mrf.mxu0
      %v2098 = vadd.f32 %v437, %v2097
      %2099 = vmatmul.bf16.gmra.mxu0 %v1462
      %v2100 = vpop.f32.mrf.mxu0
      %v2101 = vadd.f32 %v437, %v2100
      %v2102 = vpop.f32.mrf.mxu0
      %v2103 = vadd.f32 %v437, %v2102
      %2104 = vmatmul.bf16.gmra.mxu0 %v1465
      %v2105 = vpop.f32.mrf.mxu0
      %v2106 = vadd.f32 %v437, %v2105
      %v2107 = vpop.f32.mrf.mxu0
      %v2108 = vadd.f32 %v437, %v2107
      %2109 = vmatmul.bf16.gmra.mxu0 %v1468
      %v2110 = vpop.f32.mrf.mxu0
      %v2111 = vadd.f32 %v437, %v2110
      %v2112 = vpop.f32.mrf.mxu0
      %v2113 = vadd.f32 %v437, %v2112
      %2114 = vmatmul.bf16.gmra.mxu0 %v1471
      %v2115 = vpop.f32.mrf.mxu0
      %v2116 = vadd.f32 %v437, %v2115
      %v2117 = vpop.f32.mrf.mxu0
      %v2118 = vadd.f32 %v437, %v2117
      %2119 = vmatmul.bf16.gmra.mxu0 %v1474
      %v2120 = vpop.f32.mrf.mxu0
      %v2121 = vadd.f32 %v437, %v2120
      %v2122 = vpop.f32.mrf.mxu0
      %v2123 = vadd.f32 %v437, %v2122
      %2124 = vdwg.mxu0
      %v2125 = vmax.f32 %v1486, 0.0
      %v2126 = vmax.f32 %v1488, 0.0
      %v2127 = vmax.f32 %v1491, 0.0
      %v2128 = vmax.f32 %v1493, 0.0
      %v2129 = vmax.f32 %v1496, 0.0
      %v2130 = vmax.f32 %v1498, 0.0
      %v2131 = vmax.f32 %v1501, 0.0
      %v2132 = vmax.f32 %v1503, 0.0
      %v2133 = vmax.f32 %v1506, 0.0
      %v2134 = vmax.f32 %v1508, 0.0
      %v2135 = vmax.f32 %v1511, 0.0
      %v2136 = vmax.f32 %v1513, 0.0
      %v2137 = vmax.f32 %v1516, 0.0
      %v2138 = vmax.f32 %v1518, 0.0
      %v2139 = vmax.f32 %v1521, 0.0
      %v2140 = vmax.f32 %v1523, 0.0
      %v2141 = vmax.f32 %v1526, 0.0
      %v2142 = vmax.f32 %v1528, 0.0
      %v2143 = vmax.f32 %v1531, 0.0
      %v2144 = vmax.f32 %v1533, 0.0
      %v2145 = vmax.f32 %v1536, 0.0
      %v2146 = vmax.f32 %v1538, 0.0
      %v2147 = vmax.f32 %v1541, 0.0
      %v2148 = vmax.f32 %v1543, 0.0
      %v2149 = vmax.f32 %v1546, 0.0
      %v2150 = vmax.f32 %v1548, 0.0
      %v2151 = vmax.f32 %v1551, 0.0
      %v2152 = vmax.f32 %v1553, 0.0
      %v2153 = vmax.f32 %v1556, 0.0
      %v2154 = vmax.f32 %v1558, 0.0
      %v2155 = vmax.f32 %v1561, 0.0
      %v2156 = vmax.f32 %v1563, 0.0
      %v2157 = vmax.f32 %v1566, 0.0
      %v2158 = vmax.f32 %v1568, 0.0
      %v2159 = vmax.f32 %v1571, 0.0
      %v2160 = vmax.f32 %v1573, 0.0
      %v2161 = vmax.f32 %v1576, 0.0
      %v2162 = vmax.f32 %v1578, 0.0
      %v2163 = vmax.f32 %v1581, 0.0
      %v2164 = vmax.f32 %v1583, 0.0
      %v2165 = vmax.f32 %v1586, 0.0
      %v2166 = vmax.f32 %v1588, 0.0
      %v2167 = vmax.f32 %v1591, 0.0
      %v2168 = vmax.f32 %v1593, 0.0
      %v2169 = vmax.f32 %v1596, 0.0
      %v2170 = vmax.f32 %v1598, 0.0
      %v2171 = vmax.f32 %v1601, 0.0
      %v2172 = vmax.f32 %v1603, 0.0
      %v2173 = vmax.f32 %v1606, 0.0
      %v2174 = vmax.f32 %v1608, 0.0
      %v2175 = vmax.f32 %v1611, 0.0
      %v2176 = vmax.f32 %v1613, 0.0
      %v2177 = vmax.f32 %v1616, 0.0
      %v2178 = vmax.f32 %v1618, 0.0
      %v2179 = vmax.f32 %v1621, 0.0
      %v2180 = vmax.f32 %v1623, 0.0
      %v2181 = vmax.f32 %v1626, 0.0
      %v2182 = vmax.f32 %v1628, 0.0
      %v2183 = vmax.f32 %v1631, 0.0
      %v2184 = vmax.f32 %v1633, 0.0
      %v2185 = vmax.f32 %v1636, 0.0
      %v2186 = vmax.f32 %v1638, 0.0
      %v2187 = vmax.f32 %v1641, 0.0
      %v2188 = vmax.f32 %v1643, 0.0
      %v2189 = vmax.f32 %v1646, 0.0
      %v2190 = vmax.f32 %v1648, 0.0
      %v2191 = vmax.f32 %v1651, 0.0
      %v2192 = vmax.f32 %v1653, 0.0
      %v2193 = vmax.f32 %v1656, 0.0
      %v2194 = vmax.f32 %v1658, 0.0
      %v2195 = vmax.f32 %v1661, 0.0
      %v2196 = vmax.f32 %v1663, 0.0
      %v2197 = vmax.f32 %v1666, 0.0
      %v2198 = vmax.f32 %v1668, 0.0
      %v2199 = vmax.f32 %v1671, 0.0
      %v2200 = vmax.f32 %v1673, 0.0
      %v2201 = vmax.f32 %v1676, 0.0
      %v2202 = vmax.f32 %v1678, 0.0
      %v2203 = vmax.f32 %v1681, 0.0
      %v2204 = vmax.f32 %v1683, 0.0
      %v2205 = vmax.f32 %v1686, 0.0
      %v2206 = vmax.f32 %v1688, 0.0
      %v2207 = vmax.f32 %v1691, 0.0
      %v2208 = vmax.f32 %v1693, 0.0
      %v2209 = vmax.f32 %v1696, 0.0
      %v2210 = vmax.f32 %v1698, 0.0
      %v2211 = vmax.f32 %v1701, 0.0
      %v2212 = vmax.f32 %v1703, 0.0
      %v2213 = vmax.f32 %v1706, 0.0
      %v2214 = vmax.f32 %v1708, 0.0
      %v2215 = vmax.f32 %v1711, 0.0
      %v2216 = vmax.f32 %v1713, 0.0
      %v2217 = vmax.f32 %v1716, 0.0
      %v2218 = vmax.f32 %v1718, 0.0
      %v2219 = vmax.f32 %v1721, 0.0
      %v2220 = vmax.f32 %v1723, 0.0
      %v2221 = vmax.f32 %v1726, 0.0
      %v2222 = vmax.f32 %v1728, 0.0
      %v2223 = vmax.f32 %v1731, 0.0
      %v2224 = vmax.f32 %v1733, 0.0
      %v2225 = vmax.f32 %v1736, 0.0
      %v2226 = vmax.f32 %v1738, 0.0
      %v2227 = vmax.f32 %v1741, 0.0
      %v2228 = vmax.f32 %v1743, 0.0
      %v2229 = vmax.f32 %v1746, 0.0
      %v2230 = vmax.f32 %v1748, 0.0
      %v2231 = vmax.f32 %v1751, 0.0
      %v2232 = vmax.f32 %v1753, 0.0
      %v2233 = vmax.f32 %v1756, 0.0
      %v2234 = vmax.f32 %v1758, 0.0
      %v2235 = vmax.f32 %v1761, 0.0
      %v2236 = vmax.f32 %v1763, 0.0
      %v2237 = vmax.f32 %v1766, 0.0
      %v2238 = vmax.f32 %v1768, 0.0
      %v2239 = vmax.f32 %v1771, 0.0
      %v2240 = vmax.f32 %v1773, 0.0
      %v2241 = vmax.f32 %v1776, 0.0
      %v2242 = vmax.f32 %v1778, 0.0
      %v2243 = vmax.f32 %v1781, 0.0
      %v2244 = vmax.f32 %v1783, 0.0
      %v2245 = vmax.f32 %v1786, 0.0
      %v2246 = vmax.f32 %v1788, 0.0
      %v2247 = vmax.f32 %v1791, 0.0
      %v2248 = vmax.f32 %v1793, 0.0
      %v2249 = vmax.f32 %v1796, 0.0
      %v2250 = vmax.f32 %v1798, 0.0
      %v2251 = vmax.f32 %v1801, 0.0
      %v2252 = vmax.f32 %v1803, 0.0
      %v2253 = vmax.f32 %v1806, 0.0
      %v2254 = vmax.f32 %v1808, 0.0
      %v2255 = vmax.f32 %v1811, 0.0
      %v2256 = vmax.f32 %v1813, 0.0
      %v2257 = vmax.f32 %v1816, 0.0
      %v2258 = vmax.f32 %v1818, 0.0
      %v2259 = vmax.f32 %v1821, 0.0
      %v2260 = vmax.f32 %v1823, 0.0
      %v2261 = vmax.f32 %v1826, 0.0
      %v2262 = vmax.f32 %v1828, 0.0
      %v2263 = vmax.f32 %v1831, 0.0
      %v2264 = vmax.f32 %v1833, 0.0
      %v2265 = vmax.f32 %v1836, 0.0
      %v2266 = vmax.f32 %v1838, 0.0
      %v2267 = vmax.f32 %v1841, 0.0
      %v2268 = vmax.f32 %v1843, 0.0
      %v2269 = vmax.f32 %v1846, 0.0
      %v2270 = vmax.f32 %v1848, 0.0
      %v2271 = vmax.f32 %v1851, 0.0
      %v2272 = vmax.f32 %v1853, 0.0
      %v2273 = vmax.f32 %v1856, 0.0
      %v2274 = vmax.f32 %v1858, 0.0
      %v2275 = vmax.f32 %v1861, 0.0
      %v2276 = vmax.f32 %v1863, 0.0
      %v2277 = vmax.f32 %v1866, 0.0
      %v2278 = vmax.f32 %v1868, 0.0
      %v2279 = vmax.f32 %v1871, 0.0
      %v2280 = vmax.f32 %v1873, 0.0
      %v2281 = vmax.f32 %v1876, 0.0
      %v2282 = vmax.f32 %v1878, 0.0
      %v2283 = vmax.f32 %v1881, 0.0
      %v2284 = vmax.f32 %v1883, 0.0
      %v2285 = vmax.f32 %v1886, 0.0
      %v2286 = vmax.f32 %v1888, 0.0
      %v2287 = vmax.f32 %v1891, 0.0
      %v2288 = vmax.f32 %v1893, 0.0
      %v2289 = vmax.f32 %v1896, 0.0
      %v2290 = vmax.f32 %v1898, 0.0
      %v2291 = vmax.f32 %v1901, 0.0
      %v2292 = vmax.f32 %v1903, 0.0
      %v2293 = vmax.f32 %v1906, 0.0
      %v2294 = vmax.f32 %v1908, 0.0
      %v2295 = vmax.f32 %v1911, 0.0
      %v2296 = vmax.f32 %v1913, 0.0
      %v2297 = vmax.f32 %v1916, 0.0
      %v2298 = vmax.f32 %v1918, 0.0
      %v2299 = vmax.f32 %v1921, 0.0
      %v2300 = vmax.f32 %v1923, 0.0
      %v2301 = vmax.f32 %v1926, 0.0
      %v2302 = vmax.f32 %v1928, 0.0
      %v2303 = vmax.f32 %v1931, 0.0
      %v2304 = vmax.f32 %v1933, 0.0
      %v2305 = vmax.f32 %v1936, 0.0
      %v2306 = vmax.f32 %v1938, 0.0
      %v2307 = vmax.f32 %v1941, 0.0
      %v2308 = vmax.f32 %v1943, 0.0
      %v2309 = vmax.f32 %v1946, 0.0
      %v2310 = vmax.f32 %v1948, 0.0
      %v2311 = vmax.f32 %v1951, 0.0
      %v2312 = vmax.f32 %v1953, 0.0
      %v2313 = vmax.f32 %v1956, 0.0
      %v2314 = vmax.f32 %v1958, 0.0
      %v2315 = vmax.f32 %v1961, 0.0
      %v2316 = vmax.f32 %v1963, 0.0
      %v2317 = vmax.f32 %v1966, 0.0
      %v2318 = vmax.f32 %v1968, 0.0
      %v2319 = vmax.f32 %v1971, 0.0
      %v2320 = vmax.f32 %v1973, 0.0
      %v2321 = vmax.f32 %v1976, 0.0
      %v2322 = vmax.f32 %v1978, 0.0
      %v2323 = vmax.f32 %v1981, 0.0
      %v2324 = vmax.f32 %v1983, 0.0
      %v2325 = vmax.f32 %v1986, 0.0
      %v2326 = vmax.f32 %v1988, 0.0
      %v2327 = vmax.f32 %v1991, 0.0
      %v2328 = vmax.f32 %v1993, 0.0
      %v2329 = vmax.f32 %v1996, 0.0
      %v2330 = vmax.f32 %v1998, 0.0
      %v2331 = vmax.f32 %v2001, 0.0
      %v2332 = vmax.f32 %v2003, 0.0
      %v2333 = vmax.f32 %v2006, 0.0
      %v2334 = vmax.f32 %v2008, 0.0
      %v2335 = vmax.f32 %v2011, 0.0
      %v2336 = vmax.f32 %v2013, 0.0
      %v2337 = vmax.f32 %v2016, 0.0
      %v2338 = vmax.f32 %v2018, 0.0
      %v2339 = vmax.f32 %v2021, 0.0
      %v2340 = vmax.f32 %v2023, 0.0
      %v2341 = vmax.f32 %v2026, 0.0
      %v2342 = vmax.f32 %v2028, 0.0
      %v2343 = vmax.f32 %v2031, 0.0
      %v2344 = vmax.f32 %v2033, 0.0
      %v2345 = vmax.f32 %v2036, 0.0
      %v2346 = vmax.f32 %v2038, 0.0
      %v2347 = vmax.f32 %v2041, 0.0
      %v2348 = vmax.f32 %v2043, 0.0
      %v2349 = vmax.f32 %v2046, 0.0
      %v2350 = vmax.f32 %v2048, 0.0
      %v2351 = vmax.f32 %v2051, 0.0
      %v2352 = vmax.f32 %v2053, 0.0
      %v2353 = vmax.f32 %v2056, 0.0
      %v2354 = vmax.f32 %v2058, 0.0
      %v2355 = vmax.f32 %v2061, 0.0
      %v2356 = vmax.f32 %v2063, 0.0
      %v2357 = vmax.f32 %v2066, 0.0
      %v2358 = vmax.f32 %v2068, 0.0
      %v2359 = vmax.f32 %v2071, 0.0
      %v2360 = vmax.f32 %v2073, 0.0
      %v2361 = vmax.f32 %v2076, 0.0
      %v2362 = vmax.f32 %v2078, 0.0
      %v2363 = vmax.f32 %v2081, 0.0
      %v2364 = vmax.f32 %v2083, 0.0
      %v2365 = vmax.f32 %v2086, 0.0
      %v2366 = vmax.f32 %v2088, 0.0
      %v2367 = vmax.f32 %v2091, 0.0
      %v2368 = vmax.f32 %v2093, 0.0
      %v2369 = vmax.f32 %v2096, 0.0
      %v2370 = vmax.f32 %v2098, 0.0
      %v2371 = vmax.f32 %v2101, 0.0
      %v2372 = vmax.f32 %v2103, 0.0
      %v2373 = vmax.f32 %v2106, 0.0
      %v2374 = vmax.f32 %v2108, 0.0
      %v2375 = vmax.f32 %v2111, 0.0
      %v2376 = vmax.f32 %v2113, 0.0
      %v2377 = vmax.f32 %v2116, 0.0
      %v2378 = vmax.f32 %v2118, 0.0
      %v2379 = vmax.f32 %v2121, 0.0
      %v2380 = vmax.f32 %v2123, 0.0
      %v2381 = vpack.c.bf16 %v2125, %v2125
      %v2382 = vpack.c.bf16 %v2126, %v2126
      %v2383 = vpack.c.bf16 %v2127, %v2127
      %v2384 = vpack.c.bf16 %v2128, %v2128
      %v2385 = vpack.c.bf16 %v2129, %v2129
      %v2386 = vpack.c.bf16 %v2130, %v2130
      %v2387 = vpack.c.bf16 %v2131, %v2131
      %v2388 = vpack.c.bf16 %v2132, %v2132
      %v2389 = vpack.c.bf16 %v2133, %v2133
      %v2390 = vpack.c.bf16 %v2134, %v2134
      %v2391 = vpack.c.bf16 %v2135, %v2135
      %v2392 = vpack.c.bf16 %v2136, %v2136
      %v2393 = vpack.c.bf16 %v2137, %v2137
      %v2394 = vpack.c.bf16 %v2138, %v2138
      %v2395 = vpack.c.bf16 %v2139, %v2139
      %v2396 = vpack.c.bf16 %v2140, %v2140
      %v2397 = vpack.c.bf16 %v2141, %v2141
      %v2398 = vpack.c.bf16 %v2142, %v2142
      %v2399 = vpack.c.bf16 %v2143, %v2143
      %v2400 = vpack.c.bf16 %v2144, %v2144
      %v2401 = vpack.c.bf16 %v2145, %v2145
      %v2402 = vpack.c.bf16 %v2146, %v2146
      %v2403 = vpack.c.bf16 %v2147, %v2147
      %v2404 = vpack.c.bf16 %v2148, %v2148
      %v2405 = vpack.c.bf16 %v2149, %v2149
      %v2406 = vpack.c.bf16 %v2150, %v2150
      %v2407 = vpack.c.bf16 %v2151, %v2151
      %v2408 = vpack.c.bf16 %v2152, %v2152
      %v2409 = vpack.c.bf16 %v2153, %v2153
      %v2410 = vpack.c.bf16 %v2154, %v2154
      %v2411 = vpack.c.bf16 %v2155, %v2155
      %v2412 = vpack.c.bf16 %v2156, %v2156
      %v2413 = vpack.c.bf16 %v2157, %v2157
      %v2414 = vpack.c.bf16 %v2158, %v2158
      %v2415 = vpack.c.bf16 %v2159, %v2159
      %v2416 = vpack.c.bf16 %v2160, %v2160
      %v2417 = vpack.c.bf16 %v2161, %v2161
      %v2418 = vpack.c.bf16 %v2162, %v2162
      %v2419 = vpack.c.bf16 %v2163, %v2163
      %v2420 = vpack.c.bf16 %v2164, %v2164
      %v2421 = vpack.c.bf16 %v2165, %v2165
      %v2422 = vpack.c.bf16 %v2166, %v2166
      %v2423 = vpack.c.bf16 %v2167, %v2167
      %v2424 = vpack.c.bf16 %v2168, %v2168
      %v2425 = vpack.c.bf16 %v2169, %v2169
      %v2426 = vpack.c.bf16 %v2170, %v2170
      %v2427 = vpack.c.bf16 %v2171, %v2171
      %v2428 = vpack.c.bf16 %v2172, %v2172
      %v2429 = vpack.c.bf16 %v2173, %v2173
      %v2430 = vpack.c.bf16 %v2174, %v2174
      %v2431 = vpack.c.bf16 %v2175, %v2175
      %v2432 = vpack.c.bf16 %v2176, %v2176
      %v2433 = vpack.c.bf16 %v2177, %v2177
      %v2434 = vpack.c.bf16 %v2178, %v2178
      %v2435 = vpack.c.bf16 %v2179, %v2179
      %v2436 = vpack.c.bf16 %v2180, %v2180
      %v2437 = vpack.c.bf16 %v2181, %v2181
      %v2438 = vpack.c.bf16 %v2182, %v2182
      %v2439 = vpack.c.bf16 %v2183, %v2183
      %v2440 = vpack.c.bf16 %v2184, %v2184
      %v2441 = vpack.c.bf16 %v2185, %v2185
      %v2442 = vpack.c.bf16 %v2186, %v2186
      %v2443 = vpack.c.bf16 %v2187, %v2187
      %v2444 = vpack.c.bf16 %v2188, %v2188
      %v2445 = vpack.c.bf16 %v2189, %v2189
      %v2446 = vpack.c.bf16 %v2190, %v2190
      %v2447 = vpack.c.bf16 %v2191, %v2191
      %v2448 = vpack.c.bf16 %v2192, %v2192
      %v2449 = vpack.c.bf16 %v2193, %v2193
      %v2450 = vpack.c.bf16 %v2194, %v2194
      %v2451 = vpack.c.bf16 %v2195, %v2195
      %v2452 = vpack.c.bf16 %v2196, %v2196
      %v2453 = vpack.c.bf16 %v2197, %v2197
      %v2454 = vpack.c.bf16 %v2198, %v2198
      %v2455 = vpack.c.bf16 %v2199, %v2199
      %v2456 = vpack.c.bf16 %v2200, %v2200
      %v2457 = vpack.c.bf16 %v2201, %v2201
      %v2458 = vpack.c.bf16 %v2202, %v2202
      %v2459 = vpack.c.bf16 %v2203, %v2203
      %v2460 = vpack.c.bf16 %v2204, %v2204
      %v2461 = vpack.c.bf16 %v2205, %v2205
      %v2462 = vpack.c.bf16 %v2206, %v2206
      %v2463 = vpack.c.bf16 %v2207, %v2207
      %v2464 = vpack.c.bf16 %v2208, %v2208
      %v2465 = vpack.c.bf16 %v2209, %v2209
      %v2466 = vpack.c.bf16 %v2210, %v2210
      %v2467 = vpack.c.bf16 %v2211, %v2211
      %v2468 = vpack.c.bf16 %v2212, %v2212
      %v2469 = vpack.c.bf16 %v2213, %v2213
      %v2470 = vpack.c.bf16 %v2214, %v2214
      %v2471 = vpack.c.bf16 %v2215, %v2215
      %v2472 = vpack.c.bf16 %v2216, %v2216
      %v2473 = vpack.c.bf16 %v2217, %v2217
      %v2474 = vpack.c.bf16 %v2218, %v2218
      %v2475 = vpack.c.bf16 %v2219, %v2219
      %v2476 = vpack.c.bf16 %v2220, %v2220
      %v2477 = vpack.c.bf16 %v2221, %v2221
      %v2478 = vpack.c.bf16 %v2222, %v2222
      %v2479 = vpack.c.bf16 %v2223, %v2223
      %v2480 = vpack.c.bf16 %v2224, %v2224
      %v2481 = vpack.c.bf16 %v2225, %v2225
      %v2482 = vpack.c.bf16 %v2226, %v2226
      %v2483 = vpack.c.bf16 %v2227, %v2227
      %v2484 = vpack.c.bf16 %v2228, %v2228
      %v2485 = vpack.c.bf16 %v2229, %v2229
      %v2486 = vpack.c.bf16 %v2230, %v2230
      %v2487 = vpack.c.bf16 %v2231, %v2231
      %v2488 = vpack.c.bf16 %v2232, %v2232
      %v2489 = vpack.c.bf16 %v2233, %v2233
      %v2490 = vpack.c.bf16 %v2234, %v2234
      %v2491 = vpack.c.bf16 %v2235, %v2235
      %v2492 = vpack.c.bf16 %v2236, %v2236
      %v2493 = vpack.c.bf16 %v2237, %v2237
      %v2494 = vpack.c.bf16 %v2238, %v2238
      %v2495 = vpack.c.bf16 %v2239, %v2239
      %v2496 = vpack.c.bf16 %v2240, %v2240
      %v2497 = vpack.c.bf16 %v2241, %v2241
      %v2498 = vpack.c.bf16 %v2242, %v2242
      %v2499 = vpack.c.bf16 %v2243, %v2243
      %v2500 = vpack.c.bf16 %v2244, %v2244
      %v2501 = vpack.c.bf16 %v2245, %v2245
      %v2502 = vpack.c.bf16 %v2246, %v2246
      %v2503 = vpack.c.bf16 %v2247, %v2247
      %v2504 = vpack.c.bf16 %v2248, %v2248
      %v2505 = vpack.c.bf16 %v2249, %v2249
      %v2506 = vpack.c.bf16 %v2250, %v2250
      %v2507 = vpack.c.bf16 %v2251, %v2251
      %v2508 = vpack.c.bf16 %v2252, %v2252
      %v2509 = vpack.c.bf16 %v2253, %v2253
      %v2510 = vpack.c.bf16 %v2254, %v2254
      %v2511 = vpack.c.bf16 %v2255, %v2255
      %v2512 = vpack.c.bf16 %v2256, %v2256
      %v2513 = vpack.c.bf16 %v2257, %v2257
      %v2514 = vpack.c.bf16 %v2258, %v2258
      %v2515 = vpack.c.bf16 %v2259, %v2259
      %v2516 = vpack.c.bf16 %v2260, %v2260
      %v2517 = vpack.c.bf16 %v2261, %v2261
      %v2518 = vpack.c.bf16 %v2262, %v2262
      %v2519 = vpack.c.bf16 %v2263, %v2263
      %v2520 = vpack.c.bf16 %v2264, %v2264
      %v2521 = vpack.c.bf16 %v2265, %v2265
      %v2522 = vpack.c.bf16 %v2266, %v2266
      %v2523 = vpack.c.bf16 %v2267, %v2267
      %v2524 = vpack.c.bf16 %v2268, %v2268
      %v2525 = vpack.c.bf16 %v2269, %v2269
      %v2526 = vpack.c.bf16 %v2270, %v2270
      %v2527 = vpack.c.bf16 %v2271, %v2271
      %v2528 = vpack.c.bf16 %v2272, %v2272
      %v2529 = vpack.c.bf16 %v2273, %v2273
      %v2530 = vpack.c.bf16 %v2274, %v2274
      %v2531 = vpack.c.bf16 %v2275, %v2275
      %v2532 = vpack.c.bf16 %v2276, %v2276
      %v2533 = vpack.c.bf16 %v2277, %v2277
      %v2534 = vpack.c.bf16 %v2278, %v2278
      %v2535 = vpack.c.bf16 %v2279, %v2279
      %v2536 = vpack.c.bf16 %v2280, %v2280
      %v2537 = vpack.c.bf16 %v2281, %v2281
      %v2538 = vpack.c.bf16 %v2282, %v2282
      %v2539 = vpack.c.bf16 %v2283, %v2283
      %v2540 = vpack.c.bf16 %v2284, %v2284
      %v2541 = vpack.c.bf16 %v2285, %v2285
      %v2542 = vpack.c.bf16 %v2286, %v2286
      %v2543 = vpack.c.bf16 %v2287, %v2287
      %v2544 = vpack.c.bf16 %v2288, %v2288
      %v2545 = vpack.c.bf16 %v2289, %v2289
      %v2546 = vpack.c.bf16 %v2290, %v2290
      %v2547 = vpack.c.bf16 %v2291, %v2291
      %v2548 = vpack.c.bf16 %v2292, %v2292
      %v2549 = vpack.c.bf16 %v2293, %v2293
      %v2550 = vpack.c.bf16 %v2294, %v2294
      %v2551 = vpack.c.bf16 %v2295, %v2295
      %v2552 = vpack.c.bf16 %v2296, %v2296
      %v2553 = vpack.c.bf16 %v2297, %v2297
      %v2554 = vpack.c.bf16 %v2298, %v2298
      %v2555 = vpack.c.bf16 %v2299, %v2299
      %v2556 = vpack.c.bf16 %v2300, %v2300
      %v2557 = vpack.c.bf16 %v2301, %v2301
      %v2558 = vpack.c.bf16 %v2302, %v2302
      %v2559 = vpack.c.bf16 %v2303, %v2303
      %v2560 = vpack.c.bf16 %v2304, %v2304
      %v2561 = vpack.c.bf16 %v2305, %v2305
      %v2562 = vpack.c.bf16 %v2306, %v2306
      %v2563 = vpack.c.bf16 %v2307, %v2307
      %v2564 = vpack.c.bf16 %v2308, %v2308
      %v2565 = vpack.c.bf16 %v2309, %v2309
      %v2566 = vpack.c.bf16 %v2310, %v2310
      %v2567 = vpack.c.bf16 %v2311, %v2311
      %v2568 = vpack.c.bf16 %v2312, %v2312
      %v2569 = vpack.c.bf16 %v2313, %v2313
      %v2570 = vpack.c.bf16 %v2314, %v2314
      %v2571 = vpack.c.bf16 %v2315, %v2315
      %v2572 = vpack.c.bf16 %v2316, %v2316
      %v2573 = vpack.c.bf16 %v2317, %v2317
      %v2574 = vpack.c.bf16 %v2318, %v2318
      %v2575 = vpack.c.bf16 %v2319, %v2319
      %v2576 = vpack.c.bf16 %v2320, %v2320
      %v2577 = vpack.c.bf16 %v2321, %v2321
      %v2578 = vpack.c.bf16 %v2322, %v2322
      %v2579 = vpack.c.bf16 %v2323, %v2323
      %v2580 = vpack.c.bf16 %v2324, %v2324
      %v2581 = vpack.c.bf16 %v2325, %v2325
      %v2582 = vpack.c.bf16 %v2326, %v2326
      %v2583 = vpack.c.bf16 %v2327, %v2327
      %v2584 = vpack.c.bf16 %v2328, %v2328
      %v2585 = vpack.c.bf16 %v2329, %v2329
      %v2586 = vpack.c.bf16 %v2330, %v2330
      %v2587 = vpack.c.bf16 %v2331, %v2331
      %v2588 = vpack.c.bf16 %v2332, %v2332
      %v2589 = vpack.c.bf16 %v2333, %v2333
      %v2590 = vpack.c.bf16 %v2334, %v2334
      %v2591 = vpack.c.bf16 %v2335, %v2335
      %v2592 = vpack.c.bf16 %v2336, %v2336
      %v2593 = vpack.c.bf16 %v2337, %v2337
      %v2594 = vpack.c.bf16 %v2338, %v2338
      %v2595 = vpack.c.bf16 %v2339, %v2339
      %v2596 = vpack.c.bf16 %v2340, %v2340
      %v2597 = vpack.c.bf16 %v2341, %v2341
      %v2598 = vpack.c.bf16 %v2342, %v2342
      %v2599 = vpack.c.bf16 %v2343, %v2343
      %v2600 = vpack.c.bf16 %v2344, %v2344
      %v2601 = vpack.c.bf16 %v2345, %v2345
      %v2602 = vpack.c.bf16 %v2346, %v2346
      %v2603 = vpack.c.bf16 %v2347, %v2347
      %v2604 = vpack.c.bf16 %v2348, %v2348
      %v2605 = vpack.c.bf16 %v2349, %v2349
      %v2606 = vpack.c.bf16 %v2350, %v2350
      %v2607 = vpack.c.bf16 %v2351, %v2351
      %v2608 = vpack.c.bf16 %v2352, %v2352
      %v2609 = vpack.c.bf16 %v2353, %v2353
      %v2610 = vpack.c.bf16 %v2354, %v2354
      %v2611 = vpack.c.bf16 %v2355, %v2355
      %v2612 = vpack.c.bf16 %v2356, %v2356
      %v2613 = vpack.c.bf16 %v2357, %v2357
      %v2614 = vpack.c.bf16 %v2358, %v2358
      %v2615 = vpack.c.bf16 %v2359, %v2359
      %v2616 = vpack.c.bf16 %v2360, %v2360
      %v2617 = vpack.c.bf16 %v2361, %v2361
      %v2618 = vpack.c.bf16 %v2362, %v2362
      %v2619 = vpack.c.bf16 %v2363, %v2363
      %v2620 = vpack.c.bf16 %v2364, %v2364
      %v2621 = vpack.c.bf16 %v2365, %v2365
      %v2622 = vpack.c.bf16 %v2366, %v2366
      %v2623 = vpack.c.bf16 %v2367, %v2367
      %v2624 = vpack.c.bf16 %v2368, %v2368
      %v2625 = vpack.c.bf16 %v2369, %v2369
      %v2626 = vpack.c.bf16 %v2370, %v2370
      %v2627 = vpack.c.bf16 %v2371, %v2371
      %v2628 = vpack.c.bf16 %v2372, %v2372
      %v2629 = vpack.c.bf16 %v2373, %v2373
      %v2630 = vpack.c.bf16 %v2374, %v2374
      %v2631 = vpack.c.bf16 %v2375, %v2375
      %v2632 = vpack.c.bf16 %v2376, %v2376
      %v2633 = vpack.c.bf16 %v2377, %v2377
      %v2634 = vpack.c.bf16 %v2378, %v2378
      %v2635 = vpack.c.bf16 %v2379, %v2379
      %v2636 = vpack.c.bf16 %v2380, %v2380
      %vm2637 = vcmask 125952
      %2638 = vst.msk [vmem:[%s172] sm:$0xf] %vm2637, %v2381
      %2639 = vst.msk [vmem:[%s172 + $0x4] sm:$0xf] %vm2637, %v2382
      %2640 = vst.msk [vmem:[%s172 + $0x8] sm:$0xf] %vm2637, %v2383
      %2641 = vst.msk [vmem:[%s172 + $0xc] sm:$0xf] %vm2637, %v2384
      %2642 = vst.msk [vmem:[%s172 + $0x10] sm:$0xf] %vm2637, %v2385
      %2643 = vst.msk [vmem:[%s172 + $0x14] sm:$0xf] %vm2637, %v2386
      %2644 = vst.msk [vmem:[%s172 + $0x18] sm:$0xf] %vm2637, %v2387
      %2645 = vst.msk [vmem:[%s172 + $0x1c] sm:$0xf] %vm2637, %v2388
      %2646 = vst.msk [vmem:[%s172 + $0x20] sm:$0xf] %vm2637, %v2389
      %2647 = vst.msk [vmem:[%s172 + $0x24] sm:$0xf] %vm2637, %v2390
      %2648 = vst.msk [vmem:[%s172 + $0x28] sm:$0xf] %vm2637, %v2391
      %2649 = vst.msk [vmem:[%s172 + $0x2c] sm:$0xf] %vm2637, %v2392
      %2650 = vst.msk [vmem:[%s172 + $0x30] sm:$0xf] %vm2637, %v2393
      %2651 = vst.msk [vmem:[%s172 + $0x34] sm:$0xf] %vm2637, %v2394
      %2652 = vst.msk [vmem:[%s172 + $0x38] sm:$0xf] %vm2637, %v2395
      %2653 = vst.msk [vmem:[%s172 + $0x3c] sm:$0xf] %vm2637, %v2396
      %2654 = vst.msk [vmem:[%s172 + $0x40] sm:$0xf] %vm2637, %v2397
      %2655 = vst.msk [vmem:[%s172 + $0x44] sm:$0xf] %vm2637, %v2398
      %2656 = vst.msk [vmem:[%s172 + $0x48] sm:$0xf] %vm2637, %v2399
      %2657 = vst.msk [vmem:[%s172 + $0x4c] sm:$0xf] %vm2637, %v2400
      %2658 = vst.msk [vmem:[%s172 + $0x50] sm:$0xf] %vm2637, %v2401
      %2659 = vst.msk [vmem:[%s172 + $0x54] sm:$0xf] %vm2637, %v2402
      %2660 = vst.msk [vmem:[%s172 + $0x58] sm:$0xf] %vm2637, %v2403
      %2661 = vst.msk [vmem:[%s172 + $0x5c] sm:$0xf] %vm2637, %v2404
      %2662 = vst.msk [vmem:[%s172 + $0x60] sm:$0xf] %vm2637, %v2405
      %2663 = vst.msk [vmem:[%s172 + $0x64] sm:$0xf] %vm2637, %v2406
      %2664 = vst.msk [vmem:[%s172 + $0x68] sm:$0xf] %vm2637, %v2407
      %2665 = vst.msk [vmem:[%s172 + $0x6c] sm:$0xf] %vm2637, %v2408
      %2666 = vst.msk [vmem:[%s172 + $0x70] sm:$0xf] %vm2637, %v2409
      %2667 = vst.msk [vmem:[%s172 + $0x74] sm:$0xf] %vm2637, %v2410
      %2668 = vst.msk [vmem:[%s172 + $0x78] sm:$0xf] %vm2637, %v2411
      %2669 = vst.msk [vmem:[%s172 + $0x7c] sm:$0xf] %vm2637, %v2412
      %2670 = vst.msk [vmem:[%s172 + $0x80] sm:$0xf] %vm2637, %v2413
      %2671 = vst.msk [vmem:[%s172 + $0x84] sm:$0xf] %vm2637, %v2414
      %2672 = vst.msk [vmem:[%s172 + $0x88] sm:$0xf] %vm2637, %v2415
      %2673 = vst.msk [vmem:[%s172 + $0x8c] sm:$0xf] %vm2637, %v2416
      %2674 = vst.msk [vmem:[%s172 + $0x90] sm:$0xf] %vm2637, %v2417
      %2675 = vst.msk [vmem:[%s172 + $0x94] sm:$0xf] %vm2637, %v2418
      %2676 = vst.msk [vmem:[%s172 + $0x98] sm:$0xf] %vm2637, %v2419
      %2677 = vst.msk [vmem:[%s172 + $0x9c] sm:$0xf] %vm2637, %v2420
      %2678 = vst.msk [vmem:[%s172 + $0xa0] sm:$0xf] %vm2637, %v2421
      %2679 = vst.msk [vmem:[%s172 + $0xa4] sm:$0xf] %vm2637, %v2422
      %2680 = vst.msk [vmem:[%s172 + $0xa8] sm:$0xf] %vm2637, %v2423
      %2681 = vst.msk [vmem:[%s172 + $0xac] sm:$0xf] %vm2637, %v2424
      %2682 = vst.msk [vmem:[%s172 + $0xb0] sm:$0xf] %vm2637, %v2425
      %2683 = vst.msk [vmem:[%s172 + $0xb4] sm:$0xf] %vm2637, %v2426
      %2684 = vst.msk [vmem:[%s172 + $0xb8] sm:$0xf] %vm2637, %v2427
      %2685 = vst.msk [vmem:[%s172 + $0xbc] sm:$0xf] %vm2637, %v2428
      %2686 = vst.msk [vmem:[%s172 + $0xc0] sm:$0xf] %vm2637, %v2429
      %2687 = vst.msk [vmem:[%s172 + $0xc4] sm:$0xf] %vm2637, %v2430
      %2688 = vst.msk [vmem:[%s172 + $0xc8] sm:$0xf] %vm2637, %v2431
      %2689 = vst.msk [vmem:[%s172 + $0xcc] sm:$0xf] %vm2637, %v2432
      %2690 = vst.msk [vmem:[%s172 + $0xd0] sm:$0xf] %vm2637, %v2433
      %2691 = vst.msk [vmem:[%s172 + $0xd4] sm:$0xf] %vm2637, %v2434
      %2692 = vst.msk [vmem:[%s172 + $0xd8] sm:$0xf] %vm2637, %v2435
      %2693 = vst.msk [vmem:[%s172 + $0xdc] sm:$0xf] %vm2637, %v2436
      %2694 = vst.msk [vmem:[%s172 + $0xe0] sm:$0xf] %vm2637, %v2437
      %2695 = vst.msk [vmem:[%s172 + $0xe4] sm:$0xf] %vm2637, %v2438
      %2696 = vst.msk [vmem:[%s172 + $0xe8] sm:$0xf] %vm2637, %v2439
      %2697 = vst.msk [vmem:[%s172 + $0xec] sm:$0xf] %vm2637, %v2440
      %2698 = vst.msk [vmem:[%s172 + $0xf0] sm:$0xf] %vm2637, %v2441
      %2699 = vst.msk [vmem:[%s172 + $0xf4] sm:$0xf] %vm2637, %v2442
      %2700 = vst.msk [vmem:[%s172 + $0xf8] sm:$0xf] %vm2637, %v2443
      %2701 = vst.msk [vmem:[%s172 + $0xfc] sm:$0xf] %vm2637, %v2444
      %2702 = vst.msk [vmem:[%s172 + $0x100] sm:$0xf] %vm2637, %v2445
      %2703 = vst.msk [vmem:[%s172 + $0x104] sm:$0xf] %vm2637, %v2446
      %2704 = vst.msk [vmem:[%s172 + $0x108] sm:$0xf] %vm2637, %v2447
      %2705 = vst.msk [vmem:[%s172 + $0x10c] sm:$0xf] %vm2637, %v2448
      %2706 = vst.msk [vmem:[%s172 + $0x110] sm:$0xf] %vm2637, %v2449
      %2707 = vst.msk [vmem:[%s172 + $0x114] sm:$0xf] %vm2637, %v2450
      %2708 = vst.msk [vmem:[%s172 + $0x118] sm:$0xf] %vm2637, %v2451
      %2709 = vst.msk [vmem:[%s172 + $0x11c] sm:$0xf] %vm2637, %v2452
      %2710 = vst.msk [vmem:[%s172 + $0x120] sm:$0xf] %vm2637, %v2453
      %2711 = vst.msk [vmem:[%s172 + $0x124] sm:$0xf] %vm2637, %v2454
      %2712 = vst.msk [vmem:[%s172 + $0x128] sm:$0xf] %vm2637, %v2455
      %2713 = vst.msk [vmem:[%s172 + $0x12c] sm:$0xf] %vm2637, %v2456
      %2714 = vst.msk [vmem:[%s172 + $0x130] sm:$0xf] %vm2637, %v2457
      %2715 = vst.msk [vmem:[%s172 + $0x134] sm:$0xf] %vm2637, %v2458
      %2716 = vst.msk [vmem:[%s172 + $0x138] sm:$0xf] %vm2637, %v2459
      %2717 = vst.msk [vmem:[%s172 + $0x13c] sm:$0xf] %vm2637, %v2460
      %2718 = vst.msk [vmem:[%s172 + $0x140] sm:$0xf] %vm2637, %v2461
      %2719 = vst.msk [vmem:[%s172 + $0x144] sm:$0xf] %vm2637, %v2462
      %2720 = vst.msk [vmem:[%s172 + $0x148] sm:$0xf] %vm2637, %v2463
      %2721 = vst.msk [vmem:[%s172 + $0x14c] sm:$0xf] %vm2637, %v2464
      %2722 = vst.msk [vmem:[%s172 + $0x150] sm:$0xf] %vm2637, %v2465
      %2723 = vst.msk [vmem:[%s172 + $0x154] sm:$0xf] %vm2637, %v2466
      %2724 = vst.msk [vmem:[%s172 + $0x158] sm:$0xf] %vm2637, %v2467
      %2725 = vst.msk [vmem:[%s172 + $0x15c] sm:$0xf] %vm2637, %v2468
      %2726 = vst.msk [vmem:[%s172 + $0x160] sm:$0xf] %vm2637, %v2469
      %2727 = vst.msk [vmem:[%s172 + $0x164] sm:$0xf] %vm2637, %v2470
      %2728 = vst.msk [vmem:[%s172 + $0x168] sm:$0xf] %vm2637, %v2471
      %2729 = vst.msk [vmem:[%s172 + $0x16c] sm:$0xf] %vm2637, %v2472
      %2730 = vst.msk [vmem:[%s172 + $0x170] sm:$0xf] %vm2637, %v2473
      %2731 = vst.msk [vmem:[%s172 + $0x174] sm:$0xf] %vm2637, %v2474
      %2732 = vst.msk [vmem:[%s172 + $0x178] sm:$0xf] %vm2637, %v2475
      %2733 = vst.msk [vmem:[%s172 + $0x17c] sm:$0xf] %vm2637, %v2476
      %2734 = vst.msk [vmem:[%s172 + $0x180] sm:$0xf] %vm2637, %v2477
      %2735 = vst.msk [vmem:[%s172 + $0x184] sm:$0xf] %vm2637, %v2478
      %2736 = vst.msk [vmem:[%s172 + $0x188] sm:$0xf] %vm2637, %v2479
      %2737 = vst.msk [vmem:[%s172 + $0x18c] sm:$0xf] %vm2637, %v2480
      %2738 = vst.msk [vmem:[%s172 + $0x190] sm:$0xf] %vm2637, %v2481
      %2739 = vst.msk [vmem:[%s172 + $0x194] sm:$0xf] %vm2637, %v2482
      %2740 = vst.msk [vmem:[%s172 + $0x198] sm:$0xf] %vm2637, %v2483
      %2741 = vst.msk [vmem:[%s172 + $0x19c] sm:$0xf] %vm2637, %v2484
      %2742 = vst.msk [vmem:[%s172 + $0x1a0] sm:$0xf] %vm2637, %v2485
      %2743 = vst.msk [vmem:[%s172 + $0x1a4] sm:$0xf] %vm2637, %v2486
      %2744 = vst.msk [vmem:[%s172 + $0x1a8] sm:$0xf] %vm2637, %v2487
      %2745 = vst.msk [vmem:[%s172 + $0x1ac] sm:$0xf] %vm2637, %v2488
      %2746 = vst.msk [vmem:[%s172 + $0x1b0] sm:$0xf] %vm2637, %v2489
      %2747 = vst.msk [vmem:[%s172 + $0x1b4] sm:$0xf] %vm2637, %v2490
      %2748 = vst.msk [vmem:[%s172 + $0x1b8] sm:$0xf] %vm2637, %v2491
      %2749 = vst.msk [vmem:[%s172 + $0x1bc] sm:$0xf] %vm2637, %v2492
      %2750 = vst.msk [vmem:[%s172 + $0x1c0] sm:$0xf] %vm2637, %v2493
      %2751 = vst.msk [vmem:[%s172 + $0x1c4] sm:$0xf] %vm2637, %v2494
      %2752 = vst.msk [vmem:[%s172 + $0x1c8] sm:$0xf] %vm2637, %v2495
      %2753 = vst.msk [vmem:[%s172 + $0x1cc] sm:$0xf] %vm2637, %v2496
      %2754 = vst.msk [vmem:[%s172 + $0x1d0] sm:$0xf] %vm2637, %v2497
      %2755 = vst.msk [vmem:[%s172 + $0x1d4] sm:$0xf] %vm2637, %v2498
      %2756 = vst.msk [vmem:[%s172 + $0x1d8] sm:$0xf] %vm2637, %v2499
      %2757 = vst.msk [vmem:[%s172 + $0x1dc] sm:$0xf] %vm2637, %v2500
      %2758 = vst.msk [vmem:[%s172 + $0x1e0] sm:$0xf] %vm2637, %v2501
      %2759 = vst.msk [vmem:[%s172 + $0x1e4] sm:$0xf] %vm2637, %v2502
      %2760 = vst.msk [vmem:[%s172 + $0x1e8] sm:$0xf] %vm2637, %v2503
      %2761 = vst.msk [vmem:[%s172 + $0x1ec] sm:$0xf] %vm2637, %v2504
      %2762 = vst.msk [vmem:[%s172 + $0x1f0] sm:$0xf] %vm2637, %v2505
      %2763 = vst.msk [vmem:[%s172 + $0x1f4] sm:$0xf] %vm2637, %v2506
      %2764 = vst.msk [vmem:[%s172 + $0x1f8] sm:$0xf] %vm2637, %v2507
      %2765 = vst.msk [vmem:[%s172 + $0x1fc] sm:$0xf] %vm2637, %v2508
      %2766 = vst.msk [vmem:[%s172 + $0x200] sm:$0xf] %vm2637, %v2509
      %2767 = vst.msk [vmem:[%s172 + $0x204] sm:$0xf] %vm2637, %v2510
      %2768 = vst.msk [vmem:[%s172 + $0x208] sm:$0xf] %vm2637, %v2511
      %2769 = vst.msk [vmem:[%s172 + $0x20c] sm:$0xf] %vm2637, %v2512
      %2770 = vst.msk [vmem:[%s172 + $0x210] sm:$0xf] %vm2637, %v2513
      %2771 = vst.msk [vmem:[%s172 + $0x214] sm:$0xf] %vm2637, %v2514
      %2772 = vst.msk [vmem:[%s172 + $0x218] sm:$0xf] %vm2637, %v2515
      %2773 = vst.msk [vmem:[%s172 + $0x21c] sm:$0xf] %vm2637, %v2516
      %2774 = vst.msk [vmem:[%s172 + $0x220] sm:$0xf] %vm2637, %v2517
      %2775 = vst.msk [vmem:[%s172 + $0x224] sm:$0xf] %vm2637, %v2518
      %2776 = vst.msk [vmem:[%s172 + $0x228] sm:$0xf] %vm2637, %v2519
      %2777 = vst.msk [vmem:[%s172 + $0x22c] sm:$0xf] %vm2637, %v2520
      %2778 = vst.msk [vmem:[%s172 + $0x230] sm:$0xf] %vm2637, %v2521
      %2779 = vst.msk [vmem:[%s172 + $0x234] sm:$0xf] %vm2637, %v2522
      %2780 = vst.msk [vmem:[%s172 + $0x238] sm:$0xf] %vm2637, %v2523
      %2781 = vst.msk [vmem:[%s172 + $0x23c] sm:$0xf] %vm2637, %v2524
      %2782 = vst.msk [vmem:[%s172 + $0x240] sm:$0xf] %vm2637, %v2525
      %2783 = vst.msk [vmem:[%s172 + $0x244] sm:$0xf] %vm2637, %v2526
      %2784 = vst.msk [vmem:[%s172 + $0x248] sm:$0xf] %vm2637, %v2527
      %2785 = vst.msk [vmem:[%s172 + $0x24c] sm:$0xf] %vm2637, %v2528
      %2786 = vst.msk [vmem:[%s172 + $0x250] sm:$0xf] %vm2637, %v2529
      %2787 = vst.msk [vmem:[%s172 + $0x254] sm:$0xf] %vm2637, %v2530
      %2788 = vst.msk [vmem:[%s172 + $0x258] sm:$0xf] %vm2637, %v2531
      %2789 = vst.msk [vmem:[%s172 + $0x25c] sm:$0xf] %vm2637, %v2532
      %2790 = vst.msk [vmem:[%s172 + $0x260] sm:$0xf] %vm2637, %v2533
      %2791 = vst.msk [vmem:[%s172 + $0x264] sm:$0xf] %vm2637, %v2534
      %2792 = vst.msk [vmem:[%s172 + $0x268] sm:$0xf] %vm2637, %v2535
      %2793 = vst.msk [vmem:[%s172 + $0x26c] sm:$0xf] %vm2637, %v2536
      %2794 = vst.msk [vmem:[%s172 + $0x270] sm:$0xf] %vm2637, %v2537
      %2795 = vst.msk [vmem:[%s172 + $0x274] sm:$0xf] %vm2637, %v2538
      %2796 = vst.msk [vmem:[%s172 + $0x278] sm:$0xf] %vm2637, %v2539
      %2797 = vst.msk [vmem:[%s172 + $0x27c] sm:$0xf] %vm2637, %v2540
      %2798 = vst.msk [vmem:[%s172 + $0x280] sm:$0xf] %vm2637, %v2541
      %2799 = vst.msk [vmem:[%s172 + $0x284] sm:$0xf] %vm2637, %v2542
      %2800 = vst.msk [vmem:[%s172 + $0x288] sm:$0xf] %vm2637, %v2543
      %2801 = vst.msk [vmem:[%s172 + $0x28c] sm:$0xf] %vm2637, %v2544
      %2802 = vst.msk [vmem:[%s172 + $0x290] sm:$0xf] %vm2637, %v2545
      %2803 = vst.msk [vmem:[%s172 + $0x294] sm:$0xf] %vm2637, %v2546
      %2804 = vst.msk [vmem:[%s172 + $0x298] sm:$0xf] %vm2637, %v2547
      %2805 = vst.msk [vmem:[%s172 + $0x29c] sm:$0xf] %vm2637, %v2548
      %2806 = vst.msk [vmem:[%s172 + $0x2a0] sm:$0xf] %vm2637, %v2549
      %2807 = vst.msk [vmem:[%s172 + $0x2a4] sm:$0xf] %vm2637, %v2550
      %2808 = vst.msk [vmem:[%s172 + $0x2a8] sm:$0xf] %vm2637, %v2551
      %2809 = vst.msk [vmem:[%s172 + $0x2ac] sm:$0xf] %vm2637, %v2552
      %2810 = vst.msk [vmem:[%s172 + $0x2b0] sm:$0xf] %vm2637, %v2553
      %2811 = vst.msk [vmem:[%s172 + $0x2b4] sm:$0xf] %vm2637, %v2554
      %2812 = vst.msk [vmem:[%s172 + $0x2b8] sm:$0xf] %vm2637, %v2555
      %2813 = vst.msk [vmem:[%s172 + $0x2bc] sm:$0xf] %vm2637, %v2556
      %2814 = vst.msk [vmem:[%s172 + $0x2c0] sm:$0xf] %vm2637, %v2557
      %2815 = vst.msk [vmem:[%s172 + $0x2c4] sm:$0xf] %vm2637, %v2558
      %2816 = vst.msk [vmem:[%s172 + $0x2c8] sm:$0xf] %vm2637, %v2559
      %2817 = vst.msk [vmem:[%s172 + $0x2cc] sm:$0xf] %vm2637, %v2560
      %2818 = vst.msk [vmem:[%s172 + $0x2d0] sm:$0xf] %vm2637, %v2561
      %2819 = vst.msk [vmem:[%s172 + $0x2d4] sm:$0xf] %vm2637, %v2562
      %2820 = vst.msk [vmem:[%s172 + $0x2d8] sm:$0xf] %vm2637, %v2563
      %2821 = vst.msk [vmem:[%s172 + $0x2dc] sm:$0xf] %vm2637, %v2564
      %2822 = vst.msk [vmem:[%s172 + $0x2e0] sm:$0xf] %vm2637, %v2565
      %2823 = vst.msk [vmem:[%s172 + $0x2e4] sm:$0xf] %vm2637, %v2566
      %2824 = vst.msk [vmem:[%s172 + $0x2e8] sm:$0xf] %vm2637, %v2567
      %2825 = vst.msk [vmem:[%s172 + $0x2ec] sm:$0xf] %vm2637, %v2568
      %2826 = vst.msk [vmem:[%s172 + $0x2f0] sm:$0xf] %vm2637, %v2569
      %2827 = vst.msk [vmem:[%s172 + $0x2f4] sm:$0xf] %vm2637, %v2570
      %2828 = vst.msk [vmem:[%s172 + $0x2f8] sm:$0xf] %vm2637, %v2571
      %2829 = vst.msk [vmem:[%s172 + $0x2fc] sm:$0xf] %vm2637, %v2572
      %2830 = vst.msk [vmem:[%s172 + $0x300] sm:$0xf] %vm2637, %v2573
      %2831 = vst.msk [vmem:[%s172 + $0x304] sm:$0xf] %vm2637, %v2574
      %2832 = vst.msk [vmem:[%s172 + $0x308] sm:$0xf] %vm2637, %v2575
      %2833 = vst.msk [vmem:[%s172 + $0x30c] sm:$0xf] %vm2637, %v2576
      %2834 = vst.msk [vmem:[%s172 + $0x310] sm:$0xf] %vm2637, %v2577
      %2835 = vst.msk [vmem:[%s172 + $0x314] sm:$0xf] %vm2637, %v2578
      %2836 = vst.msk [vmem:[%s172 + $0x318] sm:$0xf] %vm2637, %v2579
      %2837 = vst.msk [vmem:[%s172 + $0x31c] sm:$0xf] %vm2637, %v2580
      %2838 = vst.msk [vmem:[%s172 + $0x320] sm:$0xf] %vm2637, %v2581
      %2839 = vst.msk [vmem:[%s172 + $0x324] sm:$0xf] %vm2637, %v2582
      %2840 = vst.msk [vmem:[%s172 + $0x328] sm:$0xf] %vm2637, %v2583
      %2841 = vst.msk [vmem:[%s172 + $0x32c] sm:$0xf] %vm2637, %v2584
      %2842 = vst.msk [vmem:[%s172 + $0x330] sm:$0xf] %vm2637, %v2585
      %2843 = vst.msk [vmem:[%s172 + $0x334] sm:$0xf] %vm2637, %v2586
      %2844 = vst.msk [vmem:[%s172 + $0x338] sm:$0xf] %vm2637, %v2587
      %2845 = vst.msk [vmem:[%s172 + $0x33c] sm:$0xf] %vm2637, %v2588
      %2846 = vst.msk [vmem:[%s172 + $0x340] sm:$0xf] %vm2637, %v2589
      %2847 = vst.msk [vmem:[%s172 + $0x344] sm:$0xf] %vm2637, %v2590
      %2848 = vst.msk [vmem:[%s172 + $0x348] sm:$0xf] %vm2637, %v2591
      %2849 = vst.msk [vmem:[%s172 + $0x34c] sm:$0xf] %vm2637, %v2592
      %2850 = vst.msk [vmem:[%s172 + $0x350] sm:$0xf] %vm2637, %v2593
      %2851 = vst.msk [vmem:[%s172 + $0x354] sm:$0xf] %vm2637, %v2594
      %2852 = vst.msk [vmem:[%s172 + $0x358] sm:$0xf] %vm2637, %v2595
      %2853 = vst.msk [vmem:[%s172 + $0x35c] sm:$0xf] %vm2637, %v2596
      %2854 = vst.msk [vmem:[%s172 + $0x360] sm:$0xf] %vm2637, %v2597
      %2855 = vst.msk [vmem:[%s172 + $0x364] sm:$0xf] %vm2637, %v2598
      %2856 = vst.msk [vmem:[%s172 + $0x368] sm:$0xf] %vm2637, %v2599
      %2857 = vst.msk [vmem:[%s172 + $0x36c] sm:$0xf] %vm2637, %v2600
      %2858 = vst.msk [vmem:[%s172 + $0x370] sm:$0xf] %vm2637, %v2601
      %2859 = vst.msk [vmem:[%s172 + $0x374] sm:$0xf] %vm2637, %v2602
      %2860 = vst.msk [vmem:[%s172 + $0x378] sm:$0xf] %vm2637, %v2603
      %2861 = vst.msk [vmem:[%s172 + $0x37c] sm:$0xf] %vm2637, %v2604
      %2862 = vst.msk [vmem:[%s172 + $0x380] sm:$0xf] %vm2637, %v2605
      %2863 = vst.msk [vmem:[%s172 + $0x384] sm:$0xf] %vm2637, %v2606
      %2864 = vst.msk [vmem:[%s172 + $0x388] sm:$0xf] %vm2637, %v2607
      %2865 = vst.msk [vmem:[%s172 + $0x38c] sm:$0xf] %vm2637, %v2608
      %2866 = vst.msk [vmem:[%s172 + $0x390] sm:$0xf] %vm2637, %v2609
      %2867 = vst.msk [vmem:[%s172 + $0x394] sm:$0xf] %vm2637, %v2610
      %2868 = vst.msk [vmem:[%s172 + $0x398] sm:$0xf] %vm2637, %v2611
      %2869 = vst.msk [vmem:[%s172 + $0x39c] sm:$0xf] %vm2637, %v2612
      %2870 = vst.msk [vmem:[%s172 + $0x3a0] sm:$0xf] %vm2637, %v2613
      %2871 = vst.msk [vmem:[%s172 + $0x3a4] sm:$0xf] %vm2637, %v2614
      %2872 = vst.msk [vmem:[%s172 + $0x3a8] sm:$0xf] %vm2637, %v2615
      %2873 = vst.msk [vmem:[%s172 + $0x3ac] sm:$0xf] %vm2637, %v2616
      %2874 = vst.msk [vmem:[%s172 + $0x3b0] sm:$0xf] %vm2637, %v2617
      %2875 = vst.msk [vmem:[%s172 + $0x3b4] sm:$0xf] %vm2637, %v2618
      %2876 = vst.msk [vmem:[%s172 + $0x3b8] sm:$0xf] %vm2637, %v2619
      %2877 = vst.msk [vmem:[%s172 + $0x3bc] sm:$0xf] %vm2637, %v2620
      %2878 = vst.msk [vmem:[%s172 + $0x3c0] sm:$0xf] %vm2637, %v2621
      %2879 = vst.msk [vmem:[%s172 + $0x3c4] sm:$0xf] %vm2637, %v2622
      %2880 = vst.msk [vmem:[%s172 + $0x3c8] sm:$0xf] %vm2637, %v2623
      %2881 = vst.msk [vmem:[%s172 + $0x3cc] sm:$0xf] %vm2637, %v2624
      %2882 = vst.msk [vmem:[%s172 + $0x3d0] sm:$0xf] %vm2637, %v2625
      %2883 = vst.msk [vmem:[%s172 + $0x3d4] sm:$0xf] %vm2637, %v2626
      %2884 = vst.msk [vmem:[%s172 + $0x3d8] sm:$0xf] %vm2637, %v2627
      %2885 = vst.msk [vmem:[%s172 + $0x3dc] sm:$0xf] %vm2637, %v2628
      %2886 = vst.msk [vmem:[%s172 + $0x3e0] sm:$0xf] %vm2637, %v2629
      %2887 = vst.msk [vmem:[%s172 + $0x3e4] sm:$0xf] %vm2637, %v2630
      %2888 = vst.msk [vmem:[%s172 + $0x3e8] sm:$0xf] %vm2637, %v2631
      %2889 = vst.msk [vmem:[%s172 + $0x3ec] sm:$0xf] %vm2637, %v2632
      %2890 = vst.msk [vmem:[%s172 + $0x3f0] sm:$0xf] %vm2637, %v2633
      %2891 = vst.msk [vmem:[%s172 + $0x3f4] sm:$0xf] %vm2637, %v2634
      %2892 = vst.msk [vmem:[%s172 + $0x3f8] sm:$0xf] %vm2637, %v2635
      %2893 = vst.msk [vmem:[%s172 + $0x3fc] sm:$0xf] %vm2637, %v2636
      %s2894 = smul.u32 256, %s14
      %p2895 = scmp.lt.s32.totalorder %s2894, 2047
      %s2896 = scalar_select %p2895, %s2894, 2047
      %s2897 = smul.addr %s2896, 4
      %s2898 = scalar_lea.vmem %s3, %s2897
      // Predicated region
      $region33: #{skill_proposal_forward.5} parent=31 // pred_check
        %p2899 = pneg %p100
      $region34: #{skill_proposal_forward.5} parent=31 // pred_check_branch
        %2901 = sbr.rel (%p2899) target = $region36
      $region35: #{skill_proposal_forward.5} parent=31 // pred_region
        %s2902 = smul.u32 256, %s14
      $region36: #{skill_proposal_forward.5} parent=31 // pred_fallthru
        _
    $region32: #{skill_proposal_forward.5} parent=5 // pred_fallthru
      _
    %p2903 = scmp.le.s32.totalorder 2, %s9
    // Predicated region
    $region37: #{skill_proposal_forward.5} parent=5 // pred_check
      %p2904 = pneg %p2903
    $region38: #{skill_proposal_forward.5} parent=5 // pred_check_branch
      %2906 = sbr.rel (%p2904) target = $region40
    $region39: #{skill_proposal_forward.5} parent=5 // pred_region
      %s2907 = ssub.s32 %s9, 2
      // Predicated region
      $region41: #{skill_proposal_forward.5} parent=39 // pred_check
        %p2908 = pneg %p106
      $region42: #{skill_proposal_forward.5} parent=39 // pred_check_branch
        %2910 = sbr.rel (%p2908) target = $region44
      $region43: #{skill_proposal_forward.5} parent=39 // pred_region
        %s2911 = smul.u32 256, %s15
        %p2912 = scmp.lt.s32.totalorder %s2911, 2047
        %s2913 = scalar_select %p2912, %s2911, 2047
        %s2914 = smul.addr %s2913, 4
        %s2915 = scalar_lea.vmem %s3, %s2914
      $region44: #{skill_proposal_forward.5} parent=39 // pred_fallthru
        _
    $region40: #{skill_proposal_forward.5} parent=5 // pred_fallthru
      _
  $region6: #{skill_proposal_forward.5} parent=0 // loop_footer
    %s13 = sadd.s32 1, %s9
  $region7: #{skill_proposal_forward.5} parent=0 // loop_footer_branch
    %8 = sbr.rel target = $region3
  $region8: #{skill_proposal_forward.5} parent=0 // loop_exit
    _

// kernel: skill_proposal_forward.6
$region0: #{skill_proposal_forward.6}
  #allocation0 [shape = 'u32[]', space=smem, size = 0x4, offset = 0x4, fixed_abs, tag = 'smem constant byte address 0x4 - core index']
  #allocation1 [shape = 'u32[72,128]{1,0:T(1,128)}', space=vmem, size = 0x9000, scoped, tag = 'internal scratch']
  %s0 = inlined_call_operand.vmem [shape: bf16[4096,144], index: 0, kind: input, shape index: {}]
  %s1 = inlined_call_operand.vmem [shape: bf16[144,16], index: 1, kind: input, shape index: {}]
  %s2 = inlined_call_operand.vmem [shape: f32[1,16], index: 2, kind: input, shape index: {}]
  %s3 = inlined_call_operand.vmem [shape: bf16[4096,16], index: 3, kind: output, shape index: {}]
  %s4 = sld [smem:[#allocation0]]
  $region45: #{skill_proposal_forward.6} parent=0
    _
  %s6 = ssub.s32 1, %s4
  %s7 = scalar_select 0, %s6, %s4
  loop: start=0, step=1, limit=4
  $region2: #{skill_proposal_forward.6} parent=0 // loop_pre_header
    _
  $region3: #{skill_proposal_forward.6} parent=0 // loop_header
    %s9 = sphi 0, %s13
    %p10 = scmp.ge.s32.totalorder %s9, 4
    %s19 = sphi 0, %s21
    %s22 = sphi 0, %s19
    %s23 = sphi 0, %s22
    %s39 = sphi 0, %s23
    %s43 = sphi 0, %s43
    %s45 = sphi 0, %s43
    %s46 = sphi 0, %s45
    %s60 = sphi 0, %s46
    %s64 = sphi 0, %s64
    %s66 = sphi 0, %s64
    %s67 = sphi 0, %s66
    %s81 = sphi 0, %s67
    %s87 = sphi 0, %s89
    %s90 = sphi 0, %s87
    %s91 = sphi 0, %s90
    %s107 = sphi 0, %s91
  $region4: #{skill_proposal_forward.6} parent=0 // loop_header_branch
    %12 = sbr.rel (%p10) target = $region8
  $region5: #{skill_proposal_forward.6} parent=0 // loop_body
    %s14 = ssub.s32 %s9, 1
    %s15 = ssub.s32 %s9, 2
    %s16 = sadd.s32 %s9, 1
    %s17 = ssub.s32 %s9, %s16
    %p18 = scmp.eq.s32.totalorder %s17, 0
    %s20 = sadd.s32 %s19, 1
    %s21 = scalar_select %p18, %s19, %s20
    %p24 = pneg %p18
    %p25 = scmp.eq.s32.totalorder %s9, 1
    %p26 = por %p24, %p25
    %p27 = scmp.ne.s32.totalorder %s19, %s22
    %p28 = scmp.eq.s32.totalorder %s9, 0
    %p29 = por %p27, %p28
    %p30 = scmp.ne.s32.totalorder %s19, %s22
    %p31 = scmp.eq.s32.totalorder %s14, 1
    %p32 = por %p30, %p31
    %p33 = scmp.ne.s32.totalorder %s22, %s23
    %p34 = scmp.eq.s32.totalorder %s14, 0
    %p35 = por %p33, %p34
    %p36 = scmp.ne.s32.totalorder %s22, %s23
    %p37 = scmp.eq.s32.totalorder %s15, 1
    %p38 = por %p36, %p37
    %p40 = scmp.ne.s32.totalorder %s23, %s39
    %p41 = scmp.eq.s32.totalorder %s15, 0
    %p42 = por %p40, %p41
    %s44 = sadd.s32 %s43, 1
    %p47 = scmp.eq.s32.totalorder %s9, 1
    %p48 = scmp.ne.s32.totalorder %s43, %s45
    %p49 = scmp.eq.s32.totalorder %s9, 0
    %p50 = por %p48, %p49
    %p51 = scmp.ne.s32.totalorder %s43, %s45
    %p52 = scmp.eq.s32.totalorder %s14, 1
    %p53 = por %p51, %p52
    %p54 = scmp.ne.s32.totalorder %s45, %s46
    %p55 = scmp.eq.s32.totalorder %s14, 0
    %p56 = por %p54, %p55
    %p57 = scmp.ne.s32.totalorder %s45, %s46
    %p58 = scmp.eq.s32.totalorder %s15, 1
    %p59 = por %p57, %p58
    %p61 = scmp.ne.s32.totalorder %s46, %s60
    %p62 = scmp.eq.s32.totalorder %s15, 0
    %p63 = por %p61, %p62
    %s65 = sadd.s32 %s64, 1
    %p68 = scmp.eq.s32.totalorder %s9, 1
    %p69 = scmp.ne.s32.totalorder %s64, %s66
    %p70 = scmp.eq.s32.totalorder %s9, 0
    %p71 = por %p69, %p70
    %p72 = scmp.ne.s32.totalorder %s64, %s66
    %p73 = scmp.eq.s32.totalorder %s14, 1
    %p74 = por %p72, %p73
    %p75 = scmp.ne.s32.totalorder %s66, %s67
    %p76 = scmp.eq.s32.totalorder %s14, 0
    %p77 = por %p75, %p76
    %p78 = scmp.ne.s32.totalorder %s66, %s67
    %p79 = scmp.eq.s32.totalorder %s15, 1
    %p80 = por %p78, %p79
    %p82 = scmp.ne.s32.totalorder %s67, %s81
    %p83 = scmp.eq.s32.totalorder %s15, 0
    %p84 = por %p82, %p83
    %s85 = ssub.s32 %s9, %s16
    %p86 = scmp.eq.s32.totalorder %s85, 0
    %s88 = sadd.s32 %s87, 1
    %s89 = scalar_select %p86, %s87, %s88
    %p92 = pneg %p86
    %p93 = scmp.eq.s32.totalorder %s9, 1
    %p94 = por %p92, %p93
    %p95 = scmp.ne.s32.totalorder %s87, %s90
    %p96 = scmp.eq.s32.totalorder %s9, 0
    %p97 = por %p95, %p96
    %p98 = scmp.ne.s32.totalorder %s87, %s90
    %p99 = scmp.eq.s32.totalorder %s14, 1
    %p100 = por %p98, %p99
    %p101 = scmp.ne.s32.totalorder %s90, %s91
    %p102 = scmp.eq.s32.totalorder %s14, 0
    %p103 = por %p101, %p102
    %p104 = scmp.ne.s32.totalorder %s90, %s91
    %p105 = scmp.eq.s32.totalorder %s15, 1
    %p106 = por %p104, %p105
    %p108 = scmp.ne.s32.totalorder %s91, %s107
    %p109 = scmp.eq.s32.totalorder %s15, 0
    %p110 = por %p108, %p109
    %p111 = scmp.le.s32.totalorder 1, %s9
    %p112 = scmp.lt.s32.totalorder %s9, 3
    %p113 = pnand %p111, %p112
    %p114 = pneg %p113
    // Predicated region
    $region9: #{skill_proposal_forward.6} parent=5 // pred_check
      _
    $region10: #{skill_proposal_forward.6} parent=5 // pred_check_branch
      %116 = sbr.rel (%p113) target = $region12
    $region11: #{skill_proposal_forward.6} parent=5 // pred_region
      %s117 = ssub.s32 %s9, 1
      // Predicated region
      $region13: #{skill_proposal_forward.6} parent=11 // pred_check
        %p118 = pneg %p56
      $region14: #{skill_proposal_forward.6} parent=11 // pred_check_branch
        %120 = sbr.rel (%p118) target = $region16
      $region15: #{skill_proposal_forward.6} parent=11 // pred_region
        _
      $region16: #{skill_proposal_forward.6} parent=11 // pred_fallthru
        _
      // Predicated region
      $region17: #{skill_proposal_forward.6} parent=11 // pred_check
        %p121 = pneg %p77
      $region18: #{skill_proposal_forward.6} parent=11 // pred_check_branch
        %123 = sbr.rel (%p121) target = $region20
      $region19: #{skill_proposal_forward.6} parent=11 // pred_region
        _
      $region20: #{skill_proposal_forward.6} parent=11 // pred_fallthru
        _
    $region12: #{skill_proposal_forward.6} parent=5 // pred_fallthru
      _
    %p124 = scmp.lt.s32.totalorder %s9, 2
    // Predicated region
    $region21: #{skill_proposal_forward.6} parent=5 // pred_check
      %p125 = pneg %p124
    $region22: #{skill_proposal_forward.6} parent=5 // pred_check_branch
      %127 = sbr.rel (%p125) target = $region24
    $region23: #{skill_proposal_forward.6} parent=5 // pred_region
      // Predicated region
      $region25: #{skill_proposal_forward.6} parent=23 // pred_check
        %p128 = pneg %p29
      $region26: #{skill_proposal_forward.6} parent=23 // pred_check_branch
        %130 = sbr.rel (%p128) target = $region28
      $region27: #{skill_proposal_forward.6} parent=23 // pred_region
        %s131 = smul.u32 256, %s9
        %p132 = scmp.lt.s32.totalorder %s131, 511
        %s133 = scalar_select %p132, %s131, 511
        %s134 = smul.addr %s133, 2
        %s135 = smul.addr %s134, 4
        %s136 = scalar_lea.vmem %s0, %s135
        %s137 = smul.u32 256, %s9
      $region28: #{skill_proposal_forward.6} parent=23 // pred_fallthru
        _
    $region24: #{skill_proposal_forward.6} parent=5 // pred_fallthru
      _
    %p138 = scmp.le.s32.totalorder 1, %s9
    %p139 = scmp.lt.s32.totalorder %s9, 3
    %p140 = pnand %p138, %p139
    %p141 = pneg %p140
    // Predicated region
    $region29: #{skill_proposal_forward.6} parent=5 // pred_check
      _
    $region30: #{skill_proposal_forward.6} parent=5 // pred_check_branch
      %143 = sbr.rel (%p140) target = $region32
    $region31: #{skill_proposal_forward.6} parent=5 // pred_region
      %s144 = ssub.s32 %s9, 1
      %s145 = smul.u32 256, %s14
      %p146 = scmp.lt.s32.totalorder %s145, 511
      %s147 = scalar_select %p146, %s145, 511
      %s148 = smul.addr %s147, 2
      %s149 = smul.addr %s148, 4
      %s150 = scalar_lea.vmem %s0, %s149
      %p151 = pneg %p35
      %p152 = pneg %p32
      %p153 = pneg %p56
      %p154 = pneg %p53
      %p155 = pneg %p77
      %p156 = pneg %p74
      %p157 = pneg %p103
      %p158 = pneg %p100
      %s159 = smul.u32 256, %s14
      %p160 = scmp.lt.s32.totalorder %s159, 511
      %s161 = scalar_select %p160, %s159, 511
      %s162 = smul.addr %s161, 4
      %s163 = scalar_lea.vmem %s3, %s162
      %s164 = smul.u32 256, %s14
      %p165 = scmp.lt.s32.totalorder %s164, 511
      %s166 = scalar_select %p165, %s164, 511
      %s167 = smul.addr %s166, 2
      %s168 = smul.addr %s167, 4
      %s169 = scalar_lea.vmem %s0, %s168
      %s170 = smul.u32 256, %s14
      %s171 = smul.u32 256, %s14
      %p172 = scmp.lt.s32.totalorder %s171, 511
      %s173 = scalar_select %p172, %s171, 511
      %s174 = smul.addr %s173, 4
      %s175 = scalar_lea.vmem %s3, %s174
      %s176 = smul.u32 256, %s14
      %v178 = vld [vmem:[%s169] sm:$0xff]
      %v179 = vld [vmem:[%s169 + $0x8] sm:$0xff]
      %v180 = vld [vmem:[%s169 + $0x10] sm:$0xff]
      %v181 = vld [vmem:[%s169 + $0x18] sm:$0xff]
      %v182 = vld [vmem:[%s169 + $0x20] sm:$0xff]
      %v183 = vld [vmem:[%s169 + $0x28] sm:$0xff]
      %v184 = vld [vmem:[%s169 + $0x30] sm:$0xff]
      %v185 = vld [vmem:[%s169 + $0x38] sm:$0xff]
      %v186 = vld [vmem:[%s169 + $0x40] sm:$0xff]
      %v187 = vld [vmem:[%s169 + $0x48] sm:$0xff]
      %v188 = vld [vmem:[%s169 + $0x50] sm:$0xff]
      %v189 = vld [vmem:[%s169 + $0x58] sm:$0xff]
      %v190 = vld [vmem:[%s169 + $0x60] sm:$0xff]
      %v191 = vld [vmem:[%s169 + $0x68] sm:$0xff]
      %v192 = vld [vmem:[%s169 + $0x70] sm:$0xff]
      %v193 = vld [vmem:[%s169 + $0x78] sm:$0xff]
      %v194 = vld [vmem:[%s169 + $0x80] sm:$0xff]
      %v195 = vld [vmem:[%s169 + $0x88] sm:$0xff]
      %v196 = vld [vmem:[%s169 + $0x90] sm:$0xff]
      %v197 = vld [vmem:[%s169 + $0x98] sm:$0xff]
      %v198 = vld [vmem:[%s169 + $0xa0] sm:$0xff]
      %v199 = vld [vmem:[%s169 + $0xa8] sm:$0xff]
      %v200 = vld [vmem:[%s169 + $0xb0] sm:$0xff]
      %v201 = vld [vmem:[%s169 + $0xb8] sm:$0xff]
      %v202 = vld [vmem:[%s169 + $0xc0] sm:$0xff]
      %v203 = vld [vmem:[%s169 + $0xc8] sm:$0xff]
      %v204 = vld [vmem:[%s169 + $0xd0] sm:$0xff]
      %v205 = vld [vmem:[%s169 + $0xd8] sm:$0xff]
      %v206 = vld [vmem:[%s169 + $0xe0] sm:$0xff]
      %v207 = vld [vmem:[%s169 + $0xe8] sm:$0xff]
      %v208 = vld [vmem:[%s169 + $0xf0] sm:$0xff]
      %v209 = vld [vmem:[%s169 + $0xf8] sm:$0xff]
      %v210 = vld [vmem:[%s169 + $0x100] sm:$0xff]
      %v211 = vld [vmem:[%s169 + $0x108] sm:$0xff]
      %v212 = vld [vmem:[%s169 + $0x110] sm:$0xff]
      %v213 = vld [vmem:[%s169 + $0x118] sm:$0xff]
      %v214 = vld [vmem:[%s169 + $0x120] sm:$0xff]
      %v215 = vld [vmem:[%s169 + $0x128] sm:$0xff]
      %v216 = vld [vmem:[%s169 + $0x130] sm:$0xff]
      %v217 = vld [vmem:[%s169 + $0x138] sm:$0xff]
      %v218 = vld [vmem:[%s169 + $0x140] sm:$0xff]
      %v219 = vld [vmem:[%s169 + $0x148] sm:$0xff]
      %v220 = vld [vmem:[%s169 + $0x150] sm:$0xff]
      %v221 = vld [vmem:[%s169 + $0x158] sm:$0xff]
      %v222 = vld [vmem:[%s169 + $0x160] sm:$0xff]
      %v223 = vld [vmem:[%s169 + $0x168] sm:$0xff]
      %v224 = vld [vmem:[%s169 + $0x170] sm:$0xff]
      %v225 = vld [vmem:[%s169 + $0x178] sm:$0xff]
      %v226 = vld [vmem:[%s169 + $0x180] sm:$0xff]
      %v227 = vld [vmem:[%s169 + $0x188] sm:$0xff]
      %v228 = vld [vmem:[%s169 + $0x190] sm:$0xff]
      %v229 = vld [vmem:[%s169 + $0x198] sm:$0xff]
      %v230 = vld [vmem:[%s169 + $0x1a0] sm:$0xff]
      %v231 = vld [vmem:[%s169 + $0x1a8] sm:$0xff]
      %v232 = vld [vmem:[%s169 + $0x1b0] sm:$0xff]
      %v233 = vld [vmem:[%s169 + $0x1b8] sm:$0xff]
      %v234 = vld [vmem:[%s169 + $0x1c0] sm:$0xff]
      %v235 = vld [vmem:[%s169 + $0x1c8] sm:$0xff]
      %v236 = vld [vmem:[%s169 + $0x1d0] sm:$0xff]
      %v237 = vld [vmem:[%s169 + $0x1d8] sm:$0xff]
      %v238 = vld [vmem:[%s169 + $0x1e0] sm:$0xff]
      %v239 = vld [vmem:[%s169 + $0x1e8] sm:$0xff]
      %v240 = vld [vmem:[%s169 + $0x1f0] sm:$0xff]
      %v241 = vld [vmem:[%s169 + $0x1f8] sm:$0xff]
      %v242 = vld [vmem:[%s169 + $0x200] sm:$0xff]
      %v243 = vld [vmem:[%s169 + $0x208] sm:$0xff]
      %v244 = vld [vmem:[%s169 + $0x210] sm:$0xff]
      %v245 = vld [vmem:[%s169 + $0x218] sm:$0xff]
      %v246 = vld [vmem:[%s169 + $0x220] sm:$0xff]
      %v247 = vld [vmem:[%s169 + $0x228] sm:$0xff]
      %v248 = vld [vmem:[%s169 + $0x230] sm:$0xff]
      %v249 = vld [vmem:[%s169 + $0x238] sm:$0xff]
      %v250 = vld [vmem:[%s169 + $0x240] sm:$0xff]
      %v251 = vld [vmem:[%s169 + $0x248] sm:$0xff]
      %v252 = vld [vmem:[%s169 + $0x250] sm:$0xff]
      %v253 = vld [vmem:[%s169 + $0x258] sm:$0xff]
      %v254 = vld [vmem:[%s169 + $0x260] sm:$0xff]
      %v255 = vld [vmem:[%s169 + $0x268] sm:$0xff]
      %v256 = vld [vmem:[%s169 + $0x270] sm:$0xff]
      %v257 = vld [vmem:[%s169 + $0x278] sm:$0xff]
      %v258 = vld [vmem:[%s169 + $0x280] sm:$0xff]
      %v259 = vld [vmem:[%s169 + $0x288] sm:$0xff]
      %v260 = vld [vmem:[%s169 + $0x290] sm:$0xff]
      %v261 = vld [vmem:[%s169 + $0x298] sm:$0xff]
      %v262 = vld [vmem:[%s169 + $0x2a0] sm:$0xff]
      %v263 = vld [vmem:[%s169 + $0x2a8] sm:$0xff]
      %v264 = vld [vmem:[%s169 + $0x2b0] sm:$0xff]
      %v265 = vld [vmem:[%s169 + $0x2b8] sm:$0xff]
      %v266 = vld [vmem:[%s169 + $0x2c0] sm:$0xff]
      %v267 = vld [vmem:[%s169 + $0x2c8] sm:$0xff]
      %v268 = vld [vmem:[%s169 + $0x2d0] sm:$0xff]
      %v269 = vld [vmem:[%s169 + $0x2d8] sm:$0xff]
      %v270 = vld [vmem:[%s169 + $0x2e0] sm:$0xff]
      %v271 = vld [vmem:[%s169 + $0x2e8] sm:$0xff]
      %v272 = vld [vmem:[%s169 + $0x2f0] sm:$0xff]
      %v273 = vld [vmem:[%s169 + $0x2f8] sm:$0xff]
      %v274 = vld [vmem:[%s169 + $0x300] sm:$0xff]
      %v275 = vld [vmem:[%s169 + $0x308] sm:$0xff]
      %v276 = vld [vmem:[%s169 + $0x310] sm:$0xff]
      %v277 = vld [vmem:[%s169 + $0x318] sm:$0xff]
      %v278 = vld [vmem:[%s169 + $0x320] sm:$0xff]
      %v279 = vld [vmem:[%s169 + $0x328] sm:$0xff]
      %v280 = vld [vmem:[%s169 + $0x330] sm:$0xff]
      %v281 = vld [vmem:[%s169 + $0x338] sm:$0xff]
      %v282 = vld [vmem:[%s169 + $0x340] sm:$0xff]
      %v283 = vld [vmem:[%s169 + $0x348] sm:$0xff]
      %v284 = vld [vmem:[%s169 + $0x350] sm:$0xff]
      %v285 = vld [vmem:[%s169 + $0x358] sm:$0xff]
      %v286 = vld [vmem:[%s169 + $0x360] sm:$0xff]
      %v287 = vld [vmem:[%s169 + $0x368] sm:$0xff]
      %v288 = vld [vmem:[%s169 + $0x370] sm:$0xff]
      %v289 = vld [vmem:[%s169 + $0x378] sm:$0xff]
      %v290 = vld [vmem:[%s169 + $0x380] sm:$0xff]
      %v291 = vld [vmem:[%s169 + $0x388] sm:$0xff]
      %v292 = vld [vmem:[%s169 + $0x390] sm:$0xff]
      %v293 = vld [vmem:[%s169 + $0x398] sm:$0xff]
      %v294 = vld [vmem:[%s169 + $0x3a0] sm:$0xff]
      %v295 = vld [vmem:[%s169 + $0x3a8] sm:$0xff]
      %v296 = vld [vmem:[%s169 + $0x3b0] sm:$0xff]
      %v297 = vld [vmem:[%s169 + $0x3b8] sm:$0xff]
      %v298 = vld [vmem:[%s169 + $0x3c0] sm:$0xff]
      %v299 = vld [vmem:[%s169 + $0x3c8] sm:$0xff]
      %v300 = vld [vmem:[%s169 + $0x3d0] sm:$0xff]
      %v301 = vld [vmem:[%s169 + $0x3d8] sm:$0xff]
      %v302 = vld [vmem:[%s169 + $0x3e0] sm:$0xff]
      %v303 = vld [vmem:[%s169 + $0x3e8] sm:$0xff]
      %v304 = vld [vmem:[%s169 + $0x3f0] sm:$0xff]
      %v305 = vld [vmem:[%s169 + $0x3f8] sm:$0xff]
      %v306 = vld [vmem:[%s169 + $0x400] sm:$0xff]
      %v307 = vld [vmem:[%s169 + $0x408] sm:$0xff]
      %v308 = vld [vmem:[%s169 + $0x410] sm:$0xff]
      %v309 = vld [vmem:[%s169 + $0x418] sm:$0xff]
      %v310 = vld [vmem:[%s169 + $0x420] sm:$0xff]
      %v311 = vld [vmem:[%s169 + $0x428] sm:$0xff]
      %v312 = vld [vmem:[%s169 + $0x430] sm:$0xff]
      %v313 = vld [vmem:[%s169 + $0x438] sm:$0xff]
      %v314 = vld [vmem:[%s169 + $0x440] sm:$0xff]
      %v315 = vld [vmem:[%s169 + $0x448] sm:$0xff]
      %v316 = vld [vmem:[%s169 + $0x450] sm:$0xff]
      %v317 = vld [vmem:[%s169 + $0x458] sm:$0xff]
      %v318 = vld [vmem:[%s169 + $0x460] sm:$0xff]
      %v319 = vld [vmem:[%s169 + $0x468] sm:$0xff]
      %v320 = vld [vmem:[%s169 + $0x470] sm:$0xff]
      %v321 = vld [vmem:[%s169 + $0x478] sm:$0xff]
      %v322 = vld [vmem:[%s169 + $0x480] sm:$0xff]
      %v323 = vld [vmem:[%s169 + $0x488] sm:$0xff]
      %v324 = vld [vmem:[%s169 + $0x490] sm:$0xff]
      %v325 = vld [vmem:[%s169 + $0x498] sm:$0xff]
      %v326 = vld [vmem:[%s169 + $0x4a0] sm:$0xff]
      %v327 = vld [vmem:[%s169 + $0x4a8] sm:$0xff]
      %v328 = vld [vmem:[%s169 + $0x4b0] sm:$0xff]
      %v329 = vld [vmem:[%s169 + $0x4b8] sm:$0xff]
      %v330 = vld [vmem:[%s169 + $0x4c0] sm:$0xff]
      %v331 = vld [vmem:[%s169 + $0x4c8] sm:$0xff]
      %v332 = vld [vmem:[%s169 + $0x4d0] sm:$0xff]
      %v333 = vld [vmem:[%s169 + $0x4d8] sm:$0xff]
      %v334 = vld [vmem:[%s169 + $0x4e0] sm:$0xff]
      %v335 = vld [vmem:[%s169 + $0x4e8] sm:$0xff]
      %v336 = vld [vmem:[%s169 + $0x4f0] sm:$0xff]
      %v337 = vld [vmem:[%s169 + $0x4f8] sm:$0xff]
      %v338 = vld [vmem:[%s169 + $0x500] sm:$0xff]
      %v339 = vld [vmem:[%s169 + $0x508] sm:$0xff]
      %v340 = vld [vmem:[%s169 + $0x510] sm:$0xff]
      %v341 = vld [vmem:[%s169 + $0x518] sm:$0xff]
      %v342 = vld [vmem:[%s169 + $0x520] sm:$0xff]
      %v343 = vld [vmem:[%s169 + $0x528] sm:$0xff]
      %v344 = vld [vmem:[%s169 + $0x530] sm:$0xff]
      %v345 = vld [vmem:[%s169 + $0x538] sm:$0xff]
      %v346 = vld [vmem:[%s169 + $0x540] sm:$0xff]
      %v347 = vld [vmem:[%s169 + $0x548] sm:$0xff]
      %v348 = vld [vmem:[%s169 + $0x550] sm:$0xff]
      %v349 = vld [vmem:[%s169 + $0x558] sm:$0xff]
      %v350 = vld [vmem:[%s169 + $0x560] sm:$0xff]
      %v351 = vld [vmem:[%s169 + $0x568] sm:$0xff]
      %v352 = vld [vmem:[%s169 + $0x570] sm:$0xff]
      %v353 = vld [vmem:[%s169 + $0x578] sm:$0xff]
      %v354 = vld [vmem:[%s169 + $0x580] sm:$0xff]
      %v355 = vld [vmem:[%s169 + $0x588] sm:$0xff]
      %v356 = vld [vmem:[%s169 + $0x590] sm:$0xff]
      %v357 = vld [vmem:[%s169 + $0x598] sm:$0xff]
      %v358 = vld [vmem:[%s169 + $0x5a0] sm:$0xff]
      %v359 = vld [vmem:[%s169 + $0x5a8] sm:$0xff]
      %v360 = vld [vmem:[%s169 + $0x5b0] sm:$0xff]
      %v361 = vld [vmem:[%s169 + $0x5b8] sm:$0xff]
      %v362 = vld [vmem:[%s169 + $0x5c0] sm:$0xff]
      %v363 = vld [vmem:[%s169 + $0x5c8] sm:$0xff]
      %v364 = vld [vmem:[%s169 + $0x5d0] sm:$0xff]
      %v365 = vld [vmem:[%s169 + $0x5d8] sm:$0xff]
      %v366 = vld [vmem:[%s169 + $0x5e0] sm:$0xff]
      %v367 = vld [vmem:[%s169 + $0x5e8] sm:$0xff]
      %v368 = vld [vmem:[%s169 + $0x5f0] sm:$0xff]
      %v369 = vld [vmem:[%s169 + $0x5f8] sm:$0xff]
      %v370 = vld [vmem:[%s169 + $0x600] sm:$0xff]
      %v371 = vld [vmem:[%s169 + $0x608] sm:$0xff]
      %v372 = vld [vmem:[%s169 + $0x610] sm:$0xff]
      %v373 = vld [vmem:[%s169 + $0x618] sm:$0xff]
      %v374 = vld [vmem:[%s169 + $0x620] sm:$0xff]
      %v375 = vld [vmem:[%s169 + $0x628] sm:$0xff]
      %v376 = vld [vmem:[%s169 + $0x630] sm:$0xff]
      %v377 = vld [vmem:[%s169 + $0x638] sm:$0xff]
      %v378 = vld [vmem:[%s169 + $0x640] sm:$0xff]
      %v379 = vld [vmem:[%s169 + $0x648] sm:$0xff]
      %v380 = vld [vmem:[%s169 + $0x650] sm:$0xff]
      %v381 = vld [vmem:[%s169 + $0x658] sm:$0xff]
      %v382 = vld [vmem:[%s169 + $0x660] sm:$0xff]
      %v383 = vld [vmem:[%s169 + $0x668] sm:$0xff]
      %v384 = vld [vmem:[%s169 + $0x670] sm:$0xff]
      %v385 = vld [vmem:[%s169 + $0x678] sm:$0xff]
      %v386 = vld [vmem:[%s169 + $0x680] sm:$0xff]
      %v387 = vld [vmem:[%s169 + $0x688] sm:$0xff]
      %v388 = vld [vmem:[%s169 + $0x690] sm:$0xff]
      %v389 = vld [vmem:[%s169 + $0x698] sm:$0xff]
      %v390 = vld [vmem:[%s169 + $0x6a0] sm:$0xff]
      %v391 = vld [vmem:[%s169 + $0x6a8] sm:$0xff]
      %v392 = vld [vmem:[%s169 + $0x6b0] sm:$0xff]
      %v393 = vld [vmem:[%s169 + $0x6b8] sm:$0xff]
      %v394 = vld [vmem:[%s169 + $0x6c0] sm:$0xff]
      %v395 = vld [vmem:[%s169 + $0x6c8] sm:$0xff]
      %v396 = vld [vmem:[%s169 + $0x6d0] sm:$0xff]
      %v397 = vld [vmem:[%s169 + $0x6d8] sm:$0xff]
      %v398 = vld [vmem:[%s169 + $0x6e0] sm:$0xff]
      %v399 = vld [vmem:[%s169 + $0x6e8] sm:$0xff]
      %v400 = vld [vmem:[%s169 + $0x6f0] sm:$0xff]
      %v401 = vld [vmem:[%s169 + $0x6f8] sm:$0xff]
      %v402 = vld [vmem:[%s169 + $0x700] sm:$0xff]
      %v403 = vld [vmem:[%s169 + $0x708] sm:$0xff]
      %v404 = vld [vmem:[%s169 + $0x710] sm:$0xff]
      %v405 = vld [vmem:[%s169 + $0x718] sm:$0xff]
      %v406 = vld [vmem:[%s169 + $0x720] sm:$0xff]
      %v407 = vld [vmem:[%s169 + $0x728] sm:$0xff]
      %v408 = vld [vmem:[%s169 + $0x730] sm:$0xff]
      %v409 = vld [vmem:[%s169 + $0x738] sm:$0xff]
      %v410 = vld [vmem:[%s169 + $0x740] sm:$0xff]
      %v411 = vld [vmem:[%s169 + $0x748] sm:$0xff]
      %v412 = vld [vmem:[%s169 + $0x750] sm:$0xff]
      %v413 = vld [vmem:[%s169 + $0x758] sm:$0xff]
      %v414 = vld [vmem:[%s169 + $0x760] sm:$0xff]
      %v415 = vld [vmem:[%s169 + $0x768] sm:$0xff]
      %v416 = vld [vmem:[%s169 + $0x770] sm:$0xff]
      %v417 = vld [vmem:[%s169 + $0x778] sm:$0xff]
      %v418 = vld [vmem:[%s169 + $0x780] sm:$0xff]
      %v419 = vld [vmem:[%s169 + $0x788] sm:$0xff]
      %v420 = vld [vmem:[%s169 + $0x790] sm:$0xff]
      %v421 = vld [vmem:[%s169 + $0x798] sm:$0xff]
      %v422 = vld [vmem:[%s169 + $0x7a0] sm:$0xff]
      %v423 = vld [vmem:[%s169 + $0x7a8] sm:$0xff]
      %v424 = vld [vmem:[%s169 + $0x7b0] sm:$0xff]
      %v425 = vld [vmem:[%s169 + $0x7b8] sm:$0xff]
      %v426 = vld [vmem:[%s169 + $0x7c0] sm:$0xff]
      %v427 = vld [vmem:[%s169 + $0x7c8] sm:$0xff]
      %v428 = vld [vmem:[%s169 + $0x7d0] sm:$0xff]
      %v429 = vld [vmem:[%s169 + $0x7d8] sm:$0xff]
      %v430 = vld [vmem:[%s169 + $0x7e0] sm:$0xff]
      %v431 = vld [vmem:[%s169 + $0x7e8] sm:$0xff]
      %v432 = vld [vmem:[%s169 + $0x7f0] sm:$0xff]
      %v433 = vld [vmem:[%s169 + $0x7f8] sm:$0xff]
      %v434 = vld [vmem:[%s1] sm:$0xf]
      %v435 = vld [vmem:[%s1 + $0x4] sm:$0xf]
      %v436 = vld [vmem:[%s1 + $0x8] sm:$0xf]
      %v437 = vld [vmem:[%s1 + $0xc] sm:$0xf]
      %v438 = vld [vmem:[%s1 + $0x10] sm:$0xf]
      %v439 = vld [vmem:[%s1 + $0x14] sm:$0xf]
      %v440 = vld [vmem:[%s1 + $0x18] sm:$0xf]
      %v441 = vld [vmem:[%s1 + $0x1c] sm:$0xf]
      %v442 = vld [vmem:[%s1 + $0x20] sm:$0xf]
      %v443 = vld [vmem:[%s1 + $0x24] sm:$0xf]
      %v444 = vld [vmem:[%s1 + $0x28] sm:$0xf]
      %v445 = vld [vmem:[%s1 + $0x2c] sm:$0xf]
      %v446 = vld [vmem:[%s1 + $0x30] sm:$0xf]
      %v447 = vld [vmem:[%s1 + $0x34] sm:$0xf]
      %v448 = vld [vmem:[%s1 + $0x38] sm:$0xf]
      %v449 = vld [vmem:[%s1 + $0x3c] sm:$0xf]
      %v450 = vld [vmem:[%s1 + $0x40] sm:$0xf]
      %v451 = vld [vmem:[%s1 + $0x44] sm:$0xf]
      %v452 = vld [vmem:[%s2] sm:$0x1]
      %v454 = vperm.slane %v452, 0
      %v712 = vunpack.c.l.b16 %v178
      %v713 = vunpack.c.h.b16 %v178
      %v714 = vunpack.c.l.b16 %v179
      %v715 = vunpack.c.h.b16 %v179
      %v716 = vunpack.c.l.b16 %v180
      %v717 = vunpack.c.h.b16 %v180
      %v718 = vunpack.c.l.b16 %v181
      %v719 = vunpack.c.h.b16 %v181
      %v720 = vunpack.c.l.b16 %v182
      %v721 = vunpack.c.h.b16 %v182
      %v722 = vunpack.c.l.b16 %v183
      %v723 = vunpack.c.h.b16 %v183
      %v724 = vunpack.c.l.b16 %v184
      %v725 = vunpack.c.h.b16 %v184
      %v726 = vunpack.c.l.b16 %v185
      %v727 = vunpack.c.h.b16 %v185
      %v728 = vunpack.c.l.b16 %v186
      %v729 = vunpack.c.h.b16 %v186
      %v730 = vunpack.c.l.b16 %v187
      %v731 = vunpack.c.h.b16 %v187
      %v732 = vunpack.c.l.b16 %v188
      %v733 = vunpack.c.h.b16 %v188
      %v734 = vunpack.c.l.b16 %v189
      %v735 = vunpack.c.h.b16 %v189
      %v736 = vunpack.c.l.b16 %v190
      %v737 = vunpack.c.h.b16 %v190
      %v738 = vunpack.c.l.b16 %v191
      %v739 = vunpack.c.h.b16 %v191
      %v740 = vunpack.c.l.b16 %v192
      %v741 = vunpack.c.h.b16 %v192
      %v742 = vunpack.c.l.b16 %v193
      %v743 = vunpack.c.h.b16 %v193
      %v744 = vunpack.c.l.b16 %v194
      %v745 = vunpack.c.h.b16 %v194
      %v746 = vunpack.c.l.b16 %v195
      %v747 = vunpack.c.h.b16 %v195
      %v748 = vunpack.c.l.b16 %v196
      %v749 = vunpack.c.h.b16 %v196
      %v750 = vunpack.c.l.b16 %v197
      %v751 = vunpack.c.h.b16 %v197
      %v752 = vunpack.c.l.b16 %v198
      %v753 = vunpack.c.h.b16 %v198
      %v754 = vunpack.c.l.b16 %v199
      %v755 = vunpack.c.h.b16 %v199
      %v756 = vunpack.c.l.b16 %v200
      %v757 = vunpack.c.h.b16 %v200
      %v758 = vunpack.c.l.b16 %v201
      %v759 = vunpack.c.h.b16 %v201
      %v760 = vunpack.c.l.b16 %v202
      %v761 = vunpack.c.h.b16 %v202
      %v762 = vunpack.c.l.b16 %v203
      %v763 = vunpack.c.h.b16 %v203
      %v764 = vunpack.c.l.b16 %v204
      %v765 = vunpack.c.h.b16 %v204
      %v766 = vunpack.c.l.b16 %v205
      %v767 = vunpack.c.h.b16 %v205
      %v768 = vunpack.c.l.b16 %v206
      %v769 = vunpack.c.h.b16 %v206
      %v770 = vunpack.c.l.b16 %v207
      %v771 = vunpack.c.h.b16 %v207
      %v772 = vunpack.c.l.b16 %v208
      %v773 = vunpack.c.h.b16 %v208
      %v774 = vunpack.c.l.b16 %v209
      %v775 = vunpack.c.h.b16 %v209
      %v776 = vunpack.c.l.b16 %v210
      %v777 = vunpack.c.h.b16 %v210
      %v778 = vunpack.c.l.b16 %v211
      %v779 = vunpack.c.h.b16 %v211
      %v780 = vunpack.c.l.b16 %v212
      %v781 = vunpack.c.h.b16 %v212
      %v782 = vunpack.c.l.b16 %v213
      %v783 = vunpack.c.h.b16 %v213
      %v784 = vunpack.c.l.b16 %v214
      %v785 = vunpack.c.h.b16 %v214
      %v786 = vunpack.c.l.b16 %v215
      %v787 = vunpack.c.h.b16 %v215
      %v788 = vunpack.c.l.b16 %v216
      %v789 = vunpack.c.h.b16 %v216
      %v790 = vunpack.c.l.b16 %v217
      %v791 = vunpack.c.h.b16 %v217
      %v792 = vunpack.c.l.b16 %v218
      %v793 = vunpack.c.h.b16 %v218
      %v794 = vunpack.c.l.b16 %v219
      %v795 = vunpack.c.h.b16 %v219
      %v796 = vunpack.c.l.b16 %v220
      %v797 = vunpack.c.h.b16 %v220
      %v798 = vunpack.c.l.b16 %v221
      %v799 = vunpack.c.h.b16 %v221
      %v800 = vunpack.c.l.b16 %v222
      %v801 = vunpack.c.h.b16 %v222
      %v802 = vunpack.c.l.b16 %v223
      %v803 = vunpack.c.h.b16 %v223
      %v804 = vunpack.c.l.b16 %v224
      %v805 = vunpack.c.h.b16 %v224
      %v806 = vunpack.c.l.b16 %v225
      %v807 = vunpack.c.h.b16 %v225
      %v808 = vunpack.c.l.b16 %v226
      %v809 = vunpack.c.h.b16 %v226
      %v810 = vunpack.c.l.b16 %v227
      %v811 = vunpack.c.h.b16 %v227
      %v812 = vunpack.c.l.b16 %v228
      %v813 = vunpack.c.h.b16 %v228
      %v814 = vunpack.c.l.b16 %v229
      %v815 = vunpack.c.h.b16 %v229
      %v816 = vunpack.c.l.b16 %v230
      %v817 = vunpack.c.h.b16 %v230
      %v818 = vunpack.c.l.b16 %v231
      %v819 = vunpack.c.h.b16 %v231
      %v820 = vunpack.c.l.b16 %v232
      %v821 = vunpack.c.h.b16 %v232
      %v822 = vunpack.c.l.b16 %v233
      %v823 = vunpack.c.h.b16 %v233
      %v824 = vunpack.c.l.b16 %v234
      %v825 = vunpack.c.h.b16 %v234
      %v826 = vunpack.c.l.b16 %v235
      %v827 = vunpack.c.h.b16 %v235
      %v828 = vunpack.c.l.b16 %v236
      %v829 = vunpack.c.h.b16 %v236
      %v830 = vunpack.c.l.b16 %v237
      %v831 = vunpack.c.h.b16 %v237
      %v832 = vunpack.c.l.b16 %v238
      %v833 = vunpack.c.h.b16 %v238
      %v834 = vunpack.c.l.b16 %v239
      %v835 = vunpack.c.h.b16 %v239
      %v836 = vunpack.c.l.b16 %v240
      %v837 = vunpack.c.h.b16 %v240
      %v838 = vunpack.c.l.b16 %v241
      %v839 = vunpack.c.h.b16 %v241
      %v840 = vunpack.c.l.b16 %v242
      %v841 = vunpack.c.h.b16 %v242
      %v842 = vunpack.c.l.b16 %v243
      %v843 = vunpack.c.h.b16 %v243
      %v844 = vunpack.c.l.b16 %v244
      %v845 = vunpack.c.h.b16 %v244
      %v846 = vunpack.c.l.b16 %v245
      %v847 = vunpack.c.h.b16 %v245
      %v848 = vunpack.c.l.b16 %v246
      %v849 = vunpack.c.h.b16 %v246
      %v850 = vunpack.c.l.b16 %v247
      %v851 = vunpack.c.h.b16 %v247
      %v852 = vunpack.c.l.b16 %v248
      %v853 = vunpack.c.h.b16 %v248
      %v854 = vunpack.c.l.b16 %v249
      %v855 = vunpack.c.h.b16 %v249
      %v856 = vunpack.c.l.b16 %v250
      %v857 = vunpack.c.h.b16 %v250
      %v858 = vunpack.c.l.b16 %v251
      %v859 = vunpack.c.h.b16 %v251
      %v860 = vunpack.c.l.b16 %v252
      %v861 = vunpack.c.h.b16 %v252
      %v862 = vunpack.c.l.b16 %v253
      %v863 = vunpack.c.h.b16 %v253
      %v864 = vunpack.c.l.b16 %v254
      %v865 = vunpack.c.h.b16 %v254
      %v866 = vunpack.c.l.b16 %v255
      %v867 = vunpack.c.h.b16 %v255
      %v868 = vunpack.c.l.b16 %v256
      %v869 = vunpack.c.h.b16 %v256
      %v870 = vunpack.c.l.b16 %v257
      %v871 = vunpack.c.h.b16 %v257
      %v872 = vunpack.c.l.b16 %v258
      %v873 = vunpack.c.h.b16 %v258
      %v874 = vunpack.c.l.b16 %v259
      %v875 = vunpack.c.h.b16 %v259
      %v876 = vunpack.c.l.b16 %v260
      %v877 = vunpack.c.h.b16 %v260
      %v878 = vunpack.c.l.b16 %v261
      %v879 = vunpack.c.h.b16 %v261
      %v880 = vunpack.c.l.b16 %v262
      %v881 = vunpack.c.h.b16 %v262
      %v882 = vunpack.c.l.b16 %v263
      %v883 = vunpack.c.h.b16 %v263
      %v884 = vunpack.c.l.b16 %v264
      %v885 = vunpack.c.h.b16 %v264
      %v886 = vunpack.c.l.b16 %v265
      %v887 = vunpack.c.h.b16 %v265
      %v888 = vunpack.c.l.b16 %v266
      %v889 = vunpack.c.h.b16 %v266
      %v890 = vunpack.c.l.b16 %v267
      %v891 = vunpack.c.h.b16 %v267
      %v892 = vunpack.c.l.b16 %v268
      %v893 = vunpack.c.h.b16 %v268
      %v894 = vunpack.c.l.b16 %v269
      %v895 = vunpack.c.h.b16 %v269
      %v896 = vunpack.c.l.b16 %v270
      %v897 = vunpack.c.h.b16 %v270
      %v898 = vunpack.c.l.b16 %v271
      %v899 = vunpack.c.h.b16 %v271
      %v900 = vunpack.c.l.b16 %v272
      %v901 = vunpack.c.h.b16 %v272
      %v902 = vunpack.c.l.b16 %v273
      %v903 = vunpack.c.h.b16 %v273
      %v904 = vunpack.c.l.b16 %v274
      %v905 = vunpack.c.h.b16 %v274
      %v906 = vunpack.c.l.b16 %v275
      %v907 = vunpack.c.h.b16 %v275
      %v908 = vunpack.c.l.b16 %v276
      %v909 = vunpack.c.h.b16 %v276
      %v910 = vunpack.c.l.b16 %v277
      %v911 = vunpack.c.h.b16 %v277
      %v912 = vunpack.c.l.b16 %v278
      %v913 = vunpack.c.h.b16 %v278
      %v914 = vunpack.c.l.b16 %v279
      %v915 = vunpack.c.h.b16 %v279
      %v916 = vunpack.c.l.b16 %v280
      %v917 = vunpack.c.h.b16 %v280
      %v918 = vunpack.c.l.b16 %v281
      %v919 = vunpack.c.h.b16 %v281
      %v920 = vunpack.c.l.b16 %v282
      %v921 = vunpack.c.h.b16 %v282
      %v922 = vunpack.c.l.b16 %v283
      %v923 = vunpack.c.h.b16 %v283
      %v924 = vunpack.c.l.b16 %v284
      %v925 = vunpack.c.h.b16 %v284
      %v926 = vunpack.c.l.b16 %v285
      %v927 = vunpack.c.h.b16 %v285
      %v928 = vunpack.c.l.b16 %v286
      %v929 = vunpack.c.h.b16 %v286
      %v930 = vunpack.c.l.b16 %v287
      %v931 = vunpack.c.h.b16 %v287
      %v932 = vunpack.c.l.b16 %v288
      %v933 = vunpack.c.h.b16 %v288
      %v934 = vunpack.c.l.b16 %v289
      %v935 = vunpack.c.h.b16 %v289
      %v936 = vunpack.c.l.b16 %v290
      %v937 = vunpack.c.h.b16 %v290
      %v938 = vunpack.c.l.b16 %v291
      %v939 = vunpack.c.h.b16 %v291
      %v940 = vunpack.c.l.b16 %v292
      %v941 = vunpack.c.h.b16 %v292
      %v942 = vunpack.c.l.b16 %v293
      %v943 = vunpack.c.h.b16 %v293
      %v944 = vunpack.c.l.b16 %v294
      %v945 = vunpack.c.h.b16 %v294
      %v946 = vunpack.c.l.b16 %v295
      %v947 = vunpack.c.h.b16 %v295
      %v948 = vunpack.c.l.b16 %v296
      %v949 = vunpack.c.h.b16 %v296
      %v950 = vunpack.c.l.b16 %v297
      %v951 = vunpack.c.h.b16 %v297
      %v952 = vunpack.c.l.b16 %v298
      %v953 = vunpack.c.h.b16 %v298
      %v954 = vunpack.c.l.b16 %v299
      %v955 = vunpack.c.h.b16 %v299
      %v956 = vunpack.c.l.b16 %v300
      %v957 = vunpack.c.h.b16 %v300
      %v958 = vunpack.c.l.b16 %v301
      %v959 = vunpack.c.h.b16 %v301
      %v960 = vunpack.c.l.b16 %v302
      %v961 = vunpack.c.h.b16 %v302
      %v962 = vunpack.c.l.b16 %v303
      %v963 = vunpack.c.h.b16 %v303
      %v964 = vunpack.c.l.b16 %v304
      %v965 = vunpack.c.h.b16 %v304
      %v966 = vunpack.c.l.b16 %v305
      %v967 = vunpack.c.h.b16 %v305
      %v968 = vunpack.c.l.b16 %v306
      %v969 = vunpack.c.h.b16 %v306
      %v970 = vunpack.c.l.b16 %v307
      %v971 = vunpack.c.h.b16 %v307
      %v972 = vunpack.c.l.b16 %v308
      %v973 = vunpack.c.h.b16 %v308
      %v974 = vunpack.c.l.b16 %v309
      %v975 = vunpack.c.h.b16 %v309
      %v976 = vunpack.c.l.b16 %v310
      %v977 = vunpack.c.h.b16 %v310
      %v978 = vunpack.c.l.b16 %v311
      %v979 = vunpack.c.h.b16 %v311
      %v980 = vunpack.c.l.b16 %v312
      %v981 = vunpack.c.h.b16 %v312
      %v982 = vunpack.c.l.b16 %v313
      %v983 = vunpack.c.h.b16 %v313
      %v984 = vunpack.c.l.b16 %v314
      %v985 = vunpack.c.h.b16 %v314
      %v986 = vunpack.c.l.b16 %v315
      %v987 = vunpack.c.h.b16 %v315
      %v988 = vunpack.c.l.b16 %v316
      %v989 = vunpack.c.h.b16 %v316
      %v990 = vunpack.c.l.b16 %v317
      %v991 = vunpack.c.h.b16 %v317
      %v992 = vunpack.c.l.b16 %v318
      %v993 = vunpack.c.h.b16 %v318
      %v994 = vunpack.c.l.b16 %v319
      %v995 = vunpack.c.h.b16 %v319
      %v996 = vunpack.c.l.b16 %v320
      %v997 = vunpack.c.h.b16 %v320
      %v998 = vunpack.c.l.b16 %v321
      %v999 = vunpack.c.h.b16 %v321
      %v1000 = vunpack.c.l.b16 %v322
      %v1001 = vunpack.c.h.b16 %v322
      %v1002 = vunpack.c.l.b16 %v323
      %v1003 = vunpack.c.h.b16 %v323
      %v1004 = vunpack.c.l.b16 %v324
      %v1005 = vunpack.c.h.b16 %v324
      %v1006 = vunpack.c.l.b16 %v325
      %v1007 = vunpack.c.h.b16 %v325
      %v1008 = vunpack.c.l.b16 %v326
      %v1009 = vunpack.c.h.b16 %v326
      %v1010 = vunpack.c.l.b16 %v327
      %v1011 = vunpack.c.h.b16 %v327
      %v1012 = vunpack.c.l.b16 %v328
      %v1013 = vunpack.c.h.b16 %v328
      %v1014 = vunpack.c.l.b16 %v329
      %v1015 = vunpack.c.h.b16 %v329
      %v1016 = vunpack.c.l.b16 %v330
      %v1017 = vunpack.c.h.b16 %v330
      %v1018 = vunpack.c.l.b16 %v331
      %v1019 = vunpack.c.h.b16 %v331
      %v1020 = vunpack.c.l.b16 %v332
      %v1021 = vunpack.c.h.b16 %v332
      %v1022 = vunpack.c.l.b16 %v333
      %v1023 = vunpack.c.h.b16 %v333
      %v1024 = vunpack.c.l.b16 %v334
      %v1025 = vunpack.c.h.b16 %v334
      %v1026 = vunpack.c.l.b16 %v335
      %v1027 = vunpack.c.h.b16 %v335
      %v1028 = vunpack.c.l.b16 %v336
      %v1029 = vunpack.c.h.b16 %v336
      %v1030 = vunpack.c.l.b16 %v337
      %v1031 = vunpack.c.h.b16 %v337
      %v1032 = vunpack.c.l.b16 %v338
      %v1033 = vunpack.c.h.b16 %v338
      %v1034 = vunpack.c.l.b16 %v339
      %v1035 = vunpack.c.h.b16 %v339
      %v1036 = vunpack.c.l.b16 %v340
      %v1037 = vunpack.c.h.b16 %v340
      %v1038 = vunpack.c.l.b16 %v341
      %v1039 = vunpack.c.h.b16 %v341
      %v1040 = vunpack.c.l.b16 %v342
      %v1041 = vunpack.c.h.b16 %v342
      %v1042 = vunpack.c.l.b16 %v343
      %v1043 = vunpack.c.h.b16 %v343
      %v1044 = vunpack.c.l.b16 %v344
      %v1045 = vunpack.c.h.b16 %v344
      %v1046 = vunpack.c.l.b16 %v345
      %v1047 = vunpack.c.h.b16 %v345
      %v1048 = vunpack.c.l.b16 %v346
      %v1049 = vunpack.c.h.b16 %v346
      %v1050 = vunpack.c.l.b16 %v347
      %v1051 = vunpack.c.h.b16 %v347
      %v1052 = vunpack.c.l.b16 %v348
      %v1053 = vunpack.c.h.b16 %v348
      %v1054 = vunpack.c.l.b16 %v349
      %v1055 = vunpack.c.h.b16 %v349
      %v1056 = vunpack.c.l.b16 %v350
      %v1057 = vunpack.c.h.b16 %v350
      %v1058 = vunpack.c.l.b16 %v351
      %v1059 = vunpack.c.h.b16 %v351
      %v1060 = vunpack.c.l.b16 %v352
      %v1061 = vunpack.c.h.b16 %v352
      %v1062 = vunpack.c.l.b16 %v353
      %v1063 = vunpack.c.h.b16 %v353
      %v1064 = vunpack.c.l.b16 %v354
      %v1065 = vunpack.c.h.b16 %v354
      %v1066 = vunpack.c.l.b16 %v355
      %v1067 = vunpack.c.h.b16 %v355
      %v1068 = vunpack.c.l.b16 %v356
      %v1069 = vunpack.c.h.b16 %v356
      %v1070 = vunpack.c.l.b16 %v357
      %v1071 = vunpack.c.h.b16 %v357
      %v1072 = vunpack.c.l.b16 %v358
      %v1073 = vunpack.c.h.b16 %v358
      %v1074 = vunpack.c.l.b16 %v359
      %v1075 = vunpack.c.h.b16 %v359
      %v1076 = vunpack.c.l.b16 %v360
      %v1077 = vunpack.c.h.b16 %v360
      %v1078 = vunpack.c.l.b16 %v361
      %v1079 = vunpack.c.h.b16 %v361
      %v1080 = vunpack.c.l.b16 %v362
      %v1081 = vunpack.c.h.b16 %v362
      %v1082 = vunpack.c.l.b16 %v363
      %v1083 = vunpack.c.h.b16 %v363
      %v1084 = vunpack.c.l.b16 %v364
      %v1085 = vunpack.c.h.b16 %v364
      %v1086 = vunpack.c.l.b16 %v365
      %v1087 = vunpack.c.h.b16 %v365
      %v1088 = vunpack.c.l.b16 %v366
      %v1089 = vunpack.c.h.b16 %v366
      %v1090 = vunpack.c.l.b16 %v367
      %v1091 = vunpack.c.h.b16 %v367
      %v1092 = vunpack.c.l.b16 %v368
      %v1093 = vunpack.c.h.b16 %v368
      %v1094 = vunpack.c.l.b16 %v369
      %v1095 = vunpack.c.h.b16 %v369
      %v1096 = vunpack.c.l.b16 %v370
      %v1097 = vunpack.c.h.b16 %v370
      %v1098 = vunpack.c.l.b16 %v371
      %v1099 = vunpack.c.h.b16 %v371
      %v1100 = vunpack.c.l.b16 %v372
      %v1101 = vunpack.c.h.b16 %v372
      %v1102 = vunpack.c.l.b16 %v373
      %v1103 = vunpack.c.h.b16 %v373
      %v1104 = vunpack.c.l.b16 %v374
      %v1105 = vunpack.c.h.b16 %v374
      %v1106 = vunpack.c.l.b16 %v375
      %v1107 = vunpack.c.h.b16 %v375
      %v1108 = vunpack.c.l.b16 %v376
      %v1109 = vunpack.c.h.b16 %v376
      %v1110 = vunpack.c.l.b16 %v377
      %v1111 = vunpack.c.h.b16 %v377
      %v1112 = vunpack.c.l.b16 %v378
      %v1113 = vunpack.c.h.b16 %v378
      %v1114 = vunpack.c.l.b16 %v379
      %v1115 = vunpack.c.h.b16 %v379
      %v1116 = vunpack.c.l.b16 %v380
      %v1117 = vunpack.c.h.b16 %v380
      %v1118 = vunpack.c.l.b16 %v381
      %v1119 = vunpack.c.h.b16 %v381
      %v1120 = vunpack.c.l.b16 %v382
      %v1121 = vunpack.c.h.b16 %v382
      %v1122 = vunpack.c.l.b16 %v383
      %v1123 = vunpack.c.h.b16 %v383
      %v1124 = vunpack.c.l.b16 %v384
      %v1125 = vunpack.c.h.b16 %v384
      %v1126 = vunpack.c.l.b16 %v385
      %v1127 = vunpack.c.h.b16 %v385
      %v1128 = vunpack.c.l.b16 %v386
      %v1129 = vunpack.c.h.b16 %v386
      %v1130 = vunpack.c.l.b16 %v387
      %v1131 = vunpack.c.h.b16 %v387
      %v1132 = vunpack.c.l.b16 %v388
      %v1133 = vunpack.c.h.b16 %v388
      %v1134 = vunpack.c.l.b16 %v389
      %v1135 = vunpack.c.h.b16 %v389
      %v1136 = vunpack.c.l.b16 %v390
      %v1137 = vunpack.c.h.b16 %v390
      %v1138 = vunpack.c.l.b16 %v391
      %v1139 = vunpack.c.h.b16 %v391
      %v1140 = vunpack.c.l.b16 %v392
      %v1141 = vunpack.c.h.b16 %v392
      %v1142 = vunpack.c.l.b16 %v393
      %v1143 = vunpack.c.h.b16 %v393
      %v1144 = vunpack.c.l.b16 %v394
      %v1145 = vunpack.c.h.b16 %v394
      %v1146 = vunpack.c.l.b16 %v395
      %v1147 = vunpack.c.h.b16 %v395
      %v1148 = vunpack.c.l.b16 %v396
      %v1149 = vunpack.c.h.b16 %v396
      %v1150 = vunpack.c.l.b16 %v397
      %v1151 = vunpack.c.h.b16 %v397
      %v1152 = vunpack.c.l.b16 %v398
      %v1153 = vunpack.c.h.b16 %v398
      %v1154 = vunpack.c.l.b16 %v399
      %v1155 = vunpack.c.h.b16 %v399
      %v1156 = vunpack.c.l.b16 %v400
      %v1157 = vunpack.c.h.b16 %v400
      %v1158 = vunpack.c.l.b16 %v401
      %v1159 = vunpack.c.h.b16 %v401
      %v1160 = vunpack.c.l.b16 %v402
      %v1161 = vunpack.c.h.b16 %v402
      %v1162 = vunpack.c.l.b16 %v403
      %v1163 = vunpack.c.h.b16 %v403
      %v1164 = vunpack.c.l.b16 %v404
      %v1165 = vunpack.c.h.b16 %v404
      %v1166 = vunpack.c.l.b16 %v405
      %v1167 = vunpack.c.h.b16 %v405
      %v1168 = vunpack.c.l.b16 %v406
      %v1169 = vunpack.c.h.b16 %v406
      %v1170 = vunpack.c.l.b16 %v407
      %v1171 = vunpack.c.h.b16 %v407
      %v1172 = vunpack.c.l.b16 %v408
      %v1173 = vunpack.c.h.b16 %v408
      %v1174 = vunpack.c.l.b16 %v409
      %v1175 = vunpack.c.h.b16 %v409
      %v1176 = vunpack.c.l.b16 %v410
      %v1177 = vunpack.c.h.b16 %v410
      %v1178 = vunpack.c.l.b16 %v411
      %v1179 = vunpack.c.h.b16 %v411
      %v1180 = vunpack.c.l.b16 %v412
      %v1181 = vunpack.c.h.b16 %v412
      %v1182 = vunpack.c.l.b16 %v413
      %v1183 = vunpack.c.h.b16 %v413
      %v1184 = vunpack.c.l.b16 %v414
      %v1185 = vunpack.c.h.b16 %v414
      %v1186 = vunpack.c.l.b16 %v415
      %v1187 = vunpack.c.h.b16 %v415
      %v1188 = vunpack.c.l.b16 %v416
      %v1189 = vunpack.c.h.b16 %v416
      %v1190 = vunpack.c.l.b16 %v417
      %v1191 = vunpack.c.h.b16 %v417
      %v1192 = vunpack.c.l.b16 %v418
      %v1193 = vunpack.c.h.b16 %v418
      %v1194 = vunpack.c.l.b16 %v419
      %v1195 = vunpack.c.h.b16 %v419
      %v1196 = vunpack.c.l.b16 %v420
      %v1197 = vunpack.c.h.b16 %v420
      %v1198 = vunpack.c.l.b16 %v421
      %v1199 = vunpack.c.h.b16 %v421
      %v1200 = vunpack.c.l.b16 %v422
      %v1201 = vunpack.c.h.b16 %v422
      %v1202 = vunpack.c.l.b16 %v423
      %v1203 = vunpack.c.h.b16 %v423
      %v1204 = vunpack.c.l.b16 %v424
      %v1205 = vunpack.c.h.b16 %v424
      %v1206 = vunpack.c.l.b16 %v425
      %v1207 = vunpack.c.h.b16 %v425
      %v1208 = vunpack.c.l.b16 %v426
      %v1209 = vunpack.c.h.b16 %v426
      %v1210 = vunpack.c.l.b16 %v427
      %v1211 = vunpack.c.h.b16 %v427
      %v1212 = vunpack.c.l.b16 %v428
      %v1213 = vunpack.c.h.b16 %v428
      %v1214 = vunpack.c.l.b16 %v429
      %v1215 = vunpack.c.h.b16 %v429
      %v1216 = vunpack.c.l.b16 %v430
      %v1217 = vunpack.c.h.b16 %v430
      %v1218 = vunpack.c.l.b16 %v431
      %v1219 = vunpack.c.h.b16 %v431
      %v1220 = vunpack.c.l.b16 %v432
      %v1221 = vunpack.c.h.b16 %v432
      %v1222 = vunpack.c.l.b16 %v433
      %v1223 = vunpack.c.h.b16 %v433
      %v1224 = vpack.c.b16 %v714, %v712
      %v1225 = vpack.c.b16 %v715, %v713
      %v1226 = vpack.c.b16 %v718, %v716
      %v1227 = vpack.c.b16 %v719, %v717
      %v1228 = vpack.c.b16 %v722, %v720
      %v1229 = vpack.c.b16 %v723, %v721
      %v1230 = vpack.c.b16 %v726, %v724
      %v1231 = vpack.c.b16 %v727, %v725
      %v1232 = vpack.c.b16 %v730, %v728
      %v1233 = vpack.c.b16 %v731, %v729
      %v1234 = vpack.c.b16 %v734, %v732
      %v1235 = vpack.c.b16 %v735, %v733
      %v1236 = vpack.c.b16 %v738, %v736
      %v1237 = vpack.c.b16 %v739, %v737
      %v1238 = vpack.c.b16 %v742, %v740
      %v1239 = vpack.c.b16 %v743, %v741
      %v1240 = vpack.c.b16 %v746, %v744
      %v1241 = vpack.c.b16 %v747, %v745
      %v1242 = vpack.c.b16 %v750, %v748
      %v1243 = vpack.c.b16 %v751, %v749
      %v1244 = vpack.c.b16 %v754, %v752
      %v1245 = vpack.c.b16 %v755, %v753
      %v1246 = vpack.c.b16 %v758, %v756
      %v1247 = vpack.c.b16 %v759, %v757
      %v1248 = vpack.c.b16 %v762, %v760
      %v1249 = vpack.c.b16 %v763, %v761
      %v1250 = vpack.c.b16 %v766, %v764
      %v1251 = vpack.c.b16 %v767, %v765
      %v1252 = vpack.c.b16 %v770, %v768
      %v1253 = vpack.c.b16 %v771, %v769
      %v1254 = vpack.c.b16 %v774, %v772
      %v1255 = vpack.c.b16 %v775, %v773
      %v1256 = vpack.c.b16 %v778, %v776
      %v1257 = vpack.c.b16 %v779, %v777
      %v1258 = vpack.c.b16 %v782, %v780
      %v1259 = vpack.c.b16 %v783, %v781
      %v1260 = vpack.c.b16 %v786, %v784
      %v1261 = vpack.c.b16 %v787, %v785
      %v1262 = vpack.c.b16 %v790, %v788
      %v1263 = vpack.c.b16 %v791, %v789
      %v1264 = vpack.c.b16 %v794, %v792
      %v1265 = vpack.c.b16 %v795, %v793
      %v1266 = vpack.c.b16 %v798, %v796
      %v1267 = vpack.c.b16 %v799, %v797
      %v1268 = vpack.c.b16 %v802, %v800
      %v1269 = vpack.c.b16 %v803, %v801
      %v1270 = vpack.c.b16 %v806, %v804
      %v1271 = vpack.c.b16 %v807, %v805
      %v1272 = vpack.c.b16 %v810, %v808
      %v1273 = vpack.c.b16 %v811, %v809
      %v1274 = vpack.c.b16 %v814, %v812
      %v1275 = vpack.c.b16 %v815, %v813
      %v1276 = vpack.c.b16 %v818, %v816
      %v1277 = vpack.c.b16 %v819, %v817
      %v1278 = vpack.c.b16 %v822, %v820
      %v1279 = vpack.c.b16 %v823, %v821
      %v1280 = vpack.c.b16 %v826, %v824
      %v1281 = vpack.c.b16 %v827, %v825
      %v1282 = vpack.c.b16 %v830, %v828
      %v1283 = vpack.c.b16 %v831, %v829
      %v1284 = vpack.c.b16 %v834, %v832
      %v1285 = vpack.c.b16 %v835, %v833
      %v1286 = vpack.c.b16 %v838, %v836
      %v1287 = vpack.c.b16 %v839, %v837
      %v1288 = vpack.c.b16 %v842, %v840
      %v1289 = vpack.c.b16 %v843, %v841
      %v1290 = vpack.c.b16 %v846, %v844
      %v1291 = vpack.c.b16 %v847, %v845
      %v1292 = vpack.c.b16 %v850, %v848
      %v1293 = vpack.c.b16 %v851, %v849
      %v1294 = vpack.c.b16 %v854, %v852
      %v1295 = vpack.c.b16 %v855, %v853
      %v1296 = vpack.c.b16 %v858, %v856
      %v1297 = vpack.c.b16 %v859, %v857
      %v1298 = vpack.c.b16 %v862, %v860
      %v1299 = vpack.c.b16 %v863, %v861
      %v1300 = vpack.c.b16 %v866, %v864
      %v1301 = vpack.c.b16 %v867, %v865
      %v1302 = vpack.c.b16 %v870, %v868
      %v1303 = vpack.c.b16 %v871, %v869
      %v1304 = vpack.c.b16 %v874, %v872
      %v1305 = vpack.c.b16 %v875, %v873
      %v1306 = vpack.c.b16 %v878, %v876
      %v1307 = vpack.c.b16 %v879, %v877
      %v1308 = vpack.c.b16 %v882, %v880
      %v1309 = vpack.c.b16 %v883, %v881
      %v1310 = vpack.c.b16 %v886, %v884
      %v1311 = vpack.c.b16 %v887, %v885
      %v1312 = vpack.c.b16 %v890, %v888
      %v1313 = vpack.c.b16 %v891, %v889
      %v1314 = vpack.c.b16 %v894, %v892
      %v1315 = vpack.c.b16 %v895, %v893
      %v1316 = vpack.c.b16 %v898, %v896
      %v1317 = vpack.c.b16 %v899, %v897
      %v1318 = vpack.c.b16 %v902, %v900
      %v1319 = vpack.c.b16 %v903, %v901
      %v1320 = vpack.c.b16 %v906, %v904
      %v1321 = vpack.c.b16 %v907, %v905
      %v1322 = vpack.c.b16 %v910, %v908
      %v1323 = vpack.c.b16 %v911, %v909
      %v1324 = vpack.c.b16 %v914, %v912
      %v1325 = vpack.c.b16 %v915, %v913
      %v1326 = vpack.c.b16 %v918, %v916
      %v1327 = vpack.c.b16 %v919, %v917
      %v1328 = vpack.c.b16 %v922, %v920
      %v1329 = vpack.c.b16 %v923, %v921
      %v1330 = vpack.c.b16 %v926, %v924
      %v1331 = vpack.c.b16 %v927, %v925
      %v1332 = vpack.c.b16 %v930, %v928
      %v1333 = vpack.c.b16 %v931, %v929
      %v1334 = vpack.c.b16 %v934, %v932
      %v1335 = vpack.c.b16 %v935, %v933
      %v1336 = vpack.c.b16 %v938, %v936
      %v1337 = vpack.c.b16 %v939, %v937
      %v1338 = vpack.c.b16 %v942, %v940
      %v1339 = vpack.c.b16 %v943, %v941
      %v1340 = vpack.c.b16 %v946, %v944
      %v1341 = vpack.c.b16 %v947, %v945
      %v1342 = vpack.c.b16 %v950, %v948
      %v1343 = vpack.c.b16 %v951, %v949
      %v1344 = vpack.c.b16 %v954, %v952
      %v1345 = vpack.c.b16 %v955, %v953
      %v1346 = vpack.c.b16 %v958, %v956
      %v1347 = vpack.c.b16 %v959, %v957
      %v1348 = vpack.c.b16 %v962, %v960
      %v1349 = vpack.c.b16 %v963, %v961
      %v1350 = vpack.c.b16 %v966, %v964
      %v1351 = vpack.c.b16 %v967, %v965
      %v1352 = vpack.c.b16 %v970, %v968
      %v1353 = vpack.c.b16 %v971, %v969
      %v1354 = vpack.c.b16 %v974, %v972
      %v1355 = vpack.c.b16 %v975, %v973
      %v1356 = vpack.c.b16 %v978, %v976
      %v1357 = vpack.c.b16 %v979, %v977
      %v1358 = vpack.c.b16 %v982, %v980
      %v1359 = vpack.c.b16 %v983, %v981
      %v1360 = vpack.c.b16 %v986, %v984
      %v1361 = vpack.c.b16 %v987, %v985
      %v1362 = vpack.c.b16 %v990, %v988
      %v1363 = vpack.c.b16 %v991, %v989
      %v1364 = vpack.c.b16 %v994, %v992
      %v1365 = vpack.c.b16 %v995, %v993
      %v1366 = vpack.c.b16 %v998, %v996
      %v1367 = vpack.c.b16 %v999, %v997
      %v1368 = vpack.c.b16 %v1002, %v1000
      %v1369 = vpack.c.b16 %v1003, %v1001
      %v1370 = vpack.c.b16 %v1006, %v1004
      %v1371 = vpack.c.b16 %v1007, %v1005
      %v1372 = vpack.c.b16 %v1010, %v1008
      %v1373 = vpack.c.b16 %v1011, %v1009
      %v1374 = vpack.c.b16 %v1014, %v1012
      %v1375 = vpack.c.b16 %v1015, %v1013
      %v1376 = vpack.c.b16 %v1018, %v1016
      %v1377 = vpack.c.b16 %v1019, %v1017
      %v1378 = vpack.c.b16 %v1022, %v1020
      %v1379 = vpack.c.b16 %v1023, %v1021
      %v1380 = vpack.c.b16 %v1026, %v1024
      %v1381 = vpack.c.b16 %v1027, %v1025
      %v1382 = vpack.c.b16 %v1030, %v1028
      %v1383 = vpack.c.b16 %v1031, %v1029
      %v1384 = vpack.c.b16 %v1034, %v1032
      %v1385 = vpack.c.b16 %v1035, %v1033
      %v1386 = vpack.c.b16 %v1038, %v1036
      %v1387 = vpack.c.b16 %v1039, %v1037
      %v1388 = vpack.c.b16 %v1042, %v1040
      %v1389 = vpack.c.b16 %v1043, %v1041
      %v1390 = vpack.c.b16 %v1046, %v1044
      %v1391 = vpack.c.b16 %v1047, %v1045
      %v1392 = vpack.c.b16 %v1050, %v1048
      %v1393 = vpack.c.b16 %v1051, %v1049
      %v1394 = vpack.c.b16 %v1054, %v1052
      %v1395 = vpack.c.b16 %v1055, %v1053
      %v1396 = vpack.c.b16 %v1058, %v1056
      %v1397 = vpack.c.b16 %v1059, %v1057
      %v1398 = vpack.c.b16 %v1062, %v1060
      %v1399 = vpack.c.b16 %v1063, %v1061
      %v1400 = vpack.c.b16 %v1066, %v1064
      %v1401 = vpack.c.b16 %v1067, %v1065
      %v1402 = vpack.c.b16 %v1070, %v1068
      %v1403 = vpack.c.b16 %v1071, %v1069
      %v1404 = vpack.c.b16 %v1074, %v1072
      %v1405 = vpack.c.b16 %v1075, %v1073
      %v1406 = vpack.c.b16 %v1078, %v1076
      %v1407 = vpack.c.b16 %v1079, %v1077
      %v1408 = vpack.c.b16 %v1082, %v1080
      %v1409 = vpack.c.b16 %v1083, %v1081
      %v1410 = vpack.c.b16 %v1086, %v1084
      %v1411 = vpack.c.b16 %v1087, %v1085
      %v1412 = vpack.c.b16 %v1090, %v1088
      %v1413 = vpack.c.b16 %v1091, %v1089
      %v1414 = vpack.c.b16 %v1094, %v1092
      %v1415 = vpack.c.b16 %v1095, %v1093
      %v1416 = vpack.c.b16 %v1098, %v1096
      %v1417 = vpack.c.b16 %v1099, %v1097
      %v1418 = vpack.c.b16 %v1102, %v1100
      %v1419 = vpack.c.b16 %v1103, %v1101
      %v1420 = vpack.c.b16 %v1106, %v1104
      %v1421 = vpack.c.b16 %v1107, %v1105
      %v1422 = vpack.c.b16 %v1110, %v1108
      %v1423 = vpack.c.b16 %v1111, %v1109
      %v1424 = vpack.c.b16 %v1114, %v1112
      %v1425 = vpack.c.b16 %v1115, %v1113
      %v1426 = vpack.c.b16 %v1118, %v1116
      %v1427 = vpack.c.b16 %v1119, %v1117
      %v1428 = vpack.c.b16 %v1122, %v1120
      %v1429 = vpack.c.b16 %v1123, %v1121
      %v1430 = vpack.c.b16 %v1126, %v1124
      %v1431 = vpack.c.b16 %v1127, %v1125
      %v1432 = vpack.c.b16 %v1130, %v1128
      %v1433 = vpack.c.b16 %v1131, %v1129
      %v1434 = vpack.c.b16 %v1134, %v1132
      %v1435 = vpack.c.b16 %v1135, %v1133
      %v1436 = vpack.c.b16 %v1138, %v1136
      %v1437 = vpack.c.b16 %v1139, %v1137
      %v1438 = vpack.c.b16 %v1142, %v1140
      %v1439 = vpack.c.b16 %v1143, %v1141
      %v1440 = vpack.c.b16 %v1146, %v1144
      %v1441 = vpack.c.b16 %v1147, %v1145
      %v1442 = vpack.c.b16 %v1150, %v1148
      %v1443 = vpack.c.b16 %v1151, %v1149
      %v1444 = vpack.c.b16 %v1154, %v1152
      %v1445 = vpack.c.b16 %v1155, %v1153
      %v1446 = vpack.c.b16 %v1158, %v1156
      %v1447 = vpack.c.b16 %v1159, %v1157
      %v1448 = vpack.c.b16 %v1162, %v1160
      %v1449 = vpack.c.b16 %v1163, %v1161
      %v1450 = vpack.c.b16 %v1166, %v1164
      %v1451 = vpack.c.b16 %v1167, %v1165
      %v1452 = vpack.c.b16 %v1170, %v1168
      %v1453 = vpack.c.b16 %v1171, %v1169
      %v1454 = vpack.c.b16 %v1174, %v1172
      %v1455 = vpack.c.b16 %v1175, %v1173
      %v1456 = vpack.c.b16 %v1178, %v1176
      %v1457 = vpack.c.b16 %v1179, %v1177
      %v1458 = vpack.c.b16 %v1182, %v1180
      %v1459 = vpack.c.b16 %v1183, %v1181
      %v1460 = vpack.c.b16 %v1186, %v1184
      %v1461 = vpack.c.b16 %v1187, %v1185
      %v1462 = vpack.c.b16 %v1190, %v1188
      %v1463 = vpack.c.b16 %v1191, %v1189
      %v1464 = vpack.c.b16 %v1194, %v1192
      %v1465 = vpack.c.b16 %v1195, %v1193
      %v1466 = vpack.c.b16 %v1198, %v1196
      %v1467 = vpack.c.b16 %v1199, %v1197
      %v1468 = vpack.c.b16 %v1202, %v1200
      %v1469 = vpack.c.b16 %v1203, %v1201
      %v1470 = vpack.c.b16 %v1206, %v1204
      %v1471 = vpack.c.b16 %v1207, %v1205
      %v1472 = vpack.c.b16 %v1210, %v1208
      %v1473 = vpack.c.b16 %v1211, %v1209
      %v1474 = vpack.c.b16 %v1214, %v1212
      %v1475 = vpack.c.b16 %v1215, %v1213
      %v1476 = vpack.c.b16 %v1218, %v1216
      %v1477 = vpack.c.b16 %v1219, %v1217
      %v1478 = vpack.c.b16 %v1222, %v1220
      %v1479 = vpack.c.b16 %v1223, %v1221
      %v1626 = vunpack.c.l.b16 %v434
      %v1627 = vunpack.c.l.b16 %v435
      %v1628 = vunpack.c.l.b16 %v436
      %v1629 = vunpack.c.l.b16 %v437
      %v1630 = vunpack.c.l.b16 %v438
      %v1631 = vunpack.c.l.b16 %v439
      %v1632 = vunpack.c.l.b16 %v440
      %v1633 = vunpack.c.l.b16 %v441
      %v1634 = vunpack.c.l.b16 %v442
      %v1635 = vunpack.c.l.b16 %v443
      %v1636 = vunpack.c.l.b16 %v444
      %v1637 = vunpack.c.l.b16 %v445
      %v1638 = vunpack.c.l.b16 %v446
      %v1639 = vunpack.c.l.b16 %v447
      %v1640 = vunpack.c.l.b16 %v448
      %v1641 = vunpack.c.l.b16 %v449
      %v1642 = vunpack.c.l.b16 %v450
      %v1643 = vunpack.c.l.b16 %v451
      %v1644 = vpack.c.b16 %v1627, %v1626
      %v1645 = vpack.c.b16 %v1629, %v1628
      %v1646 = vpack.c.b16 %v1631, %v1630
      %v1647 = vpack.c.b16 %v1633, %v1632
      %v1648 = vpack.c.b16 %v1635, %v1634
      %v1649 = vpack.c.b16 %v1637, %v1636
      %v1650 = vpack.c.b16 %v1639, %v1638
      %v1651 = vpack.c.b16 %v1641, %v1640
      %v1652 = vpack.c.b16 %v1643, %v1642
      %vm1662 = vcmask 130048
      %v1664 = vsel %vm1662, %v1225, 0
      %v1667 = vsel %vm1662, %v1227, 0
      %v1670 = vsel %vm1662, %v1229, 0
      %v1673 = vsel %vm1662, %v1231, 0
      %v1676 = vsel %vm1662, %v1233, 0
      %v1679 = vsel %vm1662, %v1235, 0
      %v1682 = vsel %vm1662, %v1237, 0
      %v1685 = vsel %vm1662, %v1239, 0
      %v1688 = vsel %vm1662, %v1241, 0
      %v1691 = vsel %vm1662, %v1243, 0
      %v1694 = vsel %vm1662, %v1245, 0
      %v1697 = vsel %vm1662, %v1247, 0
      %v1700 = vsel %vm1662, %v1249, 0
      %v1703 = vsel %vm1662, %v1251, 0
      %v1706 = vsel %vm1662, %v1253, 0
      %v1709 = vsel %vm1662, %v1255, 0
      %v1712 = vsel %vm1662, %v1257, 0
      %v1715 = vsel %vm1662, %v1259, 0
      %v1718 = vsel %vm1662, %v1261, 0
      %v1721 = vsel %vm1662, %v1263, 0
      %v1724 = vsel %vm1662, %v1265, 0
      %v1727 = vsel %vm1662, %v1267, 0
      %v1730 = vsel %vm1662, %v1269, 0
      %v1733 = vsel %vm1662, %v1271, 0
      %v1736 = vsel %vm1662, %v1273, 0
      %v1739 = vsel %vm1662, %v1275, 0
      %v1742 = vsel %vm1662, %v1277, 0
      %v1745 = vsel %vm1662, %v1279, 0
      %v1748 = vsel %vm1662, %v1281, 0
      %v1751 = vsel %vm1662, %v1283, 0
      %v1754 = vsel %vm1662, %v1285, 0
      %v1757 = vsel %vm1662, %v1287, 0
      %v1760 = vsel %vm1662, %v1289, 0
      %v1763 = vsel %vm1662, %v1291, 0
      %v1766 = vsel %vm1662, %v1293, 0
      %v1769 = vsel %vm1662, %v1295, 0
      %v1772 = vsel %vm1662, %v1297, 0
      %v1775 = vsel %vm1662, %v1299, 0
      %v1778 = vsel %vm1662, %v1301, 0
      %v1781 = vsel %vm1662, %v1303, 0
      %v1784 = vsel %vm1662, %v1305, 0
      %v1787 = vsel %vm1662, %v1307, 0
      %v1790 = vsel %vm1662, %v1309, 0
      %v1793 = vsel %vm1662, %v1311, 0
      %v1796 = vsel %vm1662, %v1313, 0
      %v1799 = vsel %vm1662, %v1315, 0
      %v1802 = vsel %vm1662, %v1317, 0
      %v1805 = vsel %vm1662, %v1319, 0
      %v1808 = vsel %vm1662, %v1321, 0
      %v1811 = vsel %vm1662, %v1323, 0
      %v1814 = vsel %vm1662, %v1325, 0
      %v1817 = vsel %vm1662, %v1327, 0
      %v1820 = vsel %vm1662, %v1329, 0
      %v1823 = vsel %vm1662, %v1331, 0
      %v1826 = vsel %vm1662, %v1333, 0
      %v1829 = vsel %vm1662, %v1335, 0
      %v1832 = vsel %vm1662, %v1337, 0
      %v1835 = vsel %vm1662, %v1339, 0
      %v1838 = vsel %vm1662, %v1341, 0
      %v1841 = vsel %vm1662, %v1343, 0
      %v1844 = vsel %vm1662, %v1345, 0
      %v1847 = vsel %vm1662, %v1347, 0
      %v1850 = vsel %vm1662, %v1349, 0
      %v1853 = vsel %vm1662, %v1351, 0
      %v1856 = vsel %vm1662, %v1353, 0
      %v1859 = vsel %vm1662, %v1355, 0
      %v1862 = vsel %vm1662, %v1357, 0
      %v1865 = vsel %vm1662, %v1359, 0
      %v1868 = vsel %vm1662, %v1361, 0
      %v1871 = vsel %vm1662, %v1363, 0
      %v1874 = vsel %vm1662, %v1365, 0
      %v1877 = vsel %vm1662, %v1367, 0
      %v1880 = vsel %vm1662, %v1369, 0
      %v1883 = vsel %vm1662, %v1371, 0
      %v1886 = vsel %vm1662, %v1373, 0
      %v1889 = vsel %vm1662, %v1375, 0
      %v1892 = vsel %vm1662, %v1377, 0
      %v1895 = vsel %vm1662, %v1379, 0
      %v1898 = vsel %vm1662, %v1381, 0
      %v1901 = vsel %vm1662, %v1383, 0
      %v1904 = vsel %vm1662, %v1385, 0
      %v1907 = vsel %vm1662, %v1387, 0
      %v1910 = vsel %vm1662, %v1389, 0
      %v1913 = vsel %vm1662, %v1391, 0
      %v1916 = vsel %vm1662, %v1393, 0
      %v1919 = vsel %vm1662, %v1395, 0
      %v1922 = vsel %vm1662, %v1397, 0
      %v1925 = vsel %vm1662, %v1399, 0
      %v1928 = vsel %vm1662, %v1401, 0
      %v1931 = vsel %vm1662, %v1403, 0
      %v1934 = vsel %vm1662, %v1405, 0
      %v1937 = vsel %vm1662, %v1407, 0
      %v1940 = vsel %vm1662, %v1409, 0
      %v1943 = vsel %vm1662, %v1411, 0
      %v1946 = vsel %vm1662, %v1413, 0
      %v1949 = vsel %vm1662, %v1415, 0
      %v1952 = vsel %vm1662, %v1417, 0
      %v1955 = vsel %vm1662, %v1419, 0
      %v1958 = vsel %vm1662, %v1421, 0
      %v1961 = vsel %vm1662, %v1423, 0
      %v1964 = vsel %vm1662, %v1425, 0
      %v1967 = vsel %vm1662, %v1427, 0
      %v1970 = vsel %vm1662, %v1429, 0
      %v1973 = vsel %vm1662, %v1431, 0
      %v1976 = vsel %vm1662, %v1433, 0
      %v1979 = vsel %vm1662, %v1435, 0
      %v1982 = vsel %vm1662, %v1437, 0
      %v1985 = vsel %vm1662, %v1439, 0
      %v1988 = vsel %vm1662, %v1441, 0
      %v1991 = vsel %vm1662, %v1443, 0
      %v1994 = vsel %vm1662, %v1445, 0
      %v1997 = vsel %vm1662, %v1447, 0
      %v2000 = vsel %vm1662, %v1449, 0
      %v2003 = vsel %vm1662, %v1451, 0
      %v2006 = vsel %vm1662, %v1453, 0
      %v2009 = vsel %vm1662, %v1455, 0
      %v2012 = vsel %vm1662, %v1457, 0
      %v2015 = vsel %vm1662, %v1459, 0
      %v2018 = vsel %vm1662, %v1461, 0
      %v2021 = vsel %vm1662, %v1463, 0
      %v2024 = vsel %vm1662, %v1465, 0
      %v2027 = vsel %vm1662, %v1467, 0
      %v2030 = vsel %vm1662, %v1469, 0
      %v2033 = vsel %vm1662, %v1471, 0
      %v2036 = vsel %vm1662, %v1473, 0
      %v2039 = vsel %vm1662, %v1475, 0
      %v2042 = vsel %vm1662, %v1477, 0
      %v2045 = vsel %vm1662, %v1479, 0
      %2047 = vmatpush.bf16.msra.mxu0 %v1651
      %2048 = vmatpush.bf16.msra.mxu0 %v1650
      %2049 = vmatpush.bf16.msra.mxu0 %v1649
      %2050 = vmatpush.bf16.msra.mxu0 %v1648
      %2051 = vmatpush.bf16.msra.mxu0 %v1647
      %2052 = vmatpush.bf16.msra.mxu0 %v1646
      %2053 = vmatpush.bf16.msra.mxu0 %v1645
      %2054 = vmatpush.bf16.msra.mxu0 %v1644
      %2055 = vmatmul.bf16.gmra.mxu0 %v1224
      %v2056 = vpop.f32.mrf.mxu0
      %v2057 = vadd.f32 %v454, %v2056
      %v2058 = vpop.f32.mrf.mxu0
      %v2059 = vadd.f32 %v454, %v2058
      %2060 = vmatmul.bf16.gmra.mxu0 %v1226
      %v2061 = vpop.f32.mrf.mxu0
      %v2062 = vadd.f32 %v454, %v2061
      %v2063 = vpop.f32.mrf.mxu0
      %v2064 = vadd.f32 %v454, %v2063
      %2065 = vmatmul.bf16.gmra.mxu0 %v1228
      %v2066 = vpop.f32.mrf.mxu0
      %v2067 = vadd.f32 %v454, %v2066
      %v2068 = vpop.f32.mrf.mxu0
      %v2069 = vadd.f32 %v454, %v2068
      %2070 = vmatmul.bf16.gmra.mxu0 %v1230
      %v2071 = vpop.f32.mrf.mxu0
      %v2072 = vadd.f32 %v454, %v2071
      %v2073 = vpop.f32.mrf.mxu0
      %v2074 = vadd.f32 %v454, %v2073
      %2075 = vmatmul.bf16.gmra.mxu0 %v1232
      %v2076 = vpop.f32.mrf.mxu0
      %v2077 = vadd.f32 %v454, %v2076
      %v2078 = vpop.f32.mrf.mxu0
      %v2079 = vadd.f32 %v454, %v2078
      %2080 = vmatmul.bf16.gmra.mxu0 %v1234
      %v2081 = vpop.f32.mrf.mxu0
      %v2082 = vadd.f32 %v454, %v2081
      %v2083 = vpop.f32.mrf.mxu0
      %v2084 = vadd.f32 %v454, %v2083
      %2085 = vmatmul.bf16.gmra.mxu0 %v1236
      %v2086 = vpop.f32.mrf.mxu0
      %v2087 = vadd.f32 %v454, %v2086
      %v2088 = vpop.f32.mrf.mxu0
      %v2089 = vadd.f32 %v454, %v2088
      %2090 = vmatmul.bf16.gmra.mxu0 %v1238
      %v2091 = vpop.f32.mrf.mxu0
      %v2092 = vadd.f32 %v454, %v2091
      %v2093 = vpop.f32.mrf.mxu0
      %v2094 = vadd.f32 %v454, %v2093
      %2095 = vmatmul.bf16.gmra.mxu0 %v1240
      %v2096 = vpop.f32.mrf.mxu0
      %v2097 = vadd.f32 %v454, %v2096
      %v2098 = vpop.f32.mrf.mxu0
      %v2099 = vadd.f32 %v454, %v2098
      %2100 = vmatmul.bf16.gmra.mxu0 %v1242
      %v2101 = vpop.f32.mrf.mxu0
      %v2102 = vadd.f32 %v454, %v2101
      %v2103 = vpop.f32.mrf.mxu0
      %v2104 = vadd.f32 %v454, %v2103
      %2105 = vmatmul.bf16.gmra.mxu0 %v1244
      %v2106 = vpop.f32.mrf.mxu0
      %v2107 = vadd.f32 %v454, %v2106
      %v2108 = vpop.f32.mrf.mxu0
      %v2109 = vadd.f32 %v454, %v2108
      %2110 = vmatmul.bf16.gmra.mxu0 %v1246
      %v2111 = vpop.f32.mrf.mxu0
      %v2112 = vadd.f32 %v454, %v2111
      %v2113 = vpop.f32.mrf.mxu0
      %v2114 = vadd.f32 %v454, %v2113
      %2115 = vmatmul.bf16.gmra.mxu0 %v1248
      %v2116 = vpop.f32.mrf.mxu0
      %v2117 = vadd.f32 %v454, %v2116
      %v2118 = vpop.f32.mrf.mxu0
      %v2119 = vadd.f32 %v454, %v2118
      %2120 = vmatmul.bf16.gmra.mxu0 %v1250
      %v2121 = vpop.f32.mrf.mxu0
      %v2122 = vadd.f32 %v454, %v2121
      %v2123 = vpop.f32.mrf.mxu0
      %v2124 = vadd.f32 %v454, %v2123
      %2125 = vmatmul.bf16.gmra.mxu0 %v1252
      %v2126 = vpop.f32.mrf.mxu0
      %v2127 = vadd.f32 %v454, %v2126
      %v2128 = vpop.f32.mrf.mxu0
      %v2129 = vadd.f32 %v454, %v2128
      %2130 = vmatmul.bf16.gmra.mxu0 %v1254
      %v2131 = vpop.f32.mrf.mxu0
      %v2132 = vadd.f32 %v454, %v2131
      %v2133 = vpop.f32.mrf.mxu0
      %v2134 = vadd.f32 %v454, %v2133
      %2135 = vmatmul.bf16.gmra.mxu0 %v1256
      %v2136 = vpop.f32.mrf.mxu0
      %v2137 = vadd.f32 %v454, %v2136
      %v2138 = vpop.f32.mrf.mxu0
      %v2139 = vadd.f32 %v454, %v2138
      %2140 = vmatmul.bf16.gmra.mxu0 %v1258
      %v2141 = vpop.f32.mrf.mxu0
      %v2142 = vadd.f32 %v454, %v2141
      %v2143 = vpop.f32.mrf.mxu0
      %v2144 = vadd.f32 %v454, %v2143
      %2145 = vmatmul.bf16.gmra.mxu0 %v1260
      %v2146 = vpop.f32.mrf.mxu0
      %v2147 = vadd.f32 %v454, %v2146
      %v2148 = vpop.f32.mrf.mxu0
      %v2149 = vadd.f32 %v454, %v2148
      %2150 = vmatmul.bf16.gmra.mxu0 %v1262
      %v2151 = vpop.f32.mrf.mxu0
      %v2152 = vadd.f32 %v454, %v2151
      %v2153 = vpop.f32.mrf.mxu0
      %v2154 = vadd.f32 %v454, %v2153
      %2155 = vmatmul.bf16.gmra.mxu0 %v1264
      %v2156 = vpop.f32.mrf.mxu0
      %v2157 = vadd.f32 %v454, %v2156
      %v2158 = vpop.f32.mrf.mxu0
      %v2159 = vadd.f32 %v454, %v2158
      %2160 = vmatmul.bf16.gmra.mxu0 %v1266
      %v2161 = vpop.f32.mrf.mxu0
      %v2162 = vadd.f32 %v454, %v2161
      %v2163 = vpop.f32.mrf.mxu0
      %v2164 = vadd.f32 %v454, %v2163
      %2165 = vmatmul.bf16.gmra.mxu0 %v1268
      %v2166 = vpop.f32.mrf.mxu0
      %v2167 = vadd.f32 %v454, %v2166
      %v2168 = vpop.f32.mrf.mxu0
      %v2169 = vadd.f32 %v454, %v2168
      %2170 = vmatmul.bf16.gmra.mxu0 %v1270
      %v2171 = vpop.f32.mrf.mxu0
      %v2172 = vadd.f32 %v454, %v2171
      %v2173 = vpop.f32.mrf.mxu0
      %v2174 = vadd.f32 %v454, %v2173
      %2175 = vmatmul.bf16.gmra.mxu0 %v1272
      %v2176 = vpop.f32.mrf.mxu0
      %v2177 = vadd.f32 %v454, %v2176
      %v2178 = vpop.f32.mrf.mxu0
      %v2179 = vadd.f32 %v454, %v2178
      %2180 = vmatmul.bf16.gmra.mxu0 %v1274
      %v2181 = vpop.f32.mrf.mxu0
      %v2182 = vadd.f32 %v454, %v2181
      %v2183 = vpop.f32.mrf.mxu0
      %v2184 = vadd.f32 %v454, %v2183
      %2185 = vmatmul.bf16.gmra.mxu0 %v1276
      %v2186 = vpop.f32.mrf.mxu0
      %v2187 = vadd.f32 %v454, %v2186
      %v2188 = vpop.f32.mrf.mxu0
      %v2189 = vadd.f32 %v454, %v2188
      %2190 = vmatmul.bf16.gmra.mxu0 %v1278
      %v2191 = vpop.f32.mrf.mxu0
      %v2192 = vadd.f32 %v454, %v2191
      %v2193 = vpop.f32.mrf.mxu0
      %v2194 = vadd.f32 %v454, %v2193
      %2195 = vmatmul.bf16.gmra.mxu0 %v1280
      %v2196 = vpop.f32.mrf.mxu0
      %v2197 = vadd.f32 %v454, %v2196
      %v2198 = vpop.f32.mrf.mxu0
      %v2199 = vadd.f32 %v454, %v2198
      %2200 = vmatmul.bf16.gmra.mxu0 %v1282
      %v2201 = vpop.f32.mrf.mxu0
      %v2202 = vadd.f32 %v454, %v2201
      %v2203 = vpop.f32.mrf.mxu0
      %v2204 = vadd.f32 %v454, %v2203
      %2205 = vmatmul.bf16.gmra.mxu0 %v1284
      %v2206 = vpop.f32.mrf.mxu0
      %v2207 = vadd.f32 %v454, %v2206
      %v2208 = vpop.f32.mrf.mxu0
      %v2209 = vadd.f32 %v454, %v2208
      %2210 = vmatmul.bf16.gmra.mxu0 %v1286
      %v2211 = vpop.f32.mrf.mxu0
      %v2212 = vadd.f32 %v454, %v2211
      %v2213 = vpop.f32.mrf.mxu0
      %v2214 = vadd.f32 %v454, %v2213
      %2215 = vmatmul.bf16.gmra.mxu0 %v1288
      %v2216 = vpop.f32.mrf.mxu0
      %v2217 = vadd.f32 %v454, %v2216
      %v2218 = vpop.f32.mrf.mxu0
      %v2219 = vadd.f32 %v454, %v2218
      %2220 = vmatmul.bf16.gmra.mxu0 %v1290
      %v2221 = vpop.f32.mrf.mxu0
      %v2222 = vadd.f32 %v454, %v2221
      %v2223 = vpop.f32.mrf.mxu0
      %v2224 = vadd.f32 %v454, %v2223
      %2225 = vmatmul.bf16.gmra.mxu0 %v1292
      %v2226 = vpop.f32.mrf.mxu0
      %v2227 = vadd.f32 %v454, %v2226
      %v2228 = vpop.f32.mrf.mxu0
      %v2229 = vadd.f32 %v454, %v2228
      %2230 = vmatmul.bf16.gmra.mxu0 %v1294
      %v2231 = vpop.f32.mrf.mxu0
      %v2232 = vadd.f32 %v454, %v2231
      %v2233 = vpop.f32.mrf.mxu0
      %v2234 = vadd.f32 %v454, %v2233
      %2235 = vmatmul.bf16.gmra.mxu0 %v1296
      %v2236 = vpop.f32.mrf.mxu0
      %v2237 = vadd.f32 %v454, %v2236
      %v2238 = vpop.f32.mrf.mxu0
      %v2239 = vadd.f32 %v454, %v2238
      %2240 = vmatmul.bf16.gmra.mxu0 %v1298
      %v2241 = vpop.f32.mrf.mxu0
      %v2242 = vadd.f32 %v454, %v2241
      %v2243 = vpop.f32.mrf.mxu0
      %v2244 = vadd.f32 %v454, %v2243
      %2245 = vmatmul.bf16.gmra.mxu0 %v1300
      %v2246 = vpop.f32.mrf.mxu0
      %v2247 = vadd.f32 %v454, %v2246
      %v2248 = vpop.f32.mrf.mxu0
      %v2249 = vadd.f32 %v454, %v2248
      %2250 = vmatmul.bf16.gmra.mxu0 %v1302
      %v2251 = vpop.f32.mrf.mxu0
      %v2252 = vadd.f32 %v454, %v2251
      %v2253 = vpop.f32.mrf.mxu0
      %v2254 = vadd.f32 %v454, %v2253
      %2255 = vmatmul.bf16.gmra.mxu0 %v1304
      %v2256 = vpop.f32.mrf.mxu0
      %v2257 = vadd.f32 %v454, %v2256
      %v2258 = vpop.f32.mrf.mxu0
      %v2259 = vadd.f32 %v454, %v2258
      %2260 = vmatmul.bf16.gmra.mxu0 %v1306
      %v2261 = vpop.f32.mrf.mxu0
      %v2262 = vadd.f32 %v454, %v2261
      %v2263 = vpop.f32.mrf.mxu0
      %v2264 = vadd.f32 %v454, %v2263
      %2265 = vmatmul.bf16.gmra.mxu0 %v1308
      %v2266 = vpop.f32.mrf.mxu0
      %v2267 = vadd.f32 %v454, %v2266
      %v2268 = vpop.f32.mrf.mxu0
      %v2269 = vadd.f32 %v454, %v2268
      %2270 = vmatmul.bf16.gmra.mxu0 %v1310
      %v2271 = vpop.f32.mrf.mxu0
      %v2272 = vadd.f32 %v454, %v2271
      %v2273 = vpop.f32.mrf.mxu0
      %v2274 = vadd.f32 %v454, %v2273
      %2275 = vmatmul.bf16.gmra.mxu0 %v1312
      %v2276 = vpop.f32.mrf.mxu0
      %v2277 = vadd.f32 %v454, %v2276
      %v2278 = vpop.f32.mrf.mxu0
      %v2279 = vadd.f32 %v454, %v2278
      %2280 = vmatmul.bf16.gmra.mxu0 %v1314
      %v2281 = vpop.f32.mrf.mxu0
      %v2282 = vadd.f32 %v454, %v2281
      %v2283 = vpop.f32.mrf.mxu0
      %v2284 = vadd.f32 %v454, %v2283
      %2285 = vmatmul.bf16.gmra.mxu0 %v1316
      %v2286 = vpop.f32.mrf.mxu0
      %v2287 = vadd.f32 %v454, %v2286
      %v2288 = vpop.f32.mrf.mxu0
      %v2289 = vadd.f32 %v454, %v2288
      %2290 = vmatmul.bf16.gmra.mxu0 %v1318
      %v2291 = vpop.f32.mrf.mxu0
      %v2292 = vadd.f32 %v454, %v2291
      %v2293 = vpop.f32.mrf.mxu0
      %v2294 = vadd.f32 %v454, %v2293
      %2295 = vmatmul.bf16.gmra.mxu0 %v1320
      %v2296 = vpop.f32.mrf.mxu0
      %v2297 = vadd.f32 %v454, %v2296
      %v2298 = vpop.f32.mrf.mxu0
      %v2299 = vadd.f32 %v454, %v2298
      %2300 = vmatmul.bf16.gmra.mxu0 %v1322
      %v2301 = vpop.f32.mrf.mxu0
      %v2302 = vadd.f32 %v454, %v2301
      %v2303 = vpop.f32.mrf.mxu0
      %v2304 = vadd.f32 %v454, %v2303
      %2305 = vmatmul.bf16.gmra.mxu0 %v1324
      %v2306 = vpop.f32.mrf.mxu0
      %v2307 = vadd.f32 %v454, %v2306
      %v2308 = vpop.f32.mrf.mxu0
      %v2309 = vadd.f32 %v454, %v2308
      %2310 = vmatmul.bf16.gmra.mxu0 %v1326
      %v2311 = vpop.f32.mrf.mxu0
      %v2312 = vadd.f32 %v454, %v2311
      %v2313 = vpop.f32.mrf.mxu0
      %v2314 = vadd.f32 %v454, %v2313
      %2315 = vmatmul.bf16.gmra.mxu0 %v1328
      %v2316 = vpop.f32.mrf.mxu0
      %v2317 = vadd.f32 %v454, %v2316
      %v2318 = vpop.f32.mrf.mxu0
      %v2319 = vadd.f32 %v454, %v2318
      %2320 = vmatmul.bf16.gmra.mxu0 %v1330
      %v2321 = vpop.f32.mrf.mxu0
      %v2322 = vadd.f32 %v454, %v2321
      %v2323 = vpop.f32.mrf.mxu0
      %v2324 = vadd.f32 %v454, %v2323
      %2325 = vmatmul.bf16.gmra.mxu0 %v1332
      %v2326 = vpop.f32.mrf.mxu0
      %v2327 = vadd.f32 %v454, %v2326
      %v2328 = vpop.f32.mrf.mxu0
      %v2329 = vadd.f32 %v454, %v2328
      %2330 = vmatmul.bf16.gmra.mxu0 %v1334
      %v2331 = vpop.f32.mrf.mxu0
      %v2332 = vadd.f32 %v454, %v2331
      %v2333 = vpop.f32.mrf.mxu0
      %v2334 = vadd.f32 %v454, %v2333
      %2335 = vmatmul.bf16.gmra.mxu0 %v1336
      %v2336 = vpop.f32.mrf.mxu0
      %v2337 = vadd.f32 %v454, %v2336
      %v2338 = vpop.f32.mrf.mxu0
      %v2339 = vadd.f32 %v454, %v2338
      %2340 = vmatmul.bf16.gmra.mxu0 %v1338
      %v2341 = vpop.f32.mrf.mxu0
      %v2342 = vadd.f32 %v454, %v2341
      %v2343 = vpop.f32.mrf.mxu0
      %v2344 = vadd.f32 %v454, %v2343
      %2345 = vmatmul.bf16.gmra.mxu0 %v1340
      %v2346 = vpop.f32.mrf.mxu0
      %v2347 = vadd.f32 %v454, %v2346
      %v2348 = vpop.f32.mrf.mxu0
      %v2349 = vadd.f32 %v454, %v2348
      %2350 = vmatmul.bf16.gmra.mxu0 %v1342
      %v2351 = vpop.f32.mrf.mxu0
      %v2352 = vadd.f32 %v454, %v2351
      %v2353 = vpop.f32.mrf.mxu0
      %v2354 = vadd.f32 %v454, %v2353
      %2355 = vmatmul.bf16.gmra.mxu0 %v1344
      %v2356 = vpop.f32.mrf.mxu0
      %v2357 = vadd.f32 %v454, %v2356
      %v2358 = vpop.f32.mrf.mxu0
      %v2359 = vadd.f32 %v454, %v2358
      %2360 = vmatmul.bf16.gmra.mxu0 %v1346
      %v2361 = vpop.f32.mrf.mxu0
      %v2362 = vadd.f32 %v454, %v2361
      %v2363 = vpop.f32.mrf.mxu0
      %v2364 = vadd.f32 %v454, %v2363
      %2365 = vmatmul.bf16.gmra.mxu0 %v1348
      %v2366 = vpop.f32.mrf.mxu0
      %v2367 = vadd.f32 %v454, %v2366
      %v2368 = vpop.f32.mrf.mxu0
      %v2369 = vadd.f32 %v454, %v2368
      %2370 = vmatmul.bf16.gmra.mxu0 %v1350
      %v2371 = vpop.f32.mrf.mxu0
      %v2372 = vadd.f32 %v454, %v2371
      %v2373 = vpop.f32.mrf.mxu0
      %v2374 = vadd.f32 %v454, %v2373
      %2375 = vmatmul.bf16.gmra.mxu0 %v1352
      %v2376 = vpop.f32.mrf.mxu0
      %v2377 = vadd.f32 %v454, %v2376
      %v2378 = vpop.f32.mrf.mxu0
      %v2379 = vadd.f32 %v454, %v2378
      %2380 = vmatmul.bf16.gmra.mxu0 %v1354
      %v2381 = vpop.f32.mrf.mxu0
      %v2382 = vadd.f32 %v454, %v2381
      %v2383 = vpop.f32.mrf.mxu0
      %v2384 = vadd.f32 %v454, %v2383
      %2385 = vmatmul.bf16.gmra.mxu0 %v1356
      %v2386 = vpop.f32.mrf.mxu0
      %v2387 = vadd.f32 %v454, %v2386
      %v2388 = vpop.f32.mrf.mxu0
      %v2389 = vadd.f32 %v454, %v2388
      %2390 = vmatmul.bf16.gmra.mxu0 %v1358
      %v2391 = vpop.f32.mrf.mxu0
      %v2392 = vadd.f32 %v454, %v2391
      %v2393 = vpop.f32.mrf.mxu0
      %v2394 = vadd.f32 %v454, %v2393
      %2395 = vmatmul.bf16.gmra.mxu0 %v1360
      %v2396 = vpop.f32.mrf.mxu0
      %v2397 = vadd.f32 %v454, %v2396
      %v2398 = vpop.f32.mrf.mxu0
      %v2399 = vadd.f32 %v454, %v2398
      %2400 = vmatmul.bf16.gmra.mxu0 %v1362
      %v2401 = vpop.f32.mrf.mxu0
      %v2402 = vadd.f32 %v454, %v2401
      %v2403 = vpop.f32.mrf.mxu0
      %v2404 = vadd.f32 %v454, %v2403
      %2405 = vmatmul.bf16.gmra.mxu0 %v1364
      %v2406 = vpop.f32.mrf.mxu0
      %v2407 = vadd.f32 %v454, %v2406
      %v2408 = vpop.f32.mrf.mxu0
      %v2409 = vadd.f32 %v454, %v2408
      %2410 = vmatmul.bf16.gmra.mxu0 %v1366
      %v2411 = vpop.f32.mrf.mxu0
      %v2412 = vadd.f32 %v454, %v2411
      %v2413 = vpop.f32.mrf.mxu0
      %v2414 = vadd.f32 %v454, %v2413
      %2415 = vmatmul.bf16.gmra.mxu0 %v1368
      %v2416 = vpop.f32.mrf.mxu0
      %v2417 = vadd.f32 %v454, %v2416
      %v2418 = vpop.f32.mrf.mxu0
      %v2419 = vadd.f32 %v454, %v2418
      %2420 = vmatmul.bf16.gmra.mxu0 %v1370
      %v2421 = vpop.f32.mrf.mxu0
      %v2422 = vadd.f32 %v454, %v2421
      %v2423 = vpop.f32.mrf.mxu0
      %v2424 = vadd.f32 %v454, %v2423
      %2425 = vmatmul.bf16.gmra.mxu0 %v1372
      %v2426 = vpop.f32.mrf.mxu0
      %v2427 = vadd.f32 %v454, %v2426
      %v2428 = vpop.f32.mrf.mxu0
      %v2429 = vadd.f32 %v454, %v2428
      %2430 = vmatmul.bf16.gmra.mxu0 %v1374
      %v2431 = vpop.f32.mrf.mxu0
      %v2432 = vadd.f32 %v454, %v2431
      %v2433 = vpop.f32.mrf.mxu0
      %v2434 = vadd.f32 %v454, %v2433
      %2435 = vmatmul.bf16.gmra.mxu0 %v1376
      %v2436 = vpop.f32.mrf.mxu0
      %v2437 = vadd.f32 %v454, %v2436
      %v2438 = vpop.f32.mrf.mxu0
      %v2439 = vadd.f32 %v454, %v2438
      %2440 = vmatmul.bf16.gmra.mxu0 %v1378
      %v2441 = vpop.f32.mrf.mxu0
      %v2442 = vadd.f32 %v454, %v2441
      %v2443 = vpop.f32.mrf.mxu0
      %v2444 = vadd.f32 %v454, %v2443
      %2445 = vmatmul.bf16.gmra.mxu0 %v1380
      %v2446 = vpop.f32.mrf.mxu0
      %v2447 = vadd.f32 %v454, %v2446
      %v2448 = vpop.f32.mrf.mxu0
      %v2449 = vadd.f32 %v454, %v2448
      %2450 = vmatmul.bf16.gmra.mxu0 %v1382
      %v2451 = vpop.f32.mrf.mxu0
      %v2452 = vadd.f32 %v454, %v2451
      %v2453 = vpop.f32.mrf.mxu0
      %v2454 = vadd.f32 %v454, %v2453
      %2455 = vmatmul.bf16.gmra.mxu0 %v1384
      %v2456 = vpop.f32.mrf.mxu0
      %v2457 = vadd.f32 %v454, %v2456
      %v2458 = vpop.f32.mrf.mxu0
      %v2459 = vadd.f32 %v454, %v2458
      %2460 = vmatmul.bf16.gmra.mxu0 %v1386
      %v2461 = vpop.f32.mrf.mxu0
      %v2462 = vadd.f32 %v454, %v2461
      %v2463 = vpop.f32.mrf.mxu0
      %v2464 = vadd.f32 %v454, %v2463
      %2465 = vmatmul.bf16.gmra.mxu0 %v1388
      %v2466 = vpop.f32.mrf.mxu0
      %v2467 = vadd.f32 %v454, %v2466
      %v2468 = vpop.f32.mrf.mxu0
      %v2469 = vadd.f32 %v454, %v2468
      %2470 = vmatmul.bf16.gmra.mxu0 %v1390
      %v2471 = vpop.f32.mrf.mxu0
      %v2472 = vadd.f32 %v454, %v2471
      %v2473 = vpop.f32.mrf.mxu0
      %v2474 = vadd.f32 %v454, %v2473
      %2475 = vmatmul.bf16.gmra.mxu0 %v1392
      %v2476 = vpop.f32.mrf.mxu0
      %v2477 = vadd.f32 %v454, %v2476
      %v2478 = vpop.f32.mrf.mxu0
      %v2479 = vadd.f32 %v454, %v2478
      %2480 = vmatmul.bf16.gmra.mxu0 %v1394
      %v2481 = vpop.f32.mrf.mxu0
      %v2482 = vadd.f32 %v454, %v2481
      %v2483 = vpop.f32.mrf.mxu0
      %v2484 = vadd.f32 %v454, %v2483
      %2485 = vmatmul.bf16.gmra.mxu0 %v1396
      %v2486 = vpop.f32.mrf.mxu0
      %v2487 = vadd.f32 %v454, %v2486
      %v2488 = vpop.f32.mrf.mxu0
      %v2489 = vadd.f32 %v454, %v2488
      %2490 = vmatmul.bf16.gmra.mxu0 %v1398
      %v2491 = vpop.f32.mrf.mxu0
      %v2492 = vadd.f32 %v454, %v2491
      %v2493 = vpop.f32.mrf.mxu0
      %v2494 = vadd.f32 %v454, %v2493
      %2495 = vmatmul.bf16.gmra.mxu0 %v1400
      %v2496 = vpop.f32.mrf.mxu0
      %v2497 = vadd.f32 %v454, %v2496
      %v2498 = vpop.f32.mrf.mxu0
      %v2499 = vadd.f32 %v454, %v2498
      %2500 = vmatmul.bf16.gmra.mxu0 %v1402
      %v2501 = vpop.f32.mrf.mxu0
      %v2502 = vadd.f32 %v454, %v2501
      %v2503 = vpop.f32.mrf.mxu0
      %v2504 = vadd.f32 %v454, %v2503
      %2505 = vmatmul.bf16.gmra.mxu0 %v1404
      %v2506 = vpop.f32.mrf.mxu0
      %v2507 = vadd.f32 %v454, %v2506
      %v2508 = vpop.f32.mrf.mxu0
      %v2509 = vadd.f32 %v454, %v2508
      %2510 = vmatmul.bf16.gmra.mxu0 %v1406
      %v2511 = vpop.f32.mrf.mxu0
      %v2512 = vadd.f32 %v454, %v2511
      %v2513 = vpop.f32.mrf.mxu0
      %v2514 = vadd.f32 %v454, %v2513
      %2515 = vmatmul.bf16.gmra.mxu0 %v1408
      %v2516 = vpop.f32.mrf.mxu0
      %v2517 = vadd.f32 %v454, %v2516
      %v2518 = vpop.f32.mrf.mxu0
      %v2519 = vadd.f32 %v454, %v2518
      %2520 = vmatmul.bf16.gmra.mxu0 %v1410
      %v2521 = vpop.f32.mrf.mxu0
      %v2522 = vadd.f32 %v454, %v2521
      %v2523 = vpop.f32.mrf.mxu0
      %v2524 = vadd.f32 %v454, %v2523
      %2525 = vmatmul.bf16.gmra.mxu0 %v1412
      %v2526 = vpop.f32.mrf.mxu0
      %v2527 = vadd.f32 %v454, %v2526
      %v2528 = vpop.f32.mrf.mxu0
      %v2529 = vadd.f32 %v454, %v2528
      %2530 = vmatmul.bf16.gmra.mxu0 %v1414
      %v2531 = vpop.f32.mrf.mxu0
      %v2532 = vadd.f32 %v454, %v2531
      %v2533 = vpop.f32.mrf.mxu0
      %v2534 = vadd.f32 %v454, %v2533
      %2535 = vmatmul.bf16.gmra.mxu0 %v1416
      %v2536 = vpop.f32.mrf.mxu0
      %v2537 = vadd.f32 %v454, %v2536
      %v2538 = vpop.f32.mrf.mxu0
      %v2539 = vadd.f32 %v454, %v2538
      %2540 = vmatmul.bf16.gmra.mxu0 %v1418
      %v2541 = vpop.f32.mrf.mxu0
      %v2542 = vadd.f32 %v454, %v2541
      %v2543 = vpop.f32.mrf.mxu0
      %v2544 = vadd.f32 %v454, %v2543
      %2545 = vmatmul.bf16.gmra.mxu0 %v1420
      %v2546 = vpop.f32.mrf.mxu0
      %v2547 = vadd.f32 %v454, %v2546
      %v2548 = vpop.f32.mrf.mxu0
      %v2549 = vadd.f32 %v454, %v2548
      %2550 = vmatmul.bf16.gmra.mxu0 %v1422
      %v2551 = vpop.f32.mrf.mxu0
      %v2552 = vadd.f32 %v454, %v2551
      %v2553 = vpop.f32.mrf.mxu0
      %v2554 = vadd.f32 %v454, %v2553
      %2555 = vmatmul.bf16.gmra.mxu0 %v1424
      %v2556 = vpop.f32.mrf.mxu0
      %v2557 = vadd.f32 %v454, %v2556
      %v2558 = vpop.f32.mrf.mxu0
      %v2559 = vadd.f32 %v454, %v2558
      %2560 = vmatmul.bf16.gmra.mxu0 %v1426
      %v2561 = vpop.f32.mrf.mxu0
      %v2562 = vadd.f32 %v454, %v2561
      %v2563 = vpop.f32.mrf.mxu0
      %v2564 = vadd.f32 %v454, %v2563
      %2565 = vmatmul.bf16.gmra.mxu0 %v1428
      %v2566 = vpop.f32.mrf.mxu0
      %v2567 = vadd.f32 %v454, %v2566
      %v2568 = vpop.f32.mrf.mxu0
      %v2569 = vadd.f32 %v454, %v2568
      %2570 = vmatmul.bf16.gmra.mxu0 %v1430
      %v2571 = vpop.f32.mrf.mxu0
      %v2572 = vadd.f32 %v454, %v2571
      %v2573 = vpop.f32.mrf.mxu0
      %v2574 = vadd.f32 %v454, %v2573
      %2575 = vmatmul.bf16.gmra.mxu0 %v1432
      %v2576 = vpop.f32.mrf.mxu0
      %v2577 = vadd.f32 %v454, %v2576
      %v2578 = vpop.f32.mrf.mxu0
      %v2579 = vadd.f32 %v454, %v2578
      %2580 = vmatmul.bf16.gmra.mxu0 %v1434
      %v2581 = vpop.f32.mrf.mxu0
      %v2582 = vadd.f32 %v454, %v2581
      %v2583 = vpop.f32.mrf.mxu0
      %v2584 = vadd.f32 %v454, %v2583
      %2585 = vmatmul.bf16.gmra.mxu0 %v1436
      %v2586 = vpop.f32.mrf.mxu0
      %v2587 = vadd.f32 %v454, %v2586
      %v2588 = vpop.f32.mrf.mxu0
      %v2589 = vadd.f32 %v454, %v2588
      %2590 = vmatmul.bf16.gmra.mxu0 %v1438
      %v2591 = vpop.f32.mrf.mxu0
      %v2592 = vadd.f32 %v454, %v2591
      %v2593 = vpop.f32.mrf.mxu0
      %v2594 = vadd.f32 %v454, %v2593
      %2595 = vmatmul.bf16.gmra.mxu0 %v1440
      %v2596 = vpop.f32.mrf.mxu0
      %v2597 = vadd.f32 %v454, %v2596
      %v2598 = vpop.f32.mrf.mxu0
      %v2599 = vadd.f32 %v454, %v2598
      %2600 = vmatmul.bf16.gmra.mxu0 %v1442
      %v2601 = vpop.f32.mrf.mxu0
      %v2602 = vadd.f32 %v454, %v2601
      %v2603 = vpop.f32.mrf.mxu0
      %v2604 = vadd.f32 %v454, %v2603
      %2605 = vmatmul.bf16.gmra.mxu0 %v1444
      %v2606 = vpop.f32.mrf.mxu0
      %v2607 = vadd.f32 %v454, %v2606
      %v2608 = vpop.f32.mrf.mxu0
      %v2609 = vadd.f32 %v454, %v2608
      %2610 = vmatmul.bf16.gmra.mxu0 %v1446
      %v2611 = vpop.f32.mrf.mxu0
      %v2612 = vadd.f32 %v454, %v2611
      %v2613 = vpop.f32.mrf.mxu0
      %v2614 = vadd.f32 %v454, %v2613
      %2615 = vmatmul.bf16.gmra.mxu0 %v1448
      %v2616 = vpop.f32.mrf.mxu0
      %v2617 = vadd.f32 %v454, %v2616
      %v2618 = vpop.f32.mrf.mxu0
      %v2619 = vadd.f32 %v454, %v2618
      %2620 = vmatmul.bf16.gmra.mxu0 %v1450
      %v2621 = vpop.f32.mrf.mxu0
      %v2622 = vadd.f32 %v454, %v2621
      %v2623 = vpop.f32.mrf.mxu0
      %v2624 = vadd.f32 %v454, %v2623
      %2625 = vmatmul.bf16.gmra.mxu0 %v1452
      %v2626 = vpop.f32.mrf.mxu0
      %v2627 = vadd.f32 %v454, %v2626
      %v2628 = vpop.f32.mrf.mxu0
      %v2629 = vadd.f32 %v454, %v2628
      %2630 = vmatmul.bf16.gmra.mxu0 %v1454
      %v2631 = vpop.f32.mrf.mxu0
      %v2632 = vadd.f32 %v454, %v2631
      %v2633 = vpop.f32.mrf.mxu0
      %v2634 = vadd.f32 %v454, %v2633
      %2635 = vmatmul.bf16.gmra.mxu0 %v1456
      %v2636 = vpop.f32.mrf.mxu0
      %v2637 = vadd.f32 %v454, %v2636
      %v2638 = vpop.f32.mrf.mxu0
      %v2639 = vadd.f32 %v454, %v2638
      %2640 = vmatmul.bf16.gmra.mxu0 %v1458
      %v2641 = vpop.f32.mrf.mxu0
      %v2642 = vadd.f32 %v454, %v2641
      %v2643 = vpop.f32.mrf.mxu0
      %v2644 = vadd.f32 %v454, %v2643
      %2645 = vmatmul.bf16.gmra.mxu0 %v1460
      %v2646 = vpop.f32.mrf.mxu0
      %v2647 = vadd.f32 %v454, %v2646
      %v2648 = vpop.f32.mrf.mxu0
      %v2649 = vadd.f32 %v454, %v2648
      %2650 = vmatmul.bf16.gmra.mxu0 %v1462
      %v2651 = vpop.f32.mrf.mxu0
      %v2652 = vadd.f32 %v454, %v2651
      %v2653 = vpop.f32.mrf.mxu0
      %v2654 = vadd.f32 %v454, %v2653
      %2655 = vmatmul.bf16.gmra.mxu0 %v1464
      %v2656 = vpop.f32.mrf.mxu0
      %v2657 = vadd.f32 %v454, %v2656
      %v2658 = vpop.f32.mrf.mxu0
      %v2659 = vadd.f32 %v454, %v2658
      %2660 = vmatmul.bf16.gmra.mxu0 %v1466
      %v2661 = vpop.f32.mrf.mxu0
      %v2662 = vadd.f32 %v454, %v2661
      %v2663 = vpop.f32.mrf.mxu0
      %v2664 = vadd.f32 %v454, %v2663
      %2665 = vmatmul.bf16.gmra.mxu0 %v1468
      %v2666 = vpop.f32.mrf.mxu0
      %v2667 = vadd.f32 %v454, %v2666
      %v2668 = vpop.f32.mrf.mxu0
      %v2669 = vadd.f32 %v454, %v2668
      %2670 = vmatmul.bf16.gmra.mxu0 %v1470
      %v2671 = vpop.f32.mrf.mxu0
      %v2672 = vadd.f32 %v454, %v2671
      %v2673 = vpop.f32.mrf.mxu0
      %v2674 = vadd.f32 %v454, %v2673
      %2675 = vmatmul.bf16.gmra.mxu0 %v1472
      %v2676 = vpop.f32.mrf.mxu0
      %v2677 = vadd.f32 %v454, %v2676
      %v2678 = vpop.f32.mrf.mxu0
      %v2679 = vadd.f32 %v454, %v2678
      %2680 = vmatmul.bf16.gmra.mxu0 %v1474
      %v2681 = vpop.f32.mrf.mxu0
      %v2682 = vadd.f32 %v454, %v2681
      %v2683 = vpop.f32.mrf.mxu0
      %v2684 = vadd.f32 %v454, %v2683
      %2685 = vmatmul.bf16.gmra.mxu0 %v1476
      %v2686 = vpop.f32.mrf.mxu0
      %v2687 = vadd.f32 %v454, %v2686
      %v2688 = vpop.f32.mrf.mxu0
      %v2689 = vadd.f32 %v454, %v2688
      %2690 = vmatmul.bf16.gmra.mxu0 %v1478
      %v2691 = vpop.f32.mrf.mxu0
      %v2692 = vadd.f32 %v454, %v2691
      %v2693 = vpop.f32.mrf.mxu0
      %v2694 = vadd.f32 %v454, %v2693
      %2695 = vdwg.mxu0
      %2696 = vmatpush.bf16.msra.mxu0 0
      %2697 = vmatpush.bf16.msra.mxu0 0
      %2698 = vmatpush.bf16.msra.mxu0 0
      %2699 = vmatpush.bf16.msra.mxu0 0
      %2700 = vmatpush.bf16.msra.mxu0 0
      %2701 = vmatpush.bf16.msra.mxu0 0
      %2702 = vmatpush.bf16.msra.mxu0 0
      %2703 = vmatpush.bf16.msra.mxu0 %v1652
      %2704 = vmatmul.bf16.gmra.mxu0 %v1664
      %v2705 = vpop.f32.mrf.mxu0
      %v2706 = vadd.f32 %v2057, %v2705
      %v2707 = vpop.f32.mrf.mxu0
      %v2708 = vadd.f32 %v2059, %v2707
      %2709 = vmatmul.bf16.gmra.mxu0 %v1667
      %v2710 = vpop.f32.mrf.mxu0
      %v2711 = vadd.f32 %v2062, %v2710
      %v2712 = vpop.f32.mrf.mxu0
      %v2713 = vadd.f32 %v2064, %v2712
      %2714 = vmatmul.bf16.gmra.mxu0 %v1670
      %v2715 = vpop.f32.mrf.mxu0
      %v2716 = vadd.f32 %v2067, %v2715
      %v2717 = vpop.f32.mrf.mxu0
      %v2718 = vadd.f32 %v2069, %v2717
      %2719 = vmatmul.bf16.gmra.mxu0 %v1673
      %v2720 = vpop.f32.mrf.mxu0
      %v2721 = vadd.f32 %v2072, %v2720
      %v2722 = vpop.f32.mrf.mxu0
      %v2723 = vadd.f32 %v2074, %v2722
      %2724 = vmatmul.bf16.gmra.mxu0 %v1676
      %v2725 = vpop.f32.mrf.mxu0
      %v2726 = vadd.f32 %v2077, %v2725
      %v2727 = vpop.f32.mrf.mxu0
      %v2728 = vadd.f32 %v2079, %v2727
      %2729 = vmatmul.bf16.gmra.mxu0 %v1679
      %v2730 = vpop.f32.mrf.mxu0
      %v2731 = vadd.f32 %v2082, %v2730
      %v2732 = vpop.f32.mrf.mxu0
      %v2733 = vadd.f32 %v2084, %v2732
      %2734 = vmatmul.bf16.gmra.mxu0 %v1682
      %v2735 = vpop.f32.mrf.mxu0
      %v2736 = vadd.f32 %v2087, %v2735
      %v2737 = vpop.f32.mrf.mxu0
      %v2738 = vadd.f32 %v2089, %v2737
      %2739 = vmatmul.bf16.gmra.mxu0 %v1685
      %v2740 = vpop.f32.mrf.mxu0
      %v2741 = vadd.f32 %v2092, %v2740
      %v2742 = vpop.f32.mrf.mxu0
      %v2743 = vadd.f32 %v2094, %v2742
      %2744 = vmatmul.bf16.gmra.mxu0 %v1688
      %v2745 = vpop.f32.mrf.mxu0
      %v2746 = vadd.f32 %v2097, %v2745
      %v2747 = vpop.f32.mrf.mxu0
      %v2748 = vadd.f32 %v2099, %v2747
      %2749 = vmatmul.bf16.gmra.mxu0 %v1691
      %v2750 = vpop.f32.mrf.mxu0
      %v2751 = vadd.f32 %v2102, %v2750
      %v2752 = vpop.f32.mrf.mxu0
      %v2753 = vadd.f32 %v2104, %v2752
      %2754 = vmatmul.bf16.gmra.mxu0 %v1694
      %v2755 = vpop.f32.mrf.mxu0
      %v2756 = vadd.f32 %v2107, %v2755
      %v2757 = vpop.f32.mrf.mxu0
      %v2758 = vadd.f32 %v2109, %v2757
      %2759 = vmatmul.bf16.gmra.mxu0 %v1697
      %v2760 = vpop.f32.mrf.mxu0
      %v2761 = vadd.f32 %v2112, %v2760
      %v2762 = vpop.f32.mrf.mxu0
      %v2763 = vadd.f32 %v2114, %v2762
      %2764 = vmatmul.bf16.gmra.mxu0 %v1700
      %v2765 = vpop.f32.mrf.mxu0
      %v2766 = vadd.f32 %v2117, %v2765
      %v2767 = vpop.f32.mrf.mxu0
      %v2768 = vadd.f32 %v2119, %v2767
      %2769 = vmatmul.bf16.gmra.mxu0 %v1703
      %v2770 = vpop.f32.mrf.mxu0
      %v2771 = vadd.f32 %v2122, %v2770
      %v2772 = vpop.f32.mrf.mxu0
      %v2773 = vadd.f32 %v2124, %v2772
      %2774 = vmatmul.bf16.gmra.mxu0 %v1706
      %v2775 = vpop.f32.mrf.mxu0
      %v2776 = vadd.f32 %v2127, %v2775
      %v2777 = vpop.f32.mrf.mxu0
      %v2778 = vadd.f32 %v2129, %v2777
      %2779 = vmatmul.bf16.gmra.mxu0 %v1709
      %v2780 = vpop.f32.mrf.mxu0
      %v2781 = vadd.f32 %v2132, %v2780
      %v2782 = vpop.f32.mrf.mxu0
      %v2783 = vadd.f32 %v2134, %v2782
      %2784 = vmatmul.bf16.gmra.mxu0 %v1712
      %v2785 = vpop.f32.mrf.mxu0
      %v2786 = vadd.f32 %v2137, %v2785
      %v2787 = vpop.f32.mrf.mxu0
      %v2788 = vadd.f32 %v2139, %v2787
      %2789 = vmatmul.bf16.gmra.mxu0 %v1715
      %v2790 = vpop.f32.mrf.mxu0
      %v2791 = vadd.f32 %v2142, %v2790
      %v2792 = vpop.f32.mrf.mxu0
      %v2793 = vadd.f32 %v2144, %v2792
      %2794 = vmatmul.bf16.gmra.mxu0 %v1718
      %v2795 = vpop.f32.mrf.mxu0
      %v2796 = vadd.f32 %v2147, %v2795
      %v2797 = vpop.f32.mrf.mxu0
      %v2798 = vadd.f32 %v2149, %v2797
      %2799 = vmatmul.bf16.gmra.mxu0 %v1721
      %v2800 = vpop.f32.mrf.mxu0
      %v2801 = vadd.f32 %v2152, %v2800
      %v2802 = vpop.f32.mrf.mxu0
      %v2803 = vadd.f32 %v2154, %v2802
      %2804 = vmatmul.bf16.gmra.mxu0 %v1724
      %v2805 = vpop.f32.mrf.mxu0
      %v2806 = vadd.f32 %v2157, %v2805
      %v2807 = vpop.f32.mrf.mxu0
      %v2808 = vadd.f32 %v2159, %v2807
      %2809 = vmatmul.bf16.gmra.mxu0 %v1727
      %v2810 = vpop.f32.mrf.mxu0
      %v2811 = vadd.f32 %v2162, %v2810
      %v2812 = vpop.f32.mrf.mxu0
      %v2813 = vadd.f32 %v2164, %v2812
      %2814 = vmatmul.bf16.gmra.mxu0 %v1730
      %v2815 = vpop.f32.mrf.mxu0
      %v2816 = vadd.f32 %v2167, %v2815
      %v2817 = vpop.f32.mrf.mxu0
      %v2818 = vadd.f32 %v2169, %v2817
      %2819 = vmatmul.bf16.gmra.mxu0 %v1733
      %v2820 = vpop.f32.mrf.mxu0
      %v2821 = vadd.f32 %v2172, %v2820
      %v2822 = vpop.f32.mrf.mxu0
      %v2823 = vadd.f32 %v2174, %v2822
      %2824 = vmatmul.bf16.gmra.mxu0 %v1736
      %v2825 = vpop.f32.mrf.mxu0
      %v2826 = vadd.f32 %v2177, %v2825
      %v2827 = vpop.f32.mrf.mxu0
      %v2828 = vadd.f32 %v2179, %v2827
      %2829 = vmatmul.bf16.gmra.mxu0 %v1739
      %v2830 = vpop.f32.mrf.mxu0
      %v2831 = vadd.f32 %v2182, %v2830
      %v2832 = vpop.f32.mrf.mxu0
      %v2833 = vadd.f32 %v2184, %v2832
      %2834 = vmatmul.bf16.gmra.mxu0 %v1742
      %v2835 = vpop.f32.mrf.mxu0
      %v2836 = vadd.f32 %v2187, %v2835
      %v2837 = vpop.f32.mrf.mxu0
      %v2838 = vadd.f32 %v2189, %v2837
      %2839 = vmatmul.bf16.gmra.mxu0 %v1745
      %v2840 = vpop.f32.mrf.mxu0
      %v2841 = vadd.f32 %v2192, %v2840
      %v2842 = vpop.f32.mrf.mxu0
      %v2843 = vadd.f32 %v2194, %v2842
      %2844 = vmatmul.bf16.gmra.mxu0 %v1748
      %v2845 = vpop.f32.mrf.mxu0
      %v2846 = vadd.f32 %v2197, %v2845
      %v2847 = vpop.f32.mrf.mxu0
      %v2848 = vadd.f32 %v2199, %v2847
      %2849 = vmatmul.bf16.gmra.mxu0 %v1751
      %v2850 = vpop.f32.mrf.mxu0
      %v2851 = vadd.f32 %v2202, %v2850
      %v2852 = vpop.f32.mrf.mxu0
      %v2853 = vadd.f32 %v2204, %v2852
      %2854 = vmatmul.bf16.gmra.mxu0 %v1754
      %v2855 = vpop.f32.mrf.mxu0
      %v2856 = vadd.f32 %v2207, %v2855
      %v2857 = vpop.f32.mrf.mxu0
      %v2858 = vadd.f32 %v2209, %v2857
      %2859 = vmatmul.bf16.gmra.mxu0 %v1757
      %v2860 = vpop.f32.mrf.mxu0
      %v2861 = vadd.f32 %v2212, %v2860
      %v2862 = vpop.f32.mrf.mxu0
      %v2863 = vadd.f32 %v2214, %v2862
      %2864 = vmatmul.bf16.gmra.mxu0 %v1760
      %v2865 = vpop.f32.mrf.mxu0
      %v2866 = vadd.f32 %v2217, %v2865
      %v2867 = vpop.f32.mrf.mxu0
      %v2868 = vadd.f32 %v2219, %v2867
      %2869 = vmatmul.bf16.gmra.mxu0 %v1763
      %v2870 = vpop.f32.mrf.mxu0
      %v2871 = vadd.f32 %v2222, %v2870
      %v2872 = vpop.f32.mrf.mxu0
      %v2873 = vadd.f32 %v2224, %v2872
      %2874 = vmatmul.bf16.gmra.mxu0 %v1766
      %v2875 = vpop.f32.mrf.mxu0
      %v2876 = vadd.f32 %v2227, %v2875
      %v2877 = vpop.f32.mrf.mxu0
      %v2878 = vadd.f32 %v2229, %v2877
      %2879 = vmatmul.bf16.gmra.mxu0 %v1769
      %v2880 = vpop.f32.mrf.mxu0
      %v2881 = vadd.f32 %v2232, %v2880
      %v2882 = vpop.f32.mrf.mxu0
      %v2883 = vadd.f32 %v2234, %v2882
      %2884 = vmatmul.bf16.gmra.mxu0 %v1772
      %v2885 = vpop.f32.mrf.mxu0
      %v2886 = vadd.f32 %v2237, %v2885
      %v2887 = vpop.f32.mrf.mxu0
      %v2888 = vadd.f32 %v2239, %v2887
      %2889 = vmatmul.bf16.gmra.mxu0 %v1775
      %v2890 = vpop.f32.mrf.mxu0
      %v2891 = vadd.f32 %v2242, %v2890
      %v2892 = vpop.f32.mrf.mxu0
      %v2893 = vadd.f32 %v2244, %v2892
      %2894 = vmatmul.bf16.gmra.mxu0 %v1778
      %v2895 = vpop.f32.mrf.mxu0
      %v2896 = vadd.f32 %v2247, %v2895
      %v2897 = vpop.f32.mrf.mxu0
      %v2898 = vadd.f32 %v2249, %v2897
      %2899 = vmatmul.bf16.gmra.mxu0 %v1781
      %v2900 = vpop.f32.mrf.mxu0
      %v2901 = vadd.f32 %v2252, %v2900
      %v2902 = vpop.f32.mrf.mxu0
      %v2903 = vadd.f32 %v2254, %v2902
      %2904 = vmatmul.bf16.gmra.mxu0 %v1784
      %v2905 = vpop.f32.mrf.mxu0
      %v2906 = vadd.f32 %v2257, %v2905
      %v2907 = vpop.f32.mrf.mxu0
      %v2908 = vadd.f32 %v2259, %v2907
      %2909 = vmatmul.bf16.gmra.mxu0 %v1787
      %v2910 = vpop.f32.mrf.mxu0
      %v2911 = vadd.f32 %v2262, %v2910
      %v2912 = vpop.f32.mrf.mxu0
      %v2913 = vadd.f32 %v2264, %v2912
      %2914 = vmatmul.bf16.gmra.mxu0 %v1790
      %v2915 = vpop.f32.mrf.mxu0
      %v2916 = vadd.f32 %v2267, %v2915
      %v2917 = vpop.f32.mrf.mxu0
      %v2918 = vadd.f32 %v2269, %v2917
      %2919 = vmatmul.bf16.gmra.mxu0 %v1793
      %v2920 = vpop.f32.mrf.mxu0
      %v2921 = vadd.f32 %v2272, %v2920
      %v2922 = vpop.f32.mrf.mxu0
      %v2923 = vadd.f32 %v2274, %v2922
      %2924 = vmatmul.bf16.gmra.mxu0 %v1796
      %v2925 = vpop.f32.mrf.mxu0
      %v2926 = vadd.f32 %v2277, %v2925
      %v2927 = vpop.f32.mrf.mxu0
      %v2928 = vadd.f32 %v2279, %v2927
      %2929 = vmatmul.bf16.gmra.mxu0 %v1799
      %v2930 = vpop.f32.mrf.mxu0
      %v2931 = vadd.f32 %v2282, %v2930
      %v2932 = vpop.f32.mrf.mxu0
      %v2933 = vadd.f32 %v2284, %v2932
      %2934 = vmatmul.bf16.gmra.mxu0 %v1802
      %v2935 = vpop.f32.mrf.mxu0
      %v2936 = vadd.f32 %v2287, %v2935
      %v2937 = vpop.f32.mrf.mxu0
      %v2938 = vadd.f32 %v2289, %v2937
      %2939 = vmatmul.bf16.gmra.mxu0 %v1805
      %v2940 = vpop.f32.mrf.mxu0
      %v2941 = vadd.f32 %v2292, %v2940
      %v2942 = vpop.f32.mrf.mxu0
      %v2943 = vadd.f32 %v2294, %v2942
      %2944 = vmatmul.bf16.gmra.mxu0 %v1808
      %v2945 = vpop.f32.mrf.mxu0
      %v2946 = vadd.f32 %v2297, %v2945
      %v2947 = vpop.f32.mrf.mxu0
      %v2948 = vadd.f32 %v2299, %v2947
      %2949 = vmatmul.bf16.gmra.mxu0 %v1811
      %v2950 = vpop.f32.mrf.mxu0
      %v2951 = vadd.f32 %v2302, %v2950
      %v2952 = vpop.f32.mrf.mxu0
      %v2953 = vadd.f32 %v2304, %v2952
      %2954 = vmatmul.bf16.gmra.mxu0 %v1814
      %v2955 = vpop.f32.mrf.mxu0
      %v2956 = vadd.f32 %v2307, %v2955
      %v2957 = vpop.f32.mrf.mxu0
      %v2958 = vadd.f32 %v2309, %v2957
      %2959 = vmatmul.bf16.gmra.mxu0 %v1817
      %v2960 = vpop.f32.mrf.mxu0
      %v2961 = vadd.f32 %v2312, %v2960
      %v2962 = vpop.f32.mrf.mxu0
      %v2963 = vadd.f32 %v2314, %v2962
      %2964 = vmatmul.bf16.gmra.mxu0 %v1820
      %v2965 = vpop.f32.mrf.mxu0
      %v2966 = vadd.f32 %v2317, %v2965
      %v2967 = vpop.f32.mrf.mxu0
      %v2968 = vadd.f32 %v2319, %v2967
      %2969 = vmatmul.bf16.gmra.mxu0 %v1823
      %v2970 = vpop.f32.mrf.mxu0
      %v2971 = vadd.f32 %v2322, %v2970
      %v2972 = vpop.f32.mrf.mxu0
      %v2973 = vadd.f32 %v2324, %v2972
      %2974 = vmatmul.bf16.gmra.mxu0 %v1826
      %v2975 = vpop.f32.mrf.mxu0
      %v2976 = vadd.f32 %v2327, %v2975
      %v2977 = vpop.f32.mrf.mxu0
      %v2978 = vadd.f32 %v2329, %v2977
      %2979 = vmatmul.bf16.gmra.mxu0 %v1829
      %v2980 = vpop.f32.mrf.mxu0
      %v2981 = vadd.f32 %v2332, %v2980
      %v2982 = vpop.f32.mrf.mxu0
      %v2983 = vadd.f32 %v2334, %v2982
      %2984 = vmatmul.bf16.gmra.mxu0 %v1832
      %v2985 = vpop.f32.mrf.mxu0
      %v2986 = vadd.f32 %v2337, %v2985
      %v2987 = vpop.f32.mrf.mxu0
      %v2988 = vadd.f32 %v2339, %v2987
      %2989 = vmatmul.bf16.gmra.mxu0 %v1835
      %v2990 = vpop.f32.mrf.mxu0
      %v2991 = vadd.f32 %v2342, %v2990
      %v2992 = vpop.f32.mrf.mxu0
      %v2993 = vadd.f32 %v2344, %v2992
      %2994 = vmatmul.bf16.gmra.mxu0 %v1838
      %v2995 = vpop.f32.mrf.mxu0
      %v2996 = vadd.f32 %v2347, %v2995
      %v2997 = vpop.f32.mrf.mxu0
      %v2998 = vadd.f32 %v2349, %v2997
      %2999 = vmatmul.bf16.gmra.mxu0 %v1841
      %v3000 = vpop.f32.mrf.mxu0
      %v3001 = vadd.f32 %v2352, %v3000
      %v3002 = vpop.f32.mrf.mxu0
      %v3003 = vadd.f32 %v2354, %v3002
      %3004 = vmatmul.bf16.gmra.mxu0 %v1844
      %v3005 = vpop.f32.mrf.mxu0
      %v3006 = vadd.f32 %v2357, %v3005
      %v3007 = vpop.f32.mrf.mxu0
      %v3008 = vadd.f32 %v2359, %v3007
      %3009 = vmatmul.bf16.gmra.mxu0 %v1847
      %v3010 = vpop.f32.mrf.mxu0
      %v3011 = vadd.f32 %v2362, %v3010
      %v3012 = vpop.f32.mrf.mxu0
      %v3013 = vadd.f32 %v2364, %v3012
      %3014 = vmatmul.bf16.gmra.mxu0 %v1850
      %v3015 = vpop.f32.mrf.mxu0
      %v3016 = vadd.f32 %v2367, %v3015
      %v3017 = vpop.f32.mrf.mxu0
      %v3018 = vadd.f32 %v2369, %v3017
      %3019 = vmatmul.bf16.gmra.mxu0 %v1853
      %v3020 = vpop.f32.mrf.mxu0
      %v3021 = vadd.f32 %v2372, %v3020
      %v3022 = vpop.f32.mrf.mxu0
      %v3023 = vadd.f32 %v2374, %v3022
      %3024 = vmatmul.bf16.gmra.mxu0 %v1856
      %v3025 = vpop.f32.mrf.mxu0
      %v3026 = vadd.f32 %v2377, %v3025
      %v3027 = vpop.f32.mrf.mxu0
      %v3028 = vadd.f32 %v2379, %v3027
      %3029 = vmatmul.bf16.gmra.mxu0 %v1859
      %v3030 = vpop.f32.mrf.mxu0
      %v3031 = vadd.f32 %v2382, %v3030
      %v3032 = vpop.f32.mrf.mxu0
      %v3033 = vadd.f32 %v2384, %v3032
      %3034 = vmatmul.bf16.gmra.mxu0 %v1862
      %v3035 = vpop.f32.mrf.mxu0
      %v3036 = vadd.f32 %v2387, %v3035
      %v3037 = vpop.f32.mrf.mxu0
      %v3038 = vadd.f32 %v2389, %v3037
      %3039 = vmatmul.bf16.gmra.mxu0 %v1865
      %v3040 = vpop.f32.mrf.mxu0
      %v3041 = vadd.f32 %v2392, %v3040
      %v3042 = vpop.f32.mrf.mxu0
      %v3043 = vadd.f32 %v2394, %v3042
      %3044 = vmatmul.bf16.gmra.mxu0 %v1868
      %v3045 = vpop.f32.mrf.mxu0
      %v3046 = vadd.f32 %v2397, %v3045
      %v3047 = vpop.f32.mrf.mxu0
      %v3048 = vadd.f32 %v2399, %v3047
      %3049 = vmatmul.bf16.gmra.mxu0 %v1871
      %v3050 = vpop.f32.mrf.mxu0
      %v3051 = vadd.f32 %v2402, %v3050
      %v3052 = vpop.f32.mrf.mxu0
      %v3053 = vadd.f32 %v2404, %v3052
      %3054 = vmatmul.bf16.gmra.mxu0 %v1874
      %v3055 = vpop.f32.mrf.mxu0
      %v3056 = vadd.f32 %v2407, %v3055
      %v3057 = vpop.f32.mrf.mxu0
      %v3058 = vadd.f32 %v2409, %v3057
      %3059 = vmatmul.bf16.gmra.mxu0 %v1877
      %v3060 = vpop.f32.mrf.mxu0
      %v3061 = vadd.f32 %v2412, %v3060
      %v3062 = vpop.f32.mrf.mxu0
      %v3063 = vadd.f32 %v2414, %v3062
      %3064 = vmatmul.bf16.gmra.mxu0 %v1880
      %v3065 = vpop.f32.mrf.mxu0
      %v3066 = vadd.f32 %v2417, %v3065
      %v3067 = vpop.f32.mrf.mxu0
      %v3068 = vadd.f32 %v2419, %v3067
      %3069 = vmatmul.bf16.gmra.mxu0 %v1883
      %v3070 = vpop.f32.mrf.mxu0
      %v3071 = vadd.f32 %v2422, %v3070
      %v3072 = vpop.f32.mrf.mxu0
      %v3073 = vadd.f32 %v2424, %v3072
      %3074 = vmatmul.bf16.gmra.mxu0 %v1886
      %v3075 = vpop.f32.mrf.mxu0
      %v3076 = vadd.f32 %v2427, %v3075
      %v3077 = vpop.f32.mrf.mxu0
      %v3078 = vadd.f32 %v2429, %v3077
      %3079 = vmatmul.bf16.gmra.mxu0 %v1889
      %v3080 = vpop.f32.mrf.mxu0
      %v3081 = vadd.f32 %v2432, %v3080
      %v3082 = vpop.f32.mrf.mxu0
      %v3083 = vadd.f32 %v2434, %v3082
      %3084 = vmatmul.bf16.gmra.mxu0 %v1892
      %v3085 = vpop.f32.mrf.mxu0
      %v3086 = vadd.f32 %v2437, %v3085
      %v3087 = vpop.f32.mrf.mxu0
      %v3088 = vadd.f32 %v2439, %v3087
      %3089 = vmatmul.bf16.gmra.mxu0 %v1895
      %v3090 = vpop.f32.mrf.mxu0
      %v3091 = vadd.f32 %v2442, %v3090
      %v3092 = vpop.f32.mrf.mxu0
      %v3093 = vadd.f32 %v2444, %v3092
      %3094 = vmatmul.bf16.gmra.mxu0 %v1898
      %v3095 = vpop.f32.mrf.mxu0
      %v3096 = vadd.f32 %v2447, %v3095
      %v3097 = vpop.f32.mrf.mxu0
      %v3098 = vadd.f32 %v2449, %v3097
      %3099 = vmatmul.bf16.gmra.mxu0 %v1901
      %v3100 = vpop.f32.mrf.mxu0
      %v3101 = vadd.f32 %v2452, %v3100
      %v3102 = vpop.f32.mrf.mxu0
      %v3103 = vadd.f32 %v2454, %v3102
      %3104 = vmatmul.bf16.gmra.mxu0 %v1904
      %v3105 = vpop.f32.mrf.mxu0
      %v3106 = vadd.f32 %v2457, %v3105
      %v3107 = vpop.f32.mrf.mxu0
      %v3108 = vadd.f32 %v2459, %v3107
      %3109 = vmatmul.bf16.gmra.mxu0 %v1907
      %v3110 = vpop.f32.mrf.mxu0
      %v3111 = vadd.f32 %v2462, %v3110
      %v3112 = vpop.f32.mrf.mxu0
      %v3113 = vadd.f32 %v2464, %v3112
      %3114 = vmatmul.bf16.gmra.mxu0 %v1910
      %v3115 = vpop.f32.mrf.mxu0
      %v3116 = vadd.f32 %v2467, %v3115
      %v3117 = vpop.f32.mrf.mxu0
      %v3118 = vadd.f32 %v2469, %v3117
      %3119 = vmatmul.bf16.gmra.mxu0 %v1913
      %v3120 = vpop.f32.mrf.mxu0
      %v3121 = vadd.f32 %v2472, %v3120
      %v3122 = vpop.f32.mrf.mxu0
      %v3123 = vadd.f32 %v2474, %v3122
      %3124 = vmatmul.bf16.gmra.mxu0 %v1916
      %v3125 = vpop.f32.mrf.mxu0
      %v3126 = vadd.f32 %v2477, %v3125
      %v3127 = vpop.f32.mrf.mxu0
      %v3128 = vadd.f32 %v2479, %v3127
      %3129 = vmatmul.bf16.gmra.mxu0 %v1919
      %v3130 = vpop.f32.mrf.mxu0
      %v3131 = vadd.f32 %v2482, %v3130
      %v3132 = vpop.f32.mrf.mxu0
      %v3133 = vadd.f32 %v2484, %v3132
      %3134 = vmatmul.bf16.gmra.mxu0 %v1922
      %v3135 = vpop.f32.mrf.mxu0
      %v3136 = vadd.f32 %v2487, %v3135
      %v3137 = vpop.f32.mrf.mxu0
      %v3138 = vadd.f32 %v2489, %v3137
      %3139 = vmatmul.bf16.gmra.mxu0 %v1925
      %v3140 = vpop.f32.mrf.mxu0
      %v3141 = vadd.f32 %v2492, %v3140
      %v3142 = vpop.f32.mrf.mxu0
      %v3143 = vadd.f32 %v2494, %v3142
      %3144 = vmatmul.bf16.gmra.mxu0 %v1928
      %v3145 = vpop.f32.mrf.mxu0
      %v3146 = vadd.f32 %v2497, %v3145
      %v3147 = vpop.f32.mrf.mxu0
      %v3148 = vadd.f32 %v2499, %v3147
      %3149 = vmatmul.bf16.gmra.mxu0 %v1931
      %v3150 = vpop.f32.mrf.mxu0
      %v3151 = vadd.f32 %v2502, %v3150
      %v3152 = vpop.f32.mrf.mxu0
      %v3153 = vadd.f32 %v2504, %v3152
      %3154 = vmatmul.bf16.gmra.mxu0 %v1934
      %v3155 = vpop.f32.mrf.mxu0
      %v3156 = vadd.f32 %v2507, %v3155
      %v3157 = vpop.f32.mrf.mxu0
      %v3158 = vadd.f32 %v2509, %v3157
      %3159 = vmatmul.bf16.gmra.mxu0 %v1937
      %v3160 = vpop.f32.mrf.mxu0
      %v3161 = vadd.f32 %v2512, %v3160
      %v3162 = vpop.f32.mrf.mxu0
      %v3163 = vadd.f32 %v2514, %v3162
      %3164 = vmatmul.bf16.gmra.mxu0 %v1940
      %v3165 = vpop.f32.mrf.mxu0
      %v3166 = vadd.f32 %v2517, %v3165
      %v3167 = vpop.f32.mrf.mxu0
      %v3168 = vadd.f32 %v2519, %v3167
      %3169 = vmatmul.bf16.gmra.mxu0 %v1943
      %v3170 = vpop.f32.mrf.mxu0
      %v3171 = vadd.f32 %v2522, %v3170
      %v3172 = vpop.f32.mrf.mxu0
      %v3173 = vadd.f32 %v2524, %v3172
      %3174 = vmatmul.bf16.gmra.mxu0 %v1946
      %v3175 = vpop.f32.mrf.mxu0
      %v3176 = vadd.f32 %v2527, %v3175
      %v3177 = vpop.f32.mrf.mxu0
      %v3178 = vadd.f32 %v2529, %v3177
      %3179 = vmatmul.bf16.gmra.mxu0 %v1949
      %v3180 = vpop.f32.mrf.mxu0
      %v3181 = vadd.f32 %v2532, %v3180
      %v3182 = vpop.f32.mrf.mxu0
      %v3183 = vadd.f32 %v2534, %v3182
      %3184 = vmatmul.bf16.gmra.mxu0 %v1952
      %v3185 = vpop.f32.mrf.mxu0
      %v3186 = vadd.f32 %v2537, %v3185
      %v3187 = vpop.f32.mrf.mxu0
      %v3188 = vadd.f32 %v2539, %v3187
      %3189 = vmatmul.bf16.gmra.mxu0 %v1955
      %v3190 = vpop.f32.mrf.mxu0
      %v3191 = vadd.f32 %v2542, %v3190
      %v3192 = vpop.f32.mrf.mxu0
      %v3193 = vadd.f32 %v2544, %v3192
      %3194 = vmatmul.bf16.gmra.mxu0 %v1958
      %v3195 = vpop.f32.mrf.mxu0
      %v3196 = vadd.f32 %v2547, %v3195
      %v3197 = vpop.f32.mrf.mxu0
      %v3198 = vadd.f32 %v2549, %v3197
      %3199 = vmatmul.bf16.gmra.mxu0 %v1961
      %v3200 = vpop.f32.mrf.mxu0
      %v3201 = vadd.f32 %v2552, %v3200
      %v3202 = vpop.f32.mrf.mxu0
      %v3203 = vadd.f32 %v2554, %v3202
      %3204 = vmatmul.bf16.gmra.mxu0 %v1964
      %v3205 = vpop.f32.mrf.mxu0
      %v3206 = vadd.f32 %v2557, %v3205
      %v3207 = vpop.f32.mrf.mxu0
      %v3208 = vadd.f32 %v2559, %v3207
      %3209 = vmatmul.bf16.gmra.mxu0 %v1967
      %v3210 = vpop.f32.mrf.mxu0
      %v3211 = vadd.f32 %v2562, %v3210
      %v3212 = vpop.f32.mrf.mxu0
      %v3213 = vadd.f32 %v2564, %v3212
      %3214 = vmatmul.bf16.gmra.mxu0 %v1970
      %v3215 = vpop.f32.mrf.mxu0
      %v3216 = vadd.f32 %v2567, %v3215
      %v3217 = vpop.f32.mrf.mxu0
      %v3218 = vadd.f32 %v2569, %v3217
      %3219 = vmatmul.bf16.gmra.mxu0 %v1973
      %v3220 = vpop.f32.mrf.mxu0
      %v3221 = vadd.f32 %v2572, %v3220
      %v3222 = vpop.f32.mrf.mxu0
      %v3223 = vadd.f32 %v2574, %v3222
      %3224 = vmatmul.bf16.gmra.mxu0 %v1976
      %v3225 = vpop.f32.mrf.mxu0
      %v3226 = vadd.f32 %v2577, %v3225
      %v3227 = vpop.f32.mrf.mxu0
      %v3228 = vadd.f32 %v2579, %v3227
      %3229 = vmatmul.bf16.gmra.mxu0 %v1979
      %v3230 = vpop.f32.mrf.mxu0
      %v3231 = vadd.f32 %v2582, %v3230
      %v3232 = vpop.f32.mrf.mxu0
      %v3233 = vadd.f32 %v2584, %v3232
      %3234 = vmatmul.bf16.gmra.mxu0 %v1982
      %v3235 = vpop.f32.mrf.mxu0
      %v3236 = vadd.f32 %v2587, %v3235
      %v3237 = vpop.f32.mrf.mxu0
      %v3238 = vadd.f32 %v2589, %v3237
      %3239 = vmatmul.bf16.gmra.mxu0 %v1985
      %v3240 = vpop.f32.mrf.mxu0
      %v3241 = vadd.f32 %v2592, %v3240
      %v3242 = vpop.f32.mrf.mxu0
      %v3243 = vadd.f32 %v2594, %v3242
      %3244 = vmatmul.bf16.gmra.mxu0 %v1988
      %v3245 = vpop.f32.mrf.mxu0
      %v3246 = vadd.f32 %v2597, %v3245
      %v3247 = vpop.f32.mrf.mxu0
      %v3248 = vadd.f32 %v2599, %v3247
      %3249 = vmatmul.bf16.gmra.mxu0 %v1991
      %v3250 = vpop.f32.mrf.mxu0
      %v3251 = vadd.f32 %v2602, %v3250
      %v3252 = vpop.f32.mrf.mxu0
      %v3253 = vadd.f32 %v2604, %v3252
      %3254 = vmatmul.bf16.gmra.mxu0 %v1994
      %v3255 = vpop.f32.mrf.mxu0
      %v3256 = vadd.f32 %v2607, %v3255
      %v3257 = vpop.f32.mrf.mxu0
      %v3258 = vadd.f32 %v2609, %v3257
      %3259 = vmatmul.bf16.gmra.mxu0 %v1997
      %v3260 = vpop.f32.mrf.mxu0
      %v3261 = vadd.f32 %v2612, %v3260
      %v3262 = vpop.f32.mrf.mxu0
      %v3263 = vadd.f32 %v2614, %v3262
      %3264 = vmatmul.bf16.gmra.mxu0 %v2000
      %v3265 = vpop.f32.mrf.mxu0
      %v3266 = vadd.f32 %v2617, %v3265
      %v3267 = vpop.f32.mrf.mxu0
      %v3268 = vadd.f32 %v2619, %v3267
      %3269 = vmatmul.bf16.gmra.mxu0 %v2003
      %v3270 = vpop.f32.mrf.mxu0
      %v3271 = vadd.f32 %v2622, %v3270
      %v3272 = vpop.f32.mrf.mxu0
      %v3273 = vadd.f32 %v2624, %v3272
      %3274 = vmatmul.bf16.gmra.mxu0 %v2006
      %v3275 = vpop.f32.mrf.mxu0
      %v3276 = vadd.f32 %v2627, %v3275
      %v3277 = vpop.f32.mrf.mxu0
      %v3278 = vadd.f32 %v2629, %v3277
      %3279 = vmatmul.bf16.gmra.mxu0 %v2009
      %v3280 = vpop.f32.mrf.mxu0
      %v3281 = vadd.f32 %v2632, %v3280
      %v3282 = vpop.f32.mrf.mxu0
      %v3283 = vadd.f32 %v2634, %v3282
      %3284 = vmatmul.bf16.gmra.mxu0 %v2012
      %v3285 = vpop.f32.mrf.mxu0
      %v3286 = vadd.f32 %v2637, %v3285
      %v3287 = vpop.f32.mrf.mxu0
      %v3288 = vadd.f32 %v2639, %v3287
      %3289 = vmatmul.bf16.gmra.mxu0 %v2015
      %v3290 = vpop.f32.mrf.mxu0
      %v3291 = vadd.f32 %v2642, %v3290
      %v3292 = vpop.f32.mrf.mxu0
      %v3293 = vadd.f32 %v2644, %v3292
      %3294 = vmatmul.bf16.gmra.mxu0 %v2018
      %v3295 = vpop.f32.mrf.mxu0
      %v3296 = vadd.f32 %v2647, %v3295
      %v3297 = vpop.f32.mrf.mxu0
      %v3298 = vadd.f32 %v2649, %v3297
      %3299 = vmatmul.bf16.gmra.mxu0 %v2021
      %v3300 = vpop.f32.mrf.mxu0
      %v3301 = vadd.f32 %v2652, %v3300
      %v3302 = vpop.f32.mrf.mxu0
      %v3303 = vadd.f32 %v2654, %v3302
      %3304 = vmatmul.bf16.gmra.mxu0 %v2024
      %v3305 = vpop.f32.mrf.mxu0
      %v3306 = vadd.f32 %v2657, %v3305
      %v3307 = vpop.f32.mrf.mxu0
      %v3308 = vadd.f32 %v2659, %v3307
      %3309 = vmatmul.bf16.gmra.mxu0 %v2027
      %v3310 = vpop.f32.mrf.mxu0
      %v3311 = vadd.f32 %v2662, %v3310
      %v3312 = vpop.f32.mrf.mxu0
      %v3313 = vadd.f32 %v2664, %v3312
      %3314 = vmatmul.bf16.gmra.mxu0 %v2030
      %v3315 = vpop.f32.mrf.mxu0
      %v3316 = vadd.f32 %v2667, %v3315
      %v3317 = vpop.f32.mrf.mxu0
      %v3318 = vadd.f32 %v2669, %v3317
      %3319 = vmatmul.bf16.gmra.mxu0 %v2033
      %v3320 = vpop.f32.mrf.mxu0
      %v3321 = vadd.f32 %v2672, %v3320
      %v3322 = vpop.f32.mrf.mxu0
      %v3323 = vadd.f32 %v2674, %v3322
      %3324 = vmatmul.bf16.gmra.mxu0 %v2036
      %v3325 = vpop.f32.mrf.mxu0
      %v3326 = vadd.f32 %v2677, %v3325
      %v3327 = vpop.f32.mrf.mxu0
      %v3328 = vadd.f32 %v2679, %v3327
      %3329 = vmatmul.bf16.gmra.mxu0 %v2039
      %v3330 = vpop.f32.mrf.mxu0
      %v3331 = vadd.f32 %v2682, %v3330
      %v3332 = vpop.f32.mrf.mxu0
      %v3333 = vadd.f32 %v2684, %v3332
      %3334 = vmatmul.bf16.gmra.mxu0 %v2042
      %v3335 = vpop.f32.mrf.mxu0
      %v3336 = vadd.f32 %v2687, %v3335
      %v3337 = vpop.f32.mrf.mxu0
      %v3338 = vadd.f32 %v2689, %v3337
      %3339 = vmatmul.bf16.gmra.mxu0 %v2045
      %v3340 = vpop.f32.mrf.mxu0
      %v3341 = vadd.f32 %v2692, %v3340
      %v3342 = vpop.f32.mrf.mxu0
      %v3343 = vadd.f32 %v2694, %v3342
      %3344 = vdwg.mxu0
      %v3345 = vmax.f32 %v2706, 0.0
      %v3346 = vmax.f32 %v2708, 0.0
      %v3347 = vmax.f32 %v2711, 0.0
      %v3348 = vmax.f32 %v2713, 0.0
      %v3349 = vmax.f32 %v2716, 0.0
      %v3350 = vmax.f32 %v2718, 0.0
      %v3351 = vmax.f32 %v2721, 0.0
      %v3352 = vmax.f32 %v2723, 0.0
      %v3353 = vmax.f32 %v2726, 0.0
      %v3354 = vmax.f32 %v2728, 0.0
      %v3355 = vmax.f32 %v2731, 0.0
      %v3356 = vmax.f32 %v2733, 0.0
      %v3357 = vmax.f32 %v2736, 0.0
      %v3358 = vmax.f32 %v2738, 0.0
      %v3359 = vmax.f32 %v2741, 0.0
      %v3360 = vmax.f32 %v2743, 0.0
      %v3361 = vmax.f32 %v2746, 0.0
      %v3362 = vmax.f32 %v2748, 0.0
      %v3363 = vmax.f32 %v2751, 0.0
      %v3364 = vmax.f32 %v2753, 0.0
      %v3365 = vmax.f32 %v2756, 0.0
      %v3366 = vmax.f32 %v2758, 0.0
      %v3367 = vmax.f32 %v2761, 0.0
      %v3368 = vmax.f32 %v2763, 0.0
      %v3369 = vmax.f32 %v2766, 0.0
      %v3370 = vmax.f32 %v2768, 0.0
      %v3371 = vmax.f32 %v2771, 0.0
      %v3372 = vmax.f32 %v2773, 0.0
      %v3373 = vmax.f32 %v2776, 0.0
      %v3374 = vmax.f32 %v2778, 0.0
      %v3375 = vmax.f32 %v2781, 0.0
      %v3376 = vmax.f32 %v2783, 0.0
      %v3377 = vmax.f32 %v2786, 0.0
      %v3378 = vmax.f32 %v2788, 0.0
      %v3379 = vmax.f32 %v2791, 0.0
      %v3380 = vmax.f32 %v2793, 0.0
      %v3381 = vmax.f32 %v2796, 0.0
      %v3382 = vmax.f32 %v2798, 0.0
      %v3383 = vmax.f32 %v2801, 0.0
      %v3384 = vmax.f32 %v2803, 0.0
      %v3385 = vmax.f32 %v2806, 0.0
      %v3386 = vmax.f32 %v2808, 0.0
      %v3387 = vmax.f32 %v2811, 0.0
      %v3388 = vmax.f32 %v2813, 0.0
      %v3389 = vmax.f32 %v2816, 0.0
      %v3390 = vmax.f32 %v2818, 0.0
      %v3391 = vmax.f32 %v2821, 0.0
      %v3392 = vmax.f32 %v2823, 0.0
      %v3393 = vmax.f32 %v2826, 0.0
      %v3394 = vmax.f32 %v2828, 0.0
      %v3395 = vmax.f32 %v2831, 0.0
      %v3396 = vmax.f32 %v2833, 0.0
      %v3397 = vmax.f32 %v2836, 0.0
      %v3398 = vmax.f32 %v2838, 0.0
      %v3399 = vmax.f32 %v2841, 0.0
      %v3400 = vmax.f32 %v2843, 0.0
      %v3401 = vmax.f32 %v2846, 0.0
      %v3402 = vmax.f32 %v2848, 0.0
      %v3403 = vmax.f32 %v2851, 0.0
      %v3404 = vmax.f32 %v2853, 0.0
      %v3405 = vmax.f32 %v2856, 0.0
      %v3406 = vmax.f32 %v2858, 0.0
      %v3407 = vmax.f32 %v2861, 0.0
      %v3408 = vmax.f32 %v2863, 0.0
      %v3409 = vmax.f32 %v2866, 0.0
      %v3410 = vmax.f32 %v2868, 0.0
      %v3411 = vmax.f32 %v2871, 0.0
      %v3412 = vmax.f32 %v2873, 0.0
      %v3413 = vmax.f32 %v2876, 0.0
      %v3414 = vmax.f32 %v2878, 0.0
      %v3415 = vmax.f32 %v2881, 0.0
      %v3416 = vmax.f32 %v2883, 0.0
      %v3417 = vmax.f32 %v2886, 0.0
      %v3418 = vmax.f32 %v2888, 0.0
      %v3419 = vmax.f32 %v2891, 0.0
      %v3420 = vmax.f32 %v2893, 0.0
      %v3421 = vmax.f32 %v2896, 0.0
      %v3422 = vmax.f32 %v2898, 0.0
      %v3423 = vmax.f32 %v2901, 0.0
      %v3424 = vmax.f32 %v2903, 0.0
      %v3425 = vmax.f32 %v2906, 0.0
      %v3426 = vmax.f32 %v2908, 0.0
      %v3427 = vmax.f32 %v2911, 0.0
      %v3428 = vmax.f32 %v2913, 0.0
      %v3429 = vmax.f32 %v2916, 0.0
      %v3430 = vmax.f32 %v2918, 0.0
      %v3431 = vmax.f32 %v2921, 0.0
      %v3432 = vmax.f32 %v2923, 0.0
      %v3433 = vmax.f32 %v2926, 0.0
      %v3434 = vmax.f32 %v2928, 0.0
      %v3435 = vmax.f32 %v2931, 0.0
      %v3436 = vmax.f32 %v2933, 0.0
      %v3437 = vmax.f32 %v2936, 0.0
      %v3438 = vmax.f32 %v2938, 0.0
      %v3439 = vmax.f32 %v2941, 0.0
      %v3440 = vmax.f32 %v2943, 0.0
      %v3441 = vmax.f32 %v2946, 0.0
      %v3442 = vmax.f32 %v2948, 0.0
      %v3443 = vmax.f32 %v2951, 0.0
      %v3444 = vmax.f32 %v2953, 0.0
      %v3445 = vmax.f32 %v2956, 0.0
      %v3446 = vmax.f32 %v2958, 0.0
      %v3447 = vmax.f32 %v2961, 0.0
      %v3448 = vmax.f32 %v2963, 0.0
      %v3449 = vmax.f32 %v2966, 0.0
      %v3450 = vmax.f32 %v2968, 0.0
      %v3451 = vmax.f32 %v2971, 0.0
      %v3452 = vmax.f32 %v2973, 0.0
      %v3453 = vmax.f32 %v2976, 0.0
      %v3454 = vmax.f32 %v2978, 0.0
      %v3455 = vmax.f32 %v2981, 0.0
      %v3456 = vmax.f32 %v2983, 0.0
      %v3457 = vmax.f32 %v2986, 0.0
      %v3458 = vmax.f32 %v2988, 0.0
      %v3459 = vmax.f32 %v2991, 0.0
      %v3460 = vmax.f32 %v2993, 0.0
      %v3461 = vmax.f32 %v2996, 0.0
      %v3462 = vmax.f32 %v2998, 0.0
      %v3463 = vmax.f32 %v3001, 0.0
      %v3464 = vmax.f32 %v3003, 0.0
      %v3465 = vmax.f32 %v3006, 0.0
      %v3466 = vmax.f32 %v3008, 0.0
      %v3467 = vmax.f32 %v3011, 0.0
      %v3468 = vmax.f32 %v3013, 0.0
      %v3469 = vmax.f32 %v3016, 0.0
      %v3470 = vmax.f32 %v3018, 0.0
      %v3471 = vmax.f32 %v3021, 0.0
      %v3472 = vmax.f32 %v3023, 0.0
      %v3473 = vmax.f32 %v3026, 0.0
      %v3474 = vmax.f32 %v3028, 0.0
      %v3475 = vmax.f32 %v3031, 0.0
      %v3476 = vmax.f32 %v3033, 0.0
      %v3477 = vmax.f32 %v3036, 0.0
      %v3478 = vmax.f32 %v3038, 0.0
      %v3479 = vmax.f32 %v3041, 0.0
      %v3480 = vmax.f32 %v3043, 0.0
      %v3481 = vmax.f32 %v3046, 0.0
      %v3482 = vmax.f32 %v3048, 0.0
      %v3483 = vmax.f32 %v3051, 0.0
      %v3484 = vmax.f32 %v3053, 0.0
      %v3485 = vmax.f32 %v3056, 0.0
      %v3486 = vmax.f32 %v3058, 0.0
      %v3487 = vmax.f32 %v3061, 0.0
      %v3488 = vmax.f32 %v3063, 0.0
      %v3489 = vmax.f32 %v3066, 0.0
      %v3490 = vmax.f32 %v3068, 0.0
      %v3491 = vmax.f32 %v3071, 0.0
      %v3492 = vmax.f32 %v3073, 0.0
      %v3493 = vmax.f32 %v3076, 0.0
      %v3494 = vmax.f32 %v3078, 0.0
      %v3495 = vmax.f32 %v3081, 0.0
      %v3496 = vmax.f32 %v3083, 0.0
      %v3497 = vmax.f32 %v3086, 0.0
      %v3498 = vmax.f32 %v3088, 0.0
      %v3499 = vmax.f32 %v3091, 0.0
      %v3500 = vmax.f32 %v3093, 0.0
      %v3501 = vmax.f32 %v3096, 0.0
      %v3502 = vmax.f32 %v3098, 0.0
      %v3503 = vmax.f32 %v3101, 0.0
      %v3504 = vmax.f32 %v3103, 0.0
      %v3505 = vmax.f32 %v3106, 0.0
      %v3506 = vmax.f32 %v3108, 0.0
      %v3507 = vmax.f32 %v3111, 0.0
      %v3508 = vmax.f32 %v3113, 0.0
      %v3509 = vmax.f32 %v3116, 0.0
      %v3510 = vmax.f32 %v3118, 0.0
      %v3511 = vmax.f32 %v3121, 0.0
      %v3512 = vmax.f32 %v3123, 0.0
      %v3513 = vmax.f32 %v3126, 0.0
      %v3514 = vmax.f32 %v3128, 0.0
      %v3515 = vmax.f32 %v3131, 0.0
      %v3516 = vmax.f32 %v3133, 0.0
      %v3517 = vmax.f32 %v3136, 0.0
      %v3518 = vmax.f32 %v3138, 0.0
      %v3519 = vmax.f32 %v3141, 0.0
      %v3520 = vmax.f32 %v3143, 0.0
      %v3521 = vmax.f32 %v3146, 0.0
      %v3522 = vmax.f32 %v3148, 0.0
      %v3523 = vmax.f32 %v3151, 0.0
      %v3524 = vmax.f32 %v3153, 0.0
      %v3525 = vmax.f32 %v3156, 0.0
      %v3526 = vmax.f32 %v3158, 0.0
      %v3527 = vmax.f32 %v3161, 0.0
      %v3528 = vmax.f32 %v3163, 0.0
      %v3529 = vmax.f32 %v3166, 0.0
      %v3530 = vmax.f32 %v3168, 0.0
      %v3531 = vmax.f32 %v3171, 0.0
      %v3532 = vmax.f32 %v3173, 0.0
      %v3533 = vmax.f32 %v3176, 0.0
      %v3534 = vmax.f32 %v3178, 0.0
      %v3535 = vmax.f32 %v3181, 0.0
      %v3536 = vmax.f32 %v3183, 0.0
      %v3537 = vmax.f32 %v3186, 0.0
      %v3538 = vmax.f32 %v3188, 0.0
      %v3539 = vmax.f32 %v3191, 0.0
      %v3540 = vmax.f32 %v3193, 0.0
      %v3541 = vmax.f32 %v3196, 0.0
      %v3542 = vmax.f32 %v3198, 0.0
      %v3543 = vmax.f32 %v3201, 0.0
      %v3544 = vmax.f32 %v3203, 0.0
      %v3545 = vmax.f32 %v3206, 0.0
      %v3546 = vmax.f32 %v3208, 0.0
      %v3547 = vmax.f32 %v3211, 0.0
      %v3548 = vmax.f32 %v3213, 0.0
      %v3549 = vmax.f32 %v3216, 0.0
      %v3550 = vmax.f32 %v3218, 0.0
      %v3551 = vmax.f32 %v3221, 0.0
      %v3552 = vmax.f32 %v3223, 0.0
      %v3553 = vmax.f32 %v3226, 0.0
      %v3554 = vmax.f32 %v3228, 0.0
      %v3555 = vmax.f32 %v3231, 0.0
      %v3556 = vmax.f32 %v3233, 0.0
      %v3557 = vmax.f32 %v3236, 0.0
      %v3558 = vmax.f32 %v3238, 0.0
      %v3559 = vmax.f32 %v3241, 0.0
      %v3560 = vmax.f32 %v3243, 0.0
      %v3561 = vmax.f32 %v3246, 0.0
      %v3562 = vmax.f32 %v3248, 0.0
      %v3563 = vmax.f32 %v3251, 0.0
      %v3564 = vmax.f32 %v3253, 0.0
      %v3565 = vmax.f32 %v3256, 0.0
      %v3566 = vmax.f32 %v3258, 0.0
      %v3567 = vmax.f32 %v3261, 0.0
      %v3568 = vmax.f32 %v3263, 0.0
      %v3569 = vmax.f32 %v3266, 0.0
      %v3570 = vmax.f32 %v3268, 0.0
      %v3571 = vmax.f32 %v3271, 0.0
      %v3572 = vmax.f32 %v3273, 0.0
      %v3573 = vmax.f32 %v3276, 0.0
      %v3574 = vmax.f32 %v3278, 0.0
      %v3575 = vmax.f32 %v3281, 0.0
      %v3576 = vmax.f32 %v3283, 0.0
      %v3577 = vmax.f32 %v3286, 0.0
      %v3578 = vmax.f32 %v3288, 0.0
      %v3579 = vmax.f32 %v3291, 0.0
      %v3580 = vmax.f32 %v3293, 0.0
      %v3581 = vmax.f32 %v3296, 0.0
      %v3582 = vmax.f32 %v3298, 0.0
      %v3583 = vmax.f32 %v3301, 0.0
      %v3584 = vmax.f32 %v3303, 0.0
      %v3585 = vmax.f32 %v3306, 0.0
      %v3586 = vmax.f32 %v3308, 0.0
      %v3587 = vmax.f32 %v3311, 0.0
      %v3588 = vmax.f32 %v3313, 0.0
      %v3589 = vmax.f32 %v3316, 0.0
      %v3590 = vmax.f32 %v3318, 0.0
      %v3591 = vmax.f32 %v3321, 0.0
      %v3592 = vmax.f32 %v3323, 0.0
      %v3593 = vmax.f32 %v3326, 0.0
      %v3594 = vmax.f32 %v3328, 0.0
      %v3595 = vmax.f32 %v3331, 0.0
      %v3596 = vmax.f32 %v3333, 0.0
      %v3597 = vmax.f32 %v3336, 0.0
      %v3598 = vmax.f32 %v3338, 0.0
      %v3599 = vmax.f32 %v3341, 0.0
      %v3600 = vmax.f32 %v3343, 0.0
      %v3601 = vpack.c.bf16 %v3345, %v3345
      %v3602 = vpack.c.bf16 %v3346, %v3346
      %v3603 = vpack.c.bf16 %v3347, %v3347
      %v3604 = vpack.c.bf16 %v3348, %v3348
      %v3605 = vpack.c.bf16 %v3349, %v3349
      %v3606 = vpack.c.bf16 %v3350, %v3350
      %v3607 = vpack.c.bf16 %v3351, %v3351
      %v3608 = vpack.c.bf16 %v3352, %v3352
      %v3609 = vpack.c.bf16 %v3353, %v3353
      %v3610 = vpack.c.bf16 %v3354, %v3354
      %v3611 = vpack.c.bf16 %v3355, %v3355
      %v3612 = vpack.c.bf16 %v3356, %v3356
      %v3613 = vpack.c.bf16 %v3357, %v3357
      %v3614 = vpack.c.bf16 %v3358, %v3358
      %v3615 = vpack.c.bf16 %v3359, %v3359
      %v3616 = vpack.c.bf16 %v3360, %v3360
      %v3617 = vpack.c.bf16 %v3361, %v3361
      %v3618 = vpack.c.bf16 %v3362, %v3362
      %v3619 = vpack.c.bf16 %v3363, %v3363
      %v3620 = vpack.c.bf16 %v3364, %v3364
      %v3621 = vpack.c.bf16 %v3365, %v3365
      %v3622 = vpack.c.bf16 %v3366, %v3366
      %v3623 = vpack.c.bf16 %v3367, %v3367
      %v3624 = vpack.c.bf16 %v3368, %v3368
      %v3625 = vpack.c.bf16 %v3369, %v3369
      %v3626 = vpack.c.bf16 %v3370, %v3370
      %v3627 = vpack.c.bf16 %v3371, %v3371
      %v3628 = vpack.c.bf16 %v3372, %v3372
      %v3629 = vpack.c.bf16 %v3373, %v3373
      %v3630 = vpack.c.bf16 %v3374, %v3374
      %v3631 = vpack.c.bf16 %v3375, %v3375
      %v3632 = vpack.c.bf16 %v3376, %v3376
      %v3633 = vpack.c.bf16 %v3377, %v3377
      %v3634 = vpack.c.bf16 %v3378, %v3378
      %v3635 = vpack.c.bf16 %v3379, %v3379
      %v3636 = vpack.c.bf16 %v3380, %v3380
      %v3637 = vpack.c.bf16 %v3381, %v3381
      %v3638 = vpack.c.bf16 %v3382, %v3382
      %v3639 = vpack.c.bf16 %v3383, %v3383
      %v3640 = vpack.c.bf16 %v3384, %v3384
      %v3641 = vpack.c.bf16 %v3385, %v3385
      %v3642 = vpack.c.bf16 %v3386, %v3386
      %v3643 = vpack.c.bf16 %v3387, %v3387
      %v3644 = vpack.c.bf16 %v3388, %v3388
      %v3645 = vpack.c.bf16 %v3389, %v3389
      %v3646 = vpack.c.bf16 %v3390, %v3390
      %v3647 = vpack.c.bf16 %v3391, %v3391
      %v3648 = vpack.c.bf16 %v3392, %v3392
      %v3649 = vpack.c.bf16 %v3393, %v3393
      %v3650 = vpack.c.bf16 %v3394, %v3394
      %v3651 = vpack.c.bf16 %v3395, %v3395
      %v3652 = vpack.c.bf16 %v3396, %v3396
      %v3653 = vpack.c.bf16 %v3397, %v3397
      %v3654 = vpack.c.bf16 %v3398, %v3398
      %v3655 = vpack.c.bf16 %v3399, %v3399
      %v3656 = vpack.c.bf16 %v3400, %v3400
      %v3657 = vpack.c.bf16 %v3401, %v3401
      %v3658 = vpack.c.bf16 %v3402, %v3402
      %v3659 = vpack.c.bf16 %v3403, %v3403
      %v3660 = vpack.c.bf16 %v3404, %v3404
      %v3661 = vpack.c.bf16 %v3405, %v3405
      %v3662 = vpack.c.bf16 %v3406, %v3406
      %v3663 = vpack.c.bf16 %v3407, %v3407
      %v3664 = vpack.c.bf16 %v3408, %v3408
      %v3665 = vpack.c.bf16 %v3409, %v3409
      %v3666 = vpack.c.bf16 %v3410, %v3410
      %v3667 = vpack.c.bf16 %v3411, %v3411
      %v3668 = vpack.c.bf16 %v3412, %v3412
      %v3669 = vpack.c.bf16 %v3413, %v3413
      %v3670 = vpack.c.bf16 %v3414, %v3414
      %v3671 = vpack.c.bf16 %v3415, %v3415
      %v3672 = vpack.c.bf16 %v3416, %v3416
      %v3673 = vpack.c.bf16 %v3417, %v3417
      %v3674 = vpack.c.bf16 %v3418, %v3418
      %v3675 = vpack.c.bf16 %v3419, %v3419
      %v3676 = vpack.c.bf16 %v3420, %v3420
      %v3677 = vpack.c.bf16 %v3421, %v3421
      %v3678 = vpack.c.bf16 %v3422, %v3422
      %v3679 = vpack.c.bf16 %v3423, %v3423
      %v3680 = vpack.c.bf16 %v3424, %v3424
      %v3681 = vpack.c.bf16 %v3425, %v3425
      %v3682 = vpack.c.bf16 %v3426, %v3426
      %v3683 = vpack.c.bf16 %v3427, %v3427
      %v3684 = vpack.c.bf16 %v3428, %v3428
      %v3685 = vpack.c.bf16 %v3429, %v3429
      %v3686 = vpack.c.bf16 %v3430, %v3430
      %v3687 = vpack.c.bf16 %v3431, %v3431
      %v3688 = vpack.c.bf16 %v3432, %v3432
      %v3689 = vpack.c.bf16 %v3433, %v3433
      %v3690 = vpack.c.bf16 %v3434, %v3434
      %v3691 = vpack.c.bf16 %v3435, %v3435
      %v3692 = vpack.c.bf16 %v3436, %v3436
      %v3693 = vpack.c.bf16 %v3437, %v3437
      %v3694 = vpack.c.bf16 %v3438, %v3438
      %v3695 = vpack.c.bf16 %v3439, %v3439
      %v3696 = vpack.c.bf16 %v3440, %v3440
      %v3697 = vpack.c.bf16 %v3441, %v3441
      %v3698 = vpack.c.bf16 %v3442, %v3442
      %v3699 = vpack.c.bf16 %v3443, %v3443
      %v3700 = vpack.c.bf16 %v3444, %v3444
      %v3701 = vpack.c.bf16 %v3445, %v3445
      %v3702 = vpack.c.bf16 %v3446, %v3446
      %v3703 = vpack.c.bf16 %v3447, %v3447
      %v3704 = vpack.c.bf16 %v3448, %v3448
      %v3705 = vpack.c.bf16 %v3449, %v3449
      %v3706 = vpack.c.bf16 %v3450, %v3450
      %v3707 = vpack.c.bf16 %v3451, %v3451
      %v3708 = vpack.c.bf16 %v3452, %v3452
      %v3709 = vpack.c.bf16 %v3453, %v3453
      %v3710 = vpack.c.bf16 %v3454, %v3454
      %v3711 = vpack.c.bf16 %v3455, %v3455
      %v3712 = vpack.c.bf16 %v3456, %v3456
      %v3713 = vpack.c.bf16 %v3457, %v3457
      %v3714 = vpack.c.bf16 %v3458, %v3458
      %v3715 = vpack.c.bf16 %v3459, %v3459
      %v3716 = vpack.c.bf16 %v3460, %v3460
      %v3717 = vpack.c.bf16 %v3461, %v3461
      %v3718 = vpack.c.bf16 %v3462, %v3462
      %v3719 = vpack.c.bf16 %v3463, %v3463
      %v3720 = vpack.c.bf16 %v3464, %v3464
      %v3721 = vpack.c.bf16 %v3465, %v3465
      %v3722 = vpack.c.bf16 %v3466, %v3466
      %v3723 = vpack.c.bf16 %v3467, %v3467
      %v3724 = vpack.c.bf16 %v3468, %v3468
      %v3725 = vpack.c.bf16 %v3469, %v3469
      %v3726 = vpack.c.bf16 %v3470, %v3470
      %v3727 = vpack.c.bf16 %v3471, %v3471
      %v3728 = vpack.c.bf16 %v3472, %v3472
      %v3729 = vpack.c.bf16 %v3473, %v3473
      %v3730 = vpack.c.bf16 %v3474, %v3474
      %v3731 = vpack.c.bf16 %v3475, %v3475
      %v3732 = vpack.c.bf16 %v3476, %v3476
      %v3733 = vpack.c.bf16 %v3477, %v3477
      %v3734 = vpack.c.bf16 %v3478, %v3478
      %v3735 = vpack.c.bf16 %v3479, %v3479
      %v3736 = vpack.c.bf16 %v3480, %v3480
      %v3737 = vpack.c.bf16 %v3481, %v3481
      %v3738 = vpack.c.bf16 %v3482, %v3482
      %v3739 = vpack.c.bf16 %v3483, %v3483
      %v3740 = vpack.c.bf16 %v3484, %v3484
      %v3741 = vpack.c.bf16 %v3485, %v3485
      %v3742 = vpack.c.bf16 %v3486, %v3486
      %v3743 = vpack.c.bf16 %v3487, %v3487
      %v3744 = vpack.c.bf16 %v3488, %v3488
      %v3745 = vpack.c.bf16 %v3489, %v3489
      %v3746 = vpack.c.bf16 %v3490, %v3490
      %v3747 = vpack.c.bf16 %v3491, %v3491
      %v3748 = vpack.c.bf16 %v3492, %v3492
      %v3749 = vpack.c.bf16 %v3493, %v3493
      %v3750 = vpack.c.bf16 %v3494, %v3494
      %v3751 = vpack.c.bf16 %v3495, %v3495
      %v3752 = vpack.c.bf16 %v3496, %v3496
      %v3753 = vpack.c.bf16 %v3497, %v3497
      %v3754 = vpack.c.bf16 %v3498, %v3498
      %v3755 = vpack.c.bf16 %v3499, %v3499
      %v3756 = vpack.c.bf16 %v3500, %v3500
      %v3757 = vpack.c.bf16 %v3501, %v3501
      %v3758 = vpack.c.bf16 %v3502, %v3502
      %v3759 = vpack.c.bf16 %v3503, %v3503
      %v3760 = vpack.c.bf16 %v3504, %v3504
      %v3761 = vpack.c.bf16 %v3505, %v3505
      %v3762 = vpack.c.bf16 %v3506, %v3506
      %v3763 = vpack.c.bf16 %v3507, %v3507
      %v3764 = vpack.c.bf16 %v3508, %v3508
      %v3765 = vpack.c.bf16 %v3509, %v3509
      %v3766 = vpack.c.bf16 %v3510, %v3510
      %v3767 = vpack.c.bf16 %v3511, %v3511
      %v3768 = vpack.c.bf16 %v3512, %v3512
      %v3769 = vpack.c.bf16 %v3513, %v3513
      %v3770 = vpack.c.bf16 %v3514, %v3514
      %v3771 = vpack.c.bf16 %v3515, %v3515
      %v3772 = vpack.c.bf16 %v3516, %v3516
      %v3773 = vpack.c.bf16 %v3517, %v3517
      %v3774 = vpack.c.bf16 %v3518, %v3518
      %v3775 = vpack.c.bf16 %v3519, %v3519
      %v3776 = vpack.c.bf16 %v3520, %v3520
      %v3777 = vpack.c.bf16 %v3521, %v3521
      %v3778 = vpack.c.bf16 %v3522, %v3522
      %v3779 = vpack.c.bf16 %v3523, %v3523
      %v3780 = vpack.c.bf16 %v3524, %v3524
      %v3781 = vpack.c.bf16 %v3525, %v3525
      %v3782 = vpack.c.bf16 %v3526, %v3526
      %v3783 = vpack.c.bf16 %v3527, %v3527
      %v3784 = vpack.c.bf16 %v3528, %v3528
      %v3785 = vpack.c.bf16 %v3529, %v3529
      %v3786 = vpack.c.bf16 %v3530, %v3530
      %v3787 = vpack.c.bf16 %v3531, %v3531
      %v3788 = vpack.c.bf16 %v3532, %v3532
      %v3789 = vpack.c.bf16 %v3533, %v3533
      %v3790 = vpack.c.bf16 %v3534, %v3534
      %v3791 = vpack.c.bf16 %v3535, %v3535
      %v3792 = vpack.c.bf16 %v3536, %v3536
      %v3793 = vpack.c.bf16 %v3537, %v3537
      %v3794 = vpack.c.bf16 %v3538, %v3538
      %v3795 = vpack.c.bf16 %v3539, %v3539
      %v3796 = vpack.c.bf16 %v3540, %v3540
      %v3797 = vpack.c.bf16 %v3541, %v3541
      %v3798 = vpack.c.bf16 %v3542, %v3542
      %v3799 = vpack.c.bf16 %v3543, %v3543
      %v3800 = vpack.c.bf16 %v3544, %v3544
      %v3801 = vpack.c.bf16 %v3545, %v3545
      %v3802 = vpack.c.bf16 %v3546, %v3546
      %v3803 = vpack.c.bf16 %v3547, %v3547
      %v3804 = vpack.c.bf16 %v3548, %v3548
      %v3805 = vpack.c.bf16 %v3549, %v3549
      %v3806 = vpack.c.bf16 %v3550, %v3550
      %v3807 = vpack.c.bf16 %v3551, %v3551
      %v3808 = vpack.c.bf16 %v3552, %v3552
      %v3809 = vpack.c.bf16 %v3553, %v3553
      %v3810 = vpack.c.bf16 %v3554, %v3554
      %v3811 = vpack.c.bf16 %v3555, %v3555
      %v3812 = vpack.c.bf16 %v3556, %v3556
      %v3813 = vpack.c.bf16 %v3557, %v3557
      %v3814 = vpack.c.bf16 %v3558, %v3558
      %v3815 = vpack.c.bf16 %v3559, %v3559
      %v3816 = vpack.c.bf16 %v3560, %v3560
      %v3817 = vpack.c.bf16 %v3561, %v3561
      %v3818 = vpack.c.bf16 %v3562, %v3562
      %v3819 = vpack.c.bf16 %v3563, %v3563
      %v3820 = vpack.c.bf16 %v3564, %v3564
      %v3821 = vpack.c.bf16 %v3565, %v3565
      %v3822 = vpack.c.bf16 %v3566, %v3566
      %v3823 = vpack.c.bf16 %v3567, %v3567
      %v3824 = vpack.c.bf16 %v3568, %v3568
      %v3825 = vpack.c.bf16 %v3569, %v3569
      %v3826 = vpack.c.bf16 %v3570, %v3570
      %v3827 = vpack.c.bf16 %v3571, %v3571
      %v3828 = vpack.c.bf16 %v3572, %v3572
      %v3829 = vpack.c.bf16 %v3573, %v3573
      %v3830 = vpack.c.bf16 %v3574, %v3574
      %v3831 = vpack.c.bf16 %v3575, %v3575
      %v3832 = vpack.c.bf16 %v3576, %v3576
      %v3833 = vpack.c.bf16 %v3577, %v3577
      %v3834 = vpack.c.bf16 %v3578, %v3578
      %v3835 = vpack.c.bf16 %v3579, %v3579
      %v3836 = vpack.c.bf16 %v3580, %v3580
      %v3837 = vpack.c.bf16 %v3581, %v3581
      %v3838 = vpack.c.bf16 %v3582, %v3582
      %v3839 = vpack.c.bf16 %v3583, %v3583
      %v3840 = vpack.c.bf16 %v3584, %v3584
      %v3841 = vpack.c.bf16 %v3585, %v3585
      %v3842 = vpack.c.bf16 %v3586, %v3586
      %v3843 = vpack.c.bf16 %v3587, %v3587
      %v3844 = vpack.c.bf16 %v3588, %v3588
      %v3845 = vpack.c.bf16 %v3589, %v3589
      %v3846 = vpack.c.bf16 %v3590, %v3590
      %v3847 = vpack.c.bf16 %v3591, %v3591
      %v3848 = vpack.c.bf16 %v3592, %v3592
      %v3849 = vpack.c.bf16 %v3593, %v3593
      %v3850 = vpack.c.bf16 %v3594, %v3594
      %v3851 = vpack.c.bf16 %v3595, %v3595
      %v3852 = vpack.c.bf16 %v3596, %v3596
      %v3853 = vpack.c.bf16 %v3597, %v3597
      %v3854 = vpack.c.bf16 %v3598, %v3598
      %v3855 = vpack.c.bf16 %v3599, %v3599
      %v3856 = vpack.c.bf16 %v3600, %v3600
      %vm3857 = vcmask 125952
      %3858 = vst.msk [vmem:[%s175] sm:$0xf] %vm3857, %v3601
      %3859 = vst.msk [vmem:[%s175 + $0x4] sm:$0xf] %vm3857, %v3602
      %3860 = vst.msk [vmem:[%s175 + $0x8] sm:$0xf] %vm3857, %v3603
      %3861 = vst.msk [vmem:[%s175 + $0xc] sm:$0xf] %vm3857, %v3604
      %3862 = vst.msk [vmem:[%s175 + $0x10] sm:$0xf] %vm3857, %v3605
      %3863 = vst.msk [vmem:[%s175 + $0x14] sm:$0xf] %vm3857, %v3606
      %3864 = vst.msk [vmem:[%s175 + $0x18] sm:$0xf] %vm3857, %v3607
      %3865 = vst.msk [vmem:[%s175 + $0x1c] sm:$0xf] %vm3857, %v3608
      %3866 = vst.msk [vmem:[%s175 + $0x20] sm:$0xf] %vm3857, %v3609
      %3867 = vst.msk [vmem:[%s175 + $0x24] sm:$0xf] %vm3857, %v3610
      %3868 = vst.msk [vmem:[%s175 + $0x28] sm:$0xf] %vm3857, %v3611
      %3869 = vst.msk [vmem:[%s175 + $0x2c] sm:$0xf] %vm3857, %v3612
      %3870 = vst.msk [vmem:[%s175 + $0x30] sm:$0xf] %vm3857, %v3613
      %3871 = vst.msk [vmem:[%s175 + $0x34] sm:$0xf] %vm3857, %v3614
      %3872 = vst.msk [vmem:[%s175 + $0x38] sm:$0xf] %vm3857, %v3615
      %3873 = vst.msk [vmem:[%s175 + $0x3c] sm:$0xf] %vm3857, %v3616
      %3874 = vst.msk [vmem:[%s175 + $0x40] sm:$0xf] %vm3857, %v3617
      %3875 = vst.msk [vmem:[%s175 + $0x44] sm:$0xf] %vm3857, %v3618
      %3876 = vst.msk [vmem:[%s175 + $0x48] sm:$0xf] %vm3857, %v3619
      %3877 = vst.msk [vmem:[%s175 + $0x4c] sm:$0xf] %vm3857, %v3620
      %3878 = vst.msk [vmem:[%s175 + $0x50] sm:$0xf] %vm3857, %v3621
      %3879 = vst.msk [vmem:[%s175 + $0x54] sm:$0xf] %vm3857, %v3622
      %3880 = vst.msk [vmem:[%s175 + $0x58] sm:$0xf] %vm3857, %v3623
      %3881 = vst.msk [vmem:[%s175 + $0x5c] sm:$0xf] %vm3857, %v3624
      %3882 = vst.msk [vmem:[%s175 + $0x60] sm:$0xf] %vm3857, %v3625
      %3883 = vst.msk [vmem:[%s175 + $0x64] sm:$0xf] %vm3857, %v3626
      %3884 = vst.msk [vmem:[%s175 + $0x68] sm:$0xf] %vm3857, %v3627
      %3885 = vst.msk [vmem:[%s175 + $0x6c] sm:$0xf] %vm3857, %v3628
      %3886 = vst.msk [vmem:[%s175 + $0x70] sm:$0xf] %vm3857, %v3629
      %3887 = vst.msk [vmem:[%s175 + $0x74] sm:$0xf] %vm3857, %v3630
      %3888 = vst.msk [vmem:[%s175 + $0x78] sm:$0xf] %vm3857, %v3631
      %3889 = vst.msk [vmem:[%s175 + $0x7c] sm:$0xf] %vm3857, %v3632
      %3890 = vst.msk [vmem:[%s175 + $0x80] sm:$0xf] %vm3857, %v3633
      %3891 = vst.msk [vmem:[%s175 + $0x84] sm:$0xf] %vm3857, %v3634
      %3892 = vst.msk [vmem:[%s175 + $0x88] sm:$0xf] %vm3857, %v3635
      %3893 = vst.msk [vmem:[%s175 + $0x8c] sm:$0xf] %vm3857, %v3636
      %3894 = vst.msk [vmem:[%s175 + $0x90] sm:$0xf] %vm3857, %v3637
      %3895 = vst.msk [vmem:[%s175 + $0x94] sm:$0xf] %vm3857, %v3638
      %3896 = vst.msk [vmem:[%s175 + $0x98] sm:$0xf] %vm3857, %v3639
      %3897 = vst.msk [vmem:[%s175 + $0x9c] sm:$0xf] %vm3857, %v3640
      %3898 = vst.msk [vmem:[%s175 + $0xa0] sm:$0xf] %vm3857, %v3641
      %3899 = vst.msk [vmem:[%s175 + $0xa4] sm:$0xf] %vm3857, %v3642
      %3900 = vst.msk [vmem:[%s175 + $0xa8] sm:$0xf] %vm3857, %v3643
      %3901 = vst.msk [vmem:[%s175 + $0xac] sm:$0xf] %vm3857, %v3644
      %3902 = vst.msk [vmem:[%s175 + $0xb0] sm:$0xf] %vm3857, %v3645
      %3903 = vst.msk [vmem:[%s175 + $0xb4] sm:$0xf] %vm3857, %v3646
      %3904 = vst.msk [vmem:[%s175 + $0xb8] sm:$0xf] %vm3857, %v3647
      %3905 = vst.msk [vmem:[%s175 + $0xbc] sm:$0xf] %vm3857, %v3648
      %3906 = vst.msk [vmem:[%s175 + $0xc0] sm:$0xf] %vm3857, %v3649
      %3907 = vst.msk [vmem:[%s175 + $0xc4] sm:$0xf] %vm3857, %v3650
      %3908 = vst.msk [vmem:[%s175 + $0xc8] sm:$0xf] %vm3857, %v3651
      %3909 = vst.msk [vmem:[%s175 + $0xcc] sm:$0xf] %vm3857, %v3652
      %3910 = vst.msk [vmem:[%s175 + $0xd0] sm:$0xf] %vm3857, %v3653
      %3911 = vst.msk [vmem:[%s175 + $0xd4] sm:$0xf] %vm3857, %v3654
      %3912 = vst.msk [vmem:[%s175 + $0xd8] sm:$0xf] %vm3857, %v3655
      %3913 = vst.msk [vmem:[%s175 + $0xdc] sm:$0xf] %vm3857, %v3656
      %3914 = vst.msk [vmem:[%s175 + $0xe0] sm:$0xf] %vm3857, %v3657
      %3915 = vst.msk [vmem:[%s175 + $0xe4] sm:$0xf] %vm3857, %v3658
      %3916 = vst.msk [vmem:[%s175 + $0xe8] sm:$0xf] %vm3857, %v3659
      %3917 = vst.msk [vmem:[%s175 + $0xec] sm:$0xf] %vm3857, %v3660
      %3918 = vst.msk [vmem:[%s175 + $0xf0] sm:$0xf] %vm3857, %v3661
      %3919 = vst.msk [vmem:[%s175 + $0xf4] sm:$0xf] %vm3857, %v3662
      %3920 = vst.msk [vmem:[%s175 + $0xf8] sm:$0xf] %vm3857, %v3663
      %3921 = vst.msk [vmem:[%s175 + $0xfc] sm:$0xf] %vm3857, %v3664
      %3922 = vst.msk [vmem:[%s175 + $0x100] sm:$0xf] %vm3857, %v3665
      %3923 = vst.msk [vmem:[%s175 + $0x104] sm:$0xf] %vm3857, %v3666
      %3924 = vst.msk [vmem:[%s175 + $0x108] sm:$0xf] %vm3857, %v3667
      %3925 = vst.msk [vmem:[%s175 + $0x10c] sm:$0xf] %vm3857, %v3668
      %3926 = vst.msk [vmem:[%s175 + $0x110] sm:$0xf] %vm3857, %v3669
      %3927 = vst.msk [vmem:[%s175 + $0x114] sm:$0xf] %vm3857, %v3670
      %3928 = vst.msk [vmem:[%s175 + $0x118] sm:$0xf] %vm3857, %v3671
      %3929 = vst.msk [vmem:[%s175 + $0x11c] sm:$0xf] %vm3857, %v3672
      %3930 = vst.msk [vmem:[%s175 + $0x120] sm:$0xf] %vm3857, %v3673
      %3931 = vst.msk [vmem:[%s175 + $0x124] sm:$0xf] %vm3857, %v3674
      %3932 = vst.msk [vmem:[%s175 + $0x128] sm:$0xf] %vm3857, %v3675
      %3933 = vst.msk [vmem:[%s175 + $0x12c] sm:$0xf] %vm3857, %v3676
      %3934 = vst.msk [vmem:[%s175 + $0x130] sm:$0xf] %vm3857, %v3677
      %3935 = vst.msk [vmem:[%s175 + $0x134] sm:$0xf] %vm3857, %v3678
      %3936 = vst.msk [vmem:[%s175 + $0x138] sm:$0xf] %vm3857, %v3679
      %3937 = vst.msk [vmem:[%s175 + $0x13c] sm:$0xf] %vm3857, %v3680
      %3938 = vst.msk [vmem:[%s175 + $0x140] sm:$0xf] %vm3857, %v3681
      %3939 = vst.msk [vmem:[%s175 + $0x144] sm:$0xf] %vm3857, %v3682
      %3940 = vst.msk [vmem:[%s175 + $0x148] sm:$0xf] %vm3857, %v3683
      %3941 = vst.msk [vmem:[%s175 + $0x14c] sm:$0xf] %vm3857, %v3684
      %3942 = vst.msk [vmem:[%s175 + $0x150] sm:$0xf] %vm3857, %v3685
      %3943 = vst.msk [vmem:[%s175 + $0x154] sm:$0xf] %vm3857, %v3686
      %3944 = vst.msk [vmem:[%s175 + $0x158] sm:$0xf] %vm3857, %v3687
      %3945 = vst.msk [vmem:[%s175 + $0x15c] sm:$0xf] %vm3857, %v3688
      %3946 = vst.msk [vmem:[%s175 + $0x160] sm:$0xf] %vm3857, %v3689
      %3947 = vst.msk [vmem:[%s175 + $0x164] sm:$0xf] %vm3857, %v3690
      %3948 = vst.msk [vmem:[%s175 + $0x168] sm:$0xf] %vm3857, %v3691
      %3949 = vst.msk [vmem:[%s175 + $0x16c] sm:$0xf] %vm3857, %v3692
      %3950 = vst.msk [vmem:[%s175 + $0x170] sm:$0xf] %vm3857, %v3693
      %3951 = vst.msk [vmem:[%s175 + $0x174] sm:$0xf] %vm3857, %v3694
      %3952 = vst.msk [vmem:[%s175 + $0x178] sm:$0xf] %vm3857, %v3695
      %3953 = vst.msk [vmem:[%s175 + $0x17c] sm:$0xf] %vm3857, %v3696
      %3954 = vst.msk [vmem:[%s175 + $0x180] sm:$0xf] %vm3857, %v3697
      %3955 = vst.msk [vmem:[%s175 + $0x184] sm:$0xf] %vm3857, %v3698
      %3956 = vst.msk [vmem:[%s175 + $0x188] sm:$0xf] %vm3857, %v3699
      %3957 = vst.msk [vmem:[%s175 + $0x18c] sm:$0xf] %vm3857, %v3700
      %3958 = vst.msk [vmem:[%s175 + $0x190] sm:$0xf] %vm3857, %v3701
      %3959 = vst.msk [vmem:[%s175 + $0x194] sm:$0xf] %vm3857, %v3702
      %3960 = vst.msk [vmem:[%s175 + $0x198] sm:$0xf] %vm3857, %v3703
      %3961 = vst.msk [vmem:[%s175 + $0x19c] sm:$0xf] %vm3857, %v3704
      %3962 = vst.msk [vmem:[%s175 + $0x1a0] sm:$0xf] %vm3857, %v3705
      %3963 = vst.msk [vmem:[%s175 + $0x1a4] sm:$0xf] %vm3857, %v3706
      %3964 = vst.msk [vmem:[%s175 + $0x1a8] sm:$0xf] %vm3857, %v3707
      %3965 = vst.msk [vmem:[%s175 + $0x1ac] sm:$0xf] %vm3857, %v3708
      %3966 = vst.msk [vmem:[%s175 + $0x1b0] sm:$0xf] %vm3857, %v3709
      %3967 = vst.msk [vmem:[%s175 + $0x1b4] sm:$0xf] %vm3857, %v3710
      %3968 = vst.msk [vmem:[%s175 + $0x1b8] sm:$0xf] %vm3857, %v3711
      %3969 = vst.msk [vmem:[%s175 + $0x1bc] sm:$0xf] %vm3857, %v3712
      %3970 = vst.msk [vmem:[%s175 + $0x1c0] sm:$0xf] %vm3857, %v3713
      %3971 = vst.msk [vmem:[%s175 + $0x1c4] sm:$0xf] %vm3857, %v3714
      %3972 = vst.msk [vmem:[%s175 + $0x1c8] sm:$0xf] %vm3857, %v3715
      %3973 = vst.msk [vmem:[%s175 + $0x1cc] sm:$0xf] %vm3857, %v3716
      %3974 = vst.msk [vmem:[%s175 + $0x1d0] sm:$0xf] %vm3857, %v3717
      %3975 = vst.msk [vmem:[%s175 + $0x1d4] sm:$0xf] %vm3857, %v3718
      %3976 = vst.msk [vmem:[%s175 + $0x1d8] sm:$0xf] %vm3857, %v3719
      %3977 = vst.msk [vmem:[%s175 + $0x1dc] sm:$0xf] %vm3857, %v3720
      %3978 = vst.msk [vmem:[%s175 + $0x1e0] sm:$0xf] %vm3857, %v3721
      %3979 = vst.msk [vmem:[%s175 + $0x1e4] sm:$0xf] %vm3857, %v3722
      %3980 = vst.msk [vmem:[%s175 + $0x1e8] sm:$0xf] %vm3857, %v3723
      %3981 = vst.msk [vmem:[%s175 + $0x1ec] sm:$0xf] %vm3857, %v3724
      %3982 = vst.msk [vmem:[%s175 + $0x1f0] sm:$0xf] %vm3857, %v3725
      %3983 = vst.msk [vmem:[%s175 + $0x1f4] sm:$0xf] %vm3857, %v3726
      %3984 = vst.msk [vmem:[%s175 + $0x1f8] sm:$0xf] %vm3857, %v3727
      %3985 = vst.msk [vmem:[%s175 + $0x1fc] sm:$0xf] %vm3857, %v3728
      %3986 = vst.msk [vmem:[%s175 + $0x200] sm:$0xf] %vm3857, %v3729
      %3987 = vst.msk [vmem:[%s175 + $0x204] sm:$0xf] %vm3857, %v3730
      %3988 = vst.msk [vmem:[%s175 + $0x208] sm:$0xf] %vm3857, %v3731
      %3989 = vst.msk [vmem:[%s175 + $0x20c] sm:$0xf] %vm3857, %v3732
      %3990 = vst.msk [vmem:[%s175 + $0x210] sm:$0xf] %vm3857, %v3733
      %3991 = vst.msk [vmem:[%s175 + $0x214] sm:$0xf] %vm3857, %v3734
      %3992 = vst.msk [vmem:[%s175 + $0x218] sm:$0xf] %vm3857, %v3735
      %3993 = vst.msk [vmem:[%s175 + $0x21c] sm:$0xf] %vm3857, %v3736
      %3994 = vst.msk [vmem:[%s175 + $0x220] sm:$0xf] %vm3857, %v3737
      %3995 = vst.msk [vmem:[%s175 + $0x224] sm:$0xf] %vm3857, %v3738
      %3996 = vst.msk [vmem:[%s175 + $0x228] sm:$0xf] %vm3857, %v3739
      %3997 = vst.msk [vmem:[%s175 + $0x22c] sm:$0xf] %vm3857, %v3740
      %3998 = vst.msk [vmem:[%s175 + $0x230] sm:$0xf] %vm3857, %v3741
      %3999 = vst.msk [vmem:[%s175 + $0x234] sm:$0xf] %vm3857, %v3742
      %4000 = vst.msk [vmem:[%s175 + $0x238] sm:$0xf] %vm3857, %v3743
      %4001 = vst.msk [vmem:[%s175 + $0x23c] sm:$0xf] %vm3857, %v3744
      %4002 = vst.msk [vmem:[%s175 + $0x240] sm:$0xf] %vm3857, %v3745
      %4003 = vst.msk [vmem:[%s175 + $0x244] sm:$0xf] %vm3857, %v3746
      %4004 = vst.msk [vmem:[%s175 + $0x248] sm:$0xf] %vm3857, %v3747
      %4005 = vst.msk [vmem:[%s175 + $0x24c] sm:$0xf] %vm3857, %v3748
      %4006 = vst.msk [vmem:[%s175 + $0x250] sm:$0xf] %vm3857, %v3749
      %4007 = vst.msk [vmem:[%s175 + $0x254] sm:$0xf] %vm3857, %v3750
      %4008 = vst.msk [vmem:[%s175 + $0x258] sm:$0xf] %vm3857, %v3751
      %4009 = vst.msk [vmem:[%s175 + $0x25c] sm:$0xf] %vm3857, %v3752
      %4010 = vst.msk [vmem:[%s175 + $0x260] sm:$0xf] %vm3857, %v3753
      %4011 = vst.msk [vmem:[%s175 + $0x264] sm:$0xf] %vm3857, %v3754
      %4012 = vst.msk [vmem:[%s175 + $0x268] sm:$0xf] %vm3857, %v3755
      %4013 = vst.msk [vmem:[%s175 + $0x26c] sm:$0xf] %vm3857, %v3756
      %4014 = vst.msk [vmem:[%s175 + $0x270] sm:$0xf] %vm3857, %v3757
      %4015 = vst.msk [vmem:[%s175 + $0x274] sm:$0xf] %vm3857, %v3758
      %4016 = vst.msk [vmem:[%s175 + $0x278] sm:$0xf] %vm3857, %v3759
      %4017 = vst.msk [vmem:[%s175 + $0x27c] sm:$0xf] %vm3857, %v3760
      %4018 = vst.msk [vmem:[%s175 + $0x280] sm:$0xf] %vm3857, %v3761
      %4019 = vst.msk [vmem:[%s175 + $0x284] sm:$0xf] %vm3857, %v3762
      %4020 = vst.msk [vmem:[%s175 + $0x288] sm:$0xf] %vm3857, %v3763
      %4021 = vst.msk [vmem:[%s175 + $0x28c] sm:$0xf] %vm3857, %v3764
      %4022 = vst.msk [vmem:[%s175 + $0x290] sm:$0xf] %vm3857, %v3765
      %4023 = vst.msk [vmem:[%s175 + $0x294] sm:$0xf] %vm3857, %v3766
      %4024 = vst.msk [vmem:[%s175 + $0x298] sm:$0xf] %vm3857, %v3767
      %4025 = vst.msk [vmem:[%s175 + $0x29c] sm:$0xf] %vm3857, %v3768
      %4026 = vst.msk [vmem:[%s175 + $0x2a0] sm:$0xf] %vm3857, %v3769
      %4027 = vst.msk [vmem:[%s175 + $0x2a4] sm:$0xf] %vm3857, %v3770
      %4028 = vst.msk [vmem:[%s175 + $0x2a8] sm:$0xf] %vm3857, %v3771
      %4029 = vst.msk [vmem:[%s175 + $0x2ac] sm:$0xf] %vm3857, %v3772
      %4030 = vst.msk [vmem:[%s175 + $0x2b0] sm:$0xf] %vm3857, %v3773
      %4031 = vst.msk [vmem:[%s175 + $0x2b4] sm:$0xf] %vm3857, %v3774
      %4032 = vst.msk [vmem:[%s175 + $0x2b8] sm:$0xf] %vm3857, %v3775
      %4033 = vst.msk [vmem:[%s175 + $0x2bc] sm:$0xf] %vm3857, %v3776
      %4034 = vst.msk [vmem:[%s175 + $0x2c0] sm:$0xf] %vm3857, %v3777
      %4035 = vst.msk [vmem:[%s175 + $0x2c4] sm:$0xf] %vm3857, %v3778
      %4036 = vst.msk [vmem:[%s175 + $0x2c8] sm:$0xf] %vm3857, %v3779
      %4037 = vst.msk [vmem:[%s175 + $0x2cc] sm:$0xf] %vm3857, %v3780
      %4038 = vst.msk [vmem:[%s175 + $0x2d0] sm:$0xf] %vm3857, %v3781
      %4039 = vst.msk [vmem:[%s175 + $0x2d4] sm:$0xf] %vm3857, %v3782
      %4040 = vst.msk [vmem:[%s175 + $0x2d8] sm:$0xf] %vm3857, %v3783
      %4041 = vst.msk [vmem:[%s175 + $0x2dc] sm:$0xf] %vm3857, %v3784
      %4042 = vst.msk [vmem:[%s175 + $0x2e0] sm:$0xf] %vm3857, %v3785
      %4043 = vst.msk [vmem:[%s175 + $0x2e4] sm:$0xf] %vm3857, %v3786
      %4044 = vst.msk [vmem:[%s175 + $0x2e8] sm:$0xf] %vm3857, %v3787
      %4045 = vst.msk [vmem:[%s175 + $0x2ec] sm:$0xf] %vm3857, %v3788
      %4046 = vst.msk [vmem:[%s175 + $0x2f0] sm:$0xf] %vm3857, %v3789
      %4047 = vst.msk [vmem:[%s175 + $0x2f4] sm:$0xf] %vm3857, %v3790
      %4048 = vst.msk [vmem:[%s175 + $0x2f8] sm:$0xf] %vm3857, %v3791
      %4049 = vst.msk [vmem:[%s175 + $0x2fc] sm:$0xf] %vm3857, %v3792
      %4050 = vst.msk [vmem:[%s175 + $0x300] sm:$0xf] %vm3857, %v3793
      %4051 = vst.msk [vmem:[%s175 + $0x304] sm:$0xf] %vm3857, %v3794
      %4052 = vst.msk [vmem:[%s175 + $0x308] sm:$0xf] %vm3857, %v3795
      %4053 = vst.msk [vmem:[%s175 + $0x30c] sm:$0xf] %vm3857, %v3796
      %4054 = vst.msk [vmem:[%s175 + $0x310] sm:$0xf] %vm3857, %v3797
      %4055 = vst.msk [vmem:[%s175 + $0x314] sm:$0xf] %vm3857, %v3798
      %4056 = vst.msk [vmem:[%s175 + $0x318] sm:$0xf] %vm3857, %v3799
      %4057 = vst.msk [vmem:[%s175 + $0x31c] sm:$0xf] %vm3857, %v3800
      %4058 = vst.msk [vmem:[%s175 + $0x320] sm:$0xf] %vm3857, %v3801
      %4059 = vst.msk [vmem:[%s175 + $0x324] sm:$0xf] %vm3857, %v3802
      %4060 = vst.msk [vmem:[%s175 + $0x328] sm:$0xf] %vm3857, %v3803
      %4061 = vst.msk [vmem:[%s175 + $0x32c] sm:$0xf] %vm3857, %v3804
      %4062 = vst.msk [vmem:[%s175 + $0x330] sm:$0xf] %vm3857, %v3805
      %4063 = vst.msk [vmem:[%s175 + $0x334] sm:$0xf] %vm3857, %v3806
      %4064 = vst.msk [vmem:[%s175 + $0x338] sm:$0xf] %vm3857, %v3807
      %4065 = vst.msk [vmem:[%s175 + $0x33c] sm:$0xf] %vm3857, %v3808
      %4066 = vst.msk [vmem:[%s175 + $0x340] sm:$0xf] %vm3857, %v3809
      %4067 = vst.msk [vmem:[%s175 + $0x344] sm:$0xf] %vm3857, %v3810
      %4068 = vst.msk [vmem:[%s175 + $0x348] sm:$0xf] %vm3857, %v3811
      %4069 = vst.msk [vmem:[%s175 + $0x34c] sm:$0xf] %vm3857, %v3812
      %4070 = vst.msk [vmem:[%s175 + $0x350] sm:$0xf] %vm3857, %v3813
      %4071 = vst.msk [vmem:[%s175 + $0x354] sm:$0xf] %vm3857, %v3814
      %4072 = vst.msk [vmem:[%s175 + $0x358] sm:$0xf] %vm3857, %v3815
      %4073 = vst.msk [vmem:[%s175 + $0x35c] sm:$0xf] %vm3857, %v3816
      %4074 = vst.msk [vmem:[%s175 + $0x360] sm:$0xf] %vm3857, %v3817
      %4075 = vst.msk [vmem:[%s175 + $0x364] sm:$0xf] %vm3857, %v3818
      %4076 = vst.msk [vmem:[%s175 + $0x368] sm:$0xf] %vm3857, %v3819
      %4077 = vst.msk [vmem:[%s175 + $0x36c] sm:$0xf] %vm3857, %v3820
      %4078 = vst.msk [vmem:[%s175 + $0x370] sm:$0xf] %vm3857, %v3821
      %4079 = vst.msk [vmem:[%s175 + $0x374] sm:$0xf] %vm3857, %v3822
      %4080 = vst.msk [vmem:[%s175 + $0x378] sm:$0xf] %vm3857, %v3823
      %4081 = vst.msk [vmem:[%s175 + $0x37c] sm:$0xf] %vm3857, %v3824
      %4082 = vst.msk [vmem:[%s175 + $0x380] sm:$0xf] %vm3857, %v3825
      %4083 = vst.msk [vmem:[%s175 + $0x384] sm:$0xf] %vm3857, %v3826
      %4084 = vst.msk [vmem:[%s175 + $0x388] sm:$0xf] %vm3857, %v3827
      %4085 = vst.msk [vmem:[%s175 + $0x38c] sm:$0xf] %vm3857, %v3828
      %4086 = vst.msk [vmem:[%s175 + $0x390] sm:$0xf] %vm3857, %v3829
      %4087 = vst.msk [vmem:[%s175 + $0x394] sm:$0xf] %vm3857, %v3830
      %4088 = vst.msk [vmem:[%s175 + $0x398] sm:$0xf] %vm3857, %v3831
      %4089 = vst.msk [vmem:[%s175 + $0x39c] sm:$0xf] %vm3857, %v3832
      %4090 = vst.msk [vmem:[%s175 + $0x3a0] sm:$0xf] %vm3857, %v3833
      %4091 = vst.msk [vmem:[%s175 + $0x3a4] sm:$0xf] %vm3857, %v3834
      %4092 = vst.msk [vmem:[%s175 + $0x3a8] sm:$0xf] %vm3857, %v3835
      %4093 = vst.msk [vmem:[%s175 + $0x3ac] sm:$0xf] %vm3857, %v3836
      %4094 = vst.msk [vmem:[%s175 + $0x3b0] sm:$0xf] %vm3857, %v3837
      %4095 = vst.msk [vmem:[%s175 + $0x3b4] sm:$0xf] %vm3857, %v3838
      %4096 = vst.msk [vmem:[%s175 + $0x3b8] sm:$0xf] %vm3857, %v3839
      %4097 = vst.msk [vmem:[%s175 + $0x3bc] sm:$0xf] %vm3857, %v3840
      %4098 = vst.msk [vmem:[%s175 + $0x3c0] sm:$0xf] %vm3857, %v3841
      %4099 = vst.msk [vmem:[%s175 + $0x3c4] sm:$0xf] %vm3857, %v3842
      %4100 = vst.msk [vmem:[%s175 + $0x3c8] sm:$0xf] %vm3857, %v3843
      %4101 = vst.msk [vmem:[%s175 + $0x3cc] sm:$0xf] %vm3857, %v3844
      %4102 = vst.msk [vmem:[%s175 + $0x3d0] sm:$0xf] %vm3857, %v3845
      %4103 = vst.msk [vmem:[%s175 + $0x3d4] sm:$0xf] %vm3857, %v3846
      %4104 = vst.msk [vmem:[%s175 + $0x3d8] sm:$0xf] %vm3857, %v3847
      %4105 = vst.msk [vmem:[%s175 + $0x3dc] sm:$0xf] %vm3857, %v3848
      %4106 = vst.msk [vmem:[%s175 + $0x3e0] sm:$0xf] %vm3857, %v3849
      %4107 = vst.msk [vmem:[%s175 + $0x3e4] sm:$0xf] %vm3857, %v3850
      %4108 = vst.msk [vmem:[%s175 + $0x3e8] sm:$0xf] %vm3857, %v3851
      %4109 = vst.msk [vmem:[%s175 + $0x3ec] sm:$0xf] %vm3857, %v3852
      %4110 = vst.msk [vmem:[%s175 + $0x3f0] sm:$0xf] %vm3857, %v3853
      %4111 = vst.msk [vmem:[%s175 + $0x3f4] sm:$0xf] %vm3857, %v3854
      %4112 = vst.msk [vmem:[%s175 + $0x3f8] sm:$0xf] %vm3857, %v3855
      %4113 = vst.msk [vmem:[%s175 + $0x3fc] sm:$0xf] %vm3857, %v3856
      %s4114 = smul.u32 256, %s14
      %p4115 = scmp.lt.s32.totalorder %s4114, 511
      %s4116 = scalar_select %p4115, %s4114, 511
      %s4117 = smul.addr %s4116, 4
      %s4118 = scalar_lea.vmem %s3, %s4117
      // Predicated region
      $region33: #{skill_proposal_forward.6} parent=31 // pred_check
        %p4119 = pneg %p100
      $region34: #{skill_proposal_forward.6} parent=31 // pred_check_branch
        %4121 = sbr.rel (%p4119) target = $region36
      $region35: #{skill_proposal_forward.6} parent=31 // pred_region
        %s4122 = smul.u32 256, %s14
      $region36: #{skill_proposal_forward.6} parent=31 // pred_fallthru
        _
    $region32: #{skill_proposal_forward.6} parent=5 // pred_fallthru
      _
    %p4123 = scmp.le.s32.totalorder 2, %s9
    // Predicated region
    $region37: #{skill_proposal_forward.6} parent=5 // pred_check
      %p4124 = pneg %p4123
    $region38: #{skill_proposal_forward.6} parent=5 // pred_check_branch
      %4126 = sbr.rel (%p4124) target = $region40
    $region39: #{skill_proposal_forward.6} parent=5 // pred_region
      %s4127 = ssub.s32 %s9, 2
      // Predicated region
      $region41: #{skill_proposal_forward.6} parent=39 // pred_check
        %p4128 = pneg %p106
      $region42: #{skill_proposal_forward.6} parent=39 // pred_check_branch
        %4130 = sbr.rel (%p4128) target = $region44
      $region43: #{skill_proposal_forward.6} parent=39 // pred_region
        %s4131 = smul.u32 256, %s15
        %p4132 = scmp.lt.s32.totalorder %s4131, 511
        %s4133 = scalar_select %p4132, %s4131, 511
        %s4134 = smul.addr %s4133, 4
        %s4135 = scalar_lea.vmem %s3, %s4134
      $region44: #{skill_proposal_forward.6} parent=39 // pred_fallthru
        _
    $region40: #{skill_proposal_forward.6} parent=5 // pred_fallthru
      _
  $region6: #{skill_proposal_forward.6} parent=0 // loop_footer
    %s13 = sadd.s32 1, %s9
  $region7: #{skill_proposal_forward.6} parent=0 // loop_footer_branch
    %8 = sbr.rel target = $region3
  $region8: #{skill_proposal_forward.6} parent=0 // loop_exit
    _

// kernel: skill_proposal_forward.7
$region0: #{skill_proposal_forward.7}
  #allocation0 [shape = 'u32[]', space=smem, size = 0x4, offset = 0x4, fixed_abs, tag = 'smem constant byte address 0x4 - core index']
  #allocation1 [shape = 'u32[72,128]{1,0:T(1,128)}', space=vmem, size = 0x9000, scoped, tag = 'internal scratch']
  %s0 = inlined_call_operand.vmem [shape: bf16[1024,144], index: 0, kind: input, shape index: {}]
  %s1 = inlined_call_operand.vmem [shape: bf16[144,16], index: 1, kind: input, shape index: {}]
  %s2 = inlined_call_operand.vmem [shape: f32[1,16], index: 2, kind: input, shape index: {}]
  %s3 = inlined_call_operand.vmem [shape: bf16[1024,16], index: 3, kind: output, shape index: {}]
  %s4 = sld [smem:[#allocation0]]
  $region22: #{skill_proposal_forward.7} parent=0
    _
  %s6 = ssub.s32 1, %s4
  %s7 = scalar_select 0, %s6, %s4
  // Predicated region
  $region2: #{skill_proposal_forward.7} parent=0 // pred_check
    _
  $region3: #{skill_proposal_forward.7} parent=0 // pred_check_branch
    %9 = sbr.rel (0) target = $region5
  $region4: #{skill_proposal_forward.7} parent=0 // pred_region
    _
  $region5: #{skill_proposal_forward.7} parent=0 // pred_fallthru
    _
  // Predicated region
  $region6: #{skill_proposal_forward.7} parent=0 // pred_check
    _
  $region7: #{skill_proposal_forward.7} parent=0 // pred_check_branch
    %11 = sbr.rel (0) target = $region9
  $region8: #{skill_proposal_forward.7} parent=0 // pred_region
    _
  $region9: #{skill_proposal_forward.7} parent=0 // pred_fallthru
    _
  // Predicated region
  $region10: #{skill_proposal_forward.7} parent=0 // pred_check
    _
  $region11: #{skill_proposal_forward.7} parent=0 // pred_check_branch
    %13 = sbr.rel (0) target = $region13
  $region12: #{skill_proposal_forward.7} parent=0 // pred_region
    _
  $region13: #{skill_proposal_forward.7} parent=0 // pred_fallthru
    _
  %v15 = vld [vmem:[%s0] sm:$0xff]
  %v16 = vld [vmem:[%s0 + $0x8] sm:$0xff]
  %v17 = vld [vmem:[%s0 + $0x10] sm:$0xff]
  %v18 = vld [vmem:[%s0 + $0x18] sm:$0xff]
  %v19 = vld [vmem:[%s0 + $0x20] sm:$0xff]
  %v20 = vld [vmem:[%s0 + $0x28] sm:$0xff]
  %v21 = vld [vmem:[%s0 + $0x30] sm:$0xff]
  %v22 = vld [vmem:[%s0 + $0x38] sm:$0xff]
  %v23 = vld [vmem:[%s0 + $0x40] sm:$0xff]
  %v24 = vld [vmem:[%s0 + $0x48] sm:$0xff]
  %v25 = vld [vmem:[%s0 + $0x50] sm:$0xff]
  %v26 = vld [vmem:[%s0 + $0x58] sm:$0xff]
  %v27 = vld [vmem:[%s0 + $0x60] sm:$0xff]
  %v28 = vld [vmem:[%s0 + $0x68] sm:$0xff]
  %v29 = vld [vmem:[%s0 + $0x70] sm:$0xff]
  %v30 = vld [vmem:[%s0 + $0x78] sm:$0xff]
  %v31 = vld [vmem:[%s0 + $0x80] sm:$0xff]
  %v32 = vld [vmem:[%s0 + $0x88] sm:$0xff]
  %v33 = vld [vmem:[%s0 + $0x90] sm:$0xff]
  %v34 = vld [vmem:[%s0 + $0x98] sm:$0xff]
  %v35 = vld [vmem:[%s0 + $0xa0] sm:$0xff]
  %v36 = vld [vmem:[%s0 + $0xa8] sm:$0xff]
  %v37 = vld [vmem:[%s0 + $0xb0] sm:$0xff]
  %v38 = vld [vmem:[%s0 + $0xb8] sm:$0xff]
  %v39 = vld [vmem:[%s0 + $0xc0] sm:$0xff]
  %v40 = vld [vmem:[%s0 + $0xc8] sm:$0xff]
  %v41 = vld [vmem:[%s0 + $0xd0] sm:$0xff]
  %v42 = vld [vmem:[%s0 + $0xd8] sm:$0xff]
  %v43 = vld [vmem:[%s0 + $0xe0] sm:$0xff]
  %v44 = vld [vmem:[%s0 + $0xe8] sm:$0xff]
  %v45 = vld [vmem:[%s0 + $0xf0] sm:$0xff]
  %v46 = vld [vmem:[%s0 + $0xf8] sm:$0xff]
  %v47 = vld [vmem:[%s0 + $0x100] sm:$0xff]
  %v48 = vld [vmem:[%s0 + $0x108] sm:$0xff]
  %v49 = vld [vmem:[%s0 + $0x110] sm:$0xff]
  %v50 = vld [vmem:[%s0 + $0x118] sm:$0xff]
  %v51 = vld [vmem:[%s0 + $0x120] sm:$0xff]
  %v52 = vld [vmem:[%s0 + $0x128] sm:$0xff]
  %v53 = vld [vmem:[%s0 + $0x130] sm:$0xff]
  %v54 = vld [vmem:[%s0 + $0x138] sm:$0xff]
  %v55 = vld [vmem:[%s0 + $0x140] sm:$0xff]
  %v56 = vld [vmem:[%s0 + $0x148] sm:$0xff]
  %v57 = vld [vmem:[%s0 + $0x150] sm:$0xff]
  %v58 = vld [vmem:[%s0 + $0x158] sm:$0xff]
  %v59 = vld [vmem:[%s0 + $0x160] sm:$0xff]
  %v60 = vld [vmem:[%s0 + $0x168] sm:$0xff]
  %v61 = vld [vmem:[%s0 + $0x170] sm:$0xff]
  %v62 = vld [vmem:[%s0 + $0x178] sm:$0xff]
  %v63 = vld [vmem:[%s0 + $0x180] sm:$0xff]
  %v64 = vld [vmem:[%s0 + $0x188] sm:$0xff]
  %v65 = vld [vmem:[%s0 + $0x190] sm:$0xff]
  %v66 = vld [vmem:[%s0 + $0x198] sm:$0xff]
  %v67 = vld [vmem:[%s0 + $0x1a0] sm:$0xff]
  %v68 = vld [vmem:[%s0 + $0x1a8] sm:$0xff]
  %v69 = vld [vmem:[%s0 + $0x1b0] sm:$0xff]
  %v70 = vld [vmem:[%s0 + $0x1b8] sm:$0xff]
  %v71 = vld [vmem:[%s0 + $0x1c0] sm:$0xff]
  %v72 = vld [vmem:[%s0 + $0x1c8] sm:$0xff]
  %v73 = vld [vmem:[%s0 + $0x1d0] sm:$0xff]
  %v74 = vld [vmem:[%s0 + $0x1d8] sm:$0xff]
  %v75 = vld [vmem:[%s0 + $0x1e0] sm:$0xff]
  %v76 = vld [vmem:[%s0 + $0x1e8] sm:$0xff]
  %v77 = vld [vmem:[%s0 + $0x1f0] sm:$0xff]
  %v78 = vld [vmem:[%s0 + $0x1f8] sm:$0xff]
  %v79 = vld [vmem:[%s0 + $0x200] sm:$0xff]
  %v80 = vld [vmem:[%s0 + $0x208] sm:$0xff]
  %v81 = vld [vmem:[%s0 + $0x210] sm:$0xff]
  %v82 = vld [vmem:[%s0 + $0x218] sm:$0xff]
  %v83 = vld [vmem:[%s0 + $0x220] sm:$0xff]
  %v84 = vld [vmem:[%s0 + $0x228] sm:$0xff]
  %v85 = vld [vmem:[%s0 + $0x230] sm:$0xff]
  %v86 = vld [vmem:[%s0 + $0x238] sm:$0xff]
  %v87 = vld [vmem:[%s0 + $0x240] sm:$0xff]
  %v88 = vld [vmem:[%s0 + $0x248] sm:$0xff]
  %v89 = vld [vmem:[%s0 + $0x250] sm:$0xff]
  %v90 = vld [vmem:[%s0 + $0x258] sm:$0xff]
  %v91 = vld [vmem:[%s0 + $0x260] sm:$0xff]
  %v92 = vld [vmem:[%s0 + $0x268] sm:$0xff]
  %v93 = vld [vmem:[%s0 + $0x270] sm:$0xff]
  %v94 = vld [vmem:[%s0 + $0x278] sm:$0xff]
  %v95 = vld [vmem:[%s0 + $0x280] sm:$0xff]
  %v96 = vld [vmem:[%s0 + $0x288] sm:$0xff]
  %v97 = vld [vmem:[%s0 + $0x290] sm:$0xff]
  %v98 = vld [vmem:[%s0 + $0x298] sm:$0xff]
  %v99 = vld [vmem:[%s0 + $0x2a0] sm:$0xff]
  %v100 = vld [vmem:[%s0 + $0x2a8] sm:$0xff]
  %v101 = vld [vmem:[%s0 + $0x2b0] sm:$0xff]
  %v102 = vld [vmem:[%s0 + $0x2b8] sm:$0xff]
  %v103 = vld [vmem:[%s0 + $0x2c0] sm:$0xff]
  %v104 = vld [vmem:[%s0 + $0x2c8] sm:$0xff]
  %v105 = vld [vmem:[%s0 + $0x2d0] sm:$0xff]
  %v106 = vld [vmem:[%s0 + $0x2d8] sm:$0xff]
  %v107 = vld [vmem:[%s0 + $0x2e0] sm:$0xff]
  %v108 = vld [vmem:[%s0 + $0x2e8] sm:$0xff]
  %v109 = vld [vmem:[%s0 + $0x2f0] sm:$0xff]
  %v110 = vld [vmem:[%s0 + $0x2f8] sm:$0xff]
  %v111 = vld [vmem:[%s0 + $0x300] sm:$0xff]
  %v112 = vld [vmem:[%s0 + $0x308] sm:$0xff]
  %v113 = vld [vmem:[%s0 + $0x310] sm:$0xff]
  %v114 = vld [vmem:[%s0 + $0x318] sm:$0xff]
  %v115 = vld [vmem:[%s0 + $0x320] sm:$0xff]
  %v116 = vld [vmem:[%s0 + $0x328] sm:$0xff]
  %v117 = vld [vmem:[%s0 + $0x330] sm:$0xff]
  %v118 = vld [vmem:[%s0 + $0x338] sm:$0xff]
  %v119 = vld [vmem:[%s0 + $0x340] sm:$0xff]
  %v120 = vld [vmem:[%s0 + $0x348] sm:$0xff]
  %v121 = vld [vmem:[%s0 + $0x350] sm:$0xff]
  %v122 = vld [vmem:[%s0 + $0x358] sm:$0xff]
  %v123 = vld [vmem:[%s0 + $0x360] sm:$0xff]
  %v124 = vld [vmem:[%s0 + $0x368] sm:$0xff]
  %v125 = vld [vmem:[%s0 + $0x370] sm:$0xff]
  %v126 = vld [vmem:[%s0 + $0x378] sm:$0xff]
  %v127 = vld [vmem:[%s0 + $0x380] sm:$0xff]
  %v128 = vld [vmem:[%s0 + $0x388] sm:$0xff]
  %v129 = vld [vmem:[%s0 + $0x390] sm:$0xff]
  %v130 = vld [vmem:[%s0 + $0x398] sm:$0xff]
  %v131 = vld [vmem:[%s0 + $0x3a0] sm:$0xff]
  %v132 = vld [vmem:[%s0 + $0x3a8] sm:$0xff]
  %v133 = vld [vmem:[%s0 + $0x3b0] sm:$0xff]
  %v134 = vld [vmem:[%s0 + $0x3b8] sm:$0xff]
  %v135 = vld [vmem:[%s0 + $0x3c0] sm:$0xff]
  %v136 = vld [vmem:[%s0 + $0x3c8] sm:$0xff]
  %v137 = vld [vmem:[%s0 + $0x3d0] sm:$0xff]
  %v138 = vld [vmem:[%s0 + $0x3d8] sm:$0xff]
  %v139 = vld [vmem:[%s0 + $0x3e0] sm:$0xff]
  %v140 = vld [vmem:[%s0 + $0x3e8] sm:$0xff]
  %v141 = vld [vmem:[%s0 + $0x3f0] sm:$0xff]
  %v142 = vld [vmem:[%s0 + $0x3f8] sm:$0xff]
  %v143 = vld [vmem:[%s1] sm:$0xf]
  %v144 = vld [vmem:[%s1 + $0x4] sm:$0xf]
  %v145 = vld [vmem:[%s1 + $0x8] sm:$0xf]
  %v146 = vld [vmem:[%s1 + $0xc] sm:$0xf]
  %v147 = vld [vmem:[%s1 + $0x10] sm:$0xf]
  %v148 = vld [vmem:[%s1 + $0x14] sm:$0xf]
  %v149 = vld [vmem:[%s1 + $0x18] sm:$0xf]
  %v150 = vld [vmem:[%s1 + $0x1c] sm:$0xf]
  %v151 = vld [vmem:[%s1 + $0x20] sm:$0xf]
  %v152 = vld [vmem:[%s1 + $0x24] sm:$0xf]
  %v153 = vld [vmem:[%s1 + $0x28] sm:$0xf]
  %v154 = vld [vmem:[%s1 + $0x2c] sm:$0xf]
  %v155 = vld [vmem:[%s1 + $0x30] sm:$0xf]
  %v156 = vld [vmem:[%s1 + $0x34] sm:$0xf]
  %v157 = vld [vmem:[%s1 + $0x38] sm:$0xf]
  %v158 = vld [vmem:[%s1 + $0x3c] sm:$0xf]
  %v159 = vld [vmem:[%s1 + $0x40] sm:$0xf]
  %v160 = vld [vmem:[%s1 + $0x44] sm:$0xf]
  %v161 = vld [vmem:[%s2] sm:$0x1]
  %v163 = vperm.slane %v161, 0
  %v293 = vunpack.c.l.b16 %v15
  %v294 = vunpack.c.h.b16 %v15
  %v295 = vunpack.c.l.b16 %v16
  %v296 = vunpack.c.h.b16 %v16
  %v297 = vunpack.c.l.b16 %v17
  %v298 = vunpack.c.h.b16 %v17
  %v299 = vunpack.c.l.b16 %v18
  %v300 = vunpack.c.h.b16 %v18
  %v301 = vunpack.c.l.b16 %v19
  %v302 = vunpack.c.h.b16 %v19
  %v303 = vunpack.c.l.b16 %v20
  %v304 = vunpack.c.h.b16 %v20
  %v305 = vunpack.c.l.b16 %v21
  %v306 = vunpack.c.h.b16 %v21
  %v307 = vunpack.c.l.b16 %v22
  %v308 = vunpack.c.h.b16 %v22
  %v309 = vunpack.c.l.b16 %v23
  %v310 = vunpack.c.h.b16 %v23
  %v311 = vunpack.c.l.b16 %v24
  %v312 = vunpack.c.h.b16 %v24
  %v313 = vunpack.c.l.b16 %v25
  %v314 = vunpack.c.h.b16 %v25
  %v315 = vunpack.c.l.b16 %v26
  %v316 = vunpack.c.h.b16 %v26
  %v317 = vunpack.c.l.b16 %v27
  %v318 = vunpack.c.h.b16 %v27
  %v319 = vunpack.c.l.b16 %v28
  %v320 = vunpack.c.h.b16 %v28
  %v321 = vunpack.c.l.b16 %v29
  %v322 = vunpack.c.h.b16 %v29
  %v323 = vunpack.c.l.b16 %v30
  %v324 = vunpack.c.h.b16 %v30
  %v325 = vunpack.c.l.b16 %v31
  %v326 = vunpack.c.h.b16 %v31
  %v327 = vunpack.c.l.b16 %v32
  %v328 = vunpack.c.h.b16 %v32
  %v329 = vunpack.c.l.b16 %v33
  %v330 = vunpack.c.h.b16 %v33
  %v331 = vunpack.c.l.b16 %v34
  %v332 = vunpack.c.h.b16 %v34
  %v333 = vunpack.c.l.b16 %v35
  %v334 = vunpack.c.h.b16 %v35
  %v335 = vunpack.c.l.b16 %v36
  %v336 = vunpack.c.h.b16 %v36
  %v337 = vunpack.c.l.b16 %v37
  %v338 = vunpack.c.h.b16 %v37
  %v339 = vunpack.c.l.b16 %v38
  %v340 = vunpack.c.h.b16 %v38
  %v341 = vunpack.c.l.b16 %v39
  %v342 = vunpack.c.h.b16 %v39
  %v343 = vunpack.c.l.b16 %v40
  %v344 = vunpack.c.h.b16 %v40
  %v345 = vunpack.c.l.b16 %v41
  %v346 = vunpack.c.h.b16 %v41
  %v347 = vunpack.c.l.b16 %v42
  %v348 = vunpack.c.h.b16 %v42
  %v349 = vunpack.c.l.b16 %v43
  %v350 = vunpack.c.h.b16 %v43
  %v351 = vunpack.c.l.b16 %v44
  %v352 = vunpack.c.h.b16 %v44
  %v353 = vunpack.c.l.b16 %v45
  %v354 = vunpack.c.h.b16 %v45
  %v355 = vunpack.c.l.b16 %v46
  %v356 = vunpack.c.h.b16 %v46
  %v357 = vunpack.c.l.b16 %v47
  %v358 = vunpack.c.h.b16 %v47
  %v359 = vunpack.c.l.b16 %v48
  %v360 = vunpack.c.h.b16 %v48
  %v361 = vunpack.c.l.b16 %v49
  %v362 = vunpack.c.h.b16 %v49
  %v363 = vunpack.c.l.b16 %v50
  %v364 = vunpack.c.h.b16 %v50
  %v365 = vunpack.c.l.b16 %v51
  %v366 = vunpack.c.h.b16 %v51
  %v367 = vunpack.c.l.b16 %v52
  %v368 = vunpack.c.h.b16 %v52
  %v369 = vunpack.c.l.b16 %v53
  %v370 = vunpack.c.h.b16 %v53
  %v371 = vunpack.c.l.b16 %v54
  %v372 = vunpack.c.h.b16 %v54
  %v373 = vunpack.c.l.b16 %v55
  %v374 = vunpack.c.h.b16 %v55
  %v375 = vunpack.c.l.b16 %v56
  %v376 = vunpack.c.h.b16 %v56
  %v377 = vunpack.c.l.b16 %v57
  %v378 = vunpack.c.h.b16 %v57
  %v379 = vunpack.c.l.b16 %v58
  %v380 = vunpack.c.h.b16 %v58
  %v381 = vunpack.c.l.b16 %v59
  %v382 = vunpack.c.h.b16 %v59
  %v383 = vunpack.c.l.b16 %v60
  %v384 = vunpack.c.h.b16 %v60
  %v385 = vunpack.c.l.b16 %v61
  %v386 = vunpack.c.h.b16 %v61
  %v387 = vunpack.c.l.b16 %v62
  %v388 = vunpack.c.h.b16 %v62
  %v389 = vunpack.c.l.b16 %v63
  %v390 = vunpack.c.h.b16 %v63
  %v391 = vunpack.c.l.b16 %v64
  %v392 = vunpack.c.h.b16 %v64
  %v393 = vunpack.c.l.b16 %v65
  %v394 = vunpack.c.h.b16 %v65
  %v395 = vunpack.c.l.b16 %v66
  %v396 = vunpack.c.h.b16 %v66
  %v397 = vunpack.c.l.b16 %v67
  %v398 = vunpack.c.h.b16 %v67
  %v399 = vunpack.c.l.b16 %v68
  %v400 = vunpack.c.h.b16 %v68
  %v401 = vunpack.c.l.b16 %v69
  %v402 = vunpack.c.h.b16 %v69
  %v403 = vunpack.c.l.b16 %v70
  %v404 = vunpack.c.h.b16 %v70
  %v405 = vunpack.c.l.b16 %v71
  %v406 = vunpack.c.h.b16 %v71
  %v407 = vunpack.c.l.b16 %v72
  %v408 = vunpack.c.h.b16 %v72
  %v409 = vunpack.c.l.b16 %v73
  %v410 = vunpack.c.h.b16 %v73
  %v411 = vunpack.c.l.b16 %v74
  %v412 = vunpack.c.h.b16 %v74
  %v413 = vunpack.c.l.b16 %v75
  %v414 = vunpack.c.h.b16 %v75
  %v415 = vunpack.c.l.b16 %v76
  %v416 = vunpack.c.h.b16 %v76
  %v417 = vunpack.c.l.b16 %v77
  %v418 = vunpack.c.h.b16 %v77
  %v419 = vunpack.c.l.b16 %v78
  %v420 = vunpack.c.h.b16 %v78
  %v421 = vunpack.c.l.b16 %v79
  %v422 = vunpack.c.h.b16 %v79
  %v423 = vunpack.c.l.b16 %v80
  %v424 = vunpack.c.h.b16 %v80
  %v425 = vunpack.c.l.b16 %v81
  %v426 = vunpack.c.h.b16 %v81
  %v427 = vunpack.c.l.b16 %v82
  %v428 = vunpack.c.h.b16 %v82
  %v429 = vunpack.c.l.b16 %v83
  %v430 = vunpack.c.h.b16 %v83
  %v431 = vunpack.c.l.b16 %v84
  %v432 = vunpack.c.h.b16 %v84
  %v433 = vunpack.c.l.b16 %v85
  %v434 = vunpack.c.h.b16 %v85
  %v435 = vunpack.c.l.b16 %v86
  %v436 = vunpack.c.h.b16 %v86
  %v437 = vunpack.c.l.b16 %v87
  %v438 = vunpack.c.h.b16 %v87
  %v439 = vunpack.c.l.b16 %v88
  %v440 = vunpack.c.h.b16 %v88
  %v441 = vunpack.c.l.b16 %v89
  %v442 = vunpack.c.h.b16 %v89
  %v443 = vunpack.c.l.b16 %v90
  %v444 = vunpack.c.h.b16 %v90
  %v445 = vunpack.c.l.b16 %v91
  %v446 = vunpack.c.h.b16 %v91
  %v447 = vunpack.c.l.b16 %v92
  %v448 = vunpack.c.h.b16 %v92
  %v449 = vunpack.c.l.b16 %v93
  %v450 = vunpack.c.h.b16 %v93
  %v451 = vunpack.c.l.b16 %v94
  %v452 = vunpack.c.h.b16 %v94
  %v453 = vunpack.c.l.b16 %v95
  %v454 = vunpack.c.h.b16 %v95
  %v455 = vunpack.c.l.b16 %v96
  %v456 = vunpack.c.h.b16 %v96
  %v457 = vunpack.c.l.b16 %v97
  %v458 = vunpack.c.h.b16 %v97
  %v459 = vunpack.c.l.b16 %v98
  %v460 = vunpack.c.h.b16 %v98
  %v461 = vunpack.c.l.b16 %v99
  %v462 = vunpack.c.h.b16 %v99
  %v463 = vunpack.c.l.b16 %v100
  %v464 = vunpack.c.h.b16 %v100
  %v465 = vunpack.c.l.b16 %v101
  %v466 = vunpack.c.h.b16 %v101
  %v467 = vunpack.c.l.b16 %v102
  %v468 = vunpack.c.h.b16 %v102
  %v469 = vunpack.c.l.b16 %v103
  %v470 = vunpack.c.h.b16 %v103
  %v471 = vunpack.c.l.b16 %v104
  %v472 = vunpack.c.h.b16 %v104
  %v473 = vunpack.c.l.b16 %v105
  %v474 = vunpack.c.h.b16 %v105
  %v475 = vunpack.c.l.b16 %v106
  %v476 = vunpack.c.h.b16 %v106
  %v477 = vunpack.c.l.b16 %v107
  %v478 = vunpack.c.h.b16 %v107
  %v479 = vunpack.c.l.b16 %v108
  %v480 = vunpack.c.h.b16 %v108
  %v481 = vunpack.c.l.b16 %v109
  %v482 = vunpack.c.h.b16 %v109
  %v483 = vunpack.c.l.b16 %v110
  %v484 = vunpack.c.h.b16 %v110
  %v485 = vunpack.c.l.b16 %v111
  %v486 = vunpack.c.h.b16 %v111
  %v487 = vunpack.c.l.b16 %v112
  %v488 = vunpack.c.h.b16 %v112
  %v489 = vunpack.c.l.b16 %v113
  %v490 = vunpack.c.h.b16 %v113
  %v491 = vunpack.c.l.b16 %v114
  %v492 = vunpack.c.h.b16 %v114
  %v493 = vunpack.c.l.b16 %v115
  %v494 = vunpack.c.h.b16 %v115
  %v495 = vunpack.c.l.b16 %v116
  %v496 = vunpack.c.h.b16 %v116
  %v497 = vunpack.c.l.b16 %v117
  %v498 = vunpack.c.h.b16 %v117
  %v499 = vunpack.c.l.b16 %v118
  %v500 = vunpack.c.h.b16 %v118
  %v501 = vunpack.c.l.b16 %v119
  %v502 = vunpack.c.h.b16 %v119
  %v503 = vunpack.c.l.b16 %v120
  %v504 = vunpack.c.h.b16 %v120
  %v505 = vunpack.c.l.b16 %v121
  %v506 = vunpack.c.h.b16 %v121
  %v507 = vunpack.c.l.b16 %v122
  %v508 = vunpack.c.h.b16 %v122
  %v509 = vunpack.c.l.b16 %v123
  %v510 = vunpack.c.h.b16 %v123
  %v511 = vunpack.c.l.b16 %v124
  %v512 = vunpack.c.h.b16 %v124
  %v513 = vunpack.c.l.b16 %v125
  %v514 = vunpack.c.h.b16 %v125
  %v515 = vunpack.c.l.b16 %v126
  %v516 = vunpack.c.h.b16 %v126
  %v517 = vunpack.c.l.b16 %v127
  %v518 = vunpack.c.h.b16 %v127
  %v519 = vunpack.c.l.b16 %v128
  %v520 = vunpack.c.h.b16 %v128
  %v521 = vunpack.c.l.b16 %v129
  %v522 = vunpack.c.h.b16 %v129
  %v523 = vunpack.c.l.b16 %v130
  %v524 = vunpack.c.h.b16 %v130
  %v525 = vunpack.c.l.b16 %v131
  %v526 = vunpack.c.h.b16 %v131
  %v527 = vunpack.c.l.b16 %v132
  %v528 = vunpack.c.h.b16 %v132
  %v529 = vunpack.c.l.b16 %v133
  %v530 = vunpack.c.h.b16 %v133
  %v531 = vunpack.c.l.b16 %v134
  %v532 = vunpack.c.h.b16 %v134
  %v533 = vunpack.c.l.b16 %v135
  %v534 = vunpack.c.h.b16 %v135
  %v535 = vunpack.c.l.b16 %v136
  %v536 = vunpack.c.h.b16 %v136
  %v537 = vunpack.c.l.b16 %v137
  %v538 = vunpack.c.h.b16 %v137
  %v539 = vunpack.c.l.b16 %v138
  %v540 = vunpack.c.h.b16 %v138
  %v541 = vunpack.c.l.b16 %v139
  %v542 = vunpack.c.h.b16 %v139
  %v543 = vunpack.c.l.b16 %v140
  %v544 = vunpack.c.h.b16 %v140
  %v545 = vunpack.c.l.b16 %v141
  %v546 = vunpack.c.h.b16 %v141
  %v547 = vunpack.c.l.b16 %v142
  %v548 = vunpack.c.h.b16 %v142
  %v549 = vpack.c.b16 %v295, %v293
  %v550 = vpack.c.b16 %v296, %v294
  %v551 = vpack.c.b16 %v299, %v297
  %v552 = vpack.c.b16 %v300, %v298
  %v553 = vpack.c.b16 %v303, %v301
  %v554 = vpack.c.b16 %v304, %v302
  %v555 = vpack.c.b16 %v307, %v305
  %v556 = vpack.c.b16 %v308, %v306
  %v557 = vpack.c.b16 %v311, %v309
  %v558 = vpack.c.b16 %v312, %v310
  %v559 = vpack.c.b16 %v315, %v313
  %v560 = vpack.c.b16 %v316, %v314
  %v561 = vpack.c.b16 %v319, %v317
  %v562 = vpack.c.b16 %v320, %v318
  %v563 = vpack.c.b16 %v323, %v321
  %v564 = vpack.c.b16 %v324, %v322
  %v565 = vpack.c.b16 %v327, %v325
  %v566 = vpack.c.b16 %v328, %v326
  %v567 = vpack.c.b16 %v331, %v329
  %v568 = vpack.c.b16 %v332, %v330
  %v569 = vpack.c.b16 %v335, %v333
  %v570 = vpack.c.b16 %v336, %v334
  %v571 = vpack.c.b16 %v339, %v337
  %v572 = vpack.c.b16 %v340, %v338
  %v573 = vpack.c.b16 %v343, %v341
  %v574 = vpack.c.b16 %v344, %v342
  %v575 = vpack.c.b16 %v347, %v345
  %v576 = vpack.c.b16 %v348, %v346
  %v577 = vpack.c.b16 %v351, %v349
  %v578 = vpack.c.b16 %v352, %v350
  %v579 = vpack.c.b16 %v355, %v353
  %v580 = vpack.c.b16 %v356, %v354
  %v581 = vpack.c.b16 %v359, %v357
  %v582 = vpack.c.b16 %v360, %v358
  %v583 = vpack.c.b16 %v363, %v361
  %v584 = vpack.c.b16 %v364, %v362
  %v585 = vpack.c.b16 %v367, %v365
  %v586 = vpack.c.b16 %v368, %v366
  %v587 = vpack.c.b16 %v371, %v369
  %v588 = vpack.c.b16 %v372, %v370
  %v589 = vpack.c.b16 %v375, %v373
  %v590 = vpack.c.b16 %v376, %v374
  %v591 = vpack.c.b16 %v379, %v377
  %v592 = vpack.c.b16 %v380, %v378
  %v593 = vpack.c.b16 %v383, %v381
  %v594 = vpack.c.b16 %v384, %v382
  %v595 = vpack.c.b16 %v387, %v385
  %v596 = vpack.c.b16 %v388, %v386
  %v597 = vpack.c.b16 %v391, %v389
  %v598 = vpack.c.b16 %v392, %v390
  %v599 = vpack.c.b16 %v395, %v393
  %v600 = vpack.c.b16 %v396, %v394
  %v601 = vpack.c.b16 %v399, %v397
  %v602 = vpack.c.b16 %v400, %v398
  %v603 = vpack.c.b16 %v403, %v401
  %v604 = vpack.c.b16 %v404, %v402
  %v605 = vpack.c.b16 %v407, %v405
  %v606 = vpack.c.b16 %v408, %v406
  %v607 = vpack.c.b16 %v411, %v409
  %v608 = vpack.c.b16 %v412, %v410
  %v609 = vpack.c.b16 %v415, %v413
  %v610 = vpack.c.b16 %v416, %v414
  %v611 = vpack.c.b16 %v419, %v417
  %v612 = vpack.c.b16 %v420, %v418
  %v613 = vpack.c.b16 %v423, %v421
  %v614 = vpack.c.b16 %v424, %v422
  %v615 = vpack.c.b16 %v427, %v425
  %v616 = vpack.c.b16 %v428, %v426
  %v617 = vpack.c.b16 %v431, %v429
  %v618 = vpack.c.b16 %v432, %v430
  %v619 = vpack.c.b16 %v435, %v433
  %v620 = vpack.c.b16 %v436, %v434
  %v621 = vpack.c.b16 %v439, %v437
  %v622 = vpack.c.b16 %v440, %v438
  %v623 = vpack.c.b16 %v443, %v441
  %v624 = vpack.c.b16 %v444, %v442
  %v625 = vpack.c.b16 %v447, %v445
  %v626 = vpack.c.b16 %v448, %v446
  %v627 = vpack.c.b16 %v451, %v449
  %v628 = vpack.c.b16 %v452, %v450
  %v629 = vpack.c.b16 %v455, %v453
  %v630 = vpack.c.b16 %v456, %v454
  %v631 = vpack.c.b16 %v459, %v457
  %v632 = vpack.c.b16 %v460, %v458
  %v633 = vpack.c.b16 %v463, %v461
  %v634 = vpack.c.b16 %v464, %v462
  %v635 = vpack.c.b16 %v467, %v465
  %v636 = vpack.c.b16 %v468, %v466
  %v637 = vpack.c.b16 %v471, %v469
  %v638 = vpack.c.b16 %v472, %v470
  %v639 = vpack.c.b16 %v475, %v473
  %v640 = vpack.c.b16 %v476, %v474
  %v641 = vpack.c.b16 %v479, %v477
  %v642 = vpack.c.b16 %v480, %v478
  %v643 = vpack.c.b16 %v483, %v481
  %v644 = vpack.c.b16 %v484, %v482
  %v645 = vpack.c.b16 %v487, %v485
  %v646 = vpack.c.b16 %v488, %v486
  %v647 = vpack.c.b16 %v491, %v489
  %v648 = vpack.c.b16 %v492, %v490
  %v649 = vpack.c.b16 %v495, %v493
  %v650 = vpack.c.b16 %v496, %v494
  %v651 = vpack.c.b16 %v499, %v497
  %v652 = vpack.c.b16 %v500, %v498
  %v653 = vpack.c.b16 %v503, %v501
  %v654 = vpack.c.b16 %v504, %v502
  %v655 = vpack.c.b16 %v507, %v505
  %v656 = vpack.c.b16 %v508, %v506
  %v657 = vpack.c.b16 %v511, %v509
  %v658 = vpack.c.b16 %v512, %v510
  %v659 = vpack.c.b16 %v515, %v513
  %v660 = vpack.c.b16 %v516, %v514
  %v661 = vpack.c.b16 %v519, %v517
  %v662 = vpack.c.b16 %v520, %v518
  %v663 = vpack.c.b16 %v523, %v521
  %v664 = vpack.c.b16 %v524, %v522
  %v665 = vpack.c.b16 %v527, %v525
  %v666 = vpack.c.b16 %v528, %v526
  %v667 = vpack.c.b16 %v531, %v529
  %v668 = vpack.c.b16 %v532, %v530
  %v669 = vpack.c.b16 %v535, %v533
  %v670 = vpack.c.b16 %v536, %v534
  %v671 = vpack.c.b16 %v539, %v537
  %v672 = vpack.c.b16 %v540, %v538
  %v673 = vpack.c.b16 %v543, %v541
  %v674 = vpack.c.b16 %v544, %v542
  %v675 = vpack.c.b16 %v547, %v545
  %v676 = vpack.c.b16 %v548, %v546
  %v759 = vunpack.c.l.b16 %v143
  %v760 = vunpack.c.l.b16 %v144
  %v761 = vunpack.c.l.b16 %v145
  %v762 = vunpack.c.l.b16 %v146
  %v763 = vunpack.c.l.b16 %v147
  %v764 = vunpack.c.l.b16 %v148
  %v765 = vunpack.c.l.b16 %v149
  %v766 = vunpack.c.l.b16 %v150
  %v767 = vunpack.c.l.b16 %v151
  %v768 = vunpack.c.l.b16 %v152
  %v769 = vunpack.c.l.b16 %v153
  %v770 = vunpack.c.l.b16 %v154
  %v771 = vunpack.c.l.b16 %v155
  %v772 = vunpack.c.l.b16 %v156
  %v773 = vunpack.c.l.b16 %v157
  %v774 = vunpack.c.l.b16 %v158
  %v775 = vunpack.c.l.b16 %v159
  %v776 = vunpack.c.l.b16 %v160
  %v777 = vpack.c.b16 %v760, %v759
  %v778 = vpack.c.b16 %v762, %v761
  %v779 = vpack.c.b16 %v764, %v763
  %v780 = vpack.c.b16 %v766, %v765
  %v781 = vpack.c.b16 %v768, %v767
  %v782 = vpack.c.b16 %v770, %v769
  %v783 = vpack.c.b16 %v772, %v771
  %v784 = vpack.c.b16 %v774, %v773
  %v785 = vpack.c.b16 %v776, %v775
  %vm795 = vcmask 130048
  %v797 = vsel %vm795, %v550, 0
  %v800 = vsel %vm795, %v552, 0
  %v803 = vsel %vm795, %v554, 0
  %v806 = vsel %vm795, %v556, 0
  %v809 = vsel %vm795, %v558, 0
  %v812 = vsel %vm795, %v560, 0
  %v815 = vsel %vm795, %v562, 0
  %v818 = vsel %vm795, %v564, 0
  %v821 = vsel %vm795, %v566, 0
  %v824 = vsel %vm795, %v568, 0
  %v827 = vsel %vm795, %v570, 0
  %v830 = vsel %vm795, %v572, 0
  %v833 = vsel %vm795, %v574, 0
  %v836 = vsel %vm795, %v576, 0
  %v839 = vsel %vm795, %v578, 0
  %v842 = vsel %vm795, %v580, 0
  %v845 = vsel %vm795, %v582, 0
  %v848 = vsel %vm795, %v584, 0
  %v851 = vsel %vm795, %v586, 0
  %v854 = vsel %vm795, %v588, 0
  %v857 = vsel %vm795, %v590, 0
  %v860 = vsel %vm795, %v592, 0
  %v863 = vsel %vm795, %v594, 0
  %v866 = vsel %vm795, %v596, 0
  %v869 = vsel %vm795, %v598, 0
  %v872 = vsel %vm795, %v600, 0
  %v875 = vsel %vm795, %v602, 0
  %v878 = vsel %vm795, %v604, 0
  %v881 = vsel %vm795, %v606, 0
  %v884 = vsel %vm795, %v608, 0
  %v887 = vsel %vm795, %v610, 0
  %v890 = vsel %vm795, %v612, 0
  %v893 = vsel %vm795, %v614, 0
  %v896 = vsel %vm795, %v616, 0
  %v899 = vsel %vm795, %v618, 0
  %v902 = vsel %vm795, %v620, 0
  %v905 = vsel %vm795, %v622, 0
  %v908 = vsel %vm795, %v624, 0
  %v911 = vsel %vm795, %v626, 0
  %v914 = vsel %vm795, %v628, 0
  %v917 = vsel %vm795, %v630, 0
  %v920 = vsel %vm795, %v632, 0
  %v923 = vsel %vm795, %v634, 0
  %v926 = vsel %vm795, %v636, 0
  %v929 = vsel %vm795, %v638, 0
  %v932 = vsel %vm795, %v640, 0
  %v935 = vsel %vm795, %v642, 0
  %v938 = vsel %vm795, %v644, 0
  %v941 = vsel %vm795, %v646, 0
  %v944 = vsel %vm795, %v648, 0
  %v947 = vsel %vm795, %v650, 0
  %v950 = vsel %vm795, %v652, 0
  %v953 = vsel %vm795, %v654, 0
  %v956 = vsel %vm795, %v656, 0
  %v959 = vsel %vm795, %v658, 0
  %v962 = vsel %vm795, %v660, 0
  %v965 = vsel %vm795, %v662, 0
  %v968 = vsel %vm795, %v664, 0
  %v971 = vsel %vm795, %v666, 0
  %v974 = vsel %vm795, %v668, 0
  %v977 = vsel %vm795, %v670, 0
  %v980 = vsel %vm795, %v672, 0
  %v983 = vsel %vm795, %v674, 0
  %v986 = vsel %vm795, %v676, 0
  %988 = vmatpush.bf16.msra.mxu0 %v784
  %989 = vmatpush.bf16.msra.mxu0 %v783
  %990 = vmatpush.bf16.msra.mxu0 %v782
  %991 = vmatpush.bf16.msra.mxu0 %v781
  %992 = vmatpush.bf16.msra.mxu0 %v780
  %993 = vmatpush.bf16.msra.mxu0 %v779
  %994 = vmatpush.bf16.msra.mxu0 %v778
  %995 = vmatpush.bf16.msra.mxu0 %v777
  %996 = vmatmul.bf16.gmra.mxu0 %v549
  %v997 = vpop.f32.mrf.mxu0
  %v998 = vadd.f32 %v163, %v997
  %v999 = vpop.f32.mrf.mxu0
  %v1000 = vadd.f32 %v163, %v999
  %1001 = vmatmul.bf16.gmra.mxu0 %v551
  %v1002 = vpop.f32.mrf.mxu0
  %v1003 = vadd.f32 %v163, %v1002
  %v1004 = vpop.f32.mrf.mxu0
  %v1005 = vadd.f32 %v163, %v1004
  %1006 = vmatmul.bf16.gmra.mxu0 %v553
  %v1007 = vpop.f32.mrf.mxu0
  %v1008 = vadd.f32 %v163, %v1007
  %v1009 = vpop.f32.mrf.mxu0
  %v1010 = vadd.f32 %v163, %v1009
  %1011 = vmatmul.bf16.gmra.mxu0 %v555
  %v1012 = vpop.f32.mrf.mxu0
  %v1013 = vadd.f32 %v163, %v1012
  %v1014 = vpop.f32.mrf.mxu0
  %v1015 = vadd.f32 %v163, %v1014
  %1016 = vmatmul.bf16.gmra.mxu0 %v557
  %v1017 = vpop.f32.mrf.mxu0
  %v1018 = vadd.f32 %v163, %v1017
  %v1019 = vpop.f32.mrf.mxu0
  %v1020 = vadd.f32 %v163, %v1019
  %1021 = vmatmul.bf16.gmra.mxu0 %v559
  %v1022 = vpop.f32.mrf.mxu0
  %v1023 = vadd.f32 %v163, %v1022
  %v1024 = vpop.f32.mrf.mxu0
  %v1025 = vadd.f32 %v163, %v1024
  %1026 = vmatmul.bf16.gmra.mxu0 %v561
  %v1027 = vpop.f32.mrf.mxu0
  %v1028 = vadd.f32 %v163, %v1027
  %v1029 = vpop.f32.mrf.mxu0
  %v1030 = vadd.f32 %v163, %v1029
  %1031 = vmatmul.bf16.gmra.mxu0 %v563
  %v1032 = vpop.f32.mrf.mxu0
  %v1033 = vadd.f32 %v163, %v1032
  %v1034 = vpop.f32.mrf.mxu0
  %v1035 = vadd.f32 %v163, %v1034
  %1036 = vmatmul.bf16.gmra.mxu0 %v565
  %v1037 = vpop.f32.mrf.mxu0
  %v1038 = vadd.f32 %v163, %v1037
  %v1039 = vpop.f32.mrf.mxu0
  %v1040 = vadd.f32 %v163, %v1039
  %1041 = vmatmul.bf16.gmra.mxu0 %v567
  %v1042 = vpop.f32.mrf.mxu0
  %v1043 = vadd.f32 %v163, %v1042
  %v1044 = vpop.f32.mrf.mxu0
  %v1045 = vadd.f32 %v163, %v1044
  %1046 = vmatmul.bf16.gmra.mxu0 %v569
  %v1047 = vpop.f32.mrf.mxu0
  %v1048 = vadd.f32 %v163, %v1047
  %v1049 = vpop.f32.mrf.mxu0
  %v1050 = vadd.f32 %v163, %v1049
  %1051 = vmatmul.bf16.gmra.mxu0 %v571
  %v1052 = vpop.f32.mrf.mxu0
  %v1053 = vadd.f32 %v163, %v1052
  %v1054 = vpop.f32.mrf.mxu0
  %v1055 = vadd.f32 %v163, %v1054
  %1056 = vmatmul.bf16.gmra.mxu0 %v573
  %v1057 = vpop.f32.mrf.mxu0
  %v1058 = vadd.f32 %v163, %v1057
  %v1059 = vpop.f32.mrf.mxu0
  %v1060 = vadd.f32 %v163, %v1059
  %1061 = vmatmul.bf16.gmra.mxu0 %v575
  %v1062 = vpop.f32.mrf.mxu0
  %v1063 = vadd.f32 %v163, %v1062
  %v1064 = vpop.f32.mrf.mxu0
  %v1065 = vadd.f32 %v163, %v1064
  %1066 = vmatmul.bf16.gmra.mxu0 %v577
  %v1067 = vpop.f32.mrf.mxu0
  %v1068 = vadd.f32 %v163, %v1067
  %v1069 = vpop.f32.mrf.mxu0
  %v1070 = vadd.f32 %v163, %v1069
  %1071 = vmatmul.bf16.gmra.mxu0 %v579
  %v1072 = vpop.f32.mrf.mxu0
  %v1073 = vadd.f32 %v163, %v1072
  %v1074 = vpop.f32.mrf.mxu0
  %v1075 = vadd.f32 %v163, %v1074
  %1076 = vmatmul.bf16.gmra.mxu0 %v581
  %v1077 = vpop.f32.mrf.mxu0
  %v1078 = vadd.f32 %v163, %v1077
  %v1079 = vpop.f32.mrf.mxu0
  %v1080 = vadd.f32 %v163, %v1079
  %1081 = vmatmul.bf16.gmra.mxu0 %v583
  %v1082 = vpop.f32.mrf.mxu0
  %v1083 = vadd.f32 %v163, %v1082
  %v1084 = vpop.f32.mrf.mxu0
  %v1085 = vadd.f32 %v163, %v1084
  %1086 = vmatmul.bf16.gmra.mxu0 %v585
  %v1087 = vpop.f32.mrf.mxu0
  %v1088 = vadd.f32 %v163, %v1087
  %v1089 = vpop.f32.mrf.mxu0
  %v1090 = vadd.f32 %v163, %v1089
  %1091 = vmatmul.bf16.gmra.mxu0 %v587
  %v1092 = vpop.f32.mrf.mxu0
  %v1093 = vadd.f32 %v163, %v1092
  %v1094 = vpop.f32.mrf.mxu0
  %v1095 = vadd.f32 %v163, %v1094
  %1096 = vmatmul.bf16.gmra.mxu0 %v589
  %v1097 = vpop.f32.mrf.mxu0
  %v1098 = vadd.f32 %v163, %v1097
  %v1099 = vpop.f32.mrf.mxu0
  %v1100 = vadd.f32 %v163, %v1099
  %1101 = vmatmul.bf16.gmra.mxu0 %v591
  %v1102 = vpop.f32.mrf.mxu0
  %v1103 = vadd.f32 %v163, %v1102
  %v1104 = vpop.f32.mrf.mxu0
  %v1105 = vadd.f32 %v163, %v1104
  %1106 = vmatmul.bf16.gmra.mxu0 %v593
  %v1107 = vpop.f32.mrf.mxu0
  %v1108 = vadd.f32 %v163, %v1107
  %v1109 = vpop.f32.mrf.mxu0
  %v1110 = vadd.f32 %v163, %v1109
  %1111 = vmatmul.bf16.gmra.mxu0 %v595
  %v1112 = vpop.f32.mrf.mxu0
  %v1113 = vadd.f32 %v163, %v1112
  %v1114 = vpop.f32.mrf.mxu0
  %v1115 = vadd.f32 %v163, %v1114
  %1116 = vmatmul.bf16.gmra.mxu0 %v597
  %v1117 = vpop.f32.mrf.mxu0
  %v1118 = vadd.f32 %v163, %v1117
  %v1119 = vpop.f32.mrf.mxu0
  %v1120 = vadd.f32 %v163, %v1119
  %1121 = vmatmul.bf16.gmra.mxu0 %v599
  %v1122 = vpop.f32.mrf.mxu0
  %v1123 = vadd.f32 %v163, %v1122
  %v1124 = vpop.f32.mrf.mxu0
  %v1125 = vadd.f32 %v163, %v1124
  %1126 = vmatmul.bf16.gmra.mxu0 %v601
  %v1127 = vpop.f32.mrf.mxu0
  %v1128 = vadd.f32 %v163, %v1127
  %v1129 = vpop.f32.mrf.mxu0
  %v1130 = vadd.f32 %v163, %v1129
  %1131 = vmatmul.bf16.gmra.mxu0 %v603
  %v1132 = vpop.f32.mrf.mxu0
  %v1133 = vadd.f32 %v163, %v1132
  %v1134 = vpop.f32.mrf.mxu0
  %v1135 = vadd.f32 %v163, %v1134
  %1136 = vmatmul.bf16.gmra.mxu0 %v605
  %v1137 = vpop.f32.mrf.mxu0
  %v1138 = vadd.f32 %v163, %v1137
  %v1139 = vpop.f32.mrf.mxu0
  %v1140 = vadd.f32 %v163, %v1139
  %1141 = vmatmul.bf16.gmra.mxu0 %v607
  %v1142 = vpop.f32.mrf.mxu0
  %v1143 = vadd.f32 %v163, %v1142
  %v1144 = vpop.f32.mrf.mxu0
  %v1145 = vadd.f32 %v163, %v1144
  %1146 = vmatmul.bf16.gmra.mxu0 %v609
  %v1147 = vpop.f32.mrf.mxu0
  %v1148 = vadd.f32 %v163, %v1147
  %v1149 = vpop.f32.mrf.mxu0
  %v1150 = vadd.f32 %v163, %v1149
  %1151 = vmatmul.bf16.gmra.mxu0 %v611
  %v1152 = vpop.f32.mrf.mxu0
  %v1153 = vadd.f32 %v163, %v1152
  %v1154 = vpop.f32.mrf.mxu0
  %v1155 = vadd.f32 %v163, %v1154
  %1156 = vmatmul.bf16.gmra.mxu0 %v613
  %v1157 = vpop.f32.mrf.mxu0
  %v1158 = vadd.f32 %v163, %v1157
  %v1159 = vpop.f32.mrf.mxu0
  %v1160 = vadd.f32 %v163, %v1159
  %1161 = vmatmul.bf16.gmra.mxu0 %v615
  %v1162 = vpop.f32.mrf.mxu0
  %v1163 = vadd.f32 %v163, %v1162
  %v1164 = vpop.f32.mrf.mxu0
  %v1165 = vadd.f32 %v163, %v1164
  %1166 = vmatmul.bf16.gmra.mxu0 %v617
  %v1167 = vpop.f32.mrf.mxu0
  %v1168 = vadd.f32 %v163, %v1167
  %v1169 = vpop.f32.mrf.mxu0
  %v1170 = vadd.f32 %v163, %v1169
  %1171 = vmatmul.bf16.gmra.mxu0 %v619
  %v1172 = vpop.f32.mrf.mxu0
  %v1173 = vadd.f32 %v163, %v1172
  %v1174 = vpop.f32.mrf.mxu0
  %v1175 = vadd.f32 %v163, %v1174
  %1176 = vmatmul.bf16.gmra.mxu0 %v621
  %v1177 = vpop.f32.mrf.mxu0
  %v1178 = vadd.f32 %v163, %v1177
  %v1179 = vpop.f32.mrf.mxu0
  %v1180 = vadd.f32 %v163, %v1179
  %1181 = vmatmul.bf16.gmra.mxu0 %v623
  %v1182 = vpop.f32.mrf.mxu0
  %v1183 = vadd.f32 %v163, %v1182
  %v1184 = vpop.f32.mrf.mxu0
  %v1185 = vadd.f32 %v163, %v1184
  %1186 = vmatmul.bf16.gmra.mxu0 %v625
  %v1187 = vpop.f32.mrf.mxu0
  %v1188 = vadd.f32 %v163, %v1187
  %v1189 = vpop.f32.mrf.mxu0
  %v1190 = vadd.f32 %v163, %v1189
  %1191 = vmatmul.bf16.gmra.mxu0 %v627
  %v1192 = vpop.f32.mrf.mxu0
  %v1193 = vadd.f32 %v163, %v1192
  %v1194 = vpop.f32.mrf.mxu0
  %v1195 = vadd.f32 %v163, %v1194
  %1196 = vmatmul.bf16.gmra.mxu0 %v629
  %v1197 = vpop.f32.mrf.mxu0
  %v1198 = vadd.f32 %v163, %v1197
  %v1199 = vpop.f32.mrf.mxu0
  %v1200 = vadd.f32 %v163, %v1199
  %1201 = vmatmul.bf16.gmra.mxu0 %v631
  %v1202 = vpop.f32.mrf.mxu0
  %v1203 = vadd.f32 %v163, %v1202
  %v1204 = vpop.f32.mrf.mxu0
  %v1205 = vadd.f32 %v163, %v1204
  %1206 = vmatmul.bf16.gmra.mxu0 %v633
  %v1207 = vpop.f32.mrf.mxu0
  %v1208 = vadd.f32 %v163, %v1207
  %v1209 = vpop.f32.mrf.mxu0
  %v1210 = vadd.f32 %v163, %v1209
  %1211 = vmatmul.bf16.gmra.mxu0 %v635
  %v1212 = vpop.f32.mrf.mxu0
  %v1213 = vadd.f32 %v163, %v1212
  %v1214 = vpop.f32.mrf.mxu0
  %v1215 = vadd.f32 %v163, %v1214
  %1216 = vmatmul.bf16.gmra.mxu0 %v637
  %v1217 = vpop.f32.mrf.mxu0
  %v1218 = vadd.f32 %v163, %v1217
  %v1219 = vpop.f32.mrf.mxu0
  %v1220 = vadd.f32 %v163, %v1219
  %1221 = vmatmul.bf16.gmra.mxu0 %v639
  %v1222 = vpop.f32.mrf.mxu0
  %v1223 = vadd.f32 %v163, %v1222
  %v1224 = vpop.f32.mrf.mxu0
  %v1225 = vadd.f32 %v163, %v1224
  %1226 = vmatmul.bf16.gmra.mxu0 %v641
  %v1227 = vpop.f32.mrf.mxu0
  %v1228 = vadd.f32 %v163, %v1227
  %v1229 = vpop.f32.mrf.mxu0
  %v1230 = vadd.f32 %v163, %v1229
  %1231 = vmatmul.bf16.gmra.mxu0 %v643
  %v1232 = vpop.f32.mrf.mxu0
  %v1233 = vadd.f32 %v163, %v1232
  %v1234 = vpop.f32.mrf.mxu0
  %v1235 = vadd.f32 %v163, %v1234
  %1236 = vmatmul.bf16.gmra.mxu0 %v645
  %v1237 = vpop.f32.mrf.mxu0
  %v1238 = vadd.f32 %v163, %v1237
  %v1239 = vpop.f32.mrf.mxu0
  %v1240 = vadd.f32 %v163, %v1239
  %1241 = vmatmul.bf16.gmra.mxu0 %v647
  %v1242 = vpop.f32.mrf.mxu0
  %v1243 = vadd.f32 %v163, %v1242
  %v1244 = vpop.f32.mrf.mxu0
  %v1245 = vadd.f32 %v163, %v1244
  %1246 = vmatmul.bf16.gmra.mxu0 %v649
  %v1247 = vpop.f32.mrf.mxu0
  %v1248 = vadd.f32 %v163, %v1247
  %v1249 = vpop.f32.mrf.mxu0
  %v1250 = vadd.f32 %v163, %v1249
  %1251 = vmatmul.bf16.gmra.mxu0 %v651
  %v1252 = vpop.f32.mrf.mxu0
  %v1253 = vadd.f32 %v163, %v1252
  %v1254 = vpop.f32.mrf.mxu0
  %v1255 = vadd.f32 %v163, %v1254
  %1256 = vmatmul.bf16.gmra.mxu0 %v653
  %v1257 = vpop.f32.mrf.mxu0
  %v1258 = vadd.f32 %v163, %v1257
  %v1259 = vpop.f32.mrf.mxu0
  %v1260 = vadd.f32 %v163, %v1259
  %1261 = vmatmul.bf16.gmra.mxu0 %v655
  %v1262 = vpop.f32.mrf.mxu0
  %v1263 = vadd.f32 %v163, %v1262
  %v1264 = vpop.f32.mrf.mxu0
  %v1265 = vadd.f32 %v163, %v1264
  %1266 = vmatmul.bf16.gmra.mxu0 %v657
  %v1267 = vpop.f32.mrf.mxu0
  %v1268 = vadd.f32 %v163, %v1267
  %v1269 = vpop.f32.mrf.mxu0
  %v1270 = vadd.f32 %v163, %v1269
  %1271 = vmatmul.bf16.gmra.mxu0 %v659
  %v1272 = vpop.f32.mrf.mxu0
  %v1273 = vadd.f32 %v163, %v1272
  %v1274 = vpop.f32.mrf.mxu0
  %v1275 = vadd.f32 %v163, %v1274
  %1276 = vmatmul.bf16.gmra.mxu0 %v661
  %v1277 = vpop.f32.mrf.mxu0
  %v1278 = vadd.f32 %v163, %v1277
  %v1279 = vpop.f32.mrf.mxu0
  %v1280 = vadd.f32 %v163, %v1279
  %1281 = vmatmul.bf16.gmra.mxu0 %v663
  %v1282 = vpop.f32.mrf.mxu0
  %v1283 = vadd.f32 %v163, %v1282
  %v1284 = vpop.f32.mrf.mxu0
  %v1285 = vadd.f32 %v163, %v1284
  %1286 = vmatmul.bf16.gmra.mxu0 %v665
  %v1287 = vpop.f32.mrf.mxu0
  %v1288 = vadd.f32 %v163, %v1287
  %v1289 = vpop.f32.mrf.mxu0
  %v1290 = vadd.f32 %v163, %v1289
  %1291 = vmatmul.bf16.gmra.mxu0 %v667
  %v1292 = vpop.f32.mrf.mxu0
  %v1293 = vadd.f32 %v163, %v1292
  %v1294 = vpop.f32.mrf.mxu0
  %v1295 = vadd.f32 %v163, %v1294
  %1296 = vmatmul.bf16.gmra.mxu0 %v669
  %v1297 = vpop.f32.mrf.mxu0
  %v1298 = vadd.f32 %v163, %v1297
  %v1299 = vpop.f32.mrf.mxu0
  %v1300 = vadd.f32 %v163, %v1299
  %1301 = vmatmul.bf16.gmra.mxu0 %v671
  %v1302 = vpop.f32.mrf.mxu0
  %v1303 = vadd.f32 %v163, %v1302
  %v1304 = vpop.f32.mrf.mxu0
  %v1305 = vadd.f32 %v163, %v1304
  %1306 = vmatmul.bf16.gmra.mxu0 %v673
  %v1307 = vpop.f32.mrf.mxu0
  %v1308 = vadd.f32 %v163, %v1307
  %v1309 = vpop.f32.mrf.mxu0
  %v1310 = vadd.f32 %v163, %v1309
  %1311 = vmatmul.bf16.gmra.mxu0 %v675
  %v1312 = vpop.f32.mrf.mxu0
  %v1313 = vadd.f32 %v163, %v1312
  %v1314 = vpop.f32.mrf.mxu0
  %v1315 = vadd.f32 %v163, %v1314
  %1316 = vdwg.mxu0
  %1317 = vmatpush.bf16.msra.mxu0 0
  %1318 = vmatpush.bf16.msra.mxu0 0
  %1319 = vmatpush.bf16.msra.mxu0 0
  %1320 = vmatpush.bf16.msra.mxu0 0
  %1321 = vmatpush.bf16.msra.mxu0 0
  %1322 = vmatpush.bf16.msra.mxu0 0
  %1323 = vmatpush.bf16.msra.mxu0 0
  %1324 = vmatpush.bf16.msra.mxu0 %v785
  %1325 = vmatmul.bf16.gmra.mxu0 %v797
  %v1326 = vpop.f32.mrf.mxu0
  %v1327 = vadd.f32 %v998, %v1326
  %v1328 = vpop.f32.mrf.mxu0
  %v1329 = vadd.f32 %v1000, %v1328
  %1330 = vmatmul.bf16.gmra.mxu0 %v800
  %v1331 = vpop.f32.mrf.mxu0
  %v1332 = vadd.f32 %v1003, %v1331
  %v1333 = vpop.f32.mrf.mxu0
  %v1334 = vadd.f32 %v1005, %v1333
  %1335 = vmatmul.bf16.gmra.mxu0 %v803
  %v1336 = vpop.f32.mrf.mxu0
  %v1337 = vadd.f32 %v1008, %v1336
  %v1338 = vpop.f32.mrf.mxu0
  %v1339 = vadd.f32 %v1010, %v1338
  %1340 = vmatmul.bf16.gmra.mxu0 %v806
  %v1341 = vpop.f32.mrf.mxu0
  %v1342 = vadd.f32 %v1013, %v1341
  %v1343 = vpop.f32.mrf.mxu0
  %v1344 = vadd.f32 %v1015, %v1343
  %1345 = vmatmul.bf16.gmra.mxu0 %v809
  %v1346 = vpop.f32.mrf.mxu0
  %v1347 = vadd.f32 %v1018, %v1346
  %v1348 = vpop.f32.mrf.mxu0
  %v1349 = vadd.f32 %v1020, %v1348
  %1350 = vmatmul.bf16.gmra.mxu0 %v812
  %v1351 = vpop.f32.mrf.mxu0
  %v1352 = vadd.f32 %v1023, %v1351
  %v1353 = vpop.f32.mrf.mxu0
  %v1354 = vadd.f32 %v1025, %v1353
  %1355 = vmatmul.bf16.gmra.mxu0 %v815
  %v1356 = vpop.f32.mrf.mxu0
  %v1357 = vadd.f32 %v1028, %v1356
  %v1358 = vpop.f32.mrf.mxu0
  %v1359 = vadd.f32 %v1030, %v1358
  %1360 = vmatmul.bf16.gmra.mxu0 %v818
  %v1361 = vpop.f32.mrf.mxu0
  %v1362 = vadd.f32 %v1033, %v1361
  %v1363 = vpop.f32.mrf.mxu0
  %v1364 = vadd.f32 %v1035, %v1363
  %1365 = vmatmul.bf16.gmra.mxu0 %v821
  %v1366 = vpop.f32.mrf.mxu0
  %v1367 = vadd.f32 %v1038, %v1366
  %v1368 = vpop.f32.mrf.mxu0
  %v1369 = vadd.f32 %v1040, %v1368
  %1370 = vmatmul.bf16.gmra.mxu0 %v824
  %v1371 = vpop.f32.mrf.mxu0
  %v1372 = vadd.f32 %v1043, %v1371
  %v1373 = vpop.f32.mrf.mxu0
  %v1374 = vadd.f32 %v1045, %v1373
  %1375 = vmatmul.bf16.gmra.mxu0 %v827
  %v1376 = vpop.f32.mrf.mxu0
  %v1377 = vadd.f32 %v1048, %v1376
  %v1378 = vpop.f32.mrf.mxu0
  %v1379 = vadd.f32 %v1050, %v1378
  %1380 = vmatmul.bf16.gmra.mxu0 %v830
  %v1381 = vpop.f32.mrf.mxu0
  %v1382 = vadd.f32 %v1053, %v1381
  %v1383 = vpop.f32.mrf.mxu0
  %v1384 = vadd.f32 %v1055, %v1383
  %1385 = vmatmul.bf16.gmra.mxu0 %v833
  %v1386 = vpop.f32.mrf.mxu0
  %v1387 = vadd.f32 %v1058, %v1386
  %v1388 = vpop.f32.mrf.mxu0
  %v1389 = vadd.f32 %v1060, %v1388
  %1390 = vmatmul.bf16.gmra.mxu0 %v836
  %v1391 = vpop.f32.mrf.mxu0
  %v1392 = vadd.f32 %v1063, %v1391
  %v1393 = vpop.f32.mrf.mxu0
  %v1394 = vadd.f32 %v1065, %v1393
  %1395 = vmatmul.bf16.gmra.mxu0 %v839
  %v1396 = vpop.f32.mrf.mxu0
  %v1397 = vadd.f32 %v1068, %v1396
  %v1398 = vpop.f32.mrf.mxu0
  %v1399 = vadd.f32 %v1070, %v1398
  %1400 = vmatmul.bf16.gmra.mxu0 %v842
  %v1401 = vpop.f32.mrf.mxu0
  %v1402 = vadd.f32 %v1073, %v1401
  %v1403 = vpop.f32.mrf.mxu0
  %v1404 = vadd.f32 %v1075, %v1403
  %1405 = vmatmul.bf16.gmra.mxu0 %v845
  %v1406 = vpop.f32.mrf.mxu0
  %v1407 = vadd.f32 %v1078, %v1406
  %v1408 = vpop.f32.mrf.mxu0
  %v1409 = vadd.f32 %v1080, %v1408
  %1410 = vmatmul.bf16.gmra.mxu0 %v848
  %v1411 = vpop.f32.mrf.mxu0
  %v1412 = vadd.f32 %v1083, %v1411
  %v1413 = vpop.f32.mrf.mxu0
  %v1414 = vadd.f32 %v1085, %v1413
  %1415 = vmatmul.bf16.gmra.mxu0 %v851
  %v1416 = vpop.f32.mrf.mxu0
  %v1417 = vadd.f32 %v1088, %v1416
  %v1418 = vpop.f32.mrf.mxu0
  %v1419 = vadd.f32 %v1090, %v1418
  %1420 = vmatmul.bf16.gmra.mxu0 %v854
  %v1421 = vpop.f32.mrf.mxu0
  %v1422 = vadd.f32 %v1093, %v1421
  %v1423 = vpop.f32.mrf.mxu0
  %v1424 = vadd.f32 %v1095, %v1423
  %1425 = vmatmul.bf16.gmra.mxu0 %v857
  %v1426 = vpop.f32.mrf.mxu0
  %v1427 = vadd.f32 %v1098, %v1426
  %v1428 = vpop.f32.mrf.mxu0
  %v1429 = vadd.f32 %v1100, %v1428
  %1430 = vmatmul.bf16.gmra.mxu0 %v860
  %v1431 = vpop.f32.mrf.mxu0
  %v1432 = vadd.f32 %v1103, %v1431
  %v1433 = vpop.f32.mrf.mxu0
  %v1434 = vadd.f32 %v1105, %v1433
  %1435 = vmatmul.bf16.gmra.mxu0 %v863
  %v1436 = vpop.f32.mrf.mxu0
  %v1437 = vadd.f32 %v1108, %v1436
  %v1438 = vpop.f32.mrf.mxu0
  %v1439 = vadd.f32 %v1110, %v1438
  %1440 = vmatmul.bf16.gmra.mxu0 %v866
  %v1441 = vpop.f32.mrf.mxu0
  %v1442 = vadd.f32 %v1113, %v1441
  %v1443 = vpop.f32.mrf.mxu0
  %v1444 = vadd.f32 %v1115, %v1443
  %1445 = vmatmul.bf16.gmra.mxu0 %v869
  %v1446 = vpop.f32.mrf.mxu0
  %v1447 = vadd.f32 %v1118, %v1446
  %v1448 = vpop.f32.mrf.mxu0
  %v1449 = vadd.f32 %v1120, %v1448
  %1450 = vmatmul.bf16.gmra.mxu0 %v872
  %v1451 = vpop.f32.mrf.mxu0
  %v1452 = vadd.f32 %v1123, %v1451
  %v1453 = vpop.f32.mrf.mxu0
  %v1454 = vadd.f32 %v1125, %v1453
  %1455 = vmatmul.bf16.gmra.mxu0 %v875
  %v1456 = vpop.f32.mrf.mxu0
  %v1457 = vadd.f32 %v1128, %v1456
  %v1458 = vpop.f32.mrf.mxu0
  %v1459 = vadd.f32 %v1130, %v1458
  %1460 = vmatmul.bf16.gmra.mxu0 %v878
  %v1461 = vpop.f32.mrf.mxu0
  %v1462 = vadd.f32 %v1133, %v1461
  %v1463 = vpop.f32.mrf.mxu0
  %v1464 = vadd.f32 %v1135, %v1463
  %1465 = vmatmul.bf16.gmra.mxu0 %v881
  %v1466 = vpop.f32.mrf.mxu0
  %v1467 = vadd.f32 %v1138, %v1466
  %v1468 = vpop.f32.mrf.mxu0
  %v1469 = vadd.f32 %v1140, %v1468
  %1470 = vmatmul.bf16.gmra.mxu0 %v884
  %v1471 = vpop.f32.mrf.mxu0
  %v1472 = vadd.f32 %v1143, %v1471
  %v1473 = vpop.f32.mrf.mxu0
  %v1474 = vadd.f32 %v1145, %v1473
  %1475 = vmatmul.bf16.gmra.mxu0 %v887
  %v1476 = vpop.f32.mrf.mxu0
  %v1477 = vadd.f32 %v1148, %v1476
  %v1478 = vpop.f32.mrf.mxu0
  %v1479 = vadd.f32 %v1150, %v1478
  %1480 = vmatmul.bf16.gmra.mxu0 %v890
  %v1481 = vpop.f32.mrf.mxu0
  %v1482 = vadd.f32 %v1153, %v1481
  %v1483 = vpop.f32.mrf.mxu0
  %v1484 = vadd.f32 %v1155, %v1483
  %1485 = vmatmul.bf16.gmra.mxu0 %v893
  %v1486 = vpop.f32.mrf.mxu0
  %v1487 = vadd.f32 %v1158, %v1486
  %v1488 = vpop.f32.mrf.mxu0
  %v1489 = vadd.f32 %v1160, %v1488
  %1490 = vmatmul.bf16.gmra.mxu0 %v896
  %v1491 = vpop.f32.mrf.mxu0
  %v1492 = vadd.f32 %v1163, %v1491
  %v1493 = vpop.f32.mrf.mxu0
  %v1494 = vadd.f32 %v1165, %v1493
  %1495 = vmatmul.bf16.gmra.mxu0 %v899
  %v1496 = vpop.f32.mrf.mxu0
  %v1497 = vadd.f32 %v1168, %v1496
  %v1498 = vpop.f32.mrf.mxu0
  %v1499 = vadd.f32 %v1170, %v1498
  %1500 = vmatmul.bf16.gmra.mxu0 %v902
  %v1501 = vpop.f32.mrf.mxu0
  %v1502 = vadd.f32 %v1173, %v1501
  %v1503 = vpop.f32.mrf.mxu0
  %v1504 = vadd.f32 %v1175, %v1503
  %1505 = vmatmul.bf16.gmra.mxu0 %v905
  %v1506 = vpop.f32.mrf.mxu0
  %v1507 = vadd.f32 %v1178, %v1506
  %v1508 = vpop.f32.mrf.mxu0
  %v1509 = vadd.f32 %v1180, %v1508
  %1510 = vmatmul.bf16.gmra.mxu0 %v908
  %v1511 = vpop.f32.mrf.mxu0
  %v1512 = vadd.f32 %v1183, %v1511
  %v1513 = vpop.f32.mrf.mxu0
  %v1514 = vadd.f32 %v1185, %v1513
  %1515 = vmatmul.bf16.gmra.mxu0 %v911
  %v1516 = vpop.f32.mrf.mxu0
  %v1517 = vadd.f32 %v1188, %v1516
  %v1518 = vpop.f32.mrf.mxu0
  %v1519 = vadd.f32 %v1190, %v1518
  %1520 = vmatmul.bf16.gmra.mxu0 %v914
  %v1521 = vpop.f32.mrf.mxu0
  %v1522 = vadd.f32 %v1193, %v1521
  %v1523 = vpop.f32.mrf.mxu0
  %v1524 = vadd.f32 %v1195, %v1523
  %1525 = vmatmul.bf16.gmra.mxu0 %v917
  %v1526 = vpop.f32.mrf.mxu0
  %v1527 = vadd.f32 %v1198, %v1526
  %v1528 = vpop.f32.mrf.mxu0
  %v1529 = vadd.f32 %v1200, %v1528
  %1530 = vmatmul.bf16.gmra.mxu0 %v920
  %v1531 = vpop.f32.mrf.mxu0
  %v1532 = vadd.f32 %v1203, %v1531
  %v1533 = vpop.f32.mrf.mxu0
  %v1534 = vadd.f32 %v1205, %v1533
  %1535 = vmatmul.bf16.gmra.mxu0 %v923
  %v1536 = vpop.f32.mrf.mxu0
  %v1537 = vadd.f32 %v1208, %v1536
  %v1538 = vpop.f32.mrf.mxu0
  %v1539 = vadd.f32 %v1210, %v1538
  %1540 = vmatmul.bf16.gmra.mxu0 %v926
  %v1541 = vpop.f32.mrf.mxu0
  %v1542 = vadd.f32 %v1213, %v1541
  %v1543 = vpop.f32.mrf.mxu0
  %v1544 = vadd.f32 %v1215, %v1543
  %1545 = vmatmul.bf16.gmra.mxu0 %v929
  %v1546 = vpop.f32.mrf.mxu0
  %v1547 = vadd.f32 %v1218, %v1546
  %v1548 = vpop.f32.mrf.mxu0
  %v1549 = vadd.f32 %v1220, %v1548
  %1550 = vmatmul.bf16.gmra.mxu0 %v932
  %v1551 = vpop.f32.mrf.mxu0
  %v1552 = vadd.f32 %v1223, %v1551
  %v1553 = vpop.f32.mrf.mxu0
  %v1554 = vadd.f32 %v1225, %v1553
  %1555 = vmatmul.bf16.gmra.mxu0 %v935
  %v1556 = vpop.f32.mrf.mxu0
  %v1557 = vadd.f32 %v1228, %v1556
  %v1558 = vpop.f32.mrf.mxu0
  %v1559 = vadd.f32 %v1230, %v1558
  %1560 = vmatmul.bf16.gmra.mxu0 %v938
  %v1561 = vpop.f32.mrf.mxu0
  %v1562 = vadd.f32 %v1233, %v1561
  %v1563 = vpop.f32.mrf.mxu0
  %v1564 = vadd.f32 %v1235, %v1563
  %1565 = vmatmul.bf16.gmra.mxu0 %v941
  %v1566 = vpop.f32.mrf.mxu0
  %v1567 = vadd.f32 %v1238, %v1566
  %v1568 = vpop.f32.mrf.mxu0
  %v1569 = vadd.f32 %v1240, %v1568
  %1570 = vmatmul.bf16.gmra.mxu0 %v944
  %v1571 = vpop.f32.mrf.mxu0
  %v1572 = vadd.f32 %v1243, %v1571
  %v1573 = vpop.f32.mrf.mxu0
  %v1574 = vadd.f32 %v1245, %v1573
  %1575 = vmatmul.bf16.gmra.mxu0 %v947
  %v1576 = vpop.f32.mrf.mxu0
  %v1577 = vadd.f32 %v1248, %v1576
  %v1578 = vpop.f32.mrf.mxu0
  %v1579 = vadd.f32 %v1250, %v1578
  %1580 = vmatmul.bf16.gmra.mxu0 %v950
  %v1581 = vpop.f32.mrf.mxu0
  %v1582 = vadd.f32 %v1253, %v1581
  %v1583 = vpop.f32.mrf.mxu0
  %v1584 = vadd.f32 %v1255, %v1583
  %1585 = vmatmul.bf16.gmra.mxu0 %v953
  %v1586 = vpop.f32.mrf.mxu0
  %v1587 = vadd.f32 %v1258, %v1586
  %v1588 = vpop.f32.mrf.mxu0
  %v1589 = vadd.f32 %v1260, %v1588
  %1590 = vmatmul.bf16.gmra.mxu0 %v956
  %v1591 = vpop.f32.mrf.mxu0
  %v1592 = vadd.f32 %v1263, %v1591
  %v1593 = vpop.f32.mrf.mxu0
  %v1594 = vadd.f32 %v1265, %v1593
  %1595 = vmatmul.bf16.gmra.mxu0 %v959
  %v1596 = vpop.f32.mrf.mxu0
  %v1597 = vadd.f32 %v1268, %v1596
  %v1598 = vpop.f32.mrf.mxu0
  %v1599 = vadd.f32 %v1270, %v1598
  %1600 = vmatmul.bf16.gmra.mxu0 %v962
  %v1601 = vpop.f32.mrf.mxu0
  %v1602 = vadd.f32 %v1273, %v1601
  %v1603 = vpop.f32.mrf.mxu0
  %v1604 = vadd.f32 %v1275, %v1603
  %1605 = vmatmul.bf16.gmra.mxu0 %v965
  %v1606 = vpop.f32.mrf.mxu0
  %v1607 = vadd.f32 %v1278, %v1606
  %v1608 = vpop.f32.mrf.mxu0
  %v1609 = vadd.f32 %v1280, %v1608
  %1610 = vmatmul.bf16.gmra.mxu0 %v968
  %v1611 = vpop.f32.mrf.mxu0
  %v1612 = vadd.f32 %v1283, %v1611
  %v1613 = vpop.f32.mrf.mxu0
  %v1614 = vadd.f32 %v1285, %v1613
  %1615 = vmatmul.bf16.gmra.mxu0 %v971
  %v1616 = vpop.f32.mrf.mxu0
  %v1617 = vadd.f32 %v1288, %v1616
  %v1618 = vpop.f32.mrf.mxu0
  %v1619 = vadd.f32 %v1290, %v1618
  %1620 = vmatmul.bf16.gmra.mxu0 %v974
  %v1621 = vpop.f32.mrf.mxu0
  %v1622 = vadd.f32 %v1293, %v1621
  %v1623 = vpop.f32.mrf.mxu0
  %v1624 = vadd.f32 %v1295, %v1623
  %1625 = vmatmul.bf16.gmra.mxu0 %v977
  %v1626 = vpop.f32.mrf.mxu0
  %v1627 = vadd.f32 %v1298, %v1626
  %v1628 = vpop.f32.mrf.mxu0
  %v1629 = vadd.f32 %v1300, %v1628
  %1630 = vmatmul.bf16.gmra.mxu0 %v980
  %v1631 = vpop.f32.mrf.mxu0
  %v1632 = vadd.f32 %v1303, %v1631
  %v1633 = vpop.f32.mrf.mxu0
  %v1634 = vadd.f32 %v1305, %v1633
  %1635 = vmatmul.bf16.gmra.mxu0 %v983
  %v1636 = vpop.f32.mrf.mxu0
  %v1637 = vadd.f32 %v1308, %v1636
  %v1638 = vpop.f32.mrf.mxu0
  %v1639 = vadd.f32 %v1310, %v1638
  %1640 = vmatmul.bf16.gmra.mxu0 %v986
  %v1641 = vpop.f32.mrf.mxu0
  %v1642 = vadd.f32 %v1313, %v1641
  %v1643 = vpop.f32.mrf.mxu0
  %v1644 = vadd.f32 %v1315, %v1643
  %1645 = vdwg.mxu0
  %v1646 = vmax.f32 %v1327, 0.0
  %v1647 = vmax.f32 %v1329, 0.0
  %v1648 = vmax.f32 %v1332, 0.0
  %v1649 = vmax.f32 %v1334, 0.0
  %v1650 = vmax.f32 %v1337, 0.0
  %v1651 = vmax.f32 %v1339, 0.0
  %v1652 = vmax.f32 %v1342, 0.0
  %v1653 = vmax.f32 %v1344, 0.0
  %v1654 = vmax.f32 %v1347, 0.0
  %v1655 = vmax.f32 %v1349, 0.0
  %v1656 = vmax.f32 %v1352, 0.0
  %v1657 = vmax.f32 %v1354, 0.0
  %v1658 = vmax.f32 %v1357, 0.0
  %v1659 = vmax.f32 %v1359, 0.0
  %v1660 = vmax.f32 %v1362, 0.0
  %v1661 = vmax.f32 %v1364, 0.0
  %v1662 = vmax.f32 %v1367, 0.0
  %v1663 = vmax.f32 %v1369, 0.0
  %v1664 = vmax.f32 %v1372, 0.0
  %v1665 = vmax.f32 %v1374, 0.0
  %v1666 = vmax.f32 %v1377, 0.0
  %v1667 = vmax.f32 %v1379, 0.0
  %v1668 = vmax.f32 %v1382, 0.0
  %v1669 = vmax.f32 %v1384, 0.0
  %v1670 = vmax.f32 %v1387, 0.0
  %v1671 = vmax.f32 %v1389, 0.0
  %v1672 = vmax.f32 %v1392, 0.0
  %v1673 = vmax.f32 %v1394, 0.0
  %v1674 = vmax.f32 %v1397, 0.0
  %v1675 = vmax.f32 %v1399, 0.0
  %v1676 = vmax.f32 %v1402, 0.0
  %v1677 = vmax.f32 %v1404, 0.0
  %v1678 = vmax.f32 %v1407, 0.0
  %v1679 = vmax.f32 %v1409, 0.0
  %v1680 = vmax.f32 %v1412, 0.0
  %v1681 = vmax.f32 %v1414, 0.0
  %v1682 = vmax.f32 %v1417, 0.0
  %v1683 = vmax.f32 %v1419, 0.0
  %v1684 = vmax.f32 %v1422, 0.0
  %v1685 = vmax.f32 %v1424, 0.0
  %v1686 = vmax.f32 %v1427, 0.0
  %v1687 = vmax.f32 %v1429, 0.0
  %v1688 = vmax.f32 %v1432, 0.0
  %v1689 = vmax.f32 %v1434, 0.0
  %v1690 = vmax.f32 %v1437, 0.0
  %v1691 = vmax.f32 %v1439, 0.0
  %v1692 = vmax.f32 %v1442, 0.0
  %v1693 = vmax.f32 %v1444, 0.0
  %v1694 = vmax.f32 %v1447, 0.0
  %v1695 = vmax.f32 %v1449, 0.0
  %v1696 = vmax.f32 %v1452, 0.0
  %v1697 = vmax.f32 %v1454, 0.0
  %v1698 = vmax.f32 %v1457, 0.0
  %v1699 = vmax.f32 %v1459, 0.0
  %v1700 = vmax.f32 %v1462, 0.0
  %v1701 = vmax.f32 %v1464, 0.0
  %v1702 = vmax.f32 %v1467, 0.0
  %v1703 = vmax.f32 %v1469, 0.0
  %v1704 = vmax.f32 %v1472, 0.0
  %v1705 = vmax.f32 %v1474, 0.0
  %v1706 = vmax.f32 %v1477, 0.0
  %v1707 = vmax.f32 %v1479, 0.0
  %v1708 = vmax.f32 %v1482, 0.0
  %v1709 = vmax.f32 %v1484, 0.0
  %v1710 = vmax.f32 %v1487, 0.0
  %v1711 = vmax.f32 %v1489, 0.0
  %v1712 = vmax.f32 %v1492, 0.0
  %v1713 = vmax.f32 %v1494, 0.0
  %v1714 = vmax.f32 %v1497, 0.0
  %v1715 = vmax.f32 %v1499, 0.0
  %v1716 = vmax.f32 %v1502, 0.0
  %v1717 = vmax.f32 %v1504, 0.0
  %v1718 = vmax.f32 %v1507, 0.0
  %v1719 = vmax.f32 %v1509, 0.0
  %v1720 = vmax.f32 %v1512, 0.0
  %v1721 = vmax.f32 %v1514, 0.0
  %v1722 = vmax.f32 %v1517, 0.0
  %v1723 = vmax.f32 %v1519, 0.0
  %v1724 = vmax.f32 %v1522, 0.0
  %v1725 = vmax.f32 %v1524, 0.0
  %v1726 = vmax.f32 %v1527, 0.0
  %v1727 = vmax.f32 %v1529, 0.0
  %v1728 = vmax.f32 %v1532, 0.0
  %v1729 = vmax.f32 %v1534, 0.0
  %v1730 = vmax.f32 %v1537, 0.0
  %v1731 = vmax.f32 %v1539, 0.0
  %v1732 = vmax.f32 %v1542, 0.0
  %v1733 = vmax.f32 %v1544, 0.0
  %v1734 = vmax.f32 %v1547, 0.0
  %v1735 = vmax.f32 %v1549, 0.0
  %v1736 = vmax.f32 %v1552, 0.0
  %v1737 = vmax.f32 %v1554, 0.0
  %v1738 = vmax.f32 %v1557, 0.0
  %v1739 = vmax.f32 %v1559, 0.0
  %v1740 = vmax.f32 %v1562, 0.0
  %v1741 = vmax.f32 %v1564, 0.0
  %v1742 = vmax.f32 %v1567, 0.0
  %v1743 = vmax.f32 %v1569, 0.0
  %v1744 = vmax.f32 %v1572, 0.0
  %v1745 = vmax.f32 %v1574, 0.0
  %v1746 = vmax.f32 %v1577, 0.0
  %v1747 = vmax.f32 %v1579, 0.0
  %v1748 = vmax.f32 %v1582, 0.0
  %v1749 = vmax.f32 %v1584, 0.0
  %v1750 = vmax.f32 %v1587, 0.0
  %v1751 = vmax.f32 %v1589, 0.0
  %v1752 = vmax.f32 %v1592, 0.0
  %v1753 = vmax.f32 %v1594, 0.0
  %v1754 = vmax.f32 %v1597, 0.0
  %v1755 = vmax.f32 %v1599, 0.0
  %v1756 = vmax.f32 %v1602, 0.0
  %v1757 = vmax.f32 %v1604, 0.0
  %v1758 = vmax.f32 %v1607, 0.0
  %v1759 = vmax.f32 %v1609, 0.0
  %v1760 = vmax.f32 %v1612, 0.0
  %v1761 = vmax.f32 %v1614, 0.0
  %v1762 = vmax.f32 %v1617, 0.0
  %v1763 = vmax.f32 %v1619, 0.0
  %v1764 = vmax.f32 %v1622, 0.0
  %v1765 = vmax.f32 %v1624, 0.0
  %v1766 = vmax.f32 %v1627, 0.0
  %v1767 = vmax.f32 %v1629, 0.0
  %v1768 = vmax.f32 %v1632, 0.0
  %v1769 = vmax.f32 %v1634, 0.0
  %v1770 = vmax.f32 %v1637, 0.0
  %v1771 = vmax.f32 %v1639, 0.0
  %v1772 = vmax.f32 %v1642, 0.0
  %v1773 = vmax.f32 %v1644, 0.0
  %v1774 = vpack.c.bf16 %v1646, %v1646
  %v1775 = vpack.c.bf16 %v1647, %v1647
  %v1776 = vpack.c.bf16 %v1648, %v1648
  %v1777 = vpack.c.bf16 %v1649, %v1649
  %v1778 = vpack.c.bf16 %v1650, %v1650
  %v1779 = vpack.c.bf16 %v1651, %v1651
  %v1780 = vpack.c.bf16 %v1652, %v1652
  %v1781 = vpack.c.bf16 %v1653, %v1653
  %v1782 = vpack.c.bf16 %v1654, %v1654
  %v1783 = vpack.c.bf16 %v1655, %v1655
  %v1784 = vpack.c.bf16 %v1656, %v1656
  %v1785 = vpack.c.bf16 %v1657, %v1657
  %v1786 = vpack.c.bf16 %v1658, %v1658
  %v1787 = vpack.c.bf16 %v1659, %v1659
  %v1788 = vpack.c.bf16 %v1660, %v1660
  %v1789 = vpack.c.bf16 %v1661, %v1661
  %v1790 = vpack.c.bf16 %v1662, %v1662
  %v1791 = vpack.c.bf16 %v1663, %v1663
  %v1792 = vpack.c.bf16 %v1664, %v1664
  %v1793 = vpack.c.bf16 %v1665, %v1665
  %v1794 = vpack.c.bf16 %v1666, %v1666
  %v1795 = vpack.c.bf16 %v1667, %v1667
  %v1796 = vpack.c.bf16 %v1668, %v1668
  %v1797 = vpack.c.bf16 %v1669, %v1669
  %v1798 = vpack.c.bf16 %v1670, %v1670
  %v1799 = vpack.c.bf16 %v1671, %v1671
  %v1800 = vpack.c.bf16 %v1672, %v1672
  %v1801 = vpack.c.bf16 %v1673, %v1673
  %v1802 = vpack.c.bf16 %v1674, %v1674
  %v1803 = vpack.c.bf16 %v1675, %v1675
  %v1804 = vpack.c.bf16 %v1676, %v1676
  %v1805 = vpack.c.bf16 %v1677, %v1677
  %v1806 = vpack.c.bf16 %v1678, %v1678
  %v1807 = vpack.c.bf16 %v1679, %v1679
  %v1808 = vpack.c.bf16 %v1680, %v1680
  %v1809 = vpack.c.bf16 %v1681, %v1681
  %v1810 = vpack.c.bf16 %v1682, %v1682
  %v1811 = vpack.c.bf16 %v1683, %v1683
  %v1812 = vpack.c.bf16 %v1684, %v1684
  %v1813 = vpack.c.bf16 %v1685, %v1685
  %v1814 = vpack.c.bf16 %v1686, %v1686
  %v1815 = vpack.c.bf16 %v1687, %v1687
  %v1816 = vpack.c.bf16 %v1688, %v1688
  %v1817 = vpack.c.bf16 %v1689, %v1689
  %v1818 = vpack.c.bf16 %v1690, %v1690
  %v1819 = vpack.c.bf16 %v1691, %v1691
  %v1820 = vpack.c.bf16 %v1692, %v1692
  %v1821 = vpack.c.bf16 %v1693, %v1693
  %v1822 = vpack.c.bf16 %v1694, %v1694
  %v1823 = vpack.c.bf16 %v1695, %v1695
  %v1824 = vpack.c.bf16 %v1696, %v1696
  %v1825 = vpack.c.bf16 %v1697, %v1697
  %v1826 = vpack.c.bf16 %v1698, %v1698
  %v1827 = vpack.c.bf16 %v1699, %v1699
  %v1828 = vpack.c.bf16 %v1700, %v1700
  %v1829 = vpack.c.bf16 %v1701, %v1701
  %v1830 = vpack.c.bf16 %v1702, %v1702
  %v1831 = vpack.c.bf16 %v1703, %v1703
  %v1832 = vpack.c.bf16 %v1704, %v1704
  %v1833 = vpack.c.bf16 %v1705, %v1705
  %v1834 = vpack.c.bf16 %v1706, %v1706
  %v1835 = vpack.c.bf16 %v1707, %v1707
  %v1836 = vpack.c.bf16 %v1708, %v1708
  %v1837 = vpack.c.bf16 %v1709, %v1709
  %v1838 = vpack.c.bf16 %v1710, %v1710
  %v1839 = vpack.c.bf16 %v1711, %v1711
  %v1840 = vpack.c.bf16 %v1712, %v1712
  %v1841 = vpack.c.bf16 %v1713, %v1713
  %v1842 = vpack.c.bf16 %v1714, %v1714
  %v1843 = vpack.c.bf16 %v1715, %v1715
  %v1844 = vpack.c.bf16 %v1716, %v1716
  %v1845 = vpack.c.bf16 %v1717, %v1717
  %v1846 = vpack.c.bf16 %v1718, %v1718
  %v1847 = vpack.c.bf16 %v1719, %v1719
  %v1848 = vpack.c.bf16 %v1720, %v1720
  %v1849 = vpack.c.bf16 %v1721, %v1721
  %v1850 = vpack.c.bf16 %v1722, %v1722
  %v1851 = vpack.c.bf16 %v1723, %v1723
  %v1852 = vpack.c.bf16 %v1724, %v1724
  %v1853 = vpack.c.bf16 %v1725, %v1725
  %v1854 = vpack.c.bf16 %v1726, %v1726
  %v1855 = vpack.c.bf16 %v1727, %v1727
  %v1856 = vpack.c.bf16 %v1728, %v1728
  %v1857 = vpack.c.bf16 %v1729, %v1729
  %v1858 = vpack.c.bf16 %v1730, %v1730
  %v1859 = vpack.c.bf16 %v1731, %v1731
  %v1860 = vpack.c.bf16 %v1732, %v1732
  %v1861 = vpack.c.bf16 %v1733, %v1733
  %v1862 = vpack.c.bf16 %v1734, %v1734
  %v1863 = vpack.c.bf16 %v1735, %v1735
  %v1864 = vpack.c.bf16 %v1736, %v1736
  %v1865 = vpack.c.bf16 %v1737, %v1737
  %v1866 = vpack.c.bf16 %v1738, %v1738
  %v1867 = vpack.c.bf16 %v1739, %v1739
  %v1868 = vpack.c.bf16 %v1740, %v1740
  %v1869 = vpack.c.bf16 %v1741, %v1741
  %v1870 = vpack.c.bf16 %v1742, %v1742
  %v1871 = vpack.c.bf16 %v1743, %v1743
  %v1872 = vpack.c.bf16 %v1744, %v1744
  %v1873 = vpack.c.bf16 %v1745, %v1745
  %v1874 = vpack.c.bf16 %v1746, %v1746
  %v1875 = vpack.c.bf16 %v1747, %v1747
  %v1876 = vpack.c.bf16 %v1748, %v1748
  %v1877 = vpack.c.bf16 %v1749, %v1749
  %v1878 = vpack.c.bf16 %v1750, %v1750
  %v1879 = vpack.c.bf16 %v1751, %v1751
  %v1880 = vpack.c.bf16 %v1752, %v1752
  %v1881 = vpack.c.bf16 %v1753, %v1753
  %v1882 = vpack.c.bf16 %v1754, %v1754
  %v1883 = vpack.c.bf16 %v1755, %v1755
  %v1884 = vpack.c.bf16 %v1756, %v1756
  %v1885 = vpack.c.bf16 %v1757, %v1757
  %v1886 = vpack.c.bf16 %v1758, %v1758
  %v1887 = vpack.c.bf16 %v1759, %v1759
  %v1888 = vpack.c.bf16 %v1760, %v1760
  %v1889 = vpack.c.bf16 %v1761, %v1761
  %v1890 = vpack.c.bf16 %v1762, %v1762
  %v1891 = vpack.c.bf16 %v1763, %v1763
  %v1892 = vpack.c.bf16 %v1764, %v1764
  %v1893 = vpack.c.bf16 %v1765, %v1765
  %v1894 = vpack.c.bf16 %v1766, %v1766
  %v1895 = vpack.c.bf16 %v1767, %v1767
  %v1896 = vpack.c.bf16 %v1768, %v1768
  %v1897 = vpack.c.bf16 %v1769, %v1769
  %v1898 = vpack.c.bf16 %v1770, %v1770
  %v1899 = vpack.c.bf16 %v1771, %v1771
  %v1900 = vpack.c.bf16 %v1772, %v1772
  %v1901 = vpack.c.bf16 %v1773, %v1773
  %vm1902 = vcmask 125952
  %1903 = vst.msk [vmem:[%s3] sm:$0xf] %vm1902, %v1774
  %1904 = vst.msk [vmem:[%s3 + $0x4] sm:$0xf] %vm1902, %v1775
  %1905 = vst.msk [vmem:[%s3 + $0x8] sm:$0xf] %vm1902, %v1776
  %1906 = vst.msk [vmem:[%s3 + $0xc] sm:$0xf] %vm1902, %v1777
  %1907 = vst.msk [vmem:[%s3 + $0x10] sm:$0xf] %vm1902, %v1778
  %1908 = vst.msk [vmem:[%s3 + $0x14] sm:$0xf] %vm1902, %v1779
  %1909 = vst.msk [vmem:[%s3 + $0x18] sm:$0xf] %vm1902, %v1780
  %1910 = vst.msk [vmem:[%s3 + $0x1c] sm:$0xf] %vm1902, %v1781
  %1911 = vst.msk [vmem:[%s3 + $0x20] sm:$0xf] %vm1902, %v1782
  %1912 = vst.msk [vmem:[%s3 + $0x24] sm:$0xf] %vm1902, %v1783
  %1913 = vst.msk [vmem:[%s3 + $0x28] sm:$0xf] %vm1902, %v1784
  %1914 = vst.msk [vmem:[%s3 + $0x2c] sm:$0xf] %vm1902, %v1785
  %1915 = vst.msk [vmem:[%s3 + $0x30] sm:$0xf] %vm1902, %v1786
  %1916 = vst.msk [vmem:[%s3 + $0x34] sm:$0xf] %vm1902, %v1787
  %1917 = vst.msk [vmem:[%s3 + $0x38] sm:$0xf] %vm1902, %v1788
  %1918 = vst.msk [vmem:[%s3 + $0x3c] sm:$0xf] %vm1902, %v1789
  %1919 = vst.msk [vmem:[%s3 + $0x40] sm:$0xf] %vm1902, %v1790
  %1920 = vst.msk [vmem:[%s3 + $0x44] sm:$0xf] %vm1902, %v1791
  %1921 = vst.msk [vmem:[%s3 + $0x48] sm:$0xf] %vm1902, %v1792
  %1922 = vst.msk [vmem:[%s3 + $0x4c] sm:$0xf] %vm1902, %v1793
  %1923 = vst.msk [vmem:[%s3 + $0x50] sm:$0xf] %vm1902, %v1794
  %1924 = vst.msk [vmem:[%s3 + $0x54] sm:$0xf] %vm1902, %v1795
  %1925 = vst.msk [vmem:[%s3 + $0x58] sm:$0xf] %vm1902, %v1796
  %1926 = vst.msk [vmem:[%s3 + $0x5c] sm:$0xf] %vm1902, %v1797
  %1927 = vst.msk [vmem:[%s3 + $0x60] sm:$0xf] %vm1902, %v1798
  %1928 = vst.msk [vmem:[%s3 + $0x64] sm:$0xf] %vm1902, %v1799
  %1929 = vst.msk [vmem:[%s3 + $0x68] sm:$0xf] %vm1902, %v1800
  %1930 = vst.msk [vmem:[%s3 + $0x6c] sm:$0xf] %vm1902, %v1801
  %1931 = vst.msk [vmem:[%s3 + $0x70] sm:$0xf] %vm1902, %v1802
  %1932 = vst.msk [vmem:[%s3 + $0x74] sm:$0xf] %vm1902, %v1803
  %1933 = vst.msk [vmem:[%s3 + $0x78] sm:$0xf] %vm1902, %v1804
  %1934 = vst.msk [vmem:[%s3 + $0x7c] sm:$0xf] %vm1902, %v1805
  %1935 = vst.msk [vmem:[%s3 + $0x80] sm:$0xf] %vm1902, %v1806
  %1936 = vst.msk [vmem:[%s3 + $0x84] sm:$0xf] %vm1902, %v1807
  %1937 = vst.msk [vmem:[%s3 + $0x88] sm:$0xf] %vm1902, %v1808
  %1938 = vst.msk [vmem:[%s3 + $0x8c] sm:$0xf] %vm1902, %v1809
  %1939 = vst.msk [vmem:[%s3 + $0x90] sm:$0xf] %vm1902, %v1810
  %1940 = vst.msk [vmem:[%s3 + $0x94] sm:$0xf] %vm1902, %v1811
  %1941 = vst.msk [vmem:[%s3 + $0x98] sm:$0xf] %vm1902, %v1812
  %1942 = vst.msk [vmem:[%s3 + $0x9c] sm:$0xf] %vm1902, %v1813
  %1943 = vst.msk [vmem:[%s3 + $0xa0] sm:$0xf] %vm1902, %v1814
  %1944 = vst.msk [vmem:[%s3 + $0xa4] sm:$0xf] %vm1902, %v1815
  %1945 = vst.msk [vmem:[%s3 + $0xa8] sm:$0xf] %vm1902, %v1816
  %1946 = vst.msk [vmem:[%s3 + $0xac] sm:$0xf] %vm1902, %v1817
  %1947 = vst.msk [vmem:[%s3 + $0xb0] sm:$0xf] %vm1902, %v1818
  %1948 = vst.msk [vmem:[%s3 + $0xb4] sm:$0xf] %vm1902, %v1819
  %1949 = vst.msk [vmem:[%s3 + $0xb8] sm:$0xf] %vm1902, %v1820
  %1950 = vst.msk [vmem:[%s3 + $0xbc] sm:$0xf] %vm1902, %v1821
  %1951 = vst.msk [vmem:[%s3 + $0xc0] sm:$0xf] %vm1902, %v1822
  %1952 = vst.msk [vmem:[%s3 + $0xc4] sm:$0xf] %vm1902, %v1823
  %1953 = vst.msk [vmem:[%s3 + $0xc8] sm:$0xf] %vm1902, %v1824
  %1954 = vst.msk [vmem:[%s3 + $0xcc] sm:$0xf] %vm1902, %v1825
  %1955 = vst.msk [vmem:[%s3 + $0xd0] sm:$0xf] %vm1902, %v1826
  %1956 = vst.msk [vmem:[%s3 + $0xd4] sm:$0xf] %vm1902, %v1827
  %1957 = vst.msk [vmem:[%s3 + $0xd8] sm:$0xf] %vm1902, %v1828
  %1958 = vst.msk [vmem:[%s3 + $0xdc] sm:$0xf] %vm1902, %v1829
  %1959 = vst.msk [vmem:[%s3 + $0xe0] sm:$0xf] %vm1902, %v1830
  %1960 = vst.msk [vmem:[%s3 + $0xe4] sm:$0xf] %vm1902, %v1831
  %1961 = vst.msk [vmem:[%s3 + $0xe8] sm:$0xf] %vm1902, %v1832
  %1962 = vst.msk [vmem:[%s3 + $0xec] sm:$0xf] %vm1902, %v1833
  %1963 = vst.msk [vmem:[%s3 + $0xf0] sm:$0xf] %vm1902, %v1834
  %1964 = vst.msk [vmem:[%s3 + $0xf4] sm:$0xf] %vm1902, %v1835
  %1965 = vst.msk [vmem:[%s3 + $0xf8] sm:$0xf] %vm1902, %v1836
  %1966 = vst.msk [vmem:[%s3 + $0xfc] sm:$0xf] %vm1902, %v1837
  %1967 = vst.msk [vmem:[%s3 + $0x100] sm:$0xf] %vm1902, %v1838
  %1968 = vst.msk [vmem:[%s3 + $0x104] sm:$0xf] %vm1902, %v1839
  %1969 = vst.msk [vmem:[%s3 + $0x108] sm:$0xf] %vm1902, %v1840
  %1970 = vst.msk [vmem:[%s3 + $0x10c] sm:$0xf] %vm1902, %v1841
  %1971 = vst.msk [vmem:[%s3 + $0x110] sm:$0xf] %vm1902, %v1842
  %1972 = vst.msk [vmem:[%s3 + $0x114] sm:$0xf] %vm1902, %v1843
  %1973 = vst.msk [vmem:[%s3 + $0x118] sm:$0xf] %vm1902, %v1844
  %1974 = vst.msk [vmem:[%s3 + $0x11c] sm:$0xf] %vm1902, %v1845
  %1975 = vst.msk [vmem:[%s3 + $0x120] sm:$0xf] %vm1902, %v1846
  %1976 = vst.msk [vmem:[%s3 + $0x124] sm:$0xf] %vm1902, %v1847
  %1977 = vst.msk [vmem:[%s3 + $0x128] sm:$0xf] %vm1902, %v1848
  %1978 = vst.msk [vmem:[%s3 + $0x12c] sm:$0xf] %vm1902, %v1849
  %1979 = vst.msk [vmem:[%s3 + $0x130] sm:$0xf] %vm1902, %v1850
  %1980 = vst.msk [vmem:[%s3 + $0x134] sm:$0xf] %vm1902, %v1851
  %1981 = vst.msk [vmem:[%s3 + $0x138] sm:$0xf] %vm1902, %v1852
  %1982 = vst.msk [vmem:[%s3 + $0x13c] sm:$0xf] %vm1902, %v1853
  %1983 = vst.msk [vmem:[%s3 + $0x140] sm:$0xf] %vm1902, %v1854
  %1984 = vst.msk [vmem:[%s3 + $0x144] sm:$0xf] %vm1902, %v1855
  %1985 = vst.msk [vmem:[%s3 + $0x148] sm:$0xf] %vm1902, %v1856
  %1986 = vst.msk [vmem:[%s3 + $0x14c] sm:$0xf] %vm1902, %v1857
  %1987 = vst.msk [vmem:[%s3 + $0x150] sm:$0xf] %vm1902, %v1858
  %1988 = vst.msk [vmem:[%s3 + $0x154] sm:$0xf] %vm1902, %v1859
  %1989 = vst.msk [vmem:[%s3 + $0x158] sm:$0xf] %vm1902, %v1860
  %1990 = vst.msk [vmem:[%s3 + $0x15c] sm:$0xf] %vm1902, %v1861
  %1991 = vst.msk [vmem:[%s3 + $0x160] sm:$0xf] %vm1902, %v1862
  %1992 = vst.msk [vmem:[%s3 + $0x164] sm:$0xf] %vm1902, %v1863
  %1993 = vst.msk [vmem:[%s3 + $0x168] sm:$0xf] %vm1902, %v1864
  %1994 = vst.msk [vmem:[%s3 + $0x16c] sm:$0xf] %vm1902, %v1865
  %1995 = vst.msk [vmem:[%s3 + $0x170] sm:$0xf] %vm1902, %v1866
  %1996 = vst.msk [vmem:[%s3 + $0x174] sm:$0xf] %vm1902, %v1867
  %1997 = vst.msk [vmem:[%s3 + $0x178] sm:$0xf] %vm1902, %v1868
  %1998 = vst.msk [vmem:[%s3 + $0x17c] sm:$0xf] %vm1902, %v1869
  %1999 = vst.msk [vmem:[%s3 + $0x180] sm:$0xf] %vm1902, %v1870
  %2000 = vst.msk [vmem:[%s3 + $0x184] sm:$0xf] %vm1902, %v1871
  %2001 = vst.msk [vmem:[%s3 + $0x188] sm:$0xf] %vm1902, %v1872
  %2002 = vst.msk [vmem:[%s3 + $0x18c] sm:$0xf] %vm1902, %v1873
  %2003 = vst.msk [vmem:[%s3 + $0x190] sm:$0xf] %vm1902, %v1874
  %2004 = vst.msk [vmem:[%s3 + $0x194] sm:$0xf] %vm1902, %v1875
  %2005 = vst.msk [vmem:[%s3 + $0x198] sm:$0xf] %vm1902, %v1876
  %2006 = vst.msk [vmem:[%s3 + $0x19c] sm:$0xf] %vm1902, %v1877
  %2007 = vst.msk [vmem:[%s3 + $0x1a0] sm:$0xf] %vm1902, %v1878
  %2008 = vst.msk [vmem:[%s3 + $0x1a4] sm:$0xf] %vm1902, %v1879
  %2009 = vst.msk [vmem:[%s3 + $0x1a8] sm:$0xf] %vm1902, %v1880
  %2010 = vst.msk [vmem:[%s3 + $0x1ac] sm:$0xf] %vm1902, %v1881
  %2011 = vst.msk [vmem:[%s3 + $0x1b0] sm:$0xf] %vm1902, %v1882
  %2012 = vst.msk [vmem:[%s3 + $0x1b4] sm:$0xf] %vm1902, %v1883
  %2013 = vst.msk [vmem:[%s3 + $0x1b8] sm:$0xf] %vm1902, %v1884
  %2014 = vst.msk [vmem:[%s3 + $0x1bc] sm:$0xf] %vm1902, %v1885
  %2015 = vst.msk [vmem:[%s3 + $0x1c0] sm:$0xf] %vm1902, %v1886
  %2016 = vst.msk [vmem:[%s3 + $0x1c4] sm:$0xf] %vm1902, %v1887
  %2017 = vst.msk [vmem:[%s3 + $0x1c8] sm:$0xf] %vm1902, %v1888
  %2018 = vst.msk [vmem:[%s3 + $0x1cc] sm:$0xf] %vm1902, %v1889
  %2019 = vst.msk [vmem:[%s3 + $0x1d0] sm:$0xf] %vm1902, %v1890
  %2020 = vst.msk [vmem:[%s3 + $0x1d4] sm:$0xf] %vm1902, %v1891
  %2021 = vst.msk [vmem:[%s3 + $0x1d8] sm:$0xf] %vm1902, %v1892
  %2022 = vst.msk [vmem:[%s3 + $0x1dc] sm:$0xf] %vm1902, %v1893
  %2023 = vst.msk [vmem:[%s3 + $0x1e0] sm:$0xf] %vm1902, %v1894
  %2024 = vst.msk [vmem:[%s3 + $0x1e4] sm:$0xf] %vm1902, %v1895
  %2025 = vst.msk [vmem:[%s3 + $0x1e8] sm:$0xf] %vm1902, %v1896
  %2026 = vst.msk [vmem:[%s3 + $0x1ec] sm:$0xf] %vm1902, %v1897
  %2027 = vst.msk [vmem:[%s3 + $0x1f0] sm:$0xf] %vm1902, %v1898
  %2028 = vst.msk [vmem:[%s3 + $0x1f4] sm:$0xf] %vm1902, %v1899
  %2029 = vst.msk [vmem:[%s3 + $0x1f8] sm:$0xf] %vm1902, %v1900
  %2030 = vst.msk [vmem:[%s3 + $0x1fc] sm:$0xf] %vm1902, %v1901
  // Predicated region
  $region14: #{skill_proposal_forward.7} parent=0 // pred_check
    _
  $region15: #{skill_proposal_forward.7} parent=0 // pred_check_branch
    %2032 = sbr.rel (0) target = $region17
  $region16: #{skill_proposal_forward.7} parent=0 // pred_region
    _
  $region17: #{skill_proposal_forward.7} parent=0 // pred_fallthru
    _
  // Predicated region
  $region18: #{skill_proposal_forward.7} parent=0 // pred_check
    _
  $region19: #{skill_proposal_forward.7} parent=0 // pred_check_branch
    %2034 = sbr.rel (0) target = $region21
  $region20: #{skill_proposal_forward.7} parent=0 // pred_region
    _
  $region21: #{skill_proposal_forward.7} parent=0 // pred_fallthru
    _

// kernel: skill_proposal_forward.8
$region0: #{skill_proposal_forward.8}
  #allocation0 [shape = 'u32[]', space=smem, size = 0x4, offset = 0x4, fixed_abs, tag = 'smem constant byte address 0x4 - core index']
  #allocation1 [shape = 'u32[72,128]{1,0:T(1,128)}', space=vmem, size = 0x9000, scoped, tag = 'internal scratch']
  %s0 = inlined_call_operand.vmem [shape: bf16[256,144], index: 0, kind: input, shape index: {}]
  %s1 = inlined_call_operand.vmem [shape: bf16[144,16], index: 1, kind: input, shape index: {}]
  %s2 = inlined_call_operand.vmem [shape: f32[1,16], index: 2, kind: input, shape index: {}]
  %s3 = inlined_call_operand.vmem [shape: bf16[256,16], index: 3, kind: output, shape index: {}]
  %s4 = sld [smem:[#allocation0]]
  $region22: #{skill_proposal_forward.8} parent=0
    _
  %s6 = ssub.s32 1, %s4
  %s7 = scalar_select 0, %s6, %s4
  // Predicated region
  $region2: #{skill_proposal_forward.8} parent=0 // pred_check
    _
  $region3: #{skill_proposal_forward.8} parent=0 // pred_check_branch
    %9 = sbr.rel (0) target = $region5
  $region4: #{skill_proposal_forward.8} parent=0 // pred_region
    _
  $region5: #{skill_proposal_forward.8} parent=0 // pred_fallthru
    _
  // Predicated region
  $region6: #{skill_proposal_forward.8} parent=0 // pred_check
    _
  $region7: #{skill_proposal_forward.8} parent=0 // pred_check_branch
    %11 = sbr.rel (0) target = $region9
  $region8: #{skill_proposal_forward.8} parent=0 // pred_region
    _
  $region9: #{skill_proposal_forward.8} parent=0 // pred_fallthru
    _
  // Predicated region
  $region10: #{skill_proposal_forward.8} parent=0 // pred_check
    _
  $region11: #{skill_proposal_forward.8} parent=0 // pred_check_branch
    %13 = sbr.rel (0) target = $region13
  $region12: #{skill_proposal_forward.8} parent=0 // pred_region
    _
  $region13: #{skill_proposal_forward.8} parent=0 // pred_fallthru
    _
  %v15 = vld [vmem:[%s0] sm:$0xff]
  %v16 = vld [vmem:[%s0 + $0x8] sm:$0xff]
  %v17 = vld [vmem:[%s0 + $0x10] sm:$0xff]
  %v18 = vld [vmem:[%s0 + $0x18] sm:$0xff]
  %v19 = vld [vmem:[%s0 + $0x20] sm:$0xff]
  %v20 = vld [vmem:[%s0 + $0x28] sm:$0xff]
  %v21 = vld [vmem:[%s0 + $0x30] sm:$0xff]
  %v22 = vld [vmem:[%s0 + $0x38] sm:$0xff]
  %v23 = vld [vmem:[%s0 + $0x40] sm:$0xff]
  %v24 = vld [vmem:[%s0 + $0x48] sm:$0xff]
  %v25 = vld [vmem:[%s0 + $0x50] sm:$0xff]
  %v26 = vld [vmem:[%s0 + $0x58] sm:$0xff]
  %v27 = vld [vmem:[%s0 + $0x60] sm:$0xff]
  %v28 = vld [vmem:[%s0 + $0x68] sm:$0xff]
  %v29 = vld [vmem:[%s0 + $0x70] sm:$0xff]
  %v30 = vld [vmem:[%s0 + $0x78] sm:$0xff]
  %v31 = vld [vmem:[%s0 + $0x80] sm:$0xff]
  %v32 = vld [vmem:[%s0 + $0x88] sm:$0xff]
  %v33 = vld [vmem:[%s0 + $0x90] sm:$0xff]
  %v34 = vld [vmem:[%s0 + $0x98] sm:$0xff]
  %v35 = vld [vmem:[%s0 + $0xa0] sm:$0xff]
  %v36 = vld [vmem:[%s0 + $0xa8] sm:$0xff]
  %v37 = vld [vmem:[%s0 + $0xb0] sm:$0xff]
  %v38 = vld [vmem:[%s0 + $0xb8] sm:$0xff]
  %v39 = vld [vmem:[%s0 + $0xc0] sm:$0xff]
  %v40 = vld [vmem:[%s0 + $0xc8] sm:$0xff]
  %v41 = vld [vmem:[%s0 + $0xd0] sm:$0xff]
  %v42 = vld [vmem:[%s0 + $0xd8] sm:$0xff]
  %v43 = vld [vmem:[%s0 + $0xe0] sm:$0xff]
  %v44 = vld [vmem:[%s0 + $0xe8] sm:$0xff]
  %v45 = vld [vmem:[%s0 + $0xf0] sm:$0xff]
  %v46 = vld [vmem:[%s0 + $0xf8] sm:$0xff]
  %v47 = vld [vmem:[%s1] sm:$0xf]
  %v48 = vld [vmem:[%s1 + $0x4] sm:$0xf]
  %v49 = vld [vmem:[%s1 + $0x8] sm:$0xf]
  %v50 = vld [vmem:[%s1 + $0xc] sm:$0xf]
  %v51 = vld [vmem:[%s1 + $0x10] sm:$0xf]
  %v52 = vld [vmem:[%s1 + $0x14] sm:$0xf]
  %v53 = vld [vmem:[%s1 + $0x18] sm:$0xf]
  %v54 = vld [vmem:[%s1 + $0x1c] sm:$0xf]
  %v55 = vld [vmem:[%s1 + $0x20] sm:$0xf]
  %v56 = vld [vmem:[%s1 + $0x24] sm:$0xf]
  %v57 = vld [vmem:[%s1 + $0x28] sm:$0xf]
  %v58 = vld [vmem:[%s1 + $0x2c] sm:$0xf]
  %v59 = vld [vmem:[%s1 + $0x30] sm:$0xf]
  %v60 = vld [vmem:[%s1 + $0x34] sm:$0xf]
  %v61 = vld [vmem:[%s1 + $0x38] sm:$0xf]
  %v62 = vld [vmem:[%s1 + $0x3c] sm:$0xf]
  %v63 = vld [vmem:[%s1 + $0x40] sm:$0xf]
  %v64 = vld [vmem:[%s1 + $0x44] sm:$0xf]
  %v65 = vld [vmem:[%s2] sm:$0x1]
  %v67 = vperm.slane %v65, 0
  %v101 = vunpack.c.l.b16 %v15
  %v102 = vunpack.c.h.b16 %v15
  %v103 = vunpack.c.l.b16 %v16
  %v104 = vunpack.c.h.b16 %v16
  %v105 = vunpack.c.l.b16 %v17
  %v106 = vunpack.c.h.b16 %v17
  %v107 = vunpack.c.l.b16 %v18
  %v108 = vunpack.c.h.b16 %v18
  %v109 = vunpack.c.l.b16 %v19
  %v110 = vunpack.c.h.b16 %v19
  %v111 = vunpack.c.l.b16 %v20
  %v112 = vunpack.c.h.b16 %v20
  %v113 = vunpack.c.l.b16 %v21
  %v114 = vunpack.c.h.b16 %v21
  %v115 = vunpack.c.l.b16 %v22
  %v116 = vunpack.c.h.b16 %v22
  %v117 = vunpack.c.l.b16 %v23
  %v118 = vunpack.c.h.b16 %v23
  %v119 = vunpack.c.l.b16 %v24
  %v120 = vunpack.c.h.b16 %v24
  %v121 = vunpack.c.l.b16 %v25
  %v122 = vunpack.c.h.b16 %v25
  %v123 = vunpack.c.l.b16 %v26
  %v124 = vunpack.c.h.b16 %v26
  %v125 = vunpack.c.l.b16 %v27
  %v126 = vunpack.c.h.b16 %v27
  %v127 = vunpack.c.l.b16 %v28
  %v128 = vunpack.c.h.b16 %v28
  %v129 = vunpack.c.l.b16 %v29
  %v130 = vunpack.c.h.b16 %v29
  %v131 = vunpack.c.l.b16 %v30
  %v132 = vunpack.c.h.b16 %v30
  %v133 = vunpack.c.l.b16 %v31
  %v134 = vunpack.c.h.b16 %v31
  %v135 = vunpack.c.l.b16 %v32
  %v136 = vunpack.c.h.b16 %v32
  %v137 = vunpack.c.l.b16 %v33
  %v138 = vunpack.c.h.b16 %v33
  %v139 = vunpack.c.l.b16 %v34
  %v140 = vunpack.c.h.b16 %v34
  %v141 = vunpack.c.l.b16 %v35
  %v142 = vunpack.c.h.b16 %v35
  %v143 = vunpack.c.l.b16 %v36
  %v144 = vunpack.c.h.b16 %v36
  %v145 = vunpack.c.l.b16 %v37
  %v146 = vunpack.c.h.b16 %v37
  %v147 = vunpack.c.l.b16 %v38
  %v148 = vunpack.c.h.b16 %v38
  %v149 = vunpack.c.l.b16 %v39
  %v150 = vunpack.c.h.b16 %v39
  %v151 = vunpack.c.l.b16 %v40
  %v152 = vunpack.c.h.b16 %v40
  %v153 = vunpack.c.l.b16 %v41
  %v154 = vunpack.c.h.b16 %v41
  %v155 = vunpack.c.l.b16 %v42
  %v156 = vunpack.c.h.b16 %v42
  %v157 = vunpack.c.l.b16 %v43
  %v158 = vunpack.c.h.b16 %v43
  %v159 = vunpack.c.l.b16 %v44
  %v160 = vunpack.c.h.b16 %v44
  %v161 = vunpack.c.l.b16 %v45
  %v162 = vunpack.c.h.b16 %v45
  %v163 = vunpack.c.l.b16 %v46
  %v164 = vunpack.c.h.b16 %v46
  %v165 = vpack.c.b16 %v103, %v101
  %v166 = vpack.c.b16 %v104, %v102
  %v167 = vpack.c.b16 %v107, %v105
  %v168 = vpack.c.b16 %v108, %v106
  %v169 = vpack.c.b16 %v111, %v109
  %v170 = vpack.c.b16 %v112, %v110
  %v171 = vpack.c.b16 %v115, %v113
  %v172 = vpack.c.b16 %v116, %v114
  %v173 = vpack.c.b16 %v119, %v117
  %v174 = vpack.c.b16 %v120, %v118
  %v175 = vpack.c.b16 %v123, %v121
  %v176 = vpack.c.b16 %v124, %v122
  %v177 = vpack.c.b16 %v127, %v125
  %v178 = vpack.c.b16 %v128, %v126
  %v179 = vpack.c.b16 %v131, %v129
  %v180 = vpack.c.b16 %v132, %v130
  %v181 = vpack.c.b16 %v135, %v133
  %v182 = vpack.c.b16 %v136, %v134
  %v183 = vpack.c.b16 %v139, %v137
  %v184 = vpack.c.b16 %v140, %v138
  %v185 = vpack.c.b16 %v143, %v141
  %v186 = vpack.c.b16 %v144, %v142
  %v187 = vpack.c.b16 %v147, %v145
  %v188 = vpack.c.b16 %v148, %v146
  %v189 = vpack.c.b16 %v151, %v149
  %v190 = vpack.c.b16 %v152, %v150
  %v191 = vpack.c.b16 %v155, %v153
  %v192 = vpack.c.b16 %v156, %v154
  %v193 = vpack.c.b16 %v159, %v157
  %v194 = vpack.c.b16 %v160, %v158
  %v195 = vpack.c.b16 %v163, %v161
  %v196 = vpack.c.b16 %v164, %v162
  %v231 = vunpack.c.l.b16 %v47
  %v232 = vunpack.c.l.b16 %v48
  %v233 = vunpack.c.l.b16 %v49
  %v234 = vunpack.c.l.b16 %v50
  %v235 = vunpack.c.l.b16 %v51
  %v236 = vunpack.c.l.b16 %v52
  %v237 = vunpack.c.l.b16 %v53
  %v238 = vunpack.c.l.b16 %v54
  %v239 = vunpack.c.l.b16 %v55
  %v240 = vunpack.c.l.b16 %v56
  %v241 = vunpack.c.l.b16 %v57
  %v242 = vunpack.c.l.b16 %v58
  %v243 = vunpack.c.l.b16 %v59
  %v244 = vunpack.c.l.b16 %v60
  %v245 = vunpack.c.l.b16 %v61
  %v246 = vunpack.c.l.b16 %v62
  %v247 = vunpack.c.l.b16 %v63
  %v248 = vunpack.c.l.b16 %v64
  %v249 = vpack.c.b16 %v232, %v231
  %v250 = vpack.c.b16 %v234, %v233
  %v251 = vpack.c.b16 %v236, %v235
  %v252 = vpack.c.b16 %v238, %v237
  %v253 = vpack.c.b16 %v240, %v239
  %v254 = vpack.c.b16 %v242, %v241
  %v255 = vpack.c.b16 %v244, %v243
  %v256 = vpack.c.b16 %v246, %v245
  %v257 = vpack.c.b16 %v248, %v247
  %vm267 = vcmask 130048
  %v269 = vsel %vm267, %v166, 0
  %v272 = vsel %vm267, %v168, 0
  %v275 = vsel %vm267, %v170, 0
  %v278 = vsel %vm267, %v172, 0
  %v281 = vsel %vm267, %v174, 0
  %v284 = vsel %vm267, %v176, 0
  %v287 = vsel %vm267, %v178, 0
  %v290 = vsel %vm267, %v180, 0
  %v293 = vsel %vm267, %v182, 0
  %v296 = vsel %vm267, %v184, 0
  %v299 = vsel %vm267, %v186, 0
  %v302 = vsel %vm267, %v188, 0
  %v305 = vsel %vm267, %v190, 0
  %v308 = vsel %vm267, %v192, 0
  %v311 = vsel %vm267, %v194, 0
  %v314 = vsel %vm267, %v196, 0
  %316 = vmatpush.bf16.msra.mxu0 %v256
  %317 = vmatpush.bf16.msra.mxu0 %v255
  %318 = vmatpush.bf16.msra.mxu0 %v254
  %319 = vmatpush.bf16.msra.mxu0 %v253
  %320 = vmatpush.bf16.msra.mxu0 %v252
  %321 = vmatpush.bf16.msra.mxu0 %v251
  %322 = vmatpush.bf16.msra.mxu0 %v250
  %323 = vmatpush.bf16.msra.mxu0 %v249
  %324 = vmatmul.bf16.gmra.mxu0 %v165
  %v325 = vpop.f32.mrf.mxu0
  %v326 = vadd.f32 %v67, %v325
  %v327 = vpop.f32.mrf.mxu0
  %v328 = vadd.f32 %v67, %v327
  %329 = vmatmul.bf16.gmra.mxu0 %v167
  %v330 = vpop.f32.mrf.mxu0
  %v331 = vadd.f32 %v67, %v330
  %v332 = vpop.f32.mrf.mxu0
  %v333 = vadd.f32 %v67, %v332
  %334 = vmatmul.bf16.gmra.mxu0 %v169
  %v335 = vpop.f32.mrf.mxu0
  %v336 = vadd.f32 %v67, %v335
  %v337 = vpop.f32.mrf.mxu0
  %v338 = vadd.f32 %v67, %v337
  %339 = vmatmul.bf16.gmra.mxu0 %v171
  %v340 = vpop.f32.mrf.mxu0
  %v341 = vadd.f32 %v67, %v340
  %v342 = vpop.f32.mrf.mxu0
  %v343 = vadd.f32 %v67, %v342
  %344 = vmatmul.bf16.gmra.mxu0 %v173
  %v345 = vpop.f32.mrf.mxu0
  %v346 = vadd.f32 %v67, %v345
  %v347 = vpop.f32.mrf.mxu0
  %v348 = vadd.f32 %v67, %v347
  %349 = vmatmul.bf16.gmra.mxu0 %v175
  %v350 = vpop.f32.mrf.mxu0
  %v351 = vadd.f32 %v67, %v350
  %v352 = vpop.f32.mrf.mxu0
  %v353 = vadd.f32 %v67, %v352
  %354 = vmatmul.bf16.gmra.mxu0 %v177
  %v355 = vpop.f32.mrf.mxu0
  %v356 = vadd.f32 %v67, %v355
  %v357 = vpop.f32.mrf.mxu0
  %v358 = vadd.f32 %v67, %v357
  %359 = vmatmul.bf16.gmra.mxu0 %v179
  %v360 = vpop.f32.mrf.mxu0
  %v361 = vadd.f32 %v67, %v360
  %v362 = vpop.f32.mrf.mxu0
  %v363 = vadd.f32 %v67, %v362
  %364 = vmatmul.bf16.gmra.mxu0 %v181
  %v365 = vpop.f32.mrf.mxu0
  %v366 = vadd.f32 %v67, %v365
  %v367 = vpop.f32.mrf.mxu0
  %v368 = vadd.f32 %v67, %v367
  %369 = vmatmul.bf16.gmra.mxu0 %v183
  %v370 = vpop.f32.mrf.mxu0
  %v371 = vadd.f32 %v67, %v370
  %v372 = vpop.f32.mrf.mxu0
  %v373 = vadd.f32 %v67, %v372
  %374 = vmatmul.bf16.gmra.mxu0 %v185
  %v375 = vpop.f32.mrf.mxu0
  %v376 = vadd.f32 %v67, %v375
  %v377 = vpop.f32.mrf.mxu0
  %v378 = vadd.f32 %v67, %v377
  %379 = vmatmul.bf16.gmra.mxu0 %v187
  %v380 = vpop.f32.mrf.mxu0
  %v381 = vadd.f32 %v67, %v380
  %v382 = vpop.f32.mrf.mxu0
  %v383 = vadd.f32 %v67, %v382
  %384 = vmatmul.bf16.gmra.mxu0 %v189
  %v385 = vpop.f32.mrf.mxu0
  %v386 = vadd.f32 %v67, %v385
  %v387 = vpop.f32.mrf.mxu0
  %v388 = vadd.f32 %v67, %v387
  %389 = vmatmul.bf16.gmra.mxu0 %v191
  %v390 = vpop.f32.mrf.mxu0
  %v391 = vadd.f32 %v67, %v390
  %v392 = vpop.f32.mrf.mxu0
  %v393 = vadd.f32 %v67, %v392
  %394 = vmatmul.bf16.gmra.mxu0 %v193
  %v395 = vpop.f32.mrf.mxu0
  %v396 = vadd.f32 %v67, %v395
  %v397 = vpop.f32.mrf.mxu0
  %v398 = vadd.f32 %v67, %v397
  %399 = vmatmul.bf16.gmra.mxu0 %v195
  %v400 = vpop.f32.mrf.mxu0
  %v401 = vadd.f32 %v67, %v400
  %v402 = vpop.f32.mrf.mxu0
  %v403 = vadd.f32 %v67, %v402
  %404 = vdwg.mxu0
  %405 = vmatpush.bf16.msra.mxu0 0
  %406 = vmatpush.bf16.msra.mxu0 0
  %407 = vmatpush.bf16.msra.mxu0 0
  %408 = vmatpush.bf16.msra.mxu0 0
  %409 = vmatpush.bf16.msra.mxu0 0
  %410 = vmatpush.bf16.msra.mxu0 0
  %411 = vmatpush.bf16.msra.mxu0 0
  %412 = vmatpush.bf16.msra.mxu0 %v257
  %413 = vmatmul.bf16.gmra.mxu0 %v269
  %v414 = vpop.f32.mrf.mxu0
  %v415 = vadd.f32 %v326, %v414
  %v416 = vpop.f32.mrf.mxu0
  %v417 = vadd.f32 %v328, %v416
  %418 = vmatmul.bf16.gmra.mxu0 %v272
  %v419 = vpop.f32.mrf.mxu0
  %v420 = vadd.f32 %v331, %v419
  %v421 = vpop.f32.mrf.mxu0
  %v422 = vadd.f32 %v333, %v421
  %423 = vmatmul.bf16.gmra.mxu0 %v275
  %v424 = vpop.f32.mrf.mxu0
  %v425 = vadd.f32 %v336, %v424
  %v426 = vpop.f32.mrf.mxu0
  %v427 = vadd.f32 %v338, %v426
  %428 = vmatmul.bf16.gmra.mxu0 %v278
  %v429 = vpop.f32.mrf.mxu0
  %v430 = vadd.f32 %v341, %v429
  %v431 = vpop.f32.mrf.mxu0
  %v432 = vadd.f32 %v343, %v431
  %433 = vmatmul.bf16.gmra.mxu0 %v281
  %v434 = vpop.f32.mrf.mxu0
  %v435 = vadd.f32 %v346, %v434
  %v436 = vpop.f32.mrf.mxu0
  %v437 = vadd.f32 %v348, %v436
  %438 = vmatmul.bf16.gmra.mxu0 %v284
  %v439 = vpop.f32.mrf.mxu0
  %v440 = vadd.f32 %v351, %v439
  %v441 = vpop.f32.mrf.mxu0
  %v442 = vadd.f32 %v353, %v441
  %443 = vmatmul.bf16.gmra.mxu0 %v287
  %v444 = vpop.f32.mrf.mxu0
  %v445 = vadd.f32 %v356, %v444
  %v446 = vpop.f32.mrf.mxu0
  %v447 = vadd.f32 %v358, %v446
  %448 = vmatmul.bf16.gmra.mxu0 %v290
  %v449 = vpop.f32.mrf.mxu0
  %v450 = vadd.f32 %v361, %v449
  %v451 = vpop.f32.mrf.mxu0
  %v452 = vadd.f32 %v363, %v451
  %453 = vmatmul.bf16.gmra.mxu0 %v293
  %v454 = vpop.f32.mrf.mxu0
  %v455 = vadd.f32 %v366, %v454
  %v456 = vpop.f32.mrf.mxu0
  %v457 = vadd.f32 %v368, %v456
  %458 = vmatmul.bf16.gmra.mxu0 %v296
  %v459 = vpop.f32.mrf.mxu0
  %v460 = vadd.f32 %v371, %v459
  %v461 = vpop.f32.mrf.mxu0
  %v462 = vadd.f32 %v373, %v461
  %463 = vmatmul.bf16.gmra.mxu0 %v299
  %v464 = vpop.f32.mrf.mxu0
  %v465 = vadd.f32 %v376, %v464
  %v466 = vpop.f32.mrf.mxu0
  %v467 = vadd.f32 %v378, %v466
  %468 = vmatmul.bf16.gmra.mxu0 %v302
  %v469 = vpop.f32.mrf.mxu0
  %v470 = vadd.f32 %v381, %v469
  %v471 = vpop.f32.mrf.mxu0
  %v472 = vadd.f32 %v383, %v471
  %473 = vmatmul.bf16.gmra.mxu0 %v305
  %v474 = vpop.f32.mrf.mxu0
  %v475 = vadd.f32 %v386, %v474
  %v476 = vpop.f32.mrf.mxu0
  %v477 = vadd.f32 %v388, %v476
  %478 = vmatmul.bf16.gmra.mxu0 %v308
  %v479 = vpop.f32.mrf.mxu0
  %v480 = vadd.f32 %v391, %v479
  %v481 = vpop.f32.mrf.mxu0
  %v482 = vadd.f32 %v393, %v481
  %483 = vmatmul.bf16.gmra.mxu0 %v311
  %v484 = vpop.f32.mrf.mxu0
  %v485 = vadd.f32 %v396, %v484
  %v486 = vpop.f32.mrf.mxu0
  %v487 = vadd.f32 %v398, %v486
  %488 = vmatmul.bf16.gmra.mxu0 %v314
  %v489 = vpop.f32.mrf.mxu0
  %v490 = vadd.f32 %v401, %v489
  %v491 = vpop.f32.mrf.mxu0
  %v492 = vadd.f32 %v403, %v491
  %493 = vdwg.mxu0
  %v494 = vmax.f32 %v415, 0.0
  %v495 = vmax.f32 %v417, 0.0
  %v496 = vmax.f32 %v420, 0.0
  %v497 = vmax.f32 %v422, 0.0
  %v498 = vmax.f32 %v425, 0.0
  %v499 = vmax.f32 %v427, 0.0
  %v500 = vmax.f32 %v430, 0.0
  %v501 = vmax.f32 %v432, 0.0
  %v502 = vmax.f32 %v435, 0.0
  %v503 = vmax.f32 %v437, 0.0
  %v504 = vmax.f32 %v440, 0.0
  %v505 = vmax.f32 %v442, 0.0
  %v506 = vmax.f32 %v445, 0.0
  %v507 = vmax.f32 %v447, 0.0
  %v508 = vmax.f32 %v450, 0.0
  %v509 = vmax.f32 %v452, 0.0
  %v510 = vmax.f32 %v455, 0.0
  %v511 = vmax.f32 %v457, 0.0
  %v512 = vmax.f32 %v460, 0.0
  %v513 = vmax.f32 %v462, 0.0
  %v514 = vmax.f32 %v465, 0.0
  %v515 = vmax.f32 %v467, 0.0
  %v516 = vmax.f32 %v470, 0.0
  %v517 = vmax.f32 %v472, 0.0
  %v518 = vmax.f32 %v475, 0.0
  %v519 = vmax.f32 %v477, 0.0
  %v520 = vmax.f32 %v480, 0.0
  %v521 = vmax.f32 %v482, 0.0
  %v522 = vmax.f32 %v485, 0.0
  %v523 = vmax.f32 %v487, 0.0
  %v524 = vmax.f32 %v490, 0.0
  %v525 = vmax.f32 %v492, 0.0
  %v526 = vpack.c.bf16 %v494, %v494
  %v527 = vpack.c.bf16 %v495, %v495
  %v528 = vpack.c.bf16 %v496, %v496
  %v529 = vpack.c.bf16 %v497, %v497
  %v530 = vpack.c.bf16 %v498, %v498
  %v531 = vpack.c.bf16 %v499, %v499
  %v532 = vpack.c.bf16 %v500, %v500
  %v533 = vpack.c.bf16 %v501, %v501
  %v534 = vpack.c.bf16 %v502, %v502
  %v535 = vpack.c.bf16 %v503, %v503
  %v536 = vpack.c.bf16 %v504, %v504
  %v537 = vpack.c.bf16 %v505, %v505
  %v538 = vpack.c.bf16 %v506, %v506
  %v539 = vpack.c.bf16 %v507, %v507
  %v540 = vpack.c.bf16 %v508, %v508
  %v541 = vpack.c.bf16 %v509, %v509
  %v542 = vpack.c.bf16 %v510, %v510
  %v543 = vpack.c.bf16 %v511, %v511
  %v544 = vpack.c.bf16 %v512, %v512
  %v545 = vpack.c.bf16 %v513, %v513
  %v546 = vpack.c.bf16 %v514, %v514
  %v547 = vpack.c.bf16 %v515, %v515
  %v548 = vpack.c.bf16 %v516, %v516
  %v549 = vpack.c.bf16 %v517, %v517
  %v550 = vpack.c.bf16 %v518, %v518
  %v551 = vpack.c.bf16 %v519, %v519
  %v552 = vpack.c.bf16 %v520, %v520
  %v553 = vpack.c.bf16 %v521, %v521
  %v554 = vpack.c.bf16 %v522, %v522
  %v555 = vpack.c.bf16 %v523, %v523
  %v556 = vpack.c.bf16 %v524, %v524
  %v557 = vpack.c.bf16 %v525, %v525
  %vm558 = vcmask 125952
  %559 = vst.msk [vmem:[%s3] sm:$0xf] %vm558, %v526
  %560 = vst.msk [vmem:[%s3 + $0x4] sm:$0xf] %vm558, %v527
  %561 = vst.msk [vmem:[%s3 + $0x8] sm:$0xf] %vm558, %v528
  %562 = vst.msk [vmem:[%s3 + $0xc] sm:$0xf] %vm558, %v529
  %563 = vst.msk [vmem:[%s3 + $0x10] sm:$0xf] %vm558, %v530
  %564 = vst.msk [vmem:[%s3 + $0x14] sm:$0xf] %vm558, %v531
  %565 = vst.msk [vmem:[%s3 + $0x18] sm:$0xf] %vm558, %v532
  %566 = vst.msk [vmem:[%s3 + $0x1c] sm:$0xf] %vm558, %v533
  %567 = vst.msk [vmem:[%s3 + $0x20] sm:$0xf] %vm558, %v534
  %568 = vst.msk [vmem:[%s3 + $0x24] sm:$0xf] %vm558, %v535
  %569 = vst.msk [vmem:[%s3 + $0x28] sm:$0xf] %vm558, %v536
  %570 = vst.msk [vmem:[%s3 + $0x2c] sm:$0xf] %vm558, %v537
  %571 = vst.msk [vmem:[%s3 + $0x30] sm:$0xf] %vm558, %v538
  %572 = vst.msk [vmem:[%s3 + $0x34] sm:$0xf] %vm558, %v539
  %573 = vst.msk [vmem:[%s3 + $0x38] sm:$0xf] %vm558, %v540
  %574 = vst.msk [vmem:[%s3 + $0x3c] sm:$0xf] %vm558, %v541
  %575 = vst.msk [vmem:[%s3 + $0x40] sm:$0xf] %vm558, %v542
  %576 = vst.msk [vmem:[%s3 + $0x44] sm:$0xf] %vm558, %v543
  %577 = vst.msk [vmem:[%s3 + $0x48] sm:$0xf] %vm558, %v544
  %578 = vst.msk [vmem:[%s3 + $0x4c] sm:$0xf] %vm558, %v545
  %579 = vst.msk [vmem:[%s3 + $0x50] sm:$0xf] %vm558, %v546
  %580 = vst.msk [vmem:[%s3 + $0x54] sm:$0xf] %vm558, %v547
  %581 = vst.msk [vmem:[%s3 + $0x58] sm:$0xf] %vm558, %v548
  %582 = vst.msk [vmem:[%s3 + $0x5c] sm:$0xf] %vm558, %v549
  %583 = vst.msk [vmem:[%s3 + $0x60] sm:$0xf] %vm558, %v550
  %584 = vst.msk [vmem:[%s3 + $0x64] sm:$0xf] %vm558, %v551
  %585 = vst.msk [vmem:[%s3 + $0x68] sm:$0xf] %vm558, %v552
  %586 = vst.msk [vmem:[%s3 + $0x6c] sm:$0xf] %vm558, %v553
  %587 = vst.msk [vmem:[%s3 + $0x70] sm:$0xf] %vm558, %v554
  %588 = vst.msk [vmem:[%s3 + $0x74] sm:$0xf] %vm558, %v555
  %589 = vst.msk [vmem:[%s3 + $0x78] sm:$0xf] %vm558, %v556
  %590 = vst.msk [vmem:[%s3 + $0x7c] sm:$0xf] %vm558, %v557
  // Predicated region
  $region14: #{skill_proposal_forward.8} parent=0 // pred_check
    _
  $region15: #{skill_proposal_forward.8} parent=0 // pred_check_branch
    %592 = sbr.rel (0) target = $region17
  $region16: #{skill_proposal_forward.8} parent=0 // pred_region
    _
  $region17: #{skill_proposal_forward.8} parent=0 // pred_fallthru
    _
  // Predicated region
  $region18: #{skill_proposal_forward.8} parent=0 // pred_check
    _
  $region19: #{skill_proposal_forward.8} parent=0 // pred_check_branch
    %594 = sbr.rel (0) target = $region21
  $region20: #{skill_proposal_forward.8} parent=0 // pred_region
    _
  $region21: #{skill_proposal_forward.8} parent=0 // pred_fallthru
    _

// kernel: skill_proposal_forward.9
$region0: #{skill_proposal_forward.9}
  #allocation0 [shape = 'u32[]', space=smem, size = 0x4, offset = 0x4, fixed_abs, tag = 'smem constant byte address 0x4 - core index']
  #allocation1 [shape = 'u32[72,128]{1,0:T(1,128)}', space=vmem, size = 0x9000, scoped, tag = 'internal scratch']
  %s0 = inlined_call_operand.vmem [shape: f32[4,1024], index: 0, kind: input, shape index: {}]
  %s1 = inlined_call_operand.vmem [shape: f32[1024,64], index: 1, kind: input, shape index: {}]
  %s2 = inlined_call_operand.vmem [shape: f32[1,64], index: 2, kind: input, shape index: {}]
  %s3 = inlined_call_operand.vmem [shape: f32[64,32], index: 3, kind: input, shape index: {}]
  %s4 = inlined_call_operand.vmem [shape: f32[1,32], index: 4, kind: input, shape index: {}]
  %s5 = inlined_call_operand.vmem [shape: f32[32,64], index: 5, kind: input, shape index: {}]
  %s6 = inlined_call_operand.vmem [shape: f32[1,64], index: 6, kind: input, shape index: {}]
  %s7 = inlined_call_operand.vmem [shape: f32[64,64], index: 7, kind: input, shape index: {}]
  %s8 = inlined_call_operand.vmem [shape: f32[1,64], index: 8, kind: input, shape index: {}]
  %s9 = inlined_call_operand.vmem [shape: f32[64,16], index: 9, kind: input, shape index: {}]
  %s10 = inlined_call_operand.vmem [shape: f32[1,16], index: 10, kind: input, shape index: {}]
  %s11 = inlined_call_operand.vmem [shape: f32[32,64], index: 11, kind: input, shape index: {}]
  %s12 = inlined_call_operand.vmem [shape: f32[16,64], index: 12, kind: input, shape index: {}]
  %s13 = inlined_call_operand.vmem [shape: f32[1,64], index: 13, kind: input, shape index: {}]
  %s14 = inlined_call_operand.vmem [shape: f32[64,64], index: 14, kind: input, shape index: {}]
  %s15 = inlined_call_operand.vmem [shape: f32[1,64], index: 15, kind: input, shape index: {}]
  %s16 = inlined_call_operand.vmem [shape: f32[64,64], index: 16, kind: input, shape index: {}]
  %s17 = inlined_call_operand.vmem [shape: f32[1,64], index: 17, kind: input, shape index: {}]
  %s18 = inlined_call_operand.vmem [shape: f32[64,8], index: 18, kind: input, shape index: {}]
  %s19 = inlined_call_operand.vmem [shape: f32[1,8], index: 19, kind: input, shape index: {}]
  %s20 = inlined_call_operand.vmem [shape: f32[64,8], index: 20, kind: input, shape index: {}]
  %s21 = inlined_call_operand.vmem [shape: f32[1,8], index: 21, kind: input, shape index: {}]
  %s22 = inlined_call_operand.hbm [shape: f32[2,8], index: 22, kind: output, shape index: {0}]
  %s23 = inlined_call_operand.hbm [shape: f32[2,8], index: 23, kind: output, shape index: {1}]
  %24 = xla_tuple %s22, %s23
  %s25 = sld [smem:[#allocation0]]
  $region106: #{skill_proposal_forward.9} parent=0
    _
  %s27 = ssub.s32 1, %s25
  %s28 = scalar_select 0, %s27, %s25
  $region1: #{skill_proposal_forward.9} parent=0
    #allocation2 [shape = 'u8[1024]{0}', space=vmem, size = 0x400, scoped, tag = 'output window, operand 0, single buffered']
    #allocation3 [shape = 's32[1]{0}', space=sflag, size = 0x4, scoped, tag = 'scoped memory for skill_proposal_forward.9']
    #allocation4 [shape = 'u8[1024]{0}', space=vmem, size = 0x400, scoped, tag = 'output window, operand 1, single buffered']
    #allocation5 [shape = 's32[1]{0}', space=sflag, size = 0x4, scoped, tag = 'scoped memory for skill_proposal_forward.9']
    %29 = vsyncpa [#allocation3], 0
    %30 = vsyncpa [#allocation5], 0
    // Predicated region
    $region2: #{skill_proposal_forward.9} parent=1 // pred_check
      _
    $region3: #{skill_proposal_forward.9} parent=1 // pred_check_branch
      %32 = sbr.rel (0) target = $region5
    $region4: #{skill_proposal_forward.9} parent=1 // pred_region
      _
    $region5: #{skill_proposal_forward.9} parent=1 // pred_fallthru
      _
    // Predicated region
    $region6: #{skill_proposal_forward.9} parent=1 // pred_check
      _
    $region7: #{skill_proposal_forward.9} parent=1 // pred_check_branch
      %34 = sbr.rel (0) target = $region9
    $region8: #{skill_proposal_forward.9} parent=1 // pred_region
      _
    $region9: #{skill_proposal_forward.9} parent=1 // pred_fallthru
      _
    // Predicated region
    $region10: #{skill_proposal_forward.9} parent=1 // pred_check
      _
    $region11: #{skill_proposal_forward.9} parent=1 // pred_check_branch
      %36 = sbr.rel (0) target = $region13
    $region12: #{skill_proposal_forward.9} parent=1 // pred_region
      _
    $region13: #{skill_proposal_forward.9} parent=1 // pred_fallthru
      _
    // Predicated region
    $region14: #{skill_proposal_forward.9} parent=1 // pred_check
      _
    $region15: #{skill_proposal_forward.9} parent=1 // pred_check_branch
      %38 = sbr.rel (0) target = $region17
    $region16: #{skill_proposal_forward.9} parent=1 // pred_region
      _
    $region17: #{skill_proposal_forward.9} parent=1 // pred_fallthru
      _
    // Predicated region
    $region18: #{skill_proposal_forward.9} parent=1 // pred_check
      _
    $region19: #{skill_proposal_forward.9} parent=1 // pred_check_branch
      %40 = sbr.rel (0) target = $region21
    $region20: #{skill_proposal_forward.9} parent=1 // pred_region
      _
    $region21: #{skill_proposal_forward.9} parent=1 // pred_fallthru
      _
    // Predicated region
    $region22: #{skill_proposal_forward.9} parent=1 // pred_check
      _
    $region23: #{skill_proposal_forward.9} parent=1 // pred_check_branch
      %42 = sbr.rel (0) target = $region25
    $region24: #{skill_proposal_forward.9} parent=1 // pred_region
      _
    $region25: #{skill_proposal_forward.9} parent=1 // pred_fallthru
      _
    // Predicated region
    $region26: #{skill_proposal_forward.9} parent=1 // pred_check
      _
    $region27: #{skill_proposal_forward.9} parent=1 // pred_check_branch
      %44 = sbr.rel (0) target = $region29
    $region28: #{skill_proposal_forward.9} parent=1 // pred_region
      _
    $region29: #{skill_proposal_forward.9} parent=1 // pred_fallthru
      _
    // Predicated region
    $region30: #{skill_proposal_forward.9} parent=1 // pred_check
      _
    $region31: #{skill_proposal_forward.9} parent=1 // pred_check_branch
      %46 = sbr.rel (0) target = $region33
    $region32: #{skill_proposal_forward.9} parent=1 // pred_region
      _
    $region33: #{skill_proposal_forward.9} parent=1 // pred_fallthru
      _
    // Predicated region
    $region34: #{skill_proposal_forward.9} parent=1 // pred_check
      _
    $region35: #{skill_proposal_forward.9} parent=1 // pred_check_branch
      %48 = sbr.rel (0) target = $region37
    $region36: #{skill_proposal_forward.9} parent=1 // pred_region
      _
    $region37: #{skill_proposal_forward.9} parent=1 // pred_fallthru
      _
    // Predicated region
    $region38: #{skill_proposal_forward.9} parent=1 // pred_check
      _
    $region39: #{skill_proposal_forward.9} parent=1 // pred_check_branch
      %50 = sbr.rel (0) target = $region41
    $region40: #{skill_proposal_forward.9} parent=1 // pred_region
      _
    $region41: #{skill_proposal_forward.9} parent=1 // pred_fallthru
      _
    // Predicated region
    $region42: #{skill_proposal_forward.9} parent=1 // pred_check
      _
    $region43: #{skill_proposal_forward.9} parent=1 // pred_check_branch
      %52 = sbr.rel (0) target = $region45
    $region44: #{skill_proposal_forward.9} parent=1 // pred_region
      _
    $region45: #{skill_proposal_forward.9} parent=1 // pred_fallthru
      _
    // Predicated region
    $region46: #{skill_proposal_forward.9} parent=1 // pred_check
      _
    $region47: #{skill_proposal_forward.9} parent=1 // pred_check_branch
      %54 = sbr.rel (0) target = $region49
    $region48: #{skill_proposal_forward.9} parent=1 // pred_region
      _
    $region49: #{skill_proposal_forward.9} parent=1 // pred_fallthru
      _
    // Predicated region
    $region50: #{skill_proposal_forward.9} parent=1 // pred_check
      _
    $region51: #{skill_proposal_forward.9} parent=1 // pred_check_branch
      %56 = sbr.rel (0) target = $region53
    $region52: #{skill_proposal_forward.9} parent=1 // pred_region
      _
    $region53: #{skill_proposal_forward.9} parent=1 // pred_fallthru
      _
    // Predicated region
    $region54: #{skill_proposal_forward.9} parent=1 // pred_check
      _
    $region55: #{skill_proposal_forward.9} parent=1 // pred_check_branch
      %58 = sbr.rel (0) target = $region57
    $region56: #{skill_proposal_forward.9} parent=1 // pred_region
      _
    $region57: #{skill_proposal_forward.9} parent=1 // pred_fallthru
      _
    // Predicated region
    $region58: #{skill_proposal_forward.9} parent=1 // pred_check
      _
    $region59: #{skill_proposal_forward.9} parent=1 // pred_check_branch
      %60 = sbr.rel (0) target = $region61
    $region60: #{skill_proposal_forward.9} parent=1 // pred_region
      _
    $region61: #{skill_proposal_forward.9} parent=1 // pred_fallthru
      _
    // Predicated region
    $region62: #{skill_proposal_forward.9} parent=1 // pred_check
      _
    $region63: #{skill_proposal_forward.9} parent=1 // pred_check_branch
      %62 = sbr.rel (0) target = $region65
    $region64: #{skill_proposal_forward.9} parent=1 // pred_region
      _
    $region65: #{skill_proposal_forward.9} parent=1 // pred_fallthru
      _
    // Predicated region
    $region66: #{skill_proposal_forward.9} parent=1 // pred_check
      _
    $region67: #{skill_proposal_forward.9} parent=1 // pred_check_branch
      %64 = sbr.rel (0) target = $region69
    $region68: #{skill_proposal_forward.9} parent=1 // pred_region
      _
    $region69: #{skill_proposal_forward.9} parent=1 // pred_fallthru
      _
    // Predicated region
    $region70: #{skill_proposal_forward.9} parent=1 // pred_check
      _
    $region71: #{skill_proposal_forward.9} parent=1 // pred_check_branch
      %66 = sbr.rel (0) target = $region73
    $region72: #{skill_proposal_forward.9} parent=1 // pred_region
      _
    $region73: #{skill_proposal_forward.9} parent=1 // pred_fallthru
      _
    // Predicated region
    $region74: #{skill_proposal_forward.9} parent=1 // pred_check
      _
    $region75: #{skill_proposal_forward.9} parent=1 // pred_check_branch
      %68 = sbr.rel (0) target = $region77
    $region76: #{skill_proposal_forward.9} parent=1 // pred_region
      _
    $region77: #{skill_proposal_forward.9} parent=1 // pred_fallthru
      _
    // Predicated region
    $region78: #{skill_proposal_forward.9} parent=1 // pred_check
      _
    $region79: #{skill_proposal_forward.9} parent=1 // pred_check_branch
      %70 = sbr.rel (0) target = $region81
    $region80: #{skill_proposal_forward.9} parent=1 // pred_region
      _
    $region81: #{skill_proposal_forward.9} parent=1 // pred_fallthru
      _
    // Predicated region
    $region82: #{skill_proposal_forward.9} parent=1 // pred_check
      _
    $region83: #{skill_proposal_forward.9} parent=1 // pred_check_branch
      %72 = sbr.rel (0) target = $region85
    $region84: #{skill_proposal_forward.9} parent=1 // pred_region
      _
    $region85: #{skill_proposal_forward.9} parent=1 // pred_fallthru
      _
    // Predicated region
    $region86: #{skill_proposal_forward.9} parent=1 // pred_check
      _
    $region87: #{skill_proposal_forward.9} parent=1 // pred_check_branch
      %74 = sbr.rel (0) target = $region89
    $region88: #{skill_proposal_forward.9} parent=1 // pred_region
      _
    $region89: #{skill_proposal_forward.9} parent=1 // pred_fallthru
      _
    %v75 = vld [vmem:[%s0] sm:$0xff]
    %v76 = vld [vmem:[%s0 + $0x8] sm:$0xff]
    %v77 = vld [vmem:[%s0 + $0x10] sm:$0xff]
    %v78 = vld [vmem:[%s0 + $0x18] sm:$0xff]
    %v79 = vld [vmem:[%s1] sm:$0xff]
    %v80 = vld [vmem:[%s1 + $0x8] sm:$0xff]
    %v81 = vld [vmem:[%s1 + $0x10] sm:$0xff]
    %v82 = vld [vmem:[%s1 + $0x18] sm:$0xff]
    %v83 = vld [vmem:[%s1 + $0x20] sm:$0xff]
    %v84 = vld [vmem:[%s1 + $0x28] sm:$0xff]
    %v85 = vld [vmem:[%s1 + $0x30] sm:$0xff]
    %v86 = vld [vmem:[%s1 + $0x38] sm:$0xff]
    %v87 = vld [vmem:[%s1 + $0x40] sm:$0xff]
    %v88 = vld [vmem:[%s1 + $0x48] sm:$0xff]
    %v89 = vld [vmem:[%s1 + $0x50] sm:$0xff]
    %v90 = vld [vmem:[%s1 + $0x58] sm:$0xff]
    %v91 = vld [vmem:[%s1 + $0x60] sm:$0xff]
    %v92 = vld [vmem:[%s1 + $0x68] sm:$0xff]
    %v93 = vld [vmem:[%s1 + $0x70] sm:$0xff]
    %v94 = vld [vmem:[%s1 + $0x78] sm:$0xff]
    %v95 = vld [vmem:[%s1 + $0x80] sm:$0xff]
    %v96 = vld [vmem:[%s1 + $0x88] sm:$0xff]
    %v97 = vld [vmem:[%s1 + $0x90] sm:$0xff]
    %v98 = vld [vmem:[%s1 + $0x98] sm:$0xff]
    %v99 = vld [vmem:[%s1 + $0xa0] sm:$0xff]
    %v100 = vld [vmem:[%s1 + $0xa8] sm:$0xff]
    %v101 = vld [vmem:[%s1 + $0xb0] sm:$0xff]
    %v102 = vld [vmem:[%s1 + $0xb8] sm:$0xff]
    %v103 = vld [vmem:[%s1 + $0xc0] sm:$0xff]
    %v104 = vld [vmem:[%s1 + $0xc8] sm:$0xff]
    %v105 = vld [vmem:[%s1 + $0xd0] sm:$0xff]
    %v106 = vld [vmem:[%s1 + $0xd8] sm:$0xff]
    %v107 = vld [vmem:[%s1 + $0xe0] sm:$0xff]
    %v108 = vld [vmem:[%s1 + $0xe8] sm:$0xff]
    %v109 = vld [vmem:[%s1 + $0xf0] sm:$0xff]
    %v110 = vld [vmem:[%s1 + $0xf8] sm:$0xff]
    %v111 = vld [vmem:[%s1 + $0x100] sm:$0xff]
    %v112 = vld [vmem:[%s1 + $0x108] sm:$0xff]
    %v113 = vld [vmem:[%s1 + $0x110] sm:$0xff]
    %v114 = vld [vmem:[%s1 + $0x118] sm:$0xff]
    %v115 = vld [vmem:[%s1 + $0x120] sm:$0xff]
    %v116 = vld [vmem:[%s1 + $0x128] sm:$0xff]
    %v117 = vld [vmem:[%s1 + $0x130] sm:$0xff]
    %v118 = vld [vmem:[%s1 + $0x138] sm:$0xff]
    %v119 = vld [vmem:[%s1 + $0x140] sm:$0xff]
    %v120 = vld [vmem:[%s1 + $0x148] sm:$0xff]
    %v121 = vld [vmem:[%s1 + $0x150] sm:$0xff]
    %v122 = vld [vmem:[%s1 + $0x158] sm:$0xff]
    %v123 = vld [vmem:[%s1 + $0x160] sm:$0xff]
    %v124 = vld [vmem:[%s1 + $0x168] sm:$0xff]
    %v125 = vld [vmem:[%s1 + $0x170] sm:$0xff]
    %v126 = vld [vmem:[%s1 + $0x178] sm:$0xff]
    %v127 = vld [vmem:[%s1 + $0x180] sm:$0xff]
    %v128 = vld [vmem:[%s1 + $0x188] sm:$0xff]
    %v129 = vld [vmem:[%s1 + $0x190] sm:$0xff]
    %v130 = vld [vmem:[%s1 + $0x198] sm:$0xff]
    %v131 = vld [vmem:[%s1 + $0x1a0] sm:$0xff]
    %v132 = vld [vmem:[%s1 + $0x1a8] sm:$0xff]
    %v133 = vld [vmem:[%s1 + $0x1b0] sm:$0xff]
    %v134 = vld [vmem:[%s1 + $0x1b8] sm:$0xff]
    %v135 = vld [vmem:[%s1 + $0x1c0] sm:$0xff]
    %v136 = vld [vmem:[%s1 + $0x1c8] sm:$0xff]
    %v137 = vld [vmem:[%s1 + $0x1d0] sm:$0xff]
    %v138 = vld [vmem:[%s1 + $0x1d8] sm:$0xff]
    %v139 = vld [vmem:[%s1 + $0x1e0] sm:$0xff]
    %v140 = vld [vmem:[%s1 + $0x1e8] sm:$0xff]
    %v141 = vld [vmem:[%s1 + $0x1f0] sm:$0xff]
    %v142 = vld [vmem:[%s1 + $0x1f8] sm:$0xff]
    %v143 = vld [vmem:[%s1 + $0x200] sm:$0xff]
    %v144 = vld [vmem:[%s1 + $0x208] sm:$0xff]
    %v145 = vld [vmem:[%s1 + $0x210] sm:$0xff]
    %v146 = vld [vmem:[%s1 + $0x218] sm:$0xff]
    %v147 = vld [vmem:[%s1 + $0x220] sm:$0xff]
    %v148 = vld [vmem:[%s1 + $0x228] sm:$0xff]
    %v149 = vld [vmem:[%s1 + $0x230] sm:$0xff]
    %v150 = vld [vmem:[%s1 + $0x238] sm:$0xff]
    %v151 = vld [vmem:[%s1 + $0x240] sm:$0xff]
    %v152 = vld [vmem:[%s1 + $0x248] sm:$0xff]
    %v153 = vld [vmem:[%s1 + $0x250] sm:$0xff]
    %v154 = vld [vmem:[%s1 + $0x258] sm:$0xff]
    %v155 = vld [vmem:[%s1 + $0x260] sm:$0xff]
    %v156 = vld [vmem:[%s1 + $0x268] sm:$0xff]
    %v157 = vld [vmem:[%s1 + $0x270] sm:$0xff]
    %v158 = vld [vmem:[%s1 + $0x278] sm:$0xff]
    %v159 = vld [vmem:[%s1 + $0x280] sm:$0xff]
    %v160 = vld [vmem:[%s1 + $0x288] sm:$0xff]
    %v161 = vld [vmem:[%s1 + $0x290] sm:$0xff]
    %v162 = vld [vmem:[%s1 + $0x298] sm:$0xff]
    %v163 = vld [vmem:[%s1 + $0x2a0] sm:$0xff]
    %v164 = vld [vmem:[%s1 + $0x2a8] sm:$0xff]
    %v165 = vld [vmem:[%s1 + $0x2b0] sm:$0xff]
    %v166 = vld [vmem:[%s1 + $0x2b8] sm:$0xff]
    %v167 = vld [vmem:[%s1 + $0x2c0] sm:$0xff]
    %v168 = vld [vmem:[%s1 + $0x2c8] sm:$0xff]
    %v169 = vld [vmem:[%s1 + $0x2d0] sm:$0xff]
    %v170 = vld [vmem:[%s1 + $0x2d8] sm:$0xff]
    %v171 = vld [vmem:[%s1 + $0x2e0] sm:$0xff]
    %v172 = vld [vmem:[%s1 + $0x2e8] sm:$0xff]
    %v173 = vld [vmem:[%s1 + $0x2f0] sm:$0xff]
    %v174 = vld [vmem:[%s1 + $0x2f8] sm:$0xff]
    %v175 = vld [vmem:[%s1 + $0x300] sm:$0xff]
    %v176 = vld [vmem:[%s1 + $0x308] sm:$0xff]
    %v177 = vld [vmem:[%s1 + $0x310] sm:$0xff]
    %v178 = vld [vmem:[%s1 + $0x318] sm:$0xff]
    %v179 = vld [vmem:[%s1 + $0x320] sm:$0xff]
    %v180 = vld [vmem:[%s1 + $0x328] sm:$0xff]
    %v181 = vld [vmem:[%s1 + $0x330] sm:$0xff]
    %v182 = vld [vmem:[%s1 + $0x338] sm:$0xff]
    %v183 = vld [vmem:[%s1 + $0x340] sm:$0xff]
    %v184 = vld [vmem:[%s1 + $0x348] sm:$0xff]
    %v185 = vld [vmem:[%s1 + $0x350] sm:$0xff]
    %v186 = vld [vmem:[%s1 + $0x358] sm:$0xff]
    %v187 = vld [vmem:[%s1 + $0x360] sm:$0xff]
    %v188 = vld [vmem:[%s1 + $0x368] sm:$0xff]
    %v189 = vld [vmem:[%s1 + $0x370] sm:$0xff]
    %v190 = vld [vmem:[%s1 + $0x378] sm:$0xff]
    %v191 = vld [vmem:[%s1 + $0x380] sm:$0xff]
    %v192 = vld [vmem:[%s1 + $0x388] sm:$0xff]
    %v193 = vld [vmem:[%s1 + $0x390] sm:$0xff]
    %v194 = vld [vmem:[%s1 + $0x398] sm:$0xff]
    %v195 = vld [vmem:[%s1 + $0x3a0] sm:$0xff]
    %v196 = vld [vmem:[%s1 + $0x3a8] sm:$0xff]
    %v197 = vld [vmem:[%s1 + $0x3b0] sm:$0xff]
    %v198 = vld [vmem:[%s1 + $0x3b8] sm:$0xff]
    %v199 = vld [vmem:[%s1 + $0x3c0] sm:$0xff]
    %v200 = vld [vmem:[%s1 + $0x3c8] sm:$0xff]
    %v201 = vld [vmem:[%s1 + $0x3d0] sm:$0xff]
    %v202 = vld [vmem:[%s1 + $0x3d8] sm:$0xff]
    %v203 = vld [vmem:[%s1 + $0x3e0] sm:$0xff]
    %v204 = vld [vmem:[%s1 + $0x3e8] sm:$0xff]
    %v205 = vld [vmem:[%s1 + $0x3f0] sm:$0xff]
    %v206 = vld [vmem:[%s1 + $0x3f8] sm:$0xff]
    %v207 = vld [vmem:[%s2] sm:$0x1]
    %v209 = vperm.slane %v207, 0
    %215 = vst [vmem:[#allocation1] ss:$2 sm:$0xff] %v75
    %s216 = scalar_lea.vmem [#allocation1], 16
    %217 = vst [vmem:[%s216] ss:$2 sm:$0xff] %v76
    %s218 = scalar_lea.vmem [#allocation1], 32
    %219 = vst [vmem:[%s218] ss:$2 sm:$0xff] %v77
    %s220 = scalar_lea.vmem [#allocation1], 48
    %221 = vst [vmem:[%s220] ss:$2 sm:$0xff] %v78
    %v222 = vld.sshfl [vmem:[#allocation1] sm:$0xff pattern:$0x75316420]
    %v223 = vld.sshfl [vmem:[#allocation1 + $0x8] sm:$0xff pattern:$0x75316420]
    %v224 = vld.sshfl [vmem:[#allocation1 + $0x10] sm:$0xff pattern:$0x75316420]
    %v225 = vld.sshfl [vmem:[#allocation1 + $0x18] sm:$0xff pattern:$0x75316420]
    %v226 = vld.sshfl [vmem:[#allocation1 + $0x20] sm:$0xff pattern:$0x75316420]
    %v227 = vld.sshfl [vmem:[#allocation1 + $0x28] sm:$0xff pattern:$0x75316420]
    %v228 = vld.sshfl [vmem:[#allocation1 + $0x30] sm:$0xff pattern:$0x75316420]
    %v229 = vld.sshfl [vmem:[#allocation1 + $0x38] sm:$0xff pattern:$0x75316420]
    %238 = vmatpush.msra.mxu0 %v94
    %239 = vmatpush.msra.mxu0 %v93
    %240 = vmatpush.msra.mxu0 %v92
    %241 = vmatpush.msra.mxu0 %v91
    %242 = vmatpush.msra.mxu0 %v90
    %243 = vmatpush.msra.mxu0 %v89
    %244 = vmatpush.msra.mxu0 %v88
    %245 = vmatpush.msra.mxu0 %v87
    %246 = vmatpush.msra.mxu0 %v86
    %247 = vmatpush.msra.mxu0 %v85
    %248 = vmatpush.msra.mxu0 %v84
    %249 = vmatpush.msra.mxu0 %v83
    %250 = vmatpush.msra.mxu0 %v82
    %251 = vmatpush.msra.mxu0 %v81
    %252 = vmatpush.msra.mxu0 %v80
    %253 = vmatpush.msra.mxu0 %v79
    %254 = vmatmul.f32.gmra.mxu0 %v222
    %v255 = vpop.f32.mrf.mxu0
    %v256 = vadd.f32 %v209, %v255
    %257 = vdwg.mxu0
    %258 = vmatpush.msra.mxu0 %v110
    %259 = vmatpush.msra.mxu0 %v109
    %260 = vmatpush.msra.mxu0 %v108
    %261 = vmatpush.msra.mxu0 %v107
    %262 = vmatpush.msra.mxu0 %v106
    %263 = vmatpush.msra.mxu0 %v105
    %264 = vmatpush.msra.mxu0 %v104
    %265 = vmatpush.msra.mxu0 %v103
    %266 = vmatpush.msra.mxu0 %v102
    %267 = vmatpush.msra.mxu0 %v101
    %268 = vmatpush.msra.mxu0 %v100
    %269 = vmatpush.msra.mxu0 %v99
    %270 = vmatpush.msra.mxu0 %v98
    %271 = vmatpush.msra.mxu0 %v97
    %272 = vmatpush.msra.mxu0 %v96
    %273 = vmatpush.msra.mxu0 %v95
    %274 = vmatmul.f32.gmra.mxu0 %v223
    %v275 = vpop.f32.mrf.mxu0
    %v276 = vadd.f32 %v256, %v275
    %277 = vdwg.mxu0
    %278 = vmatpush.msra.mxu0 %v126
    %279 = vmatpush.msra.mxu0 %v125
    %280 = vmatpush.msra.mxu0 %v124
    %281 = vmatpush.msra.mxu0 %v123
    %282 = vmatpush.msra.mxu0 %v122
    %283 = vmatpush.msra.mxu0 %v121
    %284 = vmatpush.msra.mxu0 %v120
    %285 = vmatpush.msra.mxu0 %v119
    %286 = vmatpush.msra.mxu0 %v118
    %287 = vmatpush.msra.mxu0 %v117
    %288 = vmatpush.msra.mxu0 %v116
    %289 = vmatpush.msra.mxu0 %v115
    %290 = vmatpush.msra.mxu0 %v114
    %291 = vmatpush.msra.mxu0 %v113
    %292 = vmatpush.msra.mxu0 %v112
    %293 = vmatpush.msra.mxu0 %v111
    %294 = vmatmul.f32.gmra.mxu0 %v224
    %v295 = vpop.f32.mrf.mxu0
    %v296 = vadd.f32 %v276, %v295
    %297 = vdwg.mxu0
    %298 = vmatpush.msra.mxu0 %v142
    %299 = vmatpush.msra.mxu0 %v141
    %300 = vmatpush.msra.mxu0 %v140
    %301 = vmatpush.msra.mxu0 %v139
    %302 = vmatpush.msra.mxu0 %v138
    %303 = vmatpush.msra.mxu0 %v137
    %304 = vmatpush.msra.mxu0 %v136
    %305 = vmatpush.msra.mxu0 %v135
    %306 = vmatpush.msra.mxu0 %v134
    %307 = vmatpush.msra.mxu0 %v133
    %308 = vmatpush.msra.mxu0 %v132
    %309 = vmatpush.msra.mxu0 %v131
    %310 = vmatpush.msra.mxu0 %v130
    %311 = vmatpush.msra.mxu0 %v129
    %312 = vmatpush.msra.mxu0 %v128
    %313 = vmatpush.msra.mxu0 %v127
    %314 = vmatmul.f32.gmra.mxu0 %v225
    %v315 = vpop.f32.mrf.mxu0
    %v316 = vadd.f32 %v296, %v315
    %317 = vdwg.mxu0
    %318 = vmatpush.msra.mxu0 %v158
    %319 = vmatpush.msra.mxu0 %v157
    %320 = vmatpush.msra.mxu0 %v156
    %321 = vmatpush.msra.mxu0 %v155
    %322 = vmatpush.msra.mxu0 %v154
    %323 = vmatpush.msra.mxu0 %v153
    %324 = vmatpush.msra.mxu0 %v152
    %325 = vmatpush.msra.mxu0 %v151
    %326 = vmatpush.msra.mxu0 %v150
    %327 = vmatpush.msra.mxu0 %v149
    %328 = vmatpush.msra.mxu0 %v148
    %329 = vmatpush.msra.mxu0 %v147
    %330 = vmatpush.msra.mxu0 %v146
    %331 = vmatpush.msra.mxu0 %v145
    %332 = vmatpush.msra.mxu0 %v144
    %333 = vmatpush.msra.mxu0 %v143
    %334 = vmatmul.f32.gmra.mxu0 %v226
    %v335 = vpop.f32.mrf.mxu0
    %v336 = vadd.f32 %v316, %v335
    %337 = vdwg.mxu0
    %338 = vmatpush.msra.mxu0 %v174
    %339 = vmatpush.msra.mxu0 %v173
    %340 = vmatpush.msra.mxu0 %v172
    %341 = vmatpush.msra.mxu0 %v171
    %342 = vmatpush.msra.mxu0 %v170
    %343 = vmatpush.msra.mxu0 %v169
    %344 = vmatpush.msra.mxu0 %v168
    %345 = vmatpush.msra.mxu0 %v167
    %346 = vmatpush.msra.mxu0 %v166
    %347 = vmatpush.msra.mxu0 %v165
    %348 = vmatpush.msra.mxu0 %v164
    %349 = vmatpush.msra.mxu0 %v163
    %350 = vmatpush.msra.mxu0 %v162
    %351 = vmatpush.msra.mxu0 %v161
    %352 = vmatpush.msra.mxu0 %v160
    %353 = vmatpush.msra.mxu0 %v159
    %354 = vmatmul.f32.gmra.mxu0 %v227
    %v355 = vpop.f32.mrf.mxu0
    %v356 = vadd.f32 %v336, %v355
    %357 = vdwg.mxu0
    %358 = vmatpush.msra.mxu0 %v190
    %359 = vmatpush.msra.mxu0 %v189
    %360 = vmatpush.msra.mxu0 %v188
    %361 = vmatpush.msra.mxu0 %v187
    %362 = vmatpush.msra.mxu0 %v186
    %363 = vmatpush.msra.mxu0 %v185
    %364 = vmatpush.msra.mxu0 %v184
    %365 = vmatpush.msra.mxu0 %v183
    %366 = vmatpush.msra.mxu0 %v182
    %367 = vmatpush.msra.mxu0 %v181
    %368 = vmatpush.msra.mxu0 %v180
    %369 = vmatpush.msra.mxu0 %v179
    %370 = vmatpush.msra.mxu0 %v178
    %371 = vmatpush.msra.mxu0 %v177
    %372 = vmatpush.msra.mxu0 %v176
    %373 = vmatpush.msra.mxu0 %v175
    %374 = vmatmul.f32.gmra.mxu0 %v228
    %v375 = vpop.f32.mrf.mxu0
    %v376 = vadd.f32 %v356, %v375
    %377 = vdwg.mxu0
    %378 = vmatpush.msra.mxu0 %v206
    %379 = vmatpush.msra.mxu0 %v205
    %380 = vmatpush.msra.mxu0 %v204
    %381 = vmatpush.msra.mxu0 %v203
    %382 = vmatpush.msra.mxu0 %v202
    %383 = vmatpush.msra.mxu0 %v201
    %384 = vmatpush.msra.mxu0 %v200
    %385 = vmatpush.msra.mxu0 %v199
    %386 = vmatpush.msra.mxu0 %v198
    %387 = vmatpush.msra.mxu0 %v197
    %388 = vmatpush.msra.mxu0 %v196
    %389 = vmatpush.msra.mxu0 %v195
    %390 = vmatpush.msra.mxu0 %v194
    %391 = vmatpush.msra.mxu0 %v193
    %392 = vmatpush.msra.mxu0 %v192
    %393 = vmatpush.msra.mxu0 %v191
    %394 = vmatmul.f32.gmra.mxu0 %v229
    %v395 = vpop.f32.mrf.mxu0
    %v396 = vadd.f32 %v376, %v395
    %397 = vdwg.mxu0
    %v398 = vmax.f32 %v396, 0.0
    %v399 = vld [vmem:[%s3] sm:$0xff]
    %v400 = vld [vmem:[%s3 + $0x8] sm:$0xff]
    %v401 = vld [vmem:[%s3 + $0x10] sm:$0xff]
    %v402 = vld [vmem:[%s3 + $0x18] sm:$0xff]
    %v403 = vld [vmem:[%s3 + $0x20] sm:$0xff]
    %v404 = vld [vmem:[%s3 + $0x28] sm:$0xff]
    %v405 = vld [vmem:[%s3 + $0x30] sm:$0xff]
    %v406 = vld [vmem:[%s3 + $0x38] sm:$0xff]
    %v407 = vld [vmem:[%s4] sm:$0x1]
    %v409 = vperm.slane %v407, 0
    %vm411 = vcmask 523264
    %v413 = vsel %vm411, %v398, 0
    %415 = vmatpush.msra.mxu0 0.0
    %416 = vmatpush.msra.mxu0 0.0
    %417 = vmatpush.msra.mxu0 0.0
    %418 = vmatpush.msra.mxu0 0.0
    %419 = vmatpush.msra.mxu0 0.0
    %420 = vmatpush.msra.mxu0 0.0
    %421 = vmatpush.msra.mxu0 0.0
    %422 = vmatpush.msra.mxu0 0.0
    %423 = vmatpush.msra.mxu0 %v406
    %424 = vmatpush.msra.mxu0 %v405
    %425 = vmatpush.msra.mxu0 %v404
    %426 = vmatpush.msra.mxu0 %v403
    %427 = vmatpush.msra.mxu0 %v402
    %428 = vmatpush.msra.mxu0 %v401
    %429 = vmatpush.msra.mxu0 %v400
    %430 = vmatpush.msra.mxu0 %v399
    %431 = vmatmul.f32.gmra.mxu0 %v413
    %v432 = vpop.f32.mrf.mxu0
    %v433 = vadd.f32 %v409, %v432
    %434 = vdwg.mxu0
    %v435 = vld [vmem:[%s5] sm:$0xff]
    %v436 = vld [vmem:[%s5 + $0x8] sm:$0xff]
    %v437 = vld [vmem:[%s5 + $0x10] sm:$0xff]
    %v438 = vld [vmem:[%s5 + $0x18] sm:$0xff]
    %v439 = vld [vmem:[%s6] sm:$0x1]
    %v441 = vperm.slane %v439, 0
    %v444 = vrot.slane %v433, 2
    %vm445 = vcmask 261120
    %v446 = vsel %vm445, %v444, 0
    %448 = vmatpush.msra.mxu0 0.0
    %449 = vmatpush.msra.mxu0 0.0
    %450 = vmatpush.msra.mxu0 0.0
    %451 = vmatpush.msra.mxu0 0.0
    %452 = vmatpush.msra.mxu0 0.0
    %453 = vmatpush.msra.mxu0 0.0
    %454 = vmatpush.msra.mxu0 0.0
    %455 = vmatpush.msra.mxu0 0.0
    %456 = vmatpush.msra.mxu0 0.0
    %457 = vmatpush.msra.mxu0 0.0
    %458 = vmatpush.msra.mxu0 0.0
    %459 = vmatpush.msra.mxu0 0.0
    %460 = vmatpush.msra.mxu0 %v438
    %461 = vmatpush.msra.mxu0 %v437
    %462 = vmatpush.msra.mxu0 %v436
    %463 = vmatpush.msra.mxu0 %v435
    %464 = vmatmul.f32.gmra.mxu0 %v446
    %v465 = vpop.f32.mrf.mxu0
    %v466 = vadd.f32 %v441, %v465
    %467 = vdwg.mxu0
    %v468 = vmax.f32 %v466, 0.0
    %v469 = vld [vmem:[%s7] sm:$0xff]
    %v470 = vld [vmem:[%s7 + $0x8] sm:$0xff]
    %v471 = vld [vmem:[%s7 + $0x10] sm:$0xff]
    %v472 = vld [vmem:[%s7 + $0x18] sm:$0xff]
    %v473 = vld [vmem:[%s7 + $0x20] sm:$0xff]
    %v474 = vld [vmem:[%s7 + $0x28] sm:$0xff]
    %v475 = vld [vmem:[%s7 + $0x30] sm:$0xff]
    %v476 = vld [vmem:[%s7 + $0x38] sm:$0xff]
    %v477 = vld [vmem:[%s8] sm:$0x1]
    %v479 = vperm.slane %v477, 0
    %v482 = vsel %vm411, %v468, 0
    %484 = vmatpush.msra.mxu0 0.0
    %485 = vmatpush.msra.mxu0 0.0
    %486 = vmatpush.msra.mxu0 0.0
    %487 = vmatpush.msra.mxu0 0.0
    %488 = vmatpush.msra.mxu0 0.0
    %489 = vmatpush.msra.mxu0 0.0
    %490 = vmatpush.msra.mxu0 0.0
    %491 = vmatpush.msra.mxu0 0.0
    %492 = vmatpush.msra.mxu0 %v476
    %493 = vmatpush.msra.mxu0 %v475
    %494 = vmatpush.msra.mxu0 %v474
    %495 = vmatpush.msra.mxu0 %v473
    %496 = vmatpush.msra.mxu0 %v472
    %497 = vmatpush.msra.mxu0 %v471
    %498 = vmatpush.msra.mxu0 %v470
    %499 = vmatpush.msra.mxu0 %v469
    %500 = vmatmul.f32.gmra.mxu0 %v482
    %v501 = vpop.f32.mrf.mxu0
    %v502 = vadd.f32 %v479, %v501
    %503 = vdwg.mxu0
    %v504 = vmax.f32 %v502, 0.0
    %v505 = vld [vmem:[%s9] sm:$0xff]
    %v506 = vld [vmem:[%s9 + $0x8] sm:$0xff]
    %v507 = vld [vmem:[%s9 + $0x10] sm:$0xff]
    %v508 = vld [vmem:[%s9 + $0x18] sm:$0xff]
    %v509 = vld [vmem:[%s9 + $0x20] sm:$0xff]
    %v510 = vld [vmem:[%s9 + $0x28] sm:$0xff]
    %v511 = vld [vmem:[%s9 + $0x30] sm:$0xff]
    %v512 = vld [vmem:[%s9 + $0x38] sm:$0xff]
    %v513 = vld [vmem:[%s10] sm:$0x1]
    %v515 = vperm.slane %v513, 0
    %v518 = vsel %vm411, %v504, 0
    %520 = vmatpush.msra.mxu0 0.0
    %521 = vmatpush.msra.mxu0 0.0
    %522 = vmatpush.msra.mxu0 0.0
    %523 = vmatpush.msra.mxu0 0.0
    %524 = vmatpush.msra.mxu0 0.0
    %525 = vmatpush.msra.mxu0 0.0
    %526 = vmatpush.msra.mxu0 0.0
    %527 = vmatpush.msra.mxu0 0.0
    %528 = vmatpush.msra.mxu0 %v512
    %529 = vmatpush.msra.mxu0 %v511
    %530 = vmatpush.msra.mxu0 %v510
    %531 = vmatpush.msra.mxu0 %v509
    %532 = vmatpush.msra.mxu0 %v508
    %533 = vmatpush.msra.mxu0 %v507
    %534 = vmatpush.msra.mxu0 %v506
    %535 = vmatpush.msra.mxu0 %v505
    %536 = vmatmul.f32.gmra.mxu0 %v518
    %v537 = vpop.f32.mrf.mxu0
    %v538 = vadd.f32 %v515, %v537
    %539 = vdwg.mxu0
    %v540 = vld [vmem:[%s11] sm:$0xff]
    %v541 = vld [vmem:[%s11 + $0x8] sm:$0xff]
    %v542 = vld [vmem:[%s11 + $0x10] sm:$0xff]
    %v543 = vld [vmem:[%s11 + $0x18] sm:$0xff]
    %v544 = vld [vmem:[%s12] sm:$0xff]
    %v545 = vld [vmem:[%s12 + $0x8] sm:$0xff]
    %vm546 = vcmask 130048
    %v548 = vsel %vm546, %v538, 0
    %550 = vmatpush.msra.mxu0 0.0
    %551 = vmatpush.msra.mxu0 0.0
    %552 = vmatpush.msra.mxu0 0.0
    %553 = vmatpush.msra.mxu0 0.0
    %554 = vmatpush.msra.mxu0 0.0
    %555 = vmatpush.msra.mxu0 0.0
    %556 = vmatpush.msra.mxu0 0.0
    %557 = vmatpush.msra.mxu0 0.0
    %558 = vmatpush.msra.mxu0 0.0
    %559 = vmatpush.msra.mxu0 0.0
    %560 = vmatpush.msra.mxu0 0.0
    %561 = vmatpush.msra.mxu0 0.0
    %562 = vmatpush.msra.mxu0 0.0
    %563 = vmatpush.msra.mxu0 0.0
    %564 = vmatpush.msra.mxu0 %v545
    %565 = vmatpush.msra.mxu0 %v544
    %566 = vmatmul.f32.gmra.mxu0 %v548
    %v567 = vpop.f32.mrf.mxu0
    %v568 = vadd.f32 0.0, %v567
    %569 = vdwg.mxu0
    %v570 = vsel %vm445, %v433, 0
    %572 = vmatpush.msra.mxu0 0.0
    %573 = vmatpush.msra.mxu0 0.0
    %574 = vmatpush.msra.mxu0 0.0
    %575 = vmatpush.msra.mxu0 0.0
    %576 = vmatpush.msra.mxu0 0.0
    %577 = vmatpush.msra.mxu0 0.0
    %578 = vmatpush.msra.mxu0 0.0
    %579 = vmatpush.msra.mxu0 0.0
    %580 = vmatpush.msra.mxu0 0.0
    %581 = vmatpush.msra.mxu0 0.0
    %582 = vmatpush.msra.mxu0 0.0
    %583 = vmatpush.msra.mxu0 0.0
    %584 = vmatpush.msra.mxu0 %v543
    %585 = vmatpush.msra.mxu0 %v542
    %586 = vmatpush.msra.mxu0 %v541
    %587 = vmatpush.msra.mxu0 %v540
    %588 = vmatmul.f32.gmra.mxu0 %v570
    %v589 = vpop.f32.mrf.mxu0
    %v590 = vadd.f32 %v568, %v589
    %591 = vdwg.mxu0
    %v592 = vld [vmem:[%s13] sm:$0x1]
    %v594 = vperm.slane %v592, 0
    %v596 = vadd.f32 %v590, %v594
    %v597 = vmax.f32 %v596, 0.0
    %v598 = vld [vmem:[%s14] sm:$0xff]
    %v599 = vld [vmem:[%s14 + $0x8] sm:$0xff]
    %v600 = vld [vmem:[%s14 + $0x10] sm:$0xff]
    %v601 = vld [vmem:[%s14 + $0x18] sm:$0xff]
    %v602 = vld [vmem:[%s14 + $0x20] sm:$0xff]
    %v603 = vld [vmem:[%s14 + $0x28] sm:$0xff]
    %v604 = vld [vmem:[%s14 + $0x30] sm:$0xff]
    %v605 = vld [vmem:[%s14 + $0x38] sm:$0xff]
    %v606 = vld [vmem:[%s15] sm:$0x1]
    %v608 = vperm.slane %v606, 0
    %v611 = vsel %vm411, %v597, 0
    %613 = vmatpush.msra.mxu0 0.0
    %614 = vmatpush.msra.mxu0 0.0
    %615 = vmatpush.msra.mxu0 0.0
    %616 = vmatpush.msra.mxu0 0.0
    %617 = vmatpush.msra.mxu0 0.0
    %618 = vmatpush.msra.mxu0 0.0
    %619 = vmatpush.msra.mxu0 0.0
    %620 = vmatpush.msra.mxu0 0.0
    %621 = vmatpush.msra.mxu0 %v605
    %622 = vmatpush.msra.mxu0 %v604
    %623 = vmatpush.msra.mxu0 %v603
    %624 = vmatpush.msra.mxu0 %v602
    %625 = vmatpush.msra.mxu0 %v601
    %626 = vmatpush.msra.mxu0 %v600
    %627 = vmatpush.msra.mxu0 %v599
    %628 = vmatpush.msra.mxu0 %v598
    %629 = vmatmul.f32.gmra.mxu0 %v611
    %v630 = vpop.f32.mrf.mxu0
    %v631 = vadd.f32 %v608, %v630
    %632 = vdwg.mxu0
    %v633 = vmax.f32 %v631, 0.0
    %v634 = vld [vmem:[%s16] sm:$0xff]
    %v635 = vld [vmem:[%s16 + $0x8] sm:$0xff]
    %v636 = vld [vmem:[%s16 + $0x10] sm:$0xff]
    %v637 = vld [vmem:[%s16 + $0x18] sm:$0xff]
    %v638 = vld [vmem:[%s16 + $0x20] sm:$0xff]
    %v639 = vld [vmem:[%s16 + $0x28] sm:$0xff]
    %v640 = vld [vmem:[%s16 + $0x30] sm:$0xff]
    %v641 = vld [vmem:[%s16 + $0x38] sm:$0xff]
    %v642 = vld [vmem:[%s17] sm:$0x1]
    %v644 = vperm.slane %v642, 0
    %v647 = vsel %vm411, %v633, 0
    %649 = vmatpush.msra.mxu0 0.0
    %650 = vmatpush.msra.mxu0 0.0
    %651 = vmatpush.msra.mxu0 0.0
    %652 = vmatpush.msra.mxu0 0.0
    %653 = vmatpush.msra.mxu0 0.0
    %654 = vmatpush.msra.mxu0 0.0
    %655 = vmatpush.msra.mxu0 0.0
    %656 = vmatpush.msra.mxu0 0.0
    %657 = vmatpush.msra.mxu0 %v641
    %658 = vmatpush.msra.mxu0 %v640
    %659 = vmatpush.msra.mxu0 %v639
    %660 = vmatpush.msra.mxu0 %v638
    %661 = vmatpush.msra.mxu0 %v637
    %662 = vmatpush.msra.mxu0 %v636
    %663 = vmatpush.msra.mxu0 %v635
    %664 = vmatpush.msra.mxu0 %v634
    %665 = vmatmul.f32.gmra.mxu0 %v647
    %v666 = vpop.f32.mrf.mxu0
    %v667 = vadd.f32 %v644, %v666
    %668 = vdwg.mxu0
    %v669 = vmax.f32 %v667, 0.0
    %v670 = vld [vmem:[%s18] sm:$0xff]
    %v671 = vld [vmem:[%s18 + $0x8] sm:$0xff]
    %v672 = vld [vmem:[%s18 + $0x10] sm:$0xff]
    %v673 = vld [vmem:[%s18 + $0x18] sm:$0xff]
    %v674 = vld [vmem:[%s18 + $0x20] sm:$0xff]
    %v675 = vld [vmem:[%s18 + $0x28] sm:$0xff]
    %v676 = vld [vmem:[%s18 + $0x30] sm:$0xff]
    %v677 = vld [vmem:[%s18 + $0x38] sm:$0xff]
    %v678 = vld [vmem:[%s19] sm:$0x1]
    %v680 = vperm.slane %v678, 0
    %v683 = vsel %vm411, %v669, 0
    %685 = vmatpush.msra.mxu0 0.0
    %686 = vmatpush.msra.mxu0 0.0
    %687 = vmatpush.msra.mxu0 0.0
    %688 = vmatpush.msra.mxu0 0.0
    %689 = vmatpush.msra.mxu0 0.0
    %690 = vmatpush.msra.mxu0 0.0
    %691 = vmatpush.msra.mxu0 0.0
    %692 = vmatpush.msra.mxu0 0.0
    %693 = vmatpush.msra.mxu0 %v677
    %694 = vmatpush.msra.mxu0 %v676
    %695 = vmatpush.msra.mxu0 %v675
    %696 = vmatpush.msra.mxu0 %v674
    %697 = vmatpush.msra.mxu0 %v673
    %698 = vmatpush.msra.mxu0 %v672
    %699 = vmatpush.msra.mxu0 %v671
    %700 = vmatpush.msra.mxu0 %v670
    %701 = vmatmul.f32.gmra.mxu0 %v683
    %v702 = vpop.f32.mrf.mxu0
    %v703 = vadd.f32 %v680, %v702
    %704 = vdwg.mxu0
    %v705 = vld [vmem:[%s20] sm:$0xff]
    %v706 = vld [vmem:[%s20 + $0x8] sm:$0xff]
    %v707 = vld [vmem:[%s20 + $0x10] sm:$0xff]
    %v708 = vld [vmem:[%s20 + $0x18] sm:$0xff]
    %v709 = vld [vmem:[%s20 + $0x20] sm:$0xff]
    %v710 = vld [vmem:[%s20 + $0x28] sm:$0xff]
    %v711 = vld [vmem:[%s20 + $0x30] sm:$0xff]
    %v712 = vld [vmem:[%s20 + $0x38] sm:$0xff]
    %v713 = vld [vmem:[%s21] sm:$0x1]
    %v715 = vperm.slane %v713, 0
    %717 = vmatpush.msra.mxu0 0.0
    %718 = vmatpush.msra.mxu0 0.0
    %719 = vmatpush.msra.mxu0 0.0
    %720 = vmatpush.msra.mxu0 0.0
    %721 = vmatpush.msra.mxu0 0.0
    %722 = vmatpush.msra.mxu0 0.0
    %723 = vmatpush.msra.mxu0 0.0
    %724 = vmatpush.msra.mxu0 0.0
    %725 = vmatpush.msra.mxu0 %v712
    %726 = vmatpush.msra.mxu0 %v711
    %727 = vmatpush.msra.mxu0 %v710
    %728 = vmatpush.msra.mxu0 %v709
    %729 = vmatpush.msra.mxu0 %v708
    %730 = vmatpush.msra.mxu0 %v707
    %731 = vmatpush.msra.mxu0 %v706
    %732 = vmatpush.msra.mxu0 %v705
    %733 = vmatmul.f32.gmra.mxu0 %v683
    %v734 = vpop.f32.mrf.mxu0
    %v735 = vadd.f32 %v715, %v734
    %736 = vdwg.mxu0
    %v737 = vmax.f32 %v735, -20.0
    %v738 = vmin.f32 %v737, 2.0
    %vm739 = vcmask 58368
    %740 = vst.msk [vmem:[#allocation2] sm:$0x3] %vm739, %v703
    %v741 = vmul.f32 %v738, 1.442695
    %v742 = vpow.pop %v741
    %743 = vst.msk [vmem:[#allocation4] sm:$0x3] %vm739, %v742
    // Predicated region
    $region90: #{skill_proposal_forward.9} parent=1 // pred_check
      _
    $region91: #{skill_proposal_forward.9} parent=1 // pred_check_branch
      %745 = sbr.rel (0) target = $region93
    $region92: #{skill_proposal_forward.9} parent=1 // pred_region
      %747 = vsyncadd [#allocation3], 0
      %s749 = sshll.u32 [#allocation2], 4
      %s750 = int_to_ptr.vmem [resolvable:$true] %s749
      %s751 = sshll.u32 %s22, 4
      %s752 = int_to_ptr.hbm [resolvable:$true] %s751
      %754 = dma.vmem_to_hbm [thread:$0]  %s750, 32, %s752, [#allocation3]
    $region93: #{skill_proposal_forward.9} parent=1 // pred_fallthru
      _
    // Predicated region
    $region94: #{skill_proposal_forward.9} parent=1 // pred_check
      _
    $region95: #{skill_proposal_forward.9} parent=1 // pred_check_branch
      %756 = sbr.rel (0) target = $region97
    $region96: #{skill_proposal_forward.9} parent=1 // pred_region
      %758 = vsyncadd [#allocation5], 0
      %s760 = sshll.u32 [#allocation4], 4
      %s761 = int_to_ptr.vmem [resolvable:$true] %s760
      %s762 = sshll.u32 %s23, 4
      %s763 = int_to_ptr.hbm [resolvable:$true] %s762
      %765 = dma.vmem_to_hbm [thread:$0]  %s761, 32, %s763, [#allocation5]
    $region97: #{skill_proposal_forward.9} parent=1 // pred_fallthru
      _
    // Predicated region
    $region98: #{skill_proposal_forward.9} parent=1 // pred_check
      _
    $region99: #{skill_proposal_forward.9} parent=1 // pred_check_branch
      %767 = sbr.rel (0) target = $region101
    $region100: #{skill_proposal_forward.9} parent=1 // pred_region
      %769 = dma.done [#allocation3], 32
    $region101: #{skill_proposal_forward.9} parent=1 // pred_fallthru
      _
    // Predicated region
    $region102: #{skill_proposal_forward.9} parent=1 // pred_check
      _
    $region103: #{skill_proposal_forward.9} parent=1 // pred_check_branch
      %771 = sbr.rel (0) target = $region105
    $region104: #{skill_proposal_forward.9} parent=1 // pred_region
      %773 = dma.done [#allocation5], 32
    $region105: #{skill_proposal_forward.9} parent=1 // pred_fallthru
      _
    %774 = vsyncpa [#allocation3], 1
    %775 = vsyncpa [#allocation5], 1

</llo_original>
